<compile_context>
chip_gen: v5e
topology: v5e:2x2
jax: 0.10.0
libtpu: 0.0.40
codegen_flags: <defaults>
</compile_context>

<pallas_src>
import functools

import jax
import jax.numpy as jnp
import numpy as np
from jax.experimental import pallas as pl
from jax.experimental.pallas import tpu as pltpu

_SUBLANE = 8


# ----------------------------------------------------------------------------
# Pallas kernel
# ----------------------------------------------------------------------------
def painn_update_kernel(
    s_ref,       # [tn, F]      scalar features tile
    v_ref,       # [3, tn, F]   vector features tile (xyz leading)
    uvwt_ref,    # [F, 2F]      concat(U.weight.T, V.weight.T)   (bf16)
    w1t_ref,     # [2F, F]      MLP layer1 weight, transposed    (bf16)
    b1_ref,      # [1, F]       MLP layer1 bias                  (f32)
    w2t_ref,     # [F, 3F]      MLP layer2 weight, transposed    (bf16)
    b2_ref,      # [1, 3F]      MLP layer2 bias                  (f32)
    s_out_ref,   # [tn, F]
    v_out_ref,   # [3, tn, F]
):
    tn, F = s_ref.shape

    s = s_ref[...].astype(jnp.float32)               # [tn, F]
    v3 = v_ref[...].astype(jnp.float32)              # [3, tn, F]

    # Fused U|V feature matmul: ONE MXU pass over [3*tn, F] x [F, 2F]
    # (bf16 operands, f32 accumulation).  tn is a multiple of 8 so the reshape
    # merging the leading dims is tile-aligned (no relayout).
    v_flat = v3.reshape(3 * tn, F).astype(jnp.bfloat16)
    uvvv = jnp.dot(v_flat, uvwt_ref[...],
                   preferred_element_type=jnp.float32)          # [3*tn, 2F]

    # Per-component, lane/sublane-aligned static slices (no [3, tn, F] copies).
    uv = [uvvv[d * tn:(d + 1) * tn, :F] for d in range(3)]      # U v, xyz
    vv = [uvvv[d * tn:(d + 1) * tn, F:] for d in range(3)]      # V v, xyz

    # ||V v||_2 and <U v, V v> over the spatial dim -- pure VPU adds.
    vnorm = jnp.sqrt(vv[0] * vv[0] + vv[1] * vv[1] + vv[2] * vv[2])   # [tn, F]
    udotv = uv[0] * vv[0] + uv[1] * vv[1] + uv[2] * vv[2]             # [tn, F]

    # scalar_vector_network: Linear(2F->F) + SiLU + Linear(F->3F), fused matmuls.
    x = jnp.concatenate([vnorm, s], axis=-1).astype(jnp.bfloat16)     # [tn, 2F]
    h = (jnp.dot(x, w1t_ref[...], preferred_element_type=jnp.float32)
         + b1_ref[...])
    h = h * (1.0 / (1.0 + jnp.exp(-h)))                                # SiLU (EUP)

    a = (jnp.dot(h.astype(jnp.bfloat16), w2t_ref[...],
                 preferred_element_type=jnp.float32)
         + b2_ref[...])                                                # [tn, 3F]
    a_vv = a[:, :F]
    a_sv = a[:, F:2 * F]
    a_ss = a[:, 2 * F:]

    # Residual updates (f32 math, stored in the output dtype).
    s_out_ref[...] = (s + a_ss + a_sv * udotv).astype(s_out_ref.dtype)
    for d in range(3):
        v_out_ref[d] = (v3[d] + uv[d] * a_vv).astype(v_out_ref.dtype)


# ----------------------------------------------------------------------------
# Hardware-aware tiling plan
# ----------------------------------------------------------------------------
def _hw_info():
    """(vmem_capacity_bytes, cores_per_device). Python/trace-time query; safe fallbacks."""
    vmem_cap = 128 * 1024 * 1024
    try:
        vmem_cap = int(pltpu.get_tpu_info().vmem_capacity_bytes)
    except Exception:
        pass
    num_cores = 1
    try:
        num_cores = max(1, int(getattr(jax.devices()[0], "num_cores", 1)))
    except Exception:
        pass
    return vmem_cap, num_cores


def _cdiv(a, b):
    return -(-a // b)


def _plan(num_nodes, num_features, requested_tile=None):
    """Returns (tile_n, n_pad, grid_steps, vmem_limit_bytes, single_buffer_weights)."""
    F = num_features
    vmem_cap, num_cores = _hw_info()

    # Per-node VMEM bytes: double-buffered f32 IO blocks (64*F) plus f32/bf16
    # intermediates (~110*F); 200*F is a conservative bound.
    per_node = 200 * F
    weight_bytes = (2 * F * F + 2 * F * F + 3 * F * F) * 2 + 4 * F * 4   # bf16 weights + f32 biases
    # Single-buffer constant weights only when they matter (large F vs VMEM).
    single_buffer_weights = weight_bytes > (vmem_cap // 8)
    weight_resident = weight_bytes if single_buffer_weights else 2 * weight_bytes

    budget = int(0.5 * min(vmem_cap, 128 * 1024 * 1024)) - weight_resident
    max_tile = max(_SUBLANE,
                   min(512, (budget // per_node) // _SUBLANE * _SUBLANE))

    if requested_tile is not None:
        tile = max(_SUBLANE, (int(requested_tile) // _SUBLANE) * _SUBLANE)
        steps = max(1, _cdiv(num_nodes, tile))
    else:
        steps = max(1, _cdiv(num_nodes, max_tile))
        # Megacore (v7x): keep the grid an even multiple of the core count so
        # neither core sits idle on a mem-bound kernel.
        if num_cores > 1 and steps % num_cores:
            steps = _cdiv(steps, num_cores) * num_cores
        tile = _cdiv(_cdiv(num_nodes, steps), _SUBLANE) * _SUBLANE
    n_pad = steps * tile

    est = weight_resident + tile * per_node
    vmem_limit = min(int(0.9 * vmem_cap),
                     max(32 * 1024 * 1024, int(1.25 * est)))
    return tile, n_pad, steps, vmem_limit, single_buffer_weights


def _const_spec(shape, single_buffer):
    """BlockSpec for a grid-invariant (weight/bias) operand."""
    ndim = len(shape)
    if single_buffer:
        # Fetched once; single-buffering halves its VMEM residency (matters at F >= ~512 on v7x).
        return pl.BlockSpec(shape, lambda i: (0,) * ndim, pipeline_mode=pl.Buffered(1))
    return pl.BlockSpec(shape, lambda i: (0,) * ndim)


# ----------------------------------------------------------------------------
# Native-layout entry point: vector features carried as [3, N, F] (no HBM transpose)
# ----------------------------------------------------------------------------
@functools.partial(jax.jit, static_argnames=("tile_n",))
def painn_update_block_v3nf(scalar_features, vector_features_3nf, params, *, tile_n=None):
    N, F = scalar_features.shape
    assert vector_features_3nf.shape == (3, N, F)

    tn, n_pad, steps, vmem_limit, single_buf_w = _plan(N, F, tile_n)

    s = scalar_features
    v = vector_features_3nf
    if n_pad != N:
        # Zero-padded rows are computed and then sliced off; harmless.
        s = jnp.pad(s, ((0, n_pad - N), (0, 0)))
        v = jnp.pad(v, ((0, 0), (0, n_pad - N), (0, 0)))

    Uw, Vw = params["Uw"], params["Vw"]
    W1, b1 = params["W1"], params["b1"]
    W2, b2 = params["W2"], params["b2"]

    # Fused / transposed weights (bf16 for the MXU; biases stay f32).
    uvwt = jnp.concatenate([Uw.T, Vw.T], axis=-1).astype(jnp.bfloat16)   # [F, 2F]
    w1t = W1.T.astype(jnp.bfloat16)                                       # [2F, F]
    b1r = b1.reshape(1, F).astype(jnp.float32)
    w2t = W2.T.astype(jnp.bfloat16)                                       # [F, 3F]
    b2r = b2.reshape(1, 3 * F).astype(jnp.float32)

    grid_spec = pltpu.PrefetchScalarGridSpec(
        num_scalar_prefetch=0,
        grid=(steps,),
        in_specs=[
            pl.BlockSpec((tn, F), lambda i: (i, 0)),          # scalar features
            pl.BlockSpec((3, tn, F), lambda i: (0, i, 0)),    # vector features
            _const_spec((F, 2 * F), single_buf_w),            # U|V weight
            _const_spec((2 * F, F), single_buf_w),            # layer1 weight
            _const_spec((1, F), single_buf_w),                # layer1 bias
            _const_spec((F, 3 * F), single_buf_w),            # layer2 weight
            _const_spec((1, 3 * F), single_buf_w),            # layer2 bias
        ],
        out_specs=[
            pl.BlockSpec((tn, F), lambda i: (i, 0)),
            pl.BlockSpec((3, tn, F), lambda i: (0, i, 0)),
        ],
    )

    # Roofline hint (HBM-bound: ~22*F/32 FLOP/byte at f32 I/O).
    io_bytes = (2 * n_pad * F * s.dtype.itemsize
                + 2 * 3 * n_pad * F * v.dtype.itemsize)
    weight_io = 7 * F * F * 2 + 4 * F * 4
    cost = pl.CostEstimate(
        flops=22 * n_pad * F * F,
        transcendentals=2 * n_pad * F,
        bytes_accessed=io_bytes + weight_io,
    )

    s_out, v_out_3nf = pl.pallas_call(
        painn_update_kernel,
        out_shape=(
            jax.ShapeDtypeStruct((n_pad, F), scalar_features.dtype),
            jax.ShapeDtypeStruct((3, n_pad, F), vector_features_3nf.dtype),
        ),
        grid_spec=grid_spec,
        compiler_params=pltpu.CompilerParams(
            dimension_semantics=("parallel",),
            vmem_limit_bytes=vmem_limit,
        ),
        cost_estimate=cost,
    )(s, v, uvwt, w1t, b1r, w2t, b2r)

    if n_pad != N:
        s_out = s_out[:N]
        v_out_3nf = v_out_3nf[:, :N]
    return s_out, v_out_3nf


# ----------------------------------------------------------------------------
# PyTorch-layout compatibility shim ([N, F, 3] in/out, matching the reference module)
# ----------------------------------------------------------------------------
@functools.partial(jax.jit, static_argnames=("tile_n",))
def painn_update_block(scalar_features, vector_features, params, *, tile_n=None):
    """PaiNN update block with the PyTorch interface.

    scalar_features: [N, F], vector_features: [N, F, 3].
    params: Uw [F,F], Vw [F,F], W1 [F,2F], b1 [F], W2 [3F,F], b2 [3F].

    NOTE: the two moveaxis calls below each re-read + re-write the 12*N*F-byte
    vector array in HBM with a layout-hostile minor dim of 3.  This kernel is
    HBM-bandwidth-bound, so persist features as [3, N, F] across layers and call
    painn_update_block_v3nf directly whenever you control the adjacent ops.
    """
    v_3nf = jnp.moveaxis(vector_features, -1, 0)
    s_out, v_out_3nf = painn_update_block_v3nf(
        scalar_features, v_3nf, params, tile_n=tile_n)
    return s_out, jnp.moveaxis(v_out_3nf, 0, -1)


# ----------------------------------------------------------------------------
# Pure-JAX references
# ----------------------------------------------------------------------------
def painn_update_ref(scalar_features, vector_features_nf3, params):
    """Mirrors the PyTorch forward exactly (f32, [N, F, 3] layout)."""
    F = scalar_features.shape[-1]
    Uw, Vw = params["Uw"], params["Vw"]
    W1, b1 = params["W1"], params["b1"]
    W2, b2 = params["W2"], params["b2"]

    Uv = jnp.einsum("fg,ngd->nfd", Uw, vector_features_nf3)
    Vv = jnp.einsum("fg,ngd->nfd", Vw, vector_features_nf3)
    vnorm = jnp.linalg.norm(Vv, axis=-1)
    x = jnp.concatenate([vnorm, scalar_features], axis=-1)
    h = x @ W1.T + b1
    h = h * jax.nn.sigmoid(h)
    a = h @ W2.T + b2
    a_vv, a_sv, a_ss = a[:, :F], a[:, F:2 * F], a[:, 2 * F:]
    vector_res = Uv * a_vv[:, :, None]
    scalar_res = a_ss + a_sv * jnp.sum(Uv * Vv, axis=-1)
    return scalar_features + scalar_res, vector_features_nf3 + vector_res


def painn_update_ref_bf16(scalar_features, vector_features_3nf, params):
    """Reference that mirrors the kernel's bf16 operand / f32 accumulation cast
    points exactly, so the Pallas kernel can be checked at tight tolerance
    (catches weight-split / transpose bugs that a 5e-2 tolerance could mask)."""
    F = scalar_features.shape[-1]
    bf16 = jnp.bfloat16
    Uw, Vw = params["Uw"], params["Vw"]
    W1, b1 = params["W1"], params["b1"]
    W2, b2 = params["W2"], params["b2"]

    uvwt = jnp.concatenate([Uw.T, Vw.T], axis=-1).astype(bf16)            # [F, 2F]
    v = vector_features_3nf.astype(bf16)                                   # [3, N, F]
    uvvv = jnp.einsum("dnf,fg->dng", v, uvwt,
                      preferred_element_type=jnp.float32)                  # [3, N, 2F]
    uv, vv = uvvv[..., :F], uvvv[..., F:]
    vnorm = jnp.sqrt(vv[0] * vv[0] + vv[1] * vv[1] + vv[2] * vv[2])
    udotv = uv[0] * vv[0] + uv[1] * vv[1] + uv[2] * vv[2]

    x = jnp.concatenate([vnorm, scalar_features], axis=-1).astype(bf16)
    h = jnp.dot(x, W1.T.astype(bf16), preferred_element_type=jnp.float32) + b1
    h = h * (1.0 / (1.0 + jnp.exp(-h)))
    a = jnp.dot(h.astype(bf16), W2.T.astype(bf16),
                preferred_element_type=jnp.float32) + b2
    a_vv, a_sv, a_ss = a[:, :F], a[:, F:2 * F], a[:, 2 * F:]
    s_out = scalar_features + a_ss + a_sv * udotv
    v_out = vector_features_3nf + uv * a_vv[None]
    return s_out, v_out


# ----------------------------------------------------------------------------
# Main
# ----------------------------------------------------------------------------
if __name__ == "__main__":
    num_nodes = 512
    num_features = 128    # module default; exactly one 128-lane vreg per row

    key = jax.random.PRNGKey(0)
    ks = jax.random.split(key, 8)

    s1 = 1.0 / np.sqrt(num_features)
    s2 = 1.0 / np.sqrt(2 * num_features)
    params = {
        "Uw": jax.random.uniform(ks[0], (num_features, num_features), jnp.float32, -s1, s1),
        "Vw": jax.random.uniform(ks[1], (num_features, num_features), jnp.float32, -s1, s1),
        "W1": jax.random.uniform(ks[2], (num_features, 2 * num_features), jnp.float32, -s2, s2),
        "b1": jax.random.uniform(ks[3], (num_features,), jnp.float32, -s2, s2),
        "W2": jax.random.uniform(ks[4], (3 * num_features, num_features), jnp.float32, -s1, s1),
        "b2": jax.random.uniform(ks[5], (3 * num_features,), jnp.float32, -s1, s1),
    }

    scalar_features = jax.random.normal(ks[6], (num_nodes, num_features), jnp.float32)
    vector_features = jax.random.normal(ks[7], (num_nodes, num_features, 3), jnp.float32)
    v3nf = jnp.moveaxis(vector_features, -1, 0)   # persisted native layout

    # --- primary path: native [3, N, F] layout, no HBM transposes -------------
    s_out, v_out_3nf = painn_update_block_v3nf(scalar_features, v3nf, params)
    jax.block_until_ready((s_out, v_out_3nf))

    # Tight check vs. a JAX reference with identical bf16 cast points.
    s_bf, v_bf = painn_update_ref_bf16(scalar_features, v3nf, params)
    np.testing.assert_allclose(np.asarray(s_out), np.asarray(s_bf), rtol=2e-4, atol=2e-4)
    np.testing.assert_allclose(np.asarray(v_out_3nf), np.asarray(v_bf), rtol=2e-4, atol=2e-4)

    # Loose check vs. the pure-f32 PyTorch-equivalent reference.
    s_ref, v_ref = painn_update_ref(scalar_features, vector_features, params)
    np.testing.assert_allclose(np.asarray(s_out), np.asarray(s_ref), rtol=5e-2, atol=5e-2)
    np.testing.assert_allclose(np.asarray(jnp.moveaxis(v_out_3nf, 0, -1)),
                               np.asarray(v_ref), rtol=5e-2, atol=5e-2)

    # --- padding path (N not a multiple of 8) via the PyTorch-layout shim -----
    n_odd = 199
    s2_in, v2_in = scalar_features[:n_odd], vector_features[:n_odd]
    s2_out, v2_out = painn_update_block(s2_in, v2_in, params)
    jax.block_until_ready((s2_out, v2_out))
    s2_ref, v2_ref = painn_update_ref(s2_in, v2_in, params)
    np.testing.assert_allclose(np.asarray(s2_out), np.asarray(s2_ref), rtol=5e-2, atol=5e-2)
    np.testing.assert_allclose(np.asarray(v2_out), np.asarray(v2_ref), rtol=5e-2, atol=5e-2)

    print("KERNEL_OK")
</pallas_src>

<mosaic_0001>
module attributes {stable_mosaic.version = 11 : i64} {
  func.func @painn_update_kernel(%arg0: i32, %arg1: memref<512x128xf32, #tpu.memory_space<vmem>>, %arg2: memref<3x512x128xf32, #tpu.memory_space<vmem>>, %arg3: memref<128x256xbf16, #tpu.memory_space<vmem>>, %arg4: memref<256x128xbf16, #tpu.memory_space<vmem>>, %arg5: memref<1x128xf32, #tpu.memory_space<vmem>>, %arg6: memref<128x384xbf16, #tpu.memory_space<vmem>>, %arg7: memref<1x384xf32, #tpu.memory_space<vmem>>, %arg8: memref<512x128xf32, #tpu.memory_space<vmem>>, %arg9: memref<3x512x128xf32, #tpu.memory_space<vmem>>) attributes {dimension_semantics = [#tpu.dimension_semantics<parallel>], iteration_bounds = array<i64: 1>, scalar_prefetch = 0 : i64, scratch_operands = 0 : i64, tpu.core_type = #tpu.core_type<tc>, window_params = [{transform_indices = @transform_0, window_bounds = array<i64: 512, 128>}, {transform_indices = @transform_1, window_bounds = array<i64: 3, 512, 128>}, {pipeline_mode = #tpu.pipeline_mode<synchronous>, transform_indices = @transform_2, window_bounds = array<i64: 128, 256>}, {pipeline_mode = #tpu.pipeline_mode<synchronous>, transform_indices = @transform_3, window_bounds = array<i64: 256, 128>}, {pipeline_mode = #tpu.pipeline_mode<synchronous>, transform_indices = @transform_4, window_bounds = array<i64: 1, 128>}, {pipeline_mode = #tpu.pipeline_mode<synchronous>, transform_indices = @transform_5, window_bounds = array<i64: 128, 384>}, {pipeline_mode = #tpu.pipeline_mode<synchronous>, transform_indices = @transform_6, window_bounds = array<i64: 1, 384>}, {transform_indices = @transform_7, window_bounds = array<i64: 512, 128>}, {transform_indices = @transform_8, window_bounds = array<i64: 3, 512, 128>}]} {
    %c0 = arith.constant 0 : index
    %c0_0 = arith.constant 0 : index
    %0 = vector.load %arg1[%c0, %c0_0] : memref<512x128xf32, #tpu.memory_space<vmem>>, vector<512x128xf32>
    %c0_1 = arith.constant 0 : index
    %c0_2 = arith.constant 0 : index
    %c0_3 = arith.constant 0 : index
    %1 = vector.load %arg2[%c0_1, %c0_2, %c0_3] : memref<3x512x128xf32, #tpu.memory_space<vmem>>, vector<3x512x128xf32>
    %2 = vector.shape_cast %1 : vector<3x512x128xf32> to vector<1536x128xf32>
    %3 = arith.truncf %2 : vector<1536x128xf32> to vector<1536x128xbf16>
    %c0_4 = arith.constant 0 : index
    %c0_5 = arith.constant 0 : index
    %4 = vector.load %arg3[%c0_4, %c0_5] : memref<128x256xbf16, #tpu.memory_space<vmem>>, vector<128x256xbf16>
    %cst = arith.constant dense<0.000000e+00> : vector<1536x256xf32>
    %5 = tpu.matmul %3, %4, %cst {dimension_numbers = #tpu.dot_dimension_numbers<[1], [0], [0], [1], [0, 0, 1, 1], [], []>} : vector<1536x128xbf16>, vector<128x256xbf16>, vector<1536x256xf32> -> vector<1536x256xf32>
    %6 = vector.extract_strided_slice %5 {offsets = [0, 0], sizes = [512, 128], strides = [1, 1]} : vector<1536x256xf32> to vector<512x128xf32>
    %7 = vector.extract_strided_slice %5 {offsets = [512, 0], sizes = [512, 128], strides = [1, 1]} : vector<1536x256xf32> to vector<512x128xf32>
    %8 = vector.extract_strided_slice %5 {offsets = [1024, 0], sizes = [512, 128], strides = [1, 1]} : vector<1536x256xf32> to vector<512x128xf32>
    %9 = vector.extract_strided_slice %5 {offsets = [0, 128], sizes = [512, 128], strides = [1, 1]} : vector<1536x256xf32> to vector<512x128xf32>
    %10 = vector.extract_strided_slice %5 {offsets = [512, 128], sizes = [512, 128], strides = [1, 1]} : vector<1536x256xf32> to vector<512x128xf32>
    %11 = vector.extract_strided_slice %5 {offsets = [1024, 128], sizes = [512, 128], strides = [1, 1]} : vector<1536x256xf32> to vector<512x128xf32>
    %12 = arith.mulf %9, %9 : vector<512x128xf32>
    %13 = arith.mulf %10, %10 : vector<512x128xf32>
    %14 = arith.addf %12, %13 : vector<512x128xf32>
    %15 = arith.mulf %11, %11 : vector<512x128xf32>
    %16 = arith.addf %14, %15 : vector<512x128xf32>
    %17 = math.sqrt %16 : vector<512x128xf32>
    %18 = arith.mulf %6, %9 : vector<512x128xf32>
    %19 = arith.mulf %7, %10 : vector<512x128xf32>
    %20 = arith.addf %18, %19 : vector<512x128xf32>
    %21 = arith.mulf %8, %11 : vector<512x128xf32>
    %22 = arith.addf %20, %21 : vector<512x128xf32>
    %23 = tpu.concatenate %17, %0 in 1 : vector<512x128xf32>, vector<512x128xf32> -> vector<512x256xf32>
    %24 = arith.truncf %23 : vector<512x256xf32> to vector<512x256xbf16>
    %c0_6 = arith.constant 0 : index
    %c0_7 = arith.constant 0 : index
    %25 = vector.load %arg4[%c0_6, %c0_7] : memref<256x128xbf16, #tpu.memory_space<vmem>>, vector<256x128xbf16>
    %cst_8 = arith.constant dense<0.000000e+00> : vector<512x128xf32>
    %26 = tpu.matmul %24, %25, %cst_8 {dimension_numbers = #tpu.dot_dimension_numbers<[1], [0], [0], [1], [0, 0, 1, 1], [], []>} : vector<512x256xbf16>, vector<256x128xbf16>, vector<512x128xf32> -> vector<512x128xf32>
    %c0_9 = arith.constant 0 : index
    %c0_10 = arith.constant 0 : index
    %27 = vector.load %arg5[%c0_9, %c0_10] : memref<1x128xf32, #tpu.memory_space<vmem>>, vector<1x128xf32>
    %28 = vector.broadcast %27 : vector<1x128xf32> to vector<512x128xf32>
    %29 = arith.addf %26, %28 : vector<512x128xf32>
    %cst_11 = arith.constant 0.000000e+00 : f32
    %30 = vector.broadcast %cst_11 : f32 to vector<512x128xf32>
    %31 = arith.subf %30, %29 : vector<512x128xf32>
    %32 = math.exp %31 : vector<512x128xf32>
    %cst_12 = arith.constant 1.000000e+00 : f32
    %33 = vector.broadcast %cst_12 : f32 to vector<512x128xf32>
    %34 = arith.addf %33, %32 : vector<512x128xf32>
    %cst_13 = arith.constant 1.000000e+00 : f32
    %35 = vector.broadcast %cst_13 : f32 to vector<512x128xf32>
    %36 = arith.divf %35, %34 : vector<512x128xf32>
    %37 = arith.mulf %29, %36 : vector<512x128xf32>
    %38 = arith.truncf %37 : vector<512x128xf32> to vector<512x128xbf16>
    %c0_14 = arith.constant 0 : index
    %c0_15 = arith.constant 0 : index
    %39 = vector.load %arg6[%c0_14, %c0_15] : memref<128x384xbf16, #tpu.memory_space<vmem>>, vector<128x384xbf16>
    %cst_16 = arith.constant dense<0.000000e+00> : vector<512x384xf32>
    %40 = tpu.matmul %38, %39, %cst_16 {dimension_numbers = #tpu.dot_dimension_numbers<[1], [0], [0], [1], [0, 0, 1, 1], [], []>} : vector<512x128xbf16>, vector<128x384xbf16>, vector<512x384xf32> -> vector<512x384xf32>
    %c0_17 = arith.constant 0 : index
    %c0_18 = arith.constant 0 : index
    %41 = vector.load %arg7[%c0_17, %c0_18] : memref<1x384xf32, #tpu.memory_space<vmem>>, vector<1x384xf32>
    %42 = vector.broadcast %41 : vector<1x384xf32> to vector<512x384xf32>
    %43 = arith.addf %40, %42 : vector<512x384xf32>
    %44 = vector.extract_strided_slice %43 {offsets = [0, 0], sizes = [512, 128], strides = [1, 1]} : vector<512x384xf32> to vector<512x128xf32>
    %45 = vector.extract_strided_slice %43 {offsets = [0, 128], sizes = [512, 128], strides = [1, 1]} : vector<512x384xf32> to vector<512x128xf32>
    %46 = vector.extract_strided_slice %43 {offsets = [0, 256], sizes = [512, 128], strides = [1, 1]} : vector<512x384xf32> to vector<512x128xf32>
    %47 = arith.addf %0, %46 : vector<512x128xf32>
    %48 = arith.mulf %45, %22 : vector<512x128xf32>
    %49 = arith.addf %47, %48 : vector<512x128xf32>
    %c0_19 = arith.constant 0 : index
    %c0_20 = arith.constant 0 : index
    %50 = vector.load %arg8[%c0_19, %c0_20] : memref<512x128xf32, #tpu.memory_space<vmem>>, vector<512x128xf32>
    tpu.vector_store %arg8[%c0_19, %c0_20], %49 {strides = array<i32>} : memref<512x128xf32, #tpu.memory_space<vmem>>, vector<512x128xf32>,
    %51 = vector.extract_strided_slice %1 {offsets = [0, 0, 0], sizes = [1, 512, 128], strides = [1, 1, 1]} : vector<3x512x128xf32> to vector<1x512x128xf32>
    %52 = vector.shape_cast %51 : vector<1x512x128xf32> to vector<512x128xf32>
    %53 = arith.mulf %6, %44 : vector<512x128xf32>
    %54 = arith.addf %52, %53 : vector<512x128xf32>
    %c0_21 = arith.constant 0 : index
    %c0_22 = arith.constant 0 : index
    %c0_23 = arith.constant 0 : index
    %55 = vector.load %arg9[%c0_21, %c0_22, %c0_23] : memref<3x512x128xf32, #tpu.memory_space<vmem>>, vector<1x512x128xf32>
    %56 = vector.shape_cast %55 : vector<1x512x128xf32> to vector<512x128xf32>
    %57 = vector.shape_cast %54 : vector<512x128xf32> to vector<1x512x128xf32>
    tpu.vector_store %arg9[%c0_21, %c0_22, %c0_23], %57 {strides = array<i32>} : memref<3x512x128xf32, #tpu.memory_space<vmem>>, vector<1x512x128xf32>,
    %58 = vector.extract_strided_slice %1 {offsets = [1, 0, 0], sizes = [1, 512, 128], strides = [1, 1, 1]} : vector<3x512x128xf32> to vector<1x512x128xf32>
    %59 = vector.shape_cast %58 : vector<1x512x128xf32> to vector<512x128xf32>
    %60 = arith.mulf %7, %44 : vector<512x128xf32>
    %61 = arith.addf %59, %60 : vector<512x128xf32>
    %c1 = arith.constant 1 : index
    %c0_24 = arith.constant 0 : index
    %c0_25 = arith.constant 0 : index
    %62 = vector.load %arg9[%c1, %c0_24, %c0_25] : memref<3x512x128xf32, #tpu.memory_space<vmem>>, vector<1x512x128xf32>
    %63 = vector.shape_cast %62 : vector<1x512x128xf32> to vector<512x128xf32>
    %64 = vector.shape_cast %61 : vector<512x128xf32> to vector<1x512x128xf32>
    tpu.vector_store %arg9[%c1, %c0_24, %c0_25], %64 {strides = array<i32>} : memref<3x512x128xf32, #tpu.memory_space<vmem>>, vector<1x512x128xf32>,
    %65 = vector.extract_strided_slice %1 {offsets = [2, 0, 0], sizes = [1, 512, 128], strides = [1, 1, 1]} : vector<3x512x128xf32> to vector<1x512x128xf32>
    %66 = vector.shape_cast %65 : vector<1x512x128xf32> to vector<512x128xf32>
    %67 = arith.mulf %8, %44 : vector<512x128xf32>
    %68 = arith.addf %66, %67 : vector<512x128xf32>
    %c2 = arith.constant 2 : index
    %c0_26 = arith.constant 0 : index
    %c0_27 = arith.constant 0 : index
    %69 = vector.load %arg9[%c2, %c0_26, %c0_27] : memref<3x512x128xf32, #tpu.memory_space<vmem>>, vector<1x512x128xf32>
    %70 = vector.shape_cast %69 : vector<1x512x128xf32> to vector<512x128xf32>
    %71 = vector.shape_cast %68 : vector<512x128xf32> to vector<1x512x128xf32>
    tpu.vector_store %arg9[%c2, %c0_26, %c0_27], %71 {strides = array<i32>} : memref<3x512x128xf32, #tpu.memory_space<vmem>>, vector<1x512x128xf32>,
    return
  }
  func.func @transform_0(%arg0: i32) -> (i32, i32) {
    %c0_i32 = arith.constant 0 : i32
    %c0_i32_0 = arith.constant 0 : i32
    return %arg0, %c0_i32 : i32, i32
  }
  func.func @transform_1(%arg0: i32) -> (i32, i32, i32) {
    %c0_i32 = arith.constant 0 : i32
    %c0_i32_0 = arith.constant 0 : i32
    %c0_i32_1 = arith.constant 0 : i32
    return %c0_i32, %arg0, %c0_i32_0 : i32, i32, i32
  }
  func.func @transform_2(%arg0: i32) -> (i32, i32) {
    %c0_i32 = arith.constant 0 : i32
    %c0_i32_0 = arith.constant 0 : i32
    %c0_i32_1 = arith.constant 0 : i32
    return %c0_i32, %c0_i32_0 : i32, i32
  }
  func.func @transform_3(%arg0: i32) -> (i32, i32) {
    %c0_i32 = arith.constant 0 : i32
    %c0_i32_0 = arith.constant 0 : i32
    %c0_i32_1 = arith.constant 0 : i32
    return %c0_i32, %c0_i32_0 : i32, i32
  }
  func.func @transform_4(%arg0: i32) -> (i32, i32) {
    %c0_i32 = arith.constant 0 : i32
    %c0_i32_0 = arith.constant 0 : i32
    %c0_i32_1 = arith.constant 0 : i32
    return %c0_i32, %c0_i32_0 : i32, i32
  }
  func.func @transform_5(%arg0: i32) -> (i32, i32) {
    %c0_i32 = arith.constant 0 : i32
    %c0_i32_0 = arith.constant 0 : i32
    %c0_i32_1 = arith.constant 0 : i32
    return %c0_i32, %c0_i32_0 : i32, i32
  }
  func.func @transform_6(%arg0: i32) -> (i32, i32) {
    %c0_i32 = arith.constant 0 : i32
    %c0_i32_0 = arith.constant 0 : i32
    %c0_i32_1 = arith.constant 0 : i32
    return %c0_i32, %c0_i32_0 : i32, i32
  }
  func.func @transform_7(%arg0: i32) -> (i32, i32) {
    %c0_i32 = arith.constant 0 : i32
    %c0_i32_0 = arith.constant 0 : i32
    return %arg0, %c0_i32 : i32, i32
  }
  func.func @transform_8(%arg0: i32) -> (i32, i32, i32) {
    %c0_i32 = arith.constant 0 : i32
    %c0_i32_0 = arith.constant 0 : i32
    %c0_i32_1 = arith.constant 0 : i32
    return %c0_i32, %arg0, %c0_i32_0 : i32, i32, i32
  }
}

</mosaic_0001>

<llo_original>
// kernel: painn_update_block_v3nf.1
$region0: #{painn_update_block_v3nf.1}
  #allocation0 [shape = 'u32[]', space=smem, size = 0x4, offset = 0x4, fixed_abs, tag = 'smem constant byte address 0x4 - core index']
  #allocation1 [shape = 'u32[72,128]{1,0:T(1,128)}', space=vmem, size = 0x9000, scoped, tag = 'internal scratch']
  %s0 = inlined_call_operand.hbm [shape: f32[512,128], index: 0, kind: input, shape index: {}]
  %s1 = inlined_call_operand.vmem [shape: f32[3,512,128], index: 1, kind: input, shape index: {}]
  %s2 = inlined_call_operand.vmem [shape: bf16[128,256], index: 2, kind: input, shape index: {}]
  %s3 = inlined_call_operand.vmem [shape: bf16[256,128], index: 3, kind: input, shape index: {}]
  %s4 = inlined_call_operand.vmem [shape: f32[1,128], index: 4, kind: input, shape index: {}]
  %s5 = inlined_call_operand.vmem [shape: bf16[128,384], index: 5, kind: input, shape index: {}]
  %s6 = inlined_call_operand.vmem [shape: f32[1,384], index: 6, kind: input, shape index: {}]
  %s7 = inlined_call_operand.hbm [shape: f32[512,128], index: 7, kind: output, shape index: {0}]
  %s8 = inlined_call_operand.hbm [shape: f32[3,512,128], index: 8, kind: output, shape index: {1}]
  %9 = xla_tuple %s7, %s8
  %s10 = sld [smem:[#allocation0]]
  $region50: #{painn_update_block_v3nf.1} parent=0
    _
  %s12 = ssub.s32 1, %s10
  %s13 = scalar_select 0, %s12, %s10
  $region1: #{painn_update_block_v3nf.1} parent=0
    #allocation2 [shape = 'u8[262144]{0}', space=vmem, size = 0x40000, scoped, tag = 'input window, operand 0, single buffered']
    #allocation3 [shape = 's32[1]{0}', space=sflag, size = 0x4, scoped, tag = 'scoped memory for painn_update_block_v3nf.1']
    #allocation4 [shape = 's32[1]{0}', space=sflag, size = 0x4, scoped, tag = 'scoped memory for painn_update_block_v3nf.1']
    #allocation5 [shape = 'u8[262144]{0}', space=vmem, size = 0x40000, scoped, tag = 'output window, operand 0, single buffered']
    #allocation6 [shape = 'u8[786432]{0}', space=vmem, size = 0xc0000, scoped, tag = 'output window, operand 1, single buffered']
    #allocation7 [shape = 's32[1]{0}', space=sflag, size = 0x4, scoped, tag = 'scoped memory for painn_update_block_v3nf.1']
    %14 = vsyncpa [#allocation3], 0
    %15 = vsyncpa [#allocation4], 0
    %16 = vsyncpa [#allocation7], 0
    // Predicated region
    $region2: #{painn_update_block_v3nf.1} parent=1 // pred_check
      _
    $region3: #{painn_update_block_v3nf.1} parent=1 // pred_check_branch
      %18 = sbr.rel (0) target = $region5
    $region4: #{painn_update_block_v3nf.1} parent=1 // pred_region
      %20 = vsyncadd [#allocation3], 0
      %s21 = sshll.u32 %s0, 4
      %s22 = int_to_ptr.hbm [resolvable:$true] %s21
      %s23 = sshll.u32 [#allocation2], 4
      %s24 = int_to_ptr.vmem [resolvable:$true] %s23
      %29 = dma.hbm_to_vmem [thread:$0]  %s22, 8192, %s24, [#allocation3], 128, 128, 8
    $region5: #{painn_update_block_v3nf.1} parent=1 // pred_fallthru
      _
    // Predicated region
    $region6: #{painn_update_block_v3nf.1} parent=1 // pred_check
      _
    $region7: #{painn_update_block_v3nf.1} parent=1 // pred_check_branch
      %31 = sbr.rel (0) target = $region9
    $region8: #{painn_update_block_v3nf.1} parent=1 // pred_region
      _
    $region9: #{painn_update_block_v3nf.1} parent=1 // pred_fallthru
      _
    // Predicated region
    $region10: #{painn_update_block_v3nf.1} parent=1 // pred_check
      _
    $region11: #{painn_update_block_v3nf.1} parent=1 // pred_check_branch
      %33 = sbr.rel (0) target = $region13
    $region12: #{painn_update_block_v3nf.1} parent=1 // pred_region
      _
    $region13: #{painn_update_block_v3nf.1} parent=1 // pred_fallthru
      _
    // Predicated region
    $region14: #{painn_update_block_v3nf.1} parent=1 // pred_check
      _
    $region15: #{painn_update_block_v3nf.1} parent=1 // pred_check_branch
      %35 = sbr.rel (0) target = $region17
    $region16: #{painn_update_block_v3nf.1} parent=1 // pred_region
      _
    $region17: #{painn_update_block_v3nf.1} parent=1 // pred_fallthru
      _
    // Predicated region
    $region18: #{painn_update_block_v3nf.1} parent=1 // pred_check
      _
    $region19: #{painn_update_block_v3nf.1} parent=1 // pred_check_branch
      %37 = sbr.rel (0) target = $region21
    $region20: #{painn_update_block_v3nf.1} parent=1 // pred_region
      _
    $region21: #{painn_update_block_v3nf.1} parent=1 // pred_fallthru
      _
    // Predicated region
    $region22: #{painn_update_block_v3nf.1} parent=1 // pred_check
      _
    $region23: #{painn_update_block_v3nf.1} parent=1 // pred_check_branch
      %39 = sbr.rel (0) target = $region25
    $region24: #{painn_update_block_v3nf.1} parent=1 // pred_region
      _
    $region25: #{painn_update_block_v3nf.1} parent=1 // pred_fallthru
      _
    // Predicated region
    $region26: #{painn_update_block_v3nf.1} parent=1 // pred_check
      _
    $region27: #{painn_update_block_v3nf.1} parent=1 // pred_check_branch
      %41 = sbr.rel (0) target = $region29
    $region28: #{painn_update_block_v3nf.1} parent=1 // pred_region
      _
    $region29: #{painn_update_block_v3nf.1} parent=1 // pred_fallthru
      _
    // Predicated region
    $region30: #{painn_update_block_v3nf.1} parent=1 // pred_check
      _
    $region31: #{painn_update_block_v3nf.1} parent=1 // pred_check_branch
      %43 = sbr.rel (0) target = $region33
    $region32: #{painn_update_block_v3nf.1} parent=1 // pred_region
      %45 = dma.done [#allocation3], 8192
    $region33: #{painn_update_block_v3nf.1} parent=1 // pred_fallthru
      _
    %v46 = vld [vmem:[#allocation2] sm:$0xff]
    %v47 = vld [vmem:[#allocation2 + $0x8] sm:$0xff]
    %v48 = vld [vmem:[#allocation2 + $0x10] sm:$0xff]
    %v49 = vld [vmem:[#allocation2 + $0x18] sm:$0xff]
    %v50 = vld [vmem:[#allocation2 + $0x20] sm:$0xff]
    %v51 = vld [vmem:[#allocation2 + $0x28] sm:$0xff]
    %v52 = vld [vmem:[#allocation2 + $0x30] sm:$0xff]
    %v53 = vld [vmem:[#allocation2 + $0x38] sm:$0xff]
    %v54 = vld [vmem:[#allocation2 + $0x40] sm:$0xff]
    %v55 = vld [vmem:[#allocation2 + $0x48] sm:$0xff]
    %v56 = vld [vmem:[#allocation2 + $0x50] sm:$0xff]
    %v57 = vld [vmem:[#allocation2 + $0x58] sm:$0xff]
    %v58 = vld [vmem:[#allocation2 + $0x60] sm:$0xff]
    %v59 = vld [vmem:[#allocation2 + $0x68] sm:$0xff]
    %v60 = vld [vmem:[#allocation2 + $0x70] sm:$0xff]
    %v61 = vld [vmem:[#allocation2 + $0x78] sm:$0xff]
    %v62 = vld [vmem:[#allocation2 + $0x80] sm:$0xff]
    %v63 = vld [vmem:[#allocation2 + $0x88] sm:$0xff]
    %v64 = vld [vmem:[#allocation2 + $0x90] sm:$0xff]
    %v65 = vld [vmem:[#allocation2 + $0x98] sm:$0xff]
    %v66 = vld [vmem:[#allocation2 + $0xa0] sm:$0xff]
    %v67 = vld [vmem:[#allocation2 + $0xa8] sm:$0xff]
    %v68 = vld [vmem:[#allocation2 + $0xb0] sm:$0xff]
    %v69 = vld [vmem:[#allocation2 + $0xb8] sm:$0xff]
    %v70 = vld [vmem:[#allocation2 + $0xc0] sm:$0xff]
    %v71 = vld [vmem:[#allocation2 + $0xc8] sm:$0xff]
    %v72 = vld [vmem:[#allocation2 + $0xd0] sm:$0xff]
    %v73 = vld [vmem:[#allocation2 + $0xd8] sm:$0xff]
    %v74 = vld [vmem:[#allocation2 + $0xe0] sm:$0xff]
    %v75 = vld [vmem:[#allocation2 + $0xe8] sm:$0xff]
    %v76 = vld [vmem:[#allocation2 + $0xf0] sm:$0xff]
    %v77 = vld [vmem:[#allocation2 + $0xf8] sm:$0xff]
    %v78 = vld [vmem:[#allocation2 + $0x100] sm:$0xff]
    %v79 = vld [vmem:[#allocation2 + $0x108] sm:$0xff]
    %v80 = vld [vmem:[#allocation2 + $0x110] sm:$0xff]
    %v81 = vld [vmem:[#allocation2 + $0x118] sm:$0xff]
    %v82 = vld [vmem:[#allocation2 + $0x120] sm:$0xff]
    %v83 = vld [vmem:[#allocation2 + $0x128] sm:$0xff]
    %v84 = vld [vmem:[#allocation2 + $0x130] sm:$0xff]
    %v85 = vld [vmem:[#allocation2 + $0x138] sm:$0xff]
    %v86 = vld [vmem:[#allocation2 + $0x140] sm:$0xff]
    %v87 = vld [vmem:[#allocation2 + $0x148] sm:$0xff]
    %v88 = vld [vmem:[#allocation2 + $0x150] sm:$0xff]
    %v89 = vld [vmem:[#allocation2 + $0x158] sm:$0xff]
    %v90 = vld [vmem:[#allocation2 + $0x160] sm:$0xff]
    %v91 = vld [vmem:[#allocation2 + $0x168] sm:$0xff]
    %v92 = vld [vmem:[#allocation2 + $0x170] sm:$0xff]
    %v93 = vld [vmem:[#allocation2 + $0x178] sm:$0xff]
    %v94 = vld [vmem:[#allocation2 + $0x180] sm:$0xff]
    %v95 = vld [vmem:[#allocation2 + $0x188] sm:$0xff]
    %v96 = vld [vmem:[#allocation2 + $0x190] sm:$0xff]
    %v97 = vld [vmem:[#allocation2 + $0x198] sm:$0xff]
    %v98 = vld [vmem:[#allocation2 + $0x1a0] sm:$0xff]
    %v99 = vld [vmem:[#allocation2 + $0x1a8] sm:$0xff]
    %v100 = vld [vmem:[#allocation2 + $0x1b0] sm:$0xff]
    %v101 = vld [vmem:[#allocation2 + $0x1b8] sm:$0xff]
    %v102 = vld [vmem:[#allocation2 + $0x1c0] sm:$0xff]
    %v103 = vld [vmem:[#allocation2 + $0x1c8] sm:$0xff]
    %v104 = vld [vmem:[#allocation2 + $0x1d0] sm:$0xff]
    %v105 = vld [vmem:[#allocation2 + $0x1d8] sm:$0xff]
    %v106 = vld [vmem:[#allocation2 + $0x1e0] sm:$0xff]
    %v107 = vld [vmem:[#allocation2 + $0x1e8] sm:$0xff]
    %v108 = vld [vmem:[#allocation2 + $0x1f0] sm:$0xff]
    %v109 = vld [vmem:[#allocation2 + $0x1f8] sm:$0xff]
    %v110 = vld [vmem:[%s1] sm:$0xff]
    %v111 = vld [vmem:[%s1 + $0x8] sm:$0xff]
    %v112 = vld [vmem:[%s1 + $0x10] sm:$0xff]
    %v113 = vld [vmem:[%s1 + $0x18] sm:$0xff]
    %v114 = vld [vmem:[%s1 + $0x20] sm:$0xff]
    %v115 = vld [vmem:[%s1 + $0x28] sm:$0xff]
    %v116 = vld [vmem:[%s1 + $0x30] sm:$0xff]
    %v117 = vld [vmem:[%s1 + $0x38] sm:$0xff]
    %v118 = vld [vmem:[%s1 + $0x40] sm:$0xff]
    %v119 = vld [vmem:[%s1 + $0x48] sm:$0xff]
    %v120 = vld [vmem:[%s1 + $0x50] sm:$0xff]
    %v121 = vld [vmem:[%s1 + $0x58] sm:$0xff]
    %v122 = vld [vmem:[%s1 + $0x60] sm:$0xff]
    %v123 = vld [vmem:[%s1 + $0x68] sm:$0xff]
    %v124 = vld [vmem:[%s1 + $0x70] sm:$0xff]
    %v125 = vld [vmem:[%s1 + $0x78] sm:$0xff]
    %v126 = vld [vmem:[%s1 + $0x80] sm:$0xff]
    %v127 = vld [vmem:[%s1 + $0x88] sm:$0xff]
    %v128 = vld [vmem:[%s1 + $0x90] sm:$0xff]
    %v129 = vld [vmem:[%s1 + $0x98] sm:$0xff]
    %v130 = vld [vmem:[%s1 + $0xa0] sm:$0xff]
    %v131 = vld [vmem:[%s1 + $0xa8] sm:$0xff]
    %v132 = vld [vmem:[%s1 + $0xb0] sm:$0xff]
    %v133 = vld [vmem:[%s1 + $0xb8] sm:$0xff]
    %v134 = vld [vmem:[%s1 + $0xc0] sm:$0xff]
    %v135 = vld [vmem:[%s1 + $0xc8] sm:$0xff]
    %v136 = vld [vmem:[%s1 + $0xd0] sm:$0xff]
    %v137 = vld [vmem:[%s1 + $0xd8] sm:$0xff]
    %v138 = vld [vmem:[%s1 + $0xe0] sm:$0xff]
    %v139 = vld [vmem:[%s1 + $0xe8] sm:$0xff]
    %v140 = vld [vmem:[%s1 + $0xf0] sm:$0xff]
    %v141 = vld [vmem:[%s1 + $0xf8] sm:$0xff]
    %v142 = vld [vmem:[%s1 + $0x100] sm:$0xff]
    %v143 = vld [vmem:[%s1 + $0x108] sm:$0xff]
    %v144 = vld [vmem:[%s1 + $0x110] sm:$0xff]
    %v145 = vld [vmem:[%s1 + $0x118] sm:$0xff]
    %v146 = vld [vmem:[%s1 + $0x120] sm:$0xff]
    %v147 = vld [vmem:[%s1 + $0x128] sm:$0xff]
    %v148 = vld [vmem:[%s1 + $0x130] sm:$0xff]
    %v149 = vld [vmem:[%s1 + $0x138] sm:$0xff]
    %v150 = vld [vmem:[%s1 + $0x140] sm:$0xff]
    %v151 = vld [vmem:[%s1 + $0x148] sm:$0xff]
    %v152 = vld [vmem:[%s1 + $0x150] sm:$0xff]
    %v153 = vld [vmem:[%s1 + $0x158] sm:$0xff]
    %v154 = vld [vmem:[%s1 + $0x160] sm:$0xff]
    %v155 = vld [vmem:[%s1 + $0x168] sm:$0xff]
    %v156 = vld [vmem:[%s1 + $0x170] sm:$0xff]
    %v157 = vld [vmem:[%s1 + $0x178] sm:$0xff]
    %v158 = vld [vmem:[%s1 + $0x180] sm:$0xff]
    %v159 = vld [vmem:[%s1 + $0x188] sm:$0xff]
    %v160 = vld [vmem:[%s1 + $0x190] sm:$0xff]
    %v161 = vld [vmem:[%s1 + $0x198] sm:$0xff]
    %v162 = vld [vmem:[%s1 + $0x1a0] sm:$0xff]
    %v163 = vld [vmem:[%s1 + $0x1a8] sm:$0xff]
    %v164 = vld [vmem:[%s1 + $0x1b0] sm:$0xff]
    %v165 = vld [vmem:[%s1 + $0x1b8] sm:$0xff]
    %v166 = vld [vmem:[%s1 + $0x1c0] sm:$0xff]
    %v167 = vld [vmem:[%s1 + $0x1c8] sm:$0xff]
    %v168 = vld [vmem:[%s1 + $0x1d0] sm:$0xff]
    %v169 = vld [vmem:[%s1 + $0x1d8] sm:$0xff]
    %v170 = vld [vmem:[%s1 + $0x1e0] sm:$0xff]
    %v171 = vld [vmem:[%s1 + $0x1e8] sm:$0xff]
    %v172 = vld [vmem:[%s1 + $0x1f0] sm:$0xff]
    %v173 = vld [vmem:[%s1 + $0x1f8] sm:$0xff]
    %v174 = vld [vmem:[%s1 + $0x200] sm:$0xff]
    %v175 = vld [vmem:[%s1 + $0x208] sm:$0xff]
    %v176 = vld [vmem:[%s1 + $0x210] sm:$0xff]
    %v177 = vld [vmem:[%s1 + $0x218] sm:$0xff]
    %v178 = vld [vmem:[%s1 + $0x220] sm:$0xff]
    %v179 = vld [vmem:[%s1 + $0x228] sm:$0xff]
    %v180 = vld [vmem:[%s1 + $0x230] sm:$0xff]
    %v181 = vld [vmem:[%s1 + $0x238] sm:$0xff]
    %v182 = vld [vmem:[%s1 + $0x240] sm:$0xff]
    %v183 = vld [vmem:[%s1 + $0x248] sm:$0xff]
    %v184 = vld [vmem:[%s1 + $0x250] sm:$0xff]
    %v185 = vld [vmem:[%s1 + $0x258] sm:$0xff]
    %v186 = vld [vmem:[%s1 + $0x260] sm:$0xff]
    %v187 = vld [vmem:[%s1 + $0x268] sm:$0xff]
    %v188 = vld [vmem:[%s1 + $0x270] sm:$0xff]
    %v189 = vld [vmem:[%s1 + $0x278] sm:$0xff]
    %v190 = vld [vmem:[%s1 + $0x280] sm:$0xff]
    %v191 = vld [vmem:[%s1 + $0x288] sm:$0xff]
    %v192 = vld [vmem:[%s1 + $0x290] sm:$0xff]
    %v193 = vld [vmem:[%s1 + $0x298] sm:$0xff]
    %v194 = vld [vmem:[%s1 + $0x2a0] sm:$0xff]
    %v195 = vld [vmem:[%s1 + $0x2a8] sm:$0xff]
    %v196 = vld [vmem:[%s1 + $0x2b0] sm:$0xff]
    %v197 = vld [vmem:[%s1 + $0x2b8] sm:$0xff]
    %v198 = vld [vmem:[%s1 + $0x2c0] sm:$0xff]
    %v199 = vld [vmem:[%s1 + $0x2c8] sm:$0xff]
    %v200 = vld [vmem:[%s1 + $0x2d0] sm:$0xff]
    %v201 = vld [vmem:[%s1 + $0x2d8] sm:$0xff]
    %v202 = vld [vmem:[%s1 + $0x2e0] sm:$0xff]
    %v203 = vld [vmem:[%s1 + $0x2e8] sm:$0xff]
    %v204 = vld [vmem:[%s1 + $0x2f0] sm:$0xff]
    %v205 = vld [vmem:[%s1 + $0x2f8] sm:$0xff]
    %v206 = vld [vmem:[%s1 + $0x300] sm:$0xff]
    %v207 = vld [vmem:[%s1 + $0x308] sm:$0xff]
    %v208 = vld [vmem:[%s1 + $0x310] sm:$0xff]
    %v209 = vld [vmem:[%s1 + $0x318] sm:$0xff]
    %v210 = vld [vmem:[%s1 + $0x320] sm:$0xff]
    %v211 = vld [vmem:[%s1 + $0x328] sm:$0xff]
    %v212 = vld [vmem:[%s1 + $0x330] sm:$0xff]
    %v213 = vld [vmem:[%s1 + $0x338] sm:$0xff]
    %v214 = vld [vmem:[%s1 + $0x340] sm:$0xff]
    %v215 = vld [vmem:[%s1 + $0x348] sm:$0xff]
    %v216 = vld [vmem:[%s1 + $0x350] sm:$0xff]
    %v217 = vld [vmem:[%s1 + $0x358] sm:$0xff]
    %v218 = vld [vmem:[%s1 + $0x360] sm:$0xff]
    %v219 = vld [vmem:[%s1 + $0x368] sm:$0xff]
    %v220 = vld [vmem:[%s1 + $0x370] sm:$0xff]
    %v221 = vld [vmem:[%s1 + $0x378] sm:$0xff]
    %v222 = vld [vmem:[%s1 + $0x380] sm:$0xff]
    %v223 = vld [vmem:[%s1 + $0x388] sm:$0xff]
    %v224 = vld [vmem:[%s1 + $0x390] sm:$0xff]
    %v225 = vld [vmem:[%s1 + $0x398] sm:$0xff]
    %v226 = vld [vmem:[%s1 + $0x3a0] sm:$0xff]
    %v227 = vld [vmem:[%s1 + $0x3a8] sm:$0xff]
    %v228 = vld [vmem:[%s1 + $0x3b0] sm:$0xff]
    %v229 = vld [vmem:[%s1 + $0x3b8] sm:$0xff]
    %v230 = vld [vmem:[%s1 + $0x3c0] sm:$0xff]
    %v231 = vld [vmem:[%s1 + $0x3c8] sm:$0xff]
    %v232 = vld [vmem:[%s1 + $0x3d0] sm:$0xff]
    %v233 = vld [vmem:[%s1 + $0x3d8] sm:$0xff]
    %v234 = vld [vmem:[%s1 + $0x3e0] sm:$0xff]
    %v235 = vld [vmem:[%s1 + $0x3e8] sm:$0xff]
    %v236 = vld [vmem:[%s1 + $0x3f0] sm:$0xff]
    %v237 = vld [vmem:[%s1 + $0x3f8] sm:$0xff]
    %v238 = vld [vmem:[%s1 + $0x400] sm:$0xff]
    %v239 = vld [vmem:[%s1 + $0x408] sm:$0xff]
    %v240 = vld [vmem:[%s1 + $0x410] sm:$0xff]
    %v241 = vld [vmem:[%s1 + $0x418] sm:$0xff]
    %v242 = vld [vmem:[%s1 + $0x420] sm:$0xff]
    %v243 = vld [vmem:[%s1 + $0x428] sm:$0xff]
    %v244 = vld [vmem:[%s1 + $0x430] sm:$0xff]
    %v245 = vld [vmem:[%s1 + $0x438] sm:$0xff]
    %v246 = vld [vmem:[%s1 + $0x440] sm:$0xff]
    %v247 = vld [vmem:[%s1 + $0x448] sm:$0xff]
    %v248 = vld [vmem:[%s1 + $0x450] sm:$0xff]
    %v249 = vld [vmem:[%s1 + $0x458] sm:$0xff]
    %v250 = vld [vmem:[%s1 + $0x460] sm:$0xff]
    %v251 = vld [vmem:[%s1 + $0x468] sm:$0xff]
    %v252 = vld [vmem:[%s1 + $0x470] sm:$0xff]
    %v253 = vld [vmem:[%s1 + $0x478] sm:$0xff]
    %v254 = vld [vmem:[%s1 + $0x480] sm:$0xff]
    %v255 = vld [vmem:[%s1 + $0x488] sm:$0xff]
    %v256 = vld [vmem:[%s1 + $0x490] sm:$0xff]
    %v257 = vld [vmem:[%s1 + $0x498] sm:$0xff]
    %v258 = vld [vmem:[%s1 + $0x4a0] sm:$0xff]
    %v259 = vld [vmem:[%s1 + $0x4a8] sm:$0xff]
    %v260 = vld [vmem:[%s1 + $0x4b0] sm:$0xff]
    %v261 = vld [vmem:[%s1 + $0x4b8] sm:$0xff]
    %v262 = vld [vmem:[%s1 + $0x4c0] sm:$0xff]
    %v263 = vld [vmem:[%s1 + $0x4c8] sm:$0xff]
    %v264 = vld [vmem:[%s1 + $0x4d0] sm:$0xff]
    %v265 = vld [vmem:[%s1 + $0x4d8] sm:$0xff]
    %v266 = vld [vmem:[%s1 + $0x4e0] sm:$0xff]
    %v267 = vld [vmem:[%s1 + $0x4e8] sm:$0xff]
    %v268 = vld [vmem:[%s1 + $0x4f0] sm:$0xff]
    %v269 = vld [vmem:[%s1 + $0x4f8] sm:$0xff]
    %v270 = vld [vmem:[%s1 + $0x500] sm:$0xff]
    %v271 = vld [vmem:[%s1 + $0x508] sm:$0xff]
    %v272 = vld [vmem:[%s1 + $0x510] sm:$0xff]
    %v273 = vld [vmem:[%s1 + $0x518] sm:$0xff]
    %v274 = vld [vmem:[%s1 + $0x520] sm:$0xff]
    %v275 = vld [vmem:[%s1 + $0x528] sm:$0xff]
    %v276 = vld [vmem:[%s1 + $0x530] sm:$0xff]
    %v277 = vld [vmem:[%s1 + $0x538] sm:$0xff]
    %v278 = vld [vmem:[%s1 + $0x540] sm:$0xff]
    %v279 = vld [vmem:[%s1 + $0x548] sm:$0xff]
    %v280 = vld [vmem:[%s1 + $0x550] sm:$0xff]
    %v281 = vld [vmem:[%s1 + $0x558] sm:$0xff]
    %v282 = vld [vmem:[%s1 + $0x560] sm:$0xff]
    %v283 = vld [vmem:[%s1 + $0x568] sm:$0xff]
    %v284 = vld [vmem:[%s1 + $0x570] sm:$0xff]
    %v285 = vld [vmem:[%s1 + $0x578] sm:$0xff]
    %v286 = vld [vmem:[%s1 + $0x580] sm:$0xff]
    %v287 = vld [vmem:[%s1 + $0x588] sm:$0xff]
    %v288 = vld [vmem:[%s1 + $0x590] sm:$0xff]
    %v289 = vld [vmem:[%s1 + $0x598] sm:$0xff]
    %v290 = vld [vmem:[%s1 + $0x5a0] sm:$0xff]
    %v291 = vld [vmem:[%s1 + $0x5a8] sm:$0xff]
    %v292 = vld [vmem:[%s1 + $0x5b0] sm:$0xff]
    %v293 = vld [vmem:[%s1 + $0x5b8] sm:$0xff]
    %v294 = vld [vmem:[%s1 + $0x5c0] sm:$0xff]
    %v295 = vld [vmem:[%s1 + $0x5c8] sm:$0xff]
    %v296 = vld [vmem:[%s1 + $0x5d0] sm:$0xff]
    %v297 = vld [vmem:[%s1 + $0x5d8] sm:$0xff]
    %v298 = vld [vmem:[%s1 + $0x5e0] sm:$0xff]
    %v299 = vld [vmem:[%s1 + $0x5e8] sm:$0xff]
    %v300 = vld [vmem:[%s1 + $0x5f0] sm:$0xff]
    %v301 = vld [vmem:[%s1 + $0x5f8] sm:$0xff]
    %v302 = vpack.c.bf16 %v111, %v110
    %v303 = vpack.c.bf16 %v113, %v112
    %v304 = vpack.c.bf16 %v115, %v114
    %v305 = vpack.c.bf16 %v117, %v116
    %v306 = vpack.c.bf16 %v119, %v118
    %v307 = vpack.c.bf16 %v121, %v120
    %v308 = vpack.c.bf16 %v123, %v122
    %v309 = vpack.c.bf16 %v125, %v124
    %v310 = vpack.c.bf16 %v127, %v126
    %v311 = vpack.c.bf16 %v129, %v128
    %v312 = vpack.c.bf16 %v131, %v130
    %v313 = vpack.c.bf16 %v133, %v132
    %v314 = vpack.c.bf16 %v135, %v134
    %v315 = vpack.c.bf16 %v137, %v136
    %v316 = vpack.c.bf16 %v139, %v138
    %v317 = vpack.c.bf16 %v141, %v140
    %v318 = vpack.c.bf16 %v143, %v142
    %v319 = vpack.c.bf16 %v145, %v144
    %v320 = vpack.c.bf16 %v147, %v146
    %v321 = vpack.c.bf16 %v149, %v148
    %v322 = vpack.c.bf16 %v151, %v150
    %v323 = vpack.c.bf16 %v153, %v152
    %v324 = vpack.c.bf16 %v155, %v154
    %v325 = vpack.c.bf16 %v157, %v156
    %v326 = vpack.c.bf16 %v159, %v158
    %v327 = vpack.c.bf16 %v161, %v160
    %v328 = vpack.c.bf16 %v163, %v162
    %v329 = vpack.c.bf16 %v165, %v164
    %v330 = vpack.c.bf16 %v167, %v166
    %v331 = vpack.c.bf16 %v169, %v168
    %v332 = vpack.c.bf16 %v171, %v170
    %v333 = vpack.c.bf16 %v173, %v172
    %v334 = vpack.c.bf16 %v175, %v174
    %v335 = vpack.c.bf16 %v177, %v176
    %v336 = vpack.c.bf16 %v179, %v178
    %v337 = vpack.c.bf16 %v181, %v180
    %v338 = vpack.c.bf16 %v183, %v182
    %v339 = vpack.c.bf16 %v185, %v184
    %v340 = vpack.c.bf16 %v187, %v186
    %v341 = vpack.c.bf16 %v189, %v188
    %v342 = vpack.c.bf16 %v191, %v190
    %v343 = vpack.c.bf16 %v193, %v192
    %v344 = vpack.c.bf16 %v195, %v194
    %v345 = vpack.c.bf16 %v197, %v196
    %v346 = vpack.c.bf16 %v199, %v198
    %v347 = vpack.c.bf16 %v201, %v200
    %v348 = vpack.c.bf16 %v203, %v202
    %v349 = vpack.c.bf16 %v205, %v204
    %v350 = vpack.c.bf16 %v207, %v206
    %v351 = vpack.c.bf16 %v209, %v208
    %v352 = vpack.c.bf16 %v211, %v210
    %v353 = vpack.c.bf16 %v213, %v212
    %v354 = vpack.c.bf16 %v215, %v214
    %v355 = vpack.c.bf16 %v217, %v216
    %v356 = vpack.c.bf16 %v219, %v218
    %v357 = vpack.c.bf16 %v221, %v220
    %v358 = vpack.c.bf16 %v223, %v222
    %v359 = vpack.c.bf16 %v225, %v224
    %v360 = vpack.c.bf16 %v227, %v226
    %v361 = vpack.c.bf16 %v229, %v228
    %v362 = vpack.c.bf16 %v231, %v230
    %v363 = vpack.c.bf16 %v233, %v232
    %v364 = vpack.c.bf16 %v235, %v234
    %v365 = vpack.c.bf16 %v237, %v236
    %v366 = vpack.c.bf16 %v239, %v238
    %v367 = vpack.c.bf16 %v241, %v240
    %v368 = vpack.c.bf16 %v243, %v242
    %v369 = vpack.c.bf16 %v245, %v244
    %v370 = vpack.c.bf16 %v247, %v246
    %v371 = vpack.c.bf16 %v249, %v248
    %v372 = vpack.c.bf16 %v251, %v250
    %v373 = vpack.c.bf16 %v253, %v252
    %v374 = vpack.c.bf16 %v255, %v254
    %v375 = vpack.c.bf16 %v257, %v256
    %v376 = vpack.c.bf16 %v259, %v258
    %v377 = vpack.c.bf16 %v261, %v260
    %v378 = vpack.c.bf16 %v263, %v262
    %v379 = vpack.c.bf16 %v265, %v264
    %v380 = vpack.c.bf16 %v267, %v266
    %v381 = vpack.c.bf16 %v269, %v268
    %v382 = vpack.c.bf16 %v271, %v270
    %v383 = vpack.c.bf16 %v273, %v272
    %v384 = vpack.c.bf16 %v275, %v274
    %v385 = vpack.c.bf16 %v277, %v276
    %v386 = vpack.c.bf16 %v279, %v278
    %v387 = vpack.c.bf16 %v281, %v280
    %v388 = vpack.c.bf16 %v283, %v282
    %v389 = vpack.c.bf16 %v285, %v284
    %v390 = vpack.c.bf16 %v287, %v286
    %v391 = vpack.c.bf16 %v289, %v288
    %v392 = vpack.c.bf16 %v291, %v290
    %v393 = vpack.c.bf16 %v293, %v292
    %v394 = vpack.c.bf16 %v295, %v294
    %v395 = vpack.c.bf16 %v297, %v296
    %v396 = vpack.c.bf16 %v299, %v298
    %v397 = vpack.c.bf16 %v301, %v300
    %v398 = vld [vmem:[%s2] sm:$0xff]
    %v399 = vld [vmem:[%s2 + $0x8] sm:$0xff]
    %v400 = vld [vmem:[%s2 + $0x10] sm:$0xff]
    %v401 = vld [vmem:[%s2 + $0x18] sm:$0xff]
    %v402 = vld [vmem:[%s2 + $0x20] sm:$0xff]
    %v403 = vld [vmem:[%s2 + $0x28] sm:$0xff]
    %v404 = vld [vmem:[%s2 + $0x30] sm:$0xff]
    %v405 = vld [vmem:[%s2 + $0x38] sm:$0xff]
    %v406 = vld [vmem:[%s2 + $0x40] sm:$0xff]
    %v407 = vld [vmem:[%s2 + $0x48] sm:$0xff]
    %v408 = vld [vmem:[%s2 + $0x50] sm:$0xff]
    %v409 = vld [vmem:[%s2 + $0x58] sm:$0xff]
    %v410 = vld [vmem:[%s2 + $0x60] sm:$0xff]
    %v411 = vld [vmem:[%s2 + $0x68] sm:$0xff]
    %v412 = vld [vmem:[%s2 + $0x70] sm:$0xff]
    %v413 = vld [vmem:[%s2 + $0x78] sm:$0xff]
    %v430 = vunpack.c.l.b16 %v398
    %v431 = vunpack.c.h.b16 %v398
    %v432 = vunpack.c.l.b16 %v399
    %v433 = vunpack.c.h.b16 %v399
    %v434 = vunpack.c.l.b16 %v400
    %v435 = vunpack.c.h.b16 %v400
    %v436 = vunpack.c.l.b16 %v401
    %v437 = vunpack.c.h.b16 %v401
    %v438 = vunpack.c.l.b16 %v402
    %v439 = vunpack.c.h.b16 %v402
    %v440 = vunpack.c.l.b16 %v403
    %v441 = vunpack.c.h.b16 %v403
    %v442 = vunpack.c.l.b16 %v404
    %v443 = vunpack.c.h.b16 %v404
    %v444 = vunpack.c.l.b16 %v405
    %v445 = vunpack.c.h.b16 %v405
    %v446 = vunpack.c.l.b16 %v406
    %v447 = vunpack.c.h.b16 %v406
    %v448 = vunpack.c.l.b16 %v407
    %v449 = vunpack.c.h.b16 %v407
    %v450 = vunpack.c.l.b16 %v408
    %v451 = vunpack.c.h.b16 %v408
    %v452 = vunpack.c.l.b16 %v409
    %v453 = vunpack.c.h.b16 %v409
    %v454 = vunpack.c.l.b16 %v410
    %v455 = vunpack.c.h.b16 %v410
    %v456 = vunpack.c.l.b16 %v411
    %v457 = vunpack.c.h.b16 %v411
    %v458 = vunpack.c.l.b16 %v412
    %v459 = vunpack.c.h.b16 %v412
    %v460 = vunpack.c.l.b16 %v413
    %v461 = vunpack.c.h.b16 %v413
    %v462 = vpack.c.b16 %v432, %v430
    %v463 = vpack.c.b16 %v433, %v431
    %v464 = vpack.c.b16 %v436, %v434
    %v465 = vpack.c.b16 %v437, %v435
    %v466 = vpack.c.b16 %v440, %v438
    %v467 = vpack.c.b16 %v441, %v439
    %v468 = vpack.c.b16 %v444, %v442
    %v469 = vpack.c.b16 %v445, %v443
    %v470 = vpack.c.b16 %v448, %v446
    %v471 = vpack.c.b16 %v449, %v447
    %v472 = vpack.c.b16 %v452, %v450
    %v473 = vpack.c.b16 %v453, %v451
    %v474 = vpack.c.b16 %v456, %v454
    %v475 = vpack.c.b16 %v457, %v455
    %v476 = vpack.c.b16 %v460, %v458
    %v477 = vpack.c.b16 %v461, %v459
    %494 = vmatpush.bf16.msra.mxu0 %v476
    %495 = vmatpush.bf16.msra.mxu0 %v474
    %496 = vmatpush.bf16.msra.mxu0 %v472
    %497 = vmatpush.bf16.msra.mxu0 %v470
    %498 = vmatpush.bf16.msra.mxu0 %v468
    %499 = vmatpush.bf16.msra.mxu0 %v466
    %500 = vmatpush.bf16.msra.mxu0 %v464
    %501 = vmatpush.bf16.msra.mxu0 %v462
    %502 = vmatmul.bf16.gmra.mxu0 %v302
    %v503 = vpop.f32.mrf.mxu0
    %v504 = vadd.f32 0.0, %v503
    %v505 = vpop.f32.mrf.mxu0
    %v506 = vadd.f32 0.0, %v505
    %507 = vmatmul.bf16.gmra.mxu0 %v303
    %v508 = vpop.f32.mrf.mxu0
    %v509 = vadd.f32 0.0, %v508
    %v510 = vpop.f32.mrf.mxu0
    %v511 = vadd.f32 0.0, %v510
    %512 = vmatmul.bf16.gmra.mxu0 %v304
    %v513 = vpop.f32.mrf.mxu0
    %v514 = vadd.f32 0.0, %v513
    %v515 = vpop.f32.mrf.mxu0
    %v516 = vadd.f32 0.0, %v515
    %517 = vmatmul.bf16.gmra.mxu0 %v305
    %v518 = vpop.f32.mrf.mxu0
    %v519 = vadd.f32 0.0, %v518
    %v520 = vpop.f32.mrf.mxu0
    %v521 = vadd.f32 0.0, %v520
    %522 = vmatmul.bf16.gmra.mxu0 %v306
    %v523 = vpop.f32.mrf.mxu0
    %v524 = vadd.f32 0.0, %v523
    %v525 = vpop.f32.mrf.mxu0
    %v526 = vadd.f32 0.0, %v525
    %527 = vmatmul.bf16.gmra.mxu0 %v307
    %v528 = vpop.f32.mrf.mxu0
    %v529 = vadd.f32 0.0, %v528
    %v530 = vpop.f32.mrf.mxu0
    %v531 = vadd.f32 0.0, %v530
    %532 = vmatmul.bf16.gmra.mxu0 %v308
    %v533 = vpop.f32.mrf.mxu0
    %v534 = vadd.f32 0.0, %v533
    %v535 = vpop.f32.mrf.mxu0
    %v536 = vadd.f32 0.0, %v535
    %537 = vmatmul.bf16.gmra.mxu0 %v309
    %v538 = vpop.f32.mrf.mxu0
    %v539 = vadd.f32 0.0, %v538
    %v540 = vpop.f32.mrf.mxu0
    %v541 = vadd.f32 0.0, %v540
    %542 = vmatmul.bf16.gmra.mxu0 %v310
    %v543 = vpop.f32.mrf.mxu0
    %v544 = vadd.f32 0.0, %v543
    %v545 = vpop.f32.mrf.mxu0
    %v546 = vadd.f32 0.0, %v545
    %547 = vmatmul.bf16.gmra.mxu0 %v311
    %v548 = vpop.f32.mrf.mxu0
    %v549 = vadd.f32 0.0, %v548
    %v550 = vpop.f32.mrf.mxu0
    %v551 = vadd.f32 0.0, %v550
    %552 = vmatmul.bf16.gmra.mxu0 %v312
    %v553 = vpop.f32.mrf.mxu0
    %v554 = vadd.f32 0.0, %v553
    %v555 = vpop.f32.mrf.mxu0
    %v556 = vadd.f32 0.0, %v555
    %557 = vmatmul.bf16.gmra.mxu0 %v313
    %v558 = vpop.f32.mrf.mxu0
    %v559 = vadd.f32 0.0, %v558
    %v560 = vpop.f32.mrf.mxu0
    %v561 = vadd.f32 0.0, %v560
    %562 = vmatmul.bf16.gmra.mxu0 %v314
    %v563 = vpop.f32.mrf.mxu0
    %v564 = vadd.f32 0.0, %v563
    %v565 = vpop.f32.mrf.mxu0
    %v566 = vadd.f32 0.0, %v565
    %567 = vmatmul.bf16.gmra.mxu0 %v315
    %v568 = vpop.f32.mrf.mxu0
    %v569 = vadd.f32 0.0, %v568
    %v570 = vpop.f32.mrf.mxu0
    %v571 = vadd.f32 0.0, %v570
    %572 = vmatmul.bf16.gmra.mxu0 %v316
    %v573 = vpop.f32.mrf.mxu0
    %v574 = vadd.f32 0.0, %v573
    %v575 = vpop.f32.mrf.mxu0
    %v576 = vadd.f32 0.0, %v575
    %577 = vmatmul.bf16.gmra.mxu0 %v317
    %v578 = vpop.f32.mrf.mxu0
    %v579 = vadd.f32 0.0, %v578
    %v580 = vpop.f32.mrf.mxu0
    %v581 = vadd.f32 0.0, %v580
    %582 = vmatmul.bf16.gmra.mxu0 %v318
    %v583 = vpop.f32.mrf.mxu0
    %v584 = vadd.f32 0.0, %v583
    %v585 = vpop.f32.mrf.mxu0
    %v586 = vadd.f32 0.0, %v585
    %587 = vmatmul.bf16.gmra.mxu0 %v319
    %v588 = vpop.f32.mrf.mxu0
    %v589 = vadd.f32 0.0, %v588
    %v590 = vpop.f32.mrf.mxu0
    %v591 = vadd.f32 0.0, %v590
    %592 = vmatmul.bf16.gmra.mxu0 %v320
    %v593 = vpop.f32.mrf.mxu0
    %v594 = vadd.f32 0.0, %v593
    %v595 = vpop.f32.mrf.mxu0
    %v596 = vadd.f32 0.0, %v595
    %597 = vmatmul.bf16.gmra.mxu0 %v321
    %v598 = vpop.f32.mrf.mxu0
    %v599 = vadd.f32 0.0, %v598
    %v600 = vpop.f32.mrf.mxu0
    %v601 = vadd.f32 0.0, %v600
    %602 = vmatmul.bf16.gmra.mxu0 %v322
    %v603 = vpop.f32.mrf.mxu0
    %v604 = vadd.f32 0.0, %v603
    %v605 = vpop.f32.mrf.mxu0
    %v606 = vadd.f32 0.0, %v605
    %607 = vmatmul.bf16.gmra.mxu0 %v323
    %v608 = vpop.f32.mrf.mxu0
    %v609 = vadd.f32 0.0, %v608
    %v610 = vpop.f32.mrf.mxu0
    %v611 = vadd.f32 0.0, %v610
    %612 = vmatmul.bf16.gmra.mxu0 %v324
    %v613 = vpop.f32.mrf.mxu0
    %v614 = vadd.f32 0.0, %v613
    %v615 = vpop.f32.mrf.mxu0
    %v616 = vadd.f32 0.0, %v615
    %617 = vmatmul.bf16.gmra.mxu0 %v325
    %v618 = vpop.f32.mrf.mxu0
    %v619 = vadd.f32 0.0, %v618
    %v620 = vpop.f32.mrf.mxu0
    %v621 = vadd.f32 0.0, %v620
    %622 = vmatmul.bf16.gmra.mxu0 %v326
    %v623 = vpop.f32.mrf.mxu0
    %v624 = vadd.f32 0.0, %v623
    %v625 = vpop.f32.mrf.mxu0
    %v626 = vadd.f32 0.0, %v625
    %627 = vmatmul.bf16.gmra.mxu0 %v327
    %v628 = vpop.f32.mrf.mxu0
    %v629 = vadd.f32 0.0, %v628
    %v630 = vpop.f32.mrf.mxu0
    %v631 = vadd.f32 0.0, %v630
    %632 = vmatmul.bf16.gmra.mxu0 %v328
    %v633 = vpop.f32.mrf.mxu0
    %v634 = vadd.f32 0.0, %v633
    %v635 = vpop.f32.mrf.mxu0
    %v636 = vadd.f32 0.0, %v635
    %637 = vmatmul.bf16.gmra.mxu0 %v329
    %v638 = vpop.f32.mrf.mxu0
    %v639 = vadd.f32 0.0, %v638
    %v640 = vpop.f32.mrf.mxu0
    %v641 = vadd.f32 0.0, %v640
    %642 = vmatmul.bf16.gmra.mxu0 %v330
    %v643 = vpop.f32.mrf.mxu0
    %v644 = vadd.f32 0.0, %v643
    %v645 = vpop.f32.mrf.mxu0
    %v646 = vadd.f32 0.0, %v645
    %647 = vmatmul.bf16.gmra.mxu0 %v331
    %v648 = vpop.f32.mrf.mxu0
    %v649 = vadd.f32 0.0, %v648
    %v650 = vpop.f32.mrf.mxu0
    %v651 = vadd.f32 0.0, %v650
    %652 = vmatmul.bf16.gmra.mxu0 %v332
    %v653 = vpop.f32.mrf.mxu0
    %v654 = vadd.f32 0.0, %v653
    %v655 = vpop.f32.mrf.mxu0
    %v656 = vadd.f32 0.0, %v655
    %657 = vmatmul.bf16.gmra.mxu0 %v333
    %v658 = vpop.f32.mrf.mxu0
    %v659 = vadd.f32 0.0, %v658
    %v660 = vpop.f32.mrf.mxu0
    %v661 = vadd.f32 0.0, %v660
    %662 = vmatmul.bf16.gmra.mxu0 %v334
    %v663 = vpop.f32.mrf.mxu0
    %v664 = vadd.f32 0.0, %v663
    %v665 = vpop.f32.mrf.mxu0
    %v666 = vadd.f32 0.0, %v665
    %667 = vmatmul.bf16.gmra.mxu0 %v335
    %v668 = vpop.f32.mrf.mxu0
    %v669 = vadd.f32 0.0, %v668
    %v670 = vpop.f32.mrf.mxu0
    %v671 = vadd.f32 0.0, %v670
    %672 = vmatmul.bf16.gmra.mxu0 %v336
    %v673 = vpop.f32.mrf.mxu0
    %v674 = vadd.f32 0.0, %v673
    %v675 = vpop.f32.mrf.mxu0
    %v676 = vadd.f32 0.0, %v675
    %677 = vmatmul.bf16.gmra.mxu0 %v337
    %v678 = vpop.f32.mrf.mxu0
    %v679 = vadd.f32 0.0, %v678
    %v680 = vpop.f32.mrf.mxu0
    %v681 = vadd.f32 0.0, %v680
    %682 = vmatmul.bf16.gmra.mxu0 %v338
    %v683 = vpop.f32.mrf.mxu0
    %v684 = vadd.f32 0.0, %v683
    %v685 = vpop.f32.mrf.mxu0
    %v686 = vadd.f32 0.0, %v685
    %687 = vmatmul.bf16.gmra.mxu0 %v339
    %v688 = vpop.f32.mrf.mxu0
    %v689 = vadd.f32 0.0, %v688
    %v690 = vpop.f32.mrf.mxu0
    %v691 = vadd.f32 0.0, %v690
    %692 = vmatmul.bf16.gmra.mxu0 %v340
    %v693 = vpop.f32.mrf.mxu0
    %v694 = vadd.f32 0.0, %v693
    %v695 = vpop.f32.mrf.mxu0
    %v696 = vadd.f32 0.0, %v695
    %697 = vmatmul.bf16.gmra.mxu0 %v341
    %v698 = vpop.f32.mrf.mxu0
    %v699 = vadd.f32 0.0, %v698
    %v700 = vpop.f32.mrf.mxu0
    %v701 = vadd.f32 0.0, %v700
    %702 = vmatmul.bf16.gmra.mxu0 %v342
    %v703 = vpop.f32.mrf.mxu0
    %v704 = vadd.f32 0.0, %v703
    %v705 = vpop.f32.mrf.mxu0
    %v706 = vadd.f32 0.0, %v705
    %707 = vmatmul.bf16.gmra.mxu0 %v343
    %v708 = vpop.f32.mrf.mxu0
    %v709 = vadd.f32 0.0, %v708
    %v710 = vpop.f32.mrf.mxu0
    %v711 = vadd.f32 0.0, %v710
    %712 = vmatmul.bf16.gmra.mxu0 %v344
    %v713 = vpop.f32.mrf.mxu0
    %v714 = vadd.f32 0.0, %v713
    %v715 = vpop.f32.mrf.mxu0
    %v716 = vadd.f32 0.0, %v715
    %717 = vmatmul.bf16.gmra.mxu0 %v345
    %v718 = vpop.f32.mrf.mxu0
    %v719 = vadd.f32 0.0, %v718
    %v720 = vpop.f32.mrf.mxu0
    %v721 = vadd.f32 0.0, %v720
    %722 = vmatmul.bf16.gmra.mxu0 %v346
    %v723 = vpop.f32.mrf.mxu0
    %v724 = vadd.f32 0.0, %v723
    %v725 = vpop.f32.mrf.mxu0
    %v726 = vadd.f32 0.0, %v725
    %727 = vmatmul.bf16.gmra.mxu0 %v347
    %v728 = vpop.f32.mrf.mxu0
    %v729 = vadd.f32 0.0, %v728
    %v730 = vpop.f32.mrf.mxu0
    %v731 = vadd.f32 0.0, %v730
    %732 = vmatmul.bf16.gmra.mxu0 %v348
    %v733 = vpop.f32.mrf.mxu0
    %v734 = vadd.f32 0.0, %v733
    %v735 = vpop.f32.mrf.mxu0
    %v736 = vadd.f32 0.0, %v735
    %737 = vmatmul.bf16.gmra.mxu0 %v349
    %v738 = vpop.f32.mrf.mxu0
    %v739 = vadd.f32 0.0, %v738
    %v740 = vpop.f32.mrf.mxu0
    %v741 = vadd.f32 0.0, %v740
    %742 = vmatmul.bf16.gmra.mxu0 %v350
    %v743 = vpop.f32.mrf.mxu0
    %v744 = vadd.f32 0.0, %v743
    %v745 = vpop.f32.mrf.mxu0
    %v746 = vadd.f32 0.0, %v745
    %747 = vmatmul.bf16.gmra.mxu0 %v351
    %v748 = vpop.f32.mrf.mxu0
    %v749 = vadd.f32 0.0, %v748
    %v750 = vpop.f32.mrf.mxu0
    %v751 = vadd.f32 0.0, %v750
    %752 = vmatmul.bf16.gmra.mxu0 %v352
    %v753 = vpop.f32.mrf.mxu0
    %v754 = vadd.f32 0.0, %v753
    %v755 = vpop.f32.mrf.mxu0
    %v756 = vadd.f32 0.0, %v755
    %757 = vmatmul.bf16.gmra.mxu0 %v353
    %v758 = vpop.f32.mrf.mxu0
    %v759 = vadd.f32 0.0, %v758
    %v760 = vpop.f32.mrf.mxu0
    %v761 = vadd.f32 0.0, %v760
    %762 = vmatmul.bf16.gmra.mxu0 %v354
    %v763 = vpop.f32.mrf.mxu0
    %v764 = vadd.f32 0.0, %v763
    %v765 = vpop.f32.mrf.mxu0
    %v766 = vadd.f32 0.0, %v765
    %767 = vmatmul.bf16.gmra.mxu0 %v355
    %v768 = vpop.f32.mrf.mxu0
    %v769 = vadd.f32 0.0, %v768
    %v770 = vpop.f32.mrf.mxu0
    %v771 = vadd.f32 0.0, %v770
    %772 = vmatmul.bf16.gmra.mxu0 %v356
    %v773 = vpop.f32.mrf.mxu0
    %v774 = vadd.f32 0.0, %v773
    %v775 = vpop.f32.mrf.mxu0
    %v776 = vadd.f32 0.0, %v775
    %777 = vmatmul.bf16.gmra.mxu0 %v357
    %v778 = vpop.f32.mrf.mxu0
    %v779 = vadd.f32 0.0, %v778
    %v780 = vpop.f32.mrf.mxu0
    %v781 = vadd.f32 0.0, %v780
    %782 = vmatmul.bf16.gmra.mxu0 %v358
    %v783 = vpop.f32.mrf.mxu0
    %v784 = vadd.f32 0.0, %v783
    %v785 = vpop.f32.mrf.mxu0
    %v786 = vadd.f32 0.0, %v785
    %787 = vmatmul.bf16.gmra.mxu0 %v359
    %v788 = vpop.f32.mrf.mxu0
    %v789 = vadd.f32 0.0, %v788
    %v790 = vpop.f32.mrf.mxu0
    %v791 = vadd.f32 0.0, %v790
    %792 = vmatmul.bf16.gmra.mxu0 %v360
    %v793 = vpop.f32.mrf.mxu0
    %v794 = vadd.f32 0.0, %v793
    %v795 = vpop.f32.mrf.mxu0
    %v796 = vadd.f32 0.0, %v795
    %797 = vmatmul.bf16.gmra.mxu0 %v361
    %v798 = vpop.f32.mrf.mxu0
    %v799 = vadd.f32 0.0, %v798
    %v800 = vpop.f32.mrf.mxu0
    %v801 = vadd.f32 0.0, %v800
    %802 = vmatmul.bf16.gmra.mxu0 %v362
    %v803 = vpop.f32.mrf.mxu0
    %v804 = vadd.f32 0.0, %v803
    %v805 = vpop.f32.mrf.mxu0
    %v806 = vadd.f32 0.0, %v805
    %807 = vmatmul.bf16.gmra.mxu0 %v363
    %v808 = vpop.f32.mrf.mxu0
    %v809 = vadd.f32 0.0, %v808
    %v810 = vpop.f32.mrf.mxu0
    %v811 = vadd.f32 0.0, %v810
    %812 = vmatmul.bf16.gmra.mxu0 %v364
    %v813 = vpop.f32.mrf.mxu0
    %v814 = vadd.f32 0.0, %v813
    %v815 = vpop.f32.mrf.mxu0
    %v816 = vadd.f32 0.0, %v815
    %817 = vmatmul.bf16.gmra.mxu0 %v365
    %v818 = vpop.f32.mrf.mxu0
    %v819 = vadd.f32 0.0, %v818
    %v820 = vpop.f32.mrf.mxu0
    %v821 = vadd.f32 0.0, %v820
    %822 = vmatmul.bf16.gmra.mxu0 %v366
    %v823 = vpop.f32.mrf.mxu0
    %v824 = vadd.f32 0.0, %v823
    %v825 = vpop.f32.mrf.mxu0
    %v826 = vadd.f32 0.0, %v825
    %827 = vmatmul.bf16.gmra.mxu0 %v367
    %v828 = vpop.f32.mrf.mxu0
    %v829 = vadd.f32 0.0, %v828
    %v830 = vpop.f32.mrf.mxu0
    %v831 = vadd.f32 0.0, %v830
    %832 = vmatmul.bf16.gmra.mxu0 %v368
    %v833 = vpop.f32.mrf.mxu0
    %v834 = vadd.f32 0.0, %v833
    %v835 = vpop.f32.mrf.mxu0
    %v836 = vadd.f32 0.0, %v835
    %837 = vmatmul.bf16.gmra.mxu0 %v369
    %v838 = vpop.f32.mrf.mxu0
    %v839 = vadd.f32 0.0, %v838
    %v840 = vpop.f32.mrf.mxu0
    %v841 = vadd.f32 0.0, %v840
    %842 = vmatmul.bf16.gmra.mxu0 %v370
    %v843 = vpop.f32.mrf.mxu0
    %v844 = vadd.f32 0.0, %v843
    %v845 = vpop.f32.mrf.mxu0
    %v846 = vadd.f32 0.0, %v845
    %847 = vmatmul.bf16.gmra.mxu0 %v371
    %v848 = vpop.f32.mrf.mxu0
    %v849 = vadd.f32 0.0, %v848
    %v850 = vpop.f32.mrf.mxu0
    %v851 = vadd.f32 0.0, %v850
    %852 = vmatmul.bf16.gmra.mxu0 %v372
    %v853 = vpop.f32.mrf.mxu0
    %v854 = vadd.f32 0.0, %v853
    %v855 = vpop.f32.mrf.mxu0
    %v856 = vadd.f32 0.0, %v855
    %857 = vmatmul.bf16.gmra.mxu0 %v373
    %v858 = vpop.f32.mrf.mxu0
    %v859 = vadd.f32 0.0, %v858
    %v860 = vpop.f32.mrf.mxu0
    %v861 = vadd.f32 0.0, %v860
    %862 = vmatmul.bf16.gmra.mxu0 %v374
    %v863 = vpop.f32.mrf.mxu0
    %v864 = vadd.f32 0.0, %v863
    %v865 = vpop.f32.mrf.mxu0
    %v866 = vadd.f32 0.0, %v865
    %867 = vmatmul.bf16.gmra.mxu0 %v375
    %v868 = vpop.f32.mrf.mxu0
    %v869 = vadd.f32 0.0, %v868
    %v870 = vpop.f32.mrf.mxu0
    %v871 = vadd.f32 0.0, %v870
    %872 = vmatmul.bf16.gmra.mxu0 %v376
    %v873 = vpop.f32.mrf.mxu0
    %v874 = vadd.f32 0.0, %v873
    %v875 = vpop.f32.mrf.mxu0
    %v876 = vadd.f32 0.0, %v875
    %877 = vmatmul.bf16.gmra.mxu0 %v377
    %v878 = vpop.f32.mrf.mxu0
    %v879 = vadd.f32 0.0, %v878
    %v880 = vpop.f32.mrf.mxu0
    %v881 = vadd.f32 0.0, %v880
    %882 = vmatmul.bf16.gmra.mxu0 %v378
    %v883 = vpop.f32.mrf.mxu0
    %v884 = vadd.f32 0.0, %v883
    %v885 = vpop.f32.mrf.mxu0
    %v886 = vadd.f32 0.0, %v885
    %887 = vmatmul.bf16.gmra.mxu0 %v379
    %v888 = vpop.f32.mrf.mxu0
    %v889 = vadd.f32 0.0, %v888
    %v890 = vpop.f32.mrf.mxu0
    %v891 = vadd.f32 0.0, %v890
    %892 = vmatmul.bf16.gmra.mxu0 %v380
    %v893 = vpop.f32.mrf.mxu0
    %v894 = vadd.f32 0.0, %v893
    %v895 = vpop.f32.mrf.mxu0
    %v896 = vadd.f32 0.0, %v895
    %897 = vmatmul.bf16.gmra.mxu0 %v381
    %v898 = vpop.f32.mrf.mxu0
    %v899 = vadd.f32 0.0, %v898
    %v900 = vpop.f32.mrf.mxu0
    %v901 = vadd.f32 0.0, %v900
    %902 = vmatmul.bf16.gmra.mxu0 %v382
    %v903 = vpop.f32.mrf.mxu0
    %v904 = vadd.f32 0.0, %v903
    %v905 = vpop.f32.mrf.mxu0
    %v906 = vadd.f32 0.0, %v905
    %907 = vmatmul.bf16.gmra.mxu0 %v383
    %v908 = vpop.f32.mrf.mxu0
    %v909 = vadd.f32 0.0, %v908
    %v910 = vpop.f32.mrf.mxu0
    %v911 = vadd.f32 0.0, %v910
    %912 = vmatmul.bf16.gmra.mxu0 %v384
    %v913 = vpop.f32.mrf.mxu0
    %v914 = vadd.f32 0.0, %v913
    %v915 = vpop.f32.mrf.mxu0
    %v916 = vadd.f32 0.0, %v915
    %917 = vmatmul.bf16.gmra.mxu0 %v385
    %v918 = vpop.f32.mrf.mxu0
    %v919 = vadd.f32 0.0, %v918
    %v920 = vpop.f32.mrf.mxu0
    %v921 = vadd.f32 0.0, %v920
    %922 = vmatmul.bf16.gmra.mxu0 %v386
    %v923 = vpop.f32.mrf.mxu0
    %v924 = vadd.f32 0.0, %v923
    %v925 = vpop.f32.mrf.mxu0
    %v926 = vadd.f32 0.0, %v925
    %927 = vmatmul.bf16.gmra.mxu0 %v387
    %v928 = vpop.f32.mrf.mxu0
    %v929 = vadd.f32 0.0, %v928
    %v930 = vpop.f32.mrf.mxu0
    %v931 = vadd.f32 0.0, %v930
    %932 = vmatmul.bf16.gmra.mxu0 %v388
    %v933 = vpop.f32.mrf.mxu0
    %v934 = vadd.f32 0.0, %v933
    %v935 = vpop.f32.mrf.mxu0
    %v936 = vadd.f32 0.0, %v935
    %937 = vmatmul.bf16.gmra.mxu0 %v389
    %v938 = vpop.f32.mrf.mxu0
    %v939 = vadd.f32 0.0, %v938
    %v940 = vpop.f32.mrf.mxu0
    %v941 = vadd.f32 0.0, %v940
    %942 = vmatmul.bf16.gmra.mxu0 %v390
    %v943 = vpop.f32.mrf.mxu0
    %v944 = vadd.f32 0.0, %v943
    %v945 = vpop.f32.mrf.mxu0
    %v946 = vadd.f32 0.0, %v945
    %947 = vmatmul.bf16.gmra.mxu0 %v391
    %v948 = vpop.f32.mrf.mxu0
    %v949 = vadd.f32 0.0, %v948
    %v950 = vpop.f32.mrf.mxu0
    %v951 = vadd.f32 0.0, %v950
    %952 = vmatmul.bf16.gmra.mxu0 %v392
    %v953 = vpop.f32.mrf.mxu0
    %v954 = vadd.f32 0.0, %v953
    %v955 = vpop.f32.mrf.mxu0
    %v956 = vadd.f32 0.0, %v955
    %957 = vmatmul.bf16.gmra.mxu0 %v393
    %v958 = vpop.f32.mrf.mxu0
    %v959 = vadd.f32 0.0, %v958
    %v960 = vpop.f32.mrf.mxu0
    %v961 = vadd.f32 0.0, %v960
    %962 = vmatmul.bf16.gmra.mxu0 %v394
    %v963 = vpop.f32.mrf.mxu0
    %v964 = vadd.f32 0.0, %v963
    %v965 = vpop.f32.mrf.mxu0
    %v966 = vadd.f32 0.0, %v965
    %967 = vmatmul.bf16.gmra.mxu0 %v395
    %v968 = vpop.f32.mrf.mxu0
    %v969 = vadd.f32 0.0, %v968
    %v970 = vpop.f32.mrf.mxu0
    %v971 = vadd.f32 0.0, %v970
    %972 = vmatmul.bf16.gmra.mxu0 %v396
    %v973 = vpop.f32.mrf.mxu0
    %v974 = vadd.f32 0.0, %v973
    %v975 = vpop.f32.mrf.mxu0
    %v976 = vadd.f32 0.0, %v975
    %977 = vmatmul.bf16.gmra.mxu0 %v397
    %v978 = vpop.f32.mrf.mxu0
    %v979 = vadd.f32 0.0, %v978
    %v980 = vpop.f32.mrf.mxu0
    %v981 = vadd.f32 0.0, %v980
    %982 = vdwg.mxu0
    %983 = vmatpush.bf16.msra.mxu0 %v477
    %984 = vmatpush.bf16.msra.mxu0 %v475
    %985 = vmatpush.bf16.msra.mxu0 %v473
    %986 = vmatpush.bf16.msra.mxu0 %v471
    %987 = vmatpush.bf16.msra.mxu0 %v469
    %988 = vmatpush.bf16.msra.mxu0 %v467
    %989 = vmatpush.bf16.msra.mxu0 %v465
    %990 = vmatpush.bf16.msra.mxu0 %v463
    %991 = vmatmul.bf16.gmra.mxu0 %v302
    %v992 = vpop.f32.mrf.mxu0
    %v993 = vadd.f32 0.0, %v992
    %v994 = vpop.f32.mrf.mxu0
    %v995 = vadd.f32 0.0, %v994
    %996 = vmatmul.bf16.gmra.mxu0 %v303
    %v997 = vpop.f32.mrf.mxu0
    %v998 = vadd.f32 0.0, %v997
    %v999 = vpop.f32.mrf.mxu0
    %v1000 = vadd.f32 0.0, %v999
    %1001 = vmatmul.bf16.gmra.mxu0 %v304
    %v1002 = vpop.f32.mrf.mxu0
    %v1003 = vadd.f32 0.0, %v1002
    %v1004 = vpop.f32.mrf.mxu0
    %v1005 = vadd.f32 0.0, %v1004
    %1006 = vmatmul.bf16.gmra.mxu0 %v305
    %v1007 = vpop.f32.mrf.mxu0
    %v1008 = vadd.f32 0.0, %v1007
    %v1009 = vpop.f32.mrf.mxu0
    %v1010 = vadd.f32 0.0, %v1009
    %1011 = vmatmul.bf16.gmra.mxu0 %v306
    %v1012 = vpop.f32.mrf.mxu0
    %v1013 = vadd.f32 0.0, %v1012
    %v1014 = vpop.f32.mrf.mxu0
    %v1015 = vadd.f32 0.0, %v1014
    %1016 = vmatmul.bf16.gmra.mxu0 %v307
    %v1017 = vpop.f32.mrf.mxu0
    %v1018 = vadd.f32 0.0, %v1017
    %v1019 = vpop.f32.mrf.mxu0
    %v1020 = vadd.f32 0.0, %v1019
    %1021 = vmatmul.bf16.gmra.mxu0 %v308
    %v1022 = vpop.f32.mrf.mxu0
    %v1023 = vadd.f32 0.0, %v1022
    %v1024 = vpop.f32.mrf.mxu0
    %v1025 = vadd.f32 0.0, %v1024
    %1026 = vmatmul.bf16.gmra.mxu0 %v309
    %v1027 = vpop.f32.mrf.mxu0
    %v1028 = vadd.f32 0.0, %v1027
    %v1029 = vpop.f32.mrf.mxu0
    %v1030 = vadd.f32 0.0, %v1029
    %1031 = vmatmul.bf16.gmra.mxu0 %v310
    %v1032 = vpop.f32.mrf.mxu0
    %v1033 = vadd.f32 0.0, %v1032
    %v1034 = vpop.f32.mrf.mxu0
    %v1035 = vadd.f32 0.0, %v1034
    %1036 = vmatmul.bf16.gmra.mxu0 %v311
    %v1037 = vpop.f32.mrf.mxu0
    %v1038 = vadd.f32 0.0, %v1037
    %v1039 = vpop.f32.mrf.mxu0
    %v1040 = vadd.f32 0.0, %v1039
    %1041 = vmatmul.bf16.gmra.mxu0 %v312
    %v1042 = vpop.f32.mrf.mxu0
    %v1043 = vadd.f32 0.0, %v1042
    %v1044 = vpop.f32.mrf.mxu0
    %v1045 = vadd.f32 0.0, %v1044
    %1046 = vmatmul.bf16.gmra.mxu0 %v313
    %v1047 = vpop.f32.mrf.mxu0
    %v1048 = vadd.f32 0.0, %v1047
    %v1049 = vpop.f32.mrf.mxu0
    %v1050 = vadd.f32 0.0, %v1049
    %1051 = vmatmul.bf16.gmra.mxu0 %v314
    %v1052 = vpop.f32.mrf.mxu0
    %v1053 = vadd.f32 0.0, %v1052
    %v1054 = vpop.f32.mrf.mxu0
    %v1055 = vadd.f32 0.0, %v1054
    %1056 = vmatmul.bf16.gmra.mxu0 %v315
    %v1057 = vpop.f32.mrf.mxu0
    %v1058 = vadd.f32 0.0, %v1057
    %v1059 = vpop.f32.mrf.mxu0
    %v1060 = vadd.f32 0.0, %v1059
    %1061 = vmatmul.bf16.gmra.mxu0 %v316
    %v1062 = vpop.f32.mrf.mxu0
    %v1063 = vadd.f32 0.0, %v1062
    %v1064 = vpop.f32.mrf.mxu0
    %v1065 = vadd.f32 0.0, %v1064
    %1066 = vmatmul.bf16.gmra.mxu0 %v317
    %v1067 = vpop.f32.mrf.mxu0
    %v1068 = vadd.f32 0.0, %v1067
    %v1069 = vpop.f32.mrf.mxu0
    %v1070 = vadd.f32 0.0, %v1069
    %1071 = vmatmul.bf16.gmra.mxu0 %v318
    %v1072 = vpop.f32.mrf.mxu0
    %v1073 = vadd.f32 0.0, %v1072
    %v1074 = vpop.f32.mrf.mxu0
    %v1075 = vadd.f32 0.0, %v1074
    %1076 = vmatmul.bf16.gmra.mxu0 %v319
    %v1077 = vpop.f32.mrf.mxu0
    %v1078 = vadd.f32 0.0, %v1077
    %v1079 = vpop.f32.mrf.mxu0
    %v1080 = vadd.f32 0.0, %v1079
    %1081 = vmatmul.bf16.gmra.mxu0 %v320
    %v1082 = vpop.f32.mrf.mxu0
    %v1083 = vadd.f32 0.0, %v1082
    %v1084 = vpop.f32.mrf.mxu0
    %v1085 = vadd.f32 0.0, %v1084
    %1086 = vmatmul.bf16.gmra.mxu0 %v321
    %v1087 = vpop.f32.mrf.mxu0
    %v1088 = vadd.f32 0.0, %v1087
    %v1089 = vpop.f32.mrf.mxu0
    %v1090 = vadd.f32 0.0, %v1089
    %1091 = vmatmul.bf16.gmra.mxu0 %v322
    %v1092 = vpop.f32.mrf.mxu0
    %v1093 = vadd.f32 0.0, %v1092
    %v1094 = vpop.f32.mrf.mxu0
    %v1095 = vadd.f32 0.0, %v1094
    %1096 = vmatmul.bf16.gmra.mxu0 %v323
    %v1097 = vpop.f32.mrf.mxu0
    %v1098 = vadd.f32 0.0, %v1097
    %v1099 = vpop.f32.mrf.mxu0
    %v1100 = vadd.f32 0.0, %v1099
    %1101 = vmatmul.bf16.gmra.mxu0 %v324
    %v1102 = vpop.f32.mrf.mxu0
    %v1103 = vadd.f32 0.0, %v1102
    %v1104 = vpop.f32.mrf.mxu0
    %v1105 = vadd.f32 0.0, %v1104
    %1106 = vmatmul.bf16.gmra.mxu0 %v325
    %v1107 = vpop.f32.mrf.mxu0
    %v1108 = vadd.f32 0.0, %v1107
    %v1109 = vpop.f32.mrf.mxu0
    %v1110 = vadd.f32 0.0, %v1109
    %1111 = vmatmul.bf16.gmra.mxu0 %v326
    %v1112 = vpop.f32.mrf.mxu0
    %v1113 = vadd.f32 0.0, %v1112
    %v1114 = vpop.f32.mrf.mxu0
    %v1115 = vadd.f32 0.0, %v1114
    %1116 = vmatmul.bf16.gmra.mxu0 %v327
    %v1117 = vpop.f32.mrf.mxu0
    %v1118 = vadd.f32 0.0, %v1117
    %v1119 = vpop.f32.mrf.mxu0
    %v1120 = vadd.f32 0.0, %v1119
    %1121 = vmatmul.bf16.gmra.mxu0 %v328
    %v1122 = vpop.f32.mrf.mxu0
    %v1123 = vadd.f32 0.0, %v1122
    %v1124 = vpop.f32.mrf.mxu0
    %v1125 = vadd.f32 0.0, %v1124
    %1126 = vmatmul.bf16.gmra.mxu0 %v329
    %v1127 = vpop.f32.mrf.mxu0
    %v1128 = vadd.f32 0.0, %v1127
    %v1129 = vpop.f32.mrf.mxu0
    %v1130 = vadd.f32 0.0, %v1129
    %1131 = vmatmul.bf16.gmra.mxu0 %v330
    %v1132 = vpop.f32.mrf.mxu0
    %v1133 = vadd.f32 0.0, %v1132
    %v1134 = vpop.f32.mrf.mxu0
    %v1135 = vadd.f32 0.0, %v1134
    %1136 = vmatmul.bf16.gmra.mxu0 %v331
    %v1137 = vpop.f32.mrf.mxu0
    %v1138 = vadd.f32 0.0, %v1137
    %v1139 = vpop.f32.mrf.mxu0
    %v1140 = vadd.f32 0.0, %v1139
    %1141 = vmatmul.bf16.gmra.mxu0 %v332
    %v1142 = vpop.f32.mrf.mxu0
    %v1143 = vadd.f32 0.0, %v1142
    %v1144 = vpop.f32.mrf.mxu0
    %v1145 = vadd.f32 0.0, %v1144
    %1146 = vmatmul.bf16.gmra.mxu0 %v333
    %v1147 = vpop.f32.mrf.mxu0
    %v1148 = vadd.f32 0.0, %v1147
    %v1149 = vpop.f32.mrf.mxu0
    %v1150 = vadd.f32 0.0, %v1149
    %1151 = vmatmul.bf16.gmra.mxu0 %v334
    %v1152 = vpop.f32.mrf.mxu0
    %v1153 = vadd.f32 0.0, %v1152
    %v1154 = vpop.f32.mrf.mxu0
    %v1155 = vadd.f32 0.0, %v1154
    %1156 = vmatmul.bf16.gmra.mxu0 %v335
    %v1157 = vpop.f32.mrf.mxu0
    %v1158 = vadd.f32 0.0, %v1157
    %v1159 = vpop.f32.mrf.mxu0
    %v1160 = vadd.f32 0.0, %v1159
    %1161 = vmatmul.bf16.gmra.mxu0 %v336
    %v1162 = vpop.f32.mrf.mxu0
    %v1163 = vadd.f32 0.0, %v1162
    %v1164 = vpop.f32.mrf.mxu0
    %v1165 = vadd.f32 0.0, %v1164
    %1166 = vmatmul.bf16.gmra.mxu0 %v337
    %v1167 = vpop.f32.mrf.mxu0
    %v1168 = vadd.f32 0.0, %v1167
    %v1169 = vpop.f32.mrf.mxu0
    %v1170 = vadd.f32 0.0, %v1169
    %1171 = vmatmul.bf16.gmra.mxu0 %v338
    %v1172 = vpop.f32.mrf.mxu0
    %v1173 = vadd.f32 0.0, %v1172
    %v1174 = vpop.f32.mrf.mxu0
    %v1175 = vadd.f32 0.0, %v1174
    %1176 = vmatmul.bf16.gmra.mxu0 %v339
    %v1177 = vpop.f32.mrf.mxu0
    %v1178 = vadd.f32 0.0, %v1177
    %v1179 = vpop.f32.mrf.mxu0
    %v1180 = vadd.f32 0.0, %v1179
    %1181 = vmatmul.bf16.gmra.mxu0 %v340
    %v1182 = vpop.f32.mrf.mxu0
    %v1183 = vadd.f32 0.0, %v1182
    %v1184 = vpop.f32.mrf.mxu0
    %v1185 = vadd.f32 0.0, %v1184
    %1186 = vmatmul.bf16.gmra.mxu0 %v341
    %v1187 = vpop.f32.mrf.mxu0
    %v1188 = vadd.f32 0.0, %v1187
    %v1189 = vpop.f32.mrf.mxu0
    %v1190 = vadd.f32 0.0, %v1189
    %1191 = vmatmul.bf16.gmra.mxu0 %v342
    %v1192 = vpop.f32.mrf.mxu0
    %v1193 = vadd.f32 0.0, %v1192
    %v1194 = vpop.f32.mrf.mxu0
    %v1195 = vadd.f32 0.0, %v1194
    %1196 = vmatmul.bf16.gmra.mxu0 %v343
    %v1197 = vpop.f32.mrf.mxu0
    %v1198 = vadd.f32 0.0, %v1197
    %v1199 = vpop.f32.mrf.mxu0
    %v1200 = vadd.f32 0.0, %v1199
    %1201 = vmatmul.bf16.gmra.mxu0 %v344
    %v1202 = vpop.f32.mrf.mxu0
    %v1203 = vadd.f32 0.0, %v1202
    %v1204 = vpop.f32.mrf.mxu0
    %v1205 = vadd.f32 0.0, %v1204
    %1206 = vmatmul.bf16.gmra.mxu0 %v345
    %v1207 = vpop.f32.mrf.mxu0
    %v1208 = vadd.f32 0.0, %v1207
    %v1209 = vpop.f32.mrf.mxu0
    %v1210 = vadd.f32 0.0, %v1209
    %1211 = vmatmul.bf16.gmra.mxu0 %v346
    %v1212 = vpop.f32.mrf.mxu0
    %v1213 = vadd.f32 0.0, %v1212
    %v1214 = vpop.f32.mrf.mxu0
    %v1215 = vadd.f32 0.0, %v1214
    %1216 = vmatmul.bf16.gmra.mxu0 %v347
    %v1217 = vpop.f32.mrf.mxu0
    %v1218 = vadd.f32 0.0, %v1217
    %v1219 = vpop.f32.mrf.mxu0
    %v1220 = vadd.f32 0.0, %v1219
    %1221 = vmatmul.bf16.gmra.mxu0 %v348
    %v1222 = vpop.f32.mrf.mxu0
    %v1223 = vadd.f32 0.0, %v1222
    %v1224 = vpop.f32.mrf.mxu0
    %v1225 = vadd.f32 0.0, %v1224
    %1226 = vmatmul.bf16.gmra.mxu0 %v349
    %v1227 = vpop.f32.mrf.mxu0
    %v1228 = vadd.f32 0.0, %v1227
    %v1229 = vpop.f32.mrf.mxu0
    %v1230 = vadd.f32 0.0, %v1229
    %1231 = vmatmul.bf16.gmra.mxu0 %v350
    %v1232 = vpop.f32.mrf.mxu0
    %v1233 = vadd.f32 0.0, %v1232
    %v1234 = vpop.f32.mrf.mxu0
    %v1235 = vadd.f32 0.0, %v1234
    %1236 = vmatmul.bf16.gmra.mxu0 %v351
    %v1237 = vpop.f32.mrf.mxu0
    %v1238 = vadd.f32 0.0, %v1237
    %v1239 = vpop.f32.mrf.mxu0
    %v1240 = vadd.f32 0.0, %v1239
    %1241 = vmatmul.bf16.gmra.mxu0 %v352
    %v1242 = vpop.f32.mrf.mxu0
    %v1243 = vadd.f32 0.0, %v1242
    %v1244 = vpop.f32.mrf.mxu0
    %v1245 = vadd.f32 0.0, %v1244
    %1246 = vmatmul.bf16.gmra.mxu0 %v353
    %v1247 = vpop.f32.mrf.mxu0
    %v1248 = vadd.f32 0.0, %v1247
    %v1249 = vpop.f32.mrf.mxu0
    %v1250 = vadd.f32 0.0, %v1249
    %1251 = vmatmul.bf16.gmra.mxu0 %v354
    %v1252 = vpop.f32.mrf.mxu0
    %v1253 = vadd.f32 0.0, %v1252
    %v1254 = vpop.f32.mrf.mxu0
    %v1255 = vadd.f32 0.0, %v1254
    %1256 = vmatmul.bf16.gmra.mxu0 %v355
    %v1257 = vpop.f32.mrf.mxu0
    %v1258 = vadd.f32 0.0, %v1257
    %v1259 = vpop.f32.mrf.mxu0
    %v1260 = vadd.f32 0.0, %v1259
    %1261 = vmatmul.bf16.gmra.mxu0 %v356
    %v1262 = vpop.f32.mrf.mxu0
    %v1263 = vadd.f32 0.0, %v1262
    %v1264 = vpop.f32.mrf.mxu0
    %v1265 = vadd.f32 0.0, %v1264
    %1266 = vmatmul.bf16.gmra.mxu0 %v357
    %v1267 = vpop.f32.mrf.mxu0
    %v1268 = vadd.f32 0.0, %v1267
    %v1269 = vpop.f32.mrf.mxu0
    %v1270 = vadd.f32 0.0, %v1269
    %1271 = vmatmul.bf16.gmra.mxu0 %v358
    %v1272 = vpop.f32.mrf.mxu0
    %v1273 = vadd.f32 0.0, %v1272
    %v1274 = vpop.f32.mrf.mxu0
    %v1275 = vadd.f32 0.0, %v1274
    %1276 = vmatmul.bf16.gmra.mxu0 %v359
    %v1277 = vpop.f32.mrf.mxu0
    %v1278 = vadd.f32 0.0, %v1277
    %v1279 = vpop.f32.mrf.mxu0
    %v1280 = vadd.f32 0.0, %v1279
    %1281 = vmatmul.bf16.gmra.mxu0 %v360
    %v1282 = vpop.f32.mrf.mxu0
    %v1283 = vadd.f32 0.0, %v1282
    %v1284 = vpop.f32.mrf.mxu0
    %v1285 = vadd.f32 0.0, %v1284
    %1286 = vmatmul.bf16.gmra.mxu0 %v361
    %v1287 = vpop.f32.mrf.mxu0
    %v1288 = vadd.f32 0.0, %v1287
    %v1289 = vpop.f32.mrf.mxu0
    %v1290 = vadd.f32 0.0, %v1289
    %1291 = vmatmul.bf16.gmra.mxu0 %v362
    %v1292 = vpop.f32.mrf.mxu0
    %v1293 = vadd.f32 0.0, %v1292
    %v1294 = vpop.f32.mrf.mxu0
    %v1295 = vadd.f32 0.0, %v1294
    %1296 = vmatmul.bf16.gmra.mxu0 %v363
    %v1297 = vpop.f32.mrf.mxu0
    %v1298 = vadd.f32 0.0, %v1297
    %v1299 = vpop.f32.mrf.mxu0
    %v1300 = vadd.f32 0.0, %v1299
    %1301 = vmatmul.bf16.gmra.mxu0 %v364
    %v1302 = vpop.f32.mrf.mxu0
    %v1303 = vadd.f32 0.0, %v1302
    %v1304 = vpop.f32.mrf.mxu0
    %v1305 = vadd.f32 0.0, %v1304
    %1306 = vmatmul.bf16.gmra.mxu0 %v365
    %v1307 = vpop.f32.mrf.mxu0
    %v1308 = vadd.f32 0.0, %v1307
    %v1309 = vpop.f32.mrf.mxu0
    %v1310 = vadd.f32 0.0, %v1309
    %1311 = vmatmul.bf16.gmra.mxu0 %v366
    %v1312 = vpop.f32.mrf.mxu0
    %v1313 = vadd.f32 0.0, %v1312
    %v1314 = vpop.f32.mrf.mxu0
    %v1315 = vadd.f32 0.0, %v1314
    %1316 = vmatmul.bf16.gmra.mxu0 %v367
    %v1317 = vpop.f32.mrf.mxu0
    %v1318 = vadd.f32 0.0, %v1317
    %v1319 = vpop.f32.mrf.mxu0
    %v1320 = vadd.f32 0.0, %v1319
    %1321 = vmatmul.bf16.gmra.mxu0 %v368
    %v1322 = vpop.f32.mrf.mxu0
    %v1323 = vadd.f32 0.0, %v1322
    %v1324 = vpop.f32.mrf.mxu0
    %v1325 = vadd.f32 0.0, %v1324
    %1326 = vmatmul.bf16.gmra.mxu0 %v369
    %v1327 = vpop.f32.mrf.mxu0
    %v1328 = vadd.f32 0.0, %v1327
    %v1329 = vpop.f32.mrf.mxu0
    %v1330 = vadd.f32 0.0, %v1329
    %1331 = vmatmul.bf16.gmra.mxu0 %v370
    %v1332 = vpop.f32.mrf.mxu0
    %v1333 = vadd.f32 0.0, %v1332
    %v1334 = vpop.f32.mrf.mxu0
    %v1335 = vadd.f32 0.0, %v1334
    %1336 = vmatmul.bf16.gmra.mxu0 %v371
    %v1337 = vpop.f32.mrf.mxu0
    %v1338 = vadd.f32 0.0, %v1337
    %v1339 = vpop.f32.mrf.mxu0
    %v1340 = vadd.f32 0.0, %v1339
    %1341 = vmatmul.bf16.gmra.mxu0 %v372
    %v1342 = vpop.f32.mrf.mxu0
    %v1343 = vadd.f32 0.0, %v1342
    %v1344 = vpop.f32.mrf.mxu0
    %v1345 = vadd.f32 0.0, %v1344
    %1346 = vmatmul.bf16.gmra.mxu0 %v373
    %v1347 = vpop.f32.mrf.mxu0
    %v1348 = vadd.f32 0.0, %v1347
    %v1349 = vpop.f32.mrf.mxu0
    %v1350 = vadd.f32 0.0, %v1349
    %1351 = vmatmul.bf16.gmra.mxu0 %v374
    %v1352 = vpop.f32.mrf.mxu0
    %v1353 = vadd.f32 0.0, %v1352
    %v1354 = vpop.f32.mrf.mxu0
    %v1355 = vadd.f32 0.0, %v1354
    %1356 = vmatmul.bf16.gmra.mxu0 %v375
    %v1357 = vpop.f32.mrf.mxu0
    %v1358 = vadd.f32 0.0, %v1357
    %v1359 = vpop.f32.mrf.mxu0
    %v1360 = vadd.f32 0.0, %v1359
    %1361 = vmatmul.bf16.gmra.mxu0 %v376
    %v1362 = vpop.f32.mrf.mxu0
    %v1363 = vadd.f32 0.0, %v1362
    %v1364 = vpop.f32.mrf.mxu0
    %v1365 = vadd.f32 0.0, %v1364
    %1366 = vmatmul.bf16.gmra.mxu0 %v377
    %v1367 = vpop.f32.mrf.mxu0
    %v1368 = vadd.f32 0.0, %v1367
    %v1369 = vpop.f32.mrf.mxu0
    %v1370 = vadd.f32 0.0, %v1369
    %1371 = vmatmul.bf16.gmra.mxu0 %v378
    %v1372 = vpop.f32.mrf.mxu0
    %v1373 = vadd.f32 0.0, %v1372
    %v1374 = vpop.f32.mrf.mxu0
    %v1375 = vadd.f32 0.0, %v1374
    %1376 = vmatmul.bf16.gmra.mxu0 %v379
    %v1377 = vpop.f32.mrf.mxu0
    %v1378 = vadd.f32 0.0, %v1377
    %v1379 = vpop.f32.mrf.mxu0
    %v1380 = vadd.f32 0.0, %v1379
    %1381 = vmatmul.bf16.gmra.mxu0 %v380
    %v1382 = vpop.f32.mrf.mxu0
    %v1383 = vadd.f32 0.0, %v1382
    %v1384 = vpop.f32.mrf.mxu0
    %v1385 = vadd.f32 0.0, %v1384
    %1386 = vmatmul.bf16.gmra.mxu0 %v381
    %v1387 = vpop.f32.mrf.mxu0
    %v1388 = vadd.f32 0.0, %v1387
    %v1389 = vpop.f32.mrf.mxu0
    %v1390 = vadd.f32 0.0, %v1389
    %1391 = vmatmul.bf16.gmra.mxu0 %v382
    %v1392 = vpop.f32.mrf.mxu0
    %v1393 = vadd.f32 0.0, %v1392
    %v1394 = vpop.f32.mrf.mxu0
    %v1395 = vadd.f32 0.0, %v1394
    %1396 = vmatmul.bf16.gmra.mxu0 %v383
    %v1397 = vpop.f32.mrf.mxu0
    %v1398 = vadd.f32 0.0, %v1397
    %v1399 = vpop.f32.mrf.mxu0
    %v1400 = vadd.f32 0.0, %v1399
    %1401 = vmatmul.bf16.gmra.mxu0 %v384
    %v1402 = vpop.f32.mrf.mxu0
    %v1403 = vadd.f32 0.0, %v1402
    %v1404 = vpop.f32.mrf.mxu0
    %v1405 = vadd.f32 0.0, %v1404
    %1406 = vmatmul.bf16.gmra.mxu0 %v385
    %v1407 = vpop.f32.mrf.mxu0
    %v1408 = vadd.f32 0.0, %v1407
    %v1409 = vpop.f32.mrf.mxu0
    %v1410 = vadd.f32 0.0, %v1409
    %1411 = vmatmul.bf16.gmra.mxu0 %v386
    %v1412 = vpop.f32.mrf.mxu0
    %v1413 = vadd.f32 0.0, %v1412
    %v1414 = vpop.f32.mrf.mxu0
    %v1415 = vadd.f32 0.0, %v1414
    %1416 = vmatmul.bf16.gmra.mxu0 %v387
    %v1417 = vpop.f32.mrf.mxu0
    %v1418 = vadd.f32 0.0, %v1417
    %v1419 = vpop.f32.mrf.mxu0
    %v1420 = vadd.f32 0.0, %v1419
    %1421 = vmatmul.bf16.gmra.mxu0 %v388
    %v1422 = vpop.f32.mrf.mxu0
    %v1423 = vadd.f32 0.0, %v1422
    %v1424 = vpop.f32.mrf.mxu0
    %v1425 = vadd.f32 0.0, %v1424
    %1426 = vmatmul.bf16.gmra.mxu0 %v389
    %v1427 = vpop.f32.mrf.mxu0
    %v1428 = vadd.f32 0.0, %v1427
    %v1429 = vpop.f32.mrf.mxu0
    %v1430 = vadd.f32 0.0, %v1429
    %1431 = vmatmul.bf16.gmra.mxu0 %v390
    %v1432 = vpop.f32.mrf.mxu0
    %v1433 = vadd.f32 0.0, %v1432
    %v1434 = vpop.f32.mrf.mxu0
    %v1435 = vadd.f32 0.0, %v1434
    %1436 = vmatmul.bf16.gmra.mxu0 %v391
    %v1437 = vpop.f32.mrf.mxu0
    %v1438 = vadd.f32 0.0, %v1437
    %v1439 = vpop.f32.mrf.mxu0
    %v1440 = vadd.f32 0.0, %v1439
    %1441 = vmatmul.bf16.gmra.mxu0 %v392
    %v1442 = vpop.f32.mrf.mxu0
    %v1443 = vadd.f32 0.0, %v1442
    %v1444 = vpop.f32.mrf.mxu0
    %v1445 = vadd.f32 0.0, %v1444
    %1446 = vmatmul.bf16.gmra.mxu0 %v393
    %v1447 = vpop.f32.mrf.mxu0
    %v1448 = vadd.f32 0.0, %v1447
    %v1449 = vpop.f32.mrf.mxu0
    %v1450 = vadd.f32 0.0, %v1449
    %1451 = vmatmul.bf16.gmra.mxu0 %v394
    %v1452 = vpop.f32.mrf.mxu0
    %v1453 = vadd.f32 0.0, %v1452
    %v1454 = vpop.f32.mrf.mxu0
    %v1455 = vadd.f32 0.0, %v1454
    %1456 = vmatmul.bf16.gmra.mxu0 %v395
    %v1457 = vpop.f32.mrf.mxu0
    %v1458 = vadd.f32 0.0, %v1457
    %v1459 = vpop.f32.mrf.mxu0
    %v1460 = vadd.f32 0.0, %v1459
    %1461 = vmatmul.bf16.gmra.mxu0 %v396
    %v1462 = vpop.f32.mrf.mxu0
    %v1463 = vadd.f32 0.0, %v1462
    %v1464 = vpop.f32.mrf.mxu0
    %v1465 = vadd.f32 0.0, %v1464
    %1466 = vmatmul.bf16.gmra.mxu0 %v397
    %v1467 = vpop.f32.mrf.mxu0
    %v1468 = vadd.f32 0.0, %v1467
    %v1469 = vpop.f32.mrf.mxu0
    %v1470 = vadd.f32 0.0, %v1469
    %1471 = vdwg.mxu0
    %v1472 = vmul.f32 %v993, %v993
    %v1473 = vmul.f32 %v995, %v995
    %v1474 = vmul.f32 %v998, %v998
    %v1475 = vmul.f32 %v1000, %v1000
    %v1476 = vmul.f32 %v1003, %v1003
    %v1477 = vmul.f32 %v1005, %v1005
    %v1478 = vmul.f32 %v1008, %v1008
    %v1479 = vmul.f32 %v1010, %v1010
    %v1480 = vmul.f32 %v1013, %v1013
    %v1481 = vmul.f32 %v1015, %v1015
    %v1482 = vmul.f32 %v1018, %v1018
    %v1483 = vmul.f32 %v1020, %v1020
    %v1484 = vmul.f32 %v1023, %v1023
    %v1485 = vmul.f32 %v1025, %v1025
    %v1486 = vmul.f32 %v1028, %v1028
    %v1487 = vmul.f32 %v1030, %v1030
    %v1488 = vmul.f32 %v1033, %v1033
    %v1489 = vmul.f32 %v1035, %v1035
    %v1490 = vmul.f32 %v1038, %v1038
    %v1491 = vmul.f32 %v1040, %v1040
    %v1492 = vmul.f32 %v1043, %v1043
    %v1493 = vmul.f32 %v1045, %v1045
    %v1494 = vmul.f32 %v1048, %v1048
    %v1495 = vmul.f32 %v1050, %v1050
    %v1496 = vmul.f32 %v1053, %v1053
    %v1497 = vmul.f32 %v1055, %v1055
    %v1498 = vmul.f32 %v1058, %v1058
    %v1499 = vmul.f32 %v1060, %v1060
    %v1500 = vmul.f32 %v1063, %v1063
    %v1501 = vmul.f32 %v1065, %v1065
    %v1502 = vmul.f32 %v1068, %v1068
    %v1503 = vmul.f32 %v1070, %v1070
    %v1504 = vmul.f32 %v1073, %v1073
    %v1505 = vmul.f32 %v1075, %v1075
    %v1506 = vmul.f32 %v1078, %v1078
    %v1507 = vmul.f32 %v1080, %v1080
    %v1508 = vmul.f32 %v1083, %v1083
    %v1509 = vmul.f32 %v1085, %v1085
    %v1510 = vmul.f32 %v1088, %v1088
    %v1511 = vmul.f32 %v1090, %v1090
    %v1512 = vmul.f32 %v1093, %v1093
    %v1513 = vmul.f32 %v1095, %v1095
    %v1514 = vmul.f32 %v1098, %v1098
    %v1515 = vmul.f32 %v1100, %v1100
    %v1516 = vmul.f32 %v1103, %v1103
    %v1517 = vmul.f32 %v1105, %v1105
    %v1518 = vmul.f32 %v1108, %v1108
    %v1519 = vmul.f32 %v1110, %v1110
    %v1520 = vmul.f32 %v1113, %v1113
    %v1521 = vmul.f32 %v1115, %v1115
    %v1522 = vmul.f32 %v1118, %v1118
    %v1523 = vmul.f32 %v1120, %v1120
    %v1524 = vmul.f32 %v1123, %v1123
    %v1525 = vmul.f32 %v1125, %v1125
    %v1526 = vmul.f32 %v1128, %v1128
    %v1527 = vmul.f32 %v1130, %v1130
    %v1528 = vmul.f32 %v1133, %v1133
    %v1529 = vmul.f32 %v1135, %v1135
    %v1530 = vmul.f32 %v1138, %v1138
    %v1531 = vmul.f32 %v1140, %v1140
    %v1532 = vmul.f32 %v1143, %v1143
    %v1533 = vmul.f32 %v1145, %v1145
    %v1534 = vmul.f32 %v1148, %v1148
    %v1535 = vmul.f32 %v1150, %v1150
    %v1536 = vmul.f32 %v1153, %v1153
    %v1537 = vmul.f32 %v1155, %v1155
    %v1538 = vmul.f32 %v1158, %v1158
    %v1539 = vmul.f32 %v1160, %v1160
    %v1540 = vmul.f32 %v1163, %v1163
    %v1541 = vmul.f32 %v1165, %v1165
    %v1542 = vmul.f32 %v1168, %v1168
    %v1543 = vmul.f32 %v1170, %v1170
    %v1544 = vmul.f32 %v1173, %v1173
    %v1545 = vmul.f32 %v1175, %v1175
    %v1546 = vmul.f32 %v1178, %v1178
    %v1547 = vmul.f32 %v1180, %v1180
    %v1548 = vmul.f32 %v1183, %v1183
    %v1549 = vmul.f32 %v1185, %v1185
    %v1550 = vmul.f32 %v1188, %v1188
    %v1551 = vmul.f32 %v1190, %v1190
    %v1552 = vmul.f32 %v1193, %v1193
    %v1553 = vmul.f32 %v1195, %v1195
    %v1554 = vmul.f32 %v1198, %v1198
    %v1555 = vmul.f32 %v1200, %v1200
    %v1556 = vmul.f32 %v1203, %v1203
    %v1557 = vmul.f32 %v1205, %v1205
    %v1558 = vmul.f32 %v1208, %v1208
    %v1559 = vmul.f32 %v1210, %v1210
    %v1560 = vmul.f32 %v1213, %v1213
    %v1561 = vmul.f32 %v1215, %v1215
    %v1562 = vmul.f32 %v1218, %v1218
    %v1563 = vmul.f32 %v1220, %v1220
    %v1564 = vmul.f32 %v1223, %v1223
    %v1565 = vmul.f32 %v1225, %v1225
    %v1566 = vmul.f32 %v1228, %v1228
    %v1567 = vmul.f32 %v1230, %v1230
    %v1568 = vmul.f32 %v1233, %v1233
    %v1569 = vmul.f32 %v1235, %v1235
    %v1570 = vmul.f32 %v1238, %v1238
    %v1571 = vmul.f32 %v1240, %v1240
    %v1572 = vmul.f32 %v1243, %v1243
    %v1573 = vmul.f32 %v1245, %v1245
    %v1574 = vmul.f32 %v1248, %v1248
    %v1575 = vmul.f32 %v1250, %v1250
    %v1576 = vmul.f32 %v1253, %v1253
    %v1577 = vmul.f32 %v1255, %v1255
    %v1578 = vmul.f32 %v1258, %v1258
    %v1579 = vmul.f32 %v1260, %v1260
    %v1580 = vmul.f32 %v1263, %v1263
    %v1581 = vmul.f32 %v1265, %v1265
    %v1582 = vmul.f32 %v1268, %v1268
    %v1583 = vmul.f32 %v1270, %v1270
    %v1584 = vmul.f32 %v1273, %v1273
    %v1585 = vmul.f32 %v1275, %v1275
    %v1586 = vmul.f32 %v1278, %v1278
    %v1587 = vmul.f32 %v1280, %v1280
    %v1588 = vmul.f32 %v1283, %v1283
    %v1589 = vmul.f32 %v1285, %v1285
    %v1590 = vmul.f32 %v1288, %v1288
    %v1591 = vmul.f32 %v1290, %v1290
    %v1592 = vmul.f32 %v1293, %v1293
    %v1593 = vmul.f32 %v1295, %v1295
    %v1594 = vmul.f32 %v1298, %v1298
    %v1595 = vmul.f32 %v1300, %v1300
    %v1596 = vmul.f32 %v1303, %v1303
    %v1597 = vmul.f32 %v1305, %v1305
    %v1598 = vmul.f32 %v1308, %v1308
    %v1599 = vmul.f32 %v1310, %v1310
    %v1600 = vadd.f32 %v1472, %v1536
    %v1601 = vadd.f32 %v1473, %v1537
    %v1602 = vadd.f32 %v1474, %v1538
    %v1603 = vadd.f32 %v1475, %v1539
    %v1604 = vadd.f32 %v1476, %v1540
    %v1605 = vadd.f32 %v1477, %v1541
    %v1606 = vadd.f32 %v1478, %v1542
    %v1607 = vadd.f32 %v1479, %v1543
    %v1608 = vadd.f32 %v1480, %v1544
    %v1609 = vadd.f32 %v1481, %v1545
    %v1610 = vadd.f32 %v1482, %v1546
    %v1611 = vadd.f32 %v1483, %v1547
    %v1612 = vadd.f32 %v1484, %v1548
    %v1613 = vadd.f32 %v1485, %v1549
    %v1614 = vadd.f32 %v1486, %v1550
    %v1615 = vadd.f32 %v1487, %v1551
    %v1616 = vadd.f32 %v1488, %v1552
    %v1617 = vadd.f32 %v1489, %v1553
    %v1618 = vadd.f32 %v1490, %v1554
    %v1619 = vadd.f32 %v1491, %v1555
    %v1620 = vadd.f32 %v1492, %v1556
    %v1621 = vadd.f32 %v1493, %v1557
    %v1622 = vadd.f32 %v1494, %v1558
    %v1623 = vadd.f32 %v1495, %v1559
    %v1624 = vadd.f32 %v1496, %v1560
    %v1625 = vadd.f32 %v1497, %v1561
    %v1626 = vadd.f32 %v1498, %v1562
    %v1627 = vadd.f32 %v1499, %v1563
    %v1628 = vadd.f32 %v1500, %v1564
    %v1629 = vadd.f32 %v1501, %v1565
    %v1630 = vadd.f32 %v1502, %v1566
    %v1631 = vadd.f32 %v1503, %v1567
    %v1632 = vadd.f32 %v1504, %v1568
    %v1633 = vadd.f32 %v1505, %v1569
    %v1634 = vadd.f32 %v1506, %v1570
    %v1635 = vadd.f32 %v1507, %v1571
    %v1636 = vadd.f32 %v1508, %v1572
    %v1637 = vadd.f32 %v1509, %v1573
    %v1638 = vadd.f32 %v1510, %v1574
    %v1639 = vadd.f32 %v1511, %v1575
    %v1640 = vadd.f32 %v1512, %v1576
    %v1641 = vadd.f32 %v1513, %v1577
    %v1642 = vadd.f32 %v1514, %v1578
    %v1643 = vadd.f32 %v1515, %v1579
    %v1644 = vadd.f32 %v1516, %v1580
    %v1645 = vadd.f32 %v1517, %v1581
    %v1646 = vadd.f32 %v1518, %v1582
    %v1647 = vadd.f32 %v1519, %v1583
    %v1648 = vadd.f32 %v1520, %v1584
    %v1649 = vadd.f32 %v1521, %v1585
    %v1650 = vadd.f32 %v1522, %v1586
    %v1651 = vadd.f32 %v1523, %v1587
    %v1652 = vadd.f32 %v1524, %v1588
    %v1653 = vadd.f32 %v1525, %v1589
    %v1654 = vadd.f32 %v1526, %v1590
    %v1655 = vadd.f32 %v1527, %v1591
    %v1656 = vadd.f32 %v1528, %v1592
    %v1657 = vadd.f32 %v1529, %v1593
    %v1658 = vadd.f32 %v1530, %v1594
    %v1659 = vadd.f32 %v1531, %v1595
    %v1660 = vadd.f32 %v1532, %v1596
    %v1661 = vadd.f32 %v1533, %v1597
    %v1662 = vadd.f32 %v1534, %v1598
    %v1663 = vadd.f32 %v1535, %v1599
    %v1664 = vmul.f32 %v1313, %v1313
    %v1665 = vmul.f32 %v1315, %v1315
    %v1666 = vmul.f32 %v1318, %v1318
    %v1667 = vmul.f32 %v1320, %v1320
    %v1668 = vmul.f32 %v1323, %v1323
    %v1669 = vmul.f32 %v1325, %v1325
    %v1670 = vmul.f32 %v1328, %v1328
    %v1671 = vmul.f32 %v1330, %v1330
    %v1672 = vmul.f32 %v1333, %v1333
    %v1673 = vmul.f32 %v1335, %v1335
    %v1674 = vmul.f32 %v1338, %v1338
    %v1675 = vmul.f32 %v1340, %v1340
    %v1676 = vmul.f32 %v1343, %v1343
    %v1677 = vmul.f32 %v1345, %v1345
    %v1678 = vmul.f32 %v1348, %v1348
    %v1679 = vmul.f32 %v1350, %v1350
    %v1680 = vmul.f32 %v1353, %v1353
    %v1681 = vmul.f32 %v1355, %v1355
    %v1682 = vmul.f32 %v1358, %v1358
    %v1683 = vmul.f32 %v1360, %v1360
    %v1684 = vmul.f32 %v1363, %v1363
    %v1685 = vmul.f32 %v1365, %v1365
    %v1686 = vmul.f32 %v1368, %v1368
    %v1687 = vmul.f32 %v1370, %v1370
    %v1688 = vmul.f32 %v1373, %v1373
    %v1689 = vmul.f32 %v1375, %v1375
    %v1690 = vmul.f32 %v1378, %v1378
    %v1691 = vmul.f32 %v1380, %v1380
    %v1692 = vmul.f32 %v1383, %v1383
    %v1693 = vmul.f32 %v1385, %v1385
    %v1694 = vmul.f32 %v1388, %v1388
    %v1695 = vmul.f32 %v1390, %v1390
    %v1696 = vmul.f32 %v1393, %v1393
    %v1697 = vmul.f32 %v1395, %v1395
    %v1698 = vmul.f32 %v1398, %v1398
    %v1699 = vmul.f32 %v1400, %v1400
    %v1700 = vmul.f32 %v1403, %v1403
    %v1701 = vmul.f32 %v1405, %v1405
    %v1702 = vmul.f32 %v1408, %v1408
    %v1703 = vmul.f32 %v1410, %v1410
    %v1704 = vmul.f32 %v1413, %v1413
    %v1705 = vmul.f32 %v1415, %v1415
    %v1706 = vmul.f32 %v1418, %v1418
    %v1707 = vmul.f32 %v1420, %v1420
    %v1708 = vmul.f32 %v1423, %v1423
    %v1709 = vmul.f32 %v1425, %v1425
    %v1710 = vmul.f32 %v1428, %v1428
    %v1711 = vmul.f32 %v1430, %v1430
    %v1712 = vmul.f32 %v1433, %v1433
    %v1713 = vmul.f32 %v1435, %v1435
    %v1714 = vmul.f32 %v1438, %v1438
    %v1715 = vmul.f32 %v1440, %v1440
    %v1716 = vmul.f32 %v1443, %v1443
    %v1717 = vmul.f32 %v1445, %v1445
    %v1718 = vmul.f32 %v1448, %v1448
    %v1719 = vmul.f32 %v1450, %v1450
    %v1720 = vmul.f32 %v1453, %v1453
    %v1721 = vmul.f32 %v1455, %v1455
    %v1722 = vmul.f32 %v1458, %v1458
    %v1723 = vmul.f32 %v1460, %v1460
    %v1724 = vmul.f32 %v1463, %v1463
    %v1725 = vmul.f32 %v1465, %v1465
    %v1726 = vmul.f32 %v1468, %v1468
    %v1727 = vmul.f32 %v1470, %v1470
    %v1728 = vadd.f32 %v1600, %v1664
    %v1729 = vadd.f32 %v1601, %v1665
    %v1730 = vadd.f32 %v1602, %v1666
    %v1731 = vadd.f32 %v1603, %v1667
    %v1732 = vadd.f32 %v1604, %v1668
    %v1733 = vadd.f32 %v1605, %v1669
    %v1734 = vadd.f32 %v1606, %v1670
    %v1735 = vadd.f32 %v1607, %v1671
    %v1736 = vadd.f32 %v1608, %v1672
    %v1737 = vadd.f32 %v1609, %v1673
    %v1738 = vadd.f32 %v1610, %v1674
    %v1739 = vadd.f32 %v1611, %v1675
    %v1740 = vadd.f32 %v1612, %v1676
    %v1741 = vadd.f32 %v1613, %v1677
    %v1742 = vadd.f32 %v1614, %v1678
    %v1743 = vadd.f32 %v1615, %v1679
    %v1744 = vadd.f32 %v1616, %v1680
    %v1745 = vadd.f32 %v1617, %v1681
    %v1746 = vadd.f32 %v1618, %v1682
    %v1747 = vadd.f32 %v1619, %v1683
    %v1748 = vadd.f32 %v1620, %v1684
    %v1749 = vadd.f32 %v1621, %v1685
    %v1750 = vadd.f32 %v1622, %v1686
    %v1751 = vadd.f32 %v1623, %v1687
    %v1752 = vadd.f32 %v1624, %v1688
    %v1753 = vadd.f32 %v1625, %v1689
    %v1754 = vadd.f32 %v1626, %v1690
    %v1755 = vadd.f32 %v1627, %v1691
    %v1756 = vadd.f32 %v1628, %v1692
    %v1757 = vadd.f32 %v1629, %v1693
    %v1758 = vadd.f32 %v1630, %v1694
    %v1759 = vadd.f32 %v1631, %v1695
    %v1760 = vadd.f32 %v1632, %v1696
    %v1761 = vadd.f32 %v1633, %v1697
    %v1762 = vadd.f32 %v1634, %v1698
    %v1763 = vadd.f32 %v1635, %v1699
    %v1764 = vadd.f32 %v1636, %v1700
    %v1765 = vadd.f32 %v1637, %v1701
    %v1766 = vadd.f32 %v1638, %v1702
    %v1767 = vadd.f32 %v1639, %v1703
    %v1768 = vadd.f32 %v1640, %v1704
    %v1769 = vadd.f32 %v1641, %v1705
    %v1770 = vadd.f32 %v1642, %v1706
    %v1771 = vadd.f32 %v1643, %v1707
    %v1772 = vadd.f32 %v1644, %v1708
    %v1773 = vadd.f32 %v1645, %v1709
    %v1774 = vadd.f32 %v1646, %v1710
    %v1775 = vadd.f32 %v1647, %v1711
    %v1776 = vadd.f32 %v1648, %v1712
    %v1777 = vadd.f32 %v1649, %v1713
    %v1778 = vadd.f32 %v1650, %v1714
    %v1779 = vadd.f32 %v1651, %v1715
    %v1780 = vadd.f32 %v1652, %v1716
    %v1781 = vadd.f32 %v1653, %v1717
    %v1782 = vadd.f32 %v1654, %v1718
    %v1783 = vadd.f32 %v1655, %v1719
    %v1784 = vadd.f32 %v1656, %v1720
    %v1785 = vadd.f32 %v1657, %v1721
    %v1786 = vadd.f32 %v1658, %v1722
    %v1787 = vadd.f32 %v1659, %v1723
    %v1788 = vadd.f32 %v1660, %v1724
    %v1789 = vadd.f32 %v1661, %v1725
    %v1790 = vadd.f32 %v1662, %v1726
    %v1791 = vadd.f32 %v1663, %v1727
    %v1792 = vrsqrt.pop %v1728
    %v1793 = vmul.f32 %v1792, %v1728
    %v1794 = vmul.f32 %v1793, %v1792
    %v1795 = vmul.f32 0.5, %v1794
    %v1796 = vsub.f32 1.5, %v1795
    %v1797 = vmul.f32 %v1792, %v1796
    %v1798 = vmul.f32 %v1728, %v1797
    %vm1799 = vcmp.eq.f32.partialorder %v1728, inf
    %v1800 = vsel %vm1799, %v1728, %v1798
    %vm1801 = vcmp.eq.f32.partialorder %v1728, 0.0
    %v1802 = vand.u32 %v1728, 2147483648
    %v1803 = vsel %vm1801, %v1802, %v1800
    %v1804 = vrsqrt.pop %v1729
    %v1805 = vmul.f32 %v1804, %v1729
    %v1806 = vmul.f32 %v1805, %v1804
    %v1807 = vmul.f32 0.5, %v1806
    %v1808 = vsub.f32 1.5, %v1807
    %v1809 = vmul.f32 %v1804, %v1808
    %v1810 = vmul.f32 %v1729, %v1809
    %vm1811 = vcmp.eq.f32.partialorder %v1729, inf
    %v1812 = vsel %vm1811, %v1729, %v1810
    %vm1813 = vcmp.eq.f32.partialorder %v1729, 0.0
    %v1814 = vand.u32 %v1729, 2147483648
    %v1815 = vsel %vm1813, %v1814, %v1812
    %v1816 = vrsqrt.pop %v1730
    %v1817 = vmul.f32 %v1816, %v1730
    %v1818 = vmul.f32 %v1817, %v1816
    %v1819 = vmul.f32 0.5, %v1818
    %v1820 = vsub.f32 1.5, %v1819
    %v1821 = vmul.f32 %v1816, %v1820
    %v1822 = vmul.f32 %v1730, %v1821
    %vm1823 = vcmp.eq.f32.partialorder %v1730, inf
    %v1824 = vsel %vm1823, %v1730, %v1822
    %vm1825 = vcmp.eq.f32.partialorder %v1730, 0.0
    %v1826 = vand.u32 %v1730, 2147483648
    %v1827 = vsel %vm1825, %v1826, %v1824
    %v1828 = vrsqrt.pop %v1731
    %v1829 = vmul.f32 %v1828, %v1731
    %v1830 = vmul.f32 %v1829, %v1828
    %v1831 = vmul.f32 0.5, %v1830
    %v1832 = vsub.f32 1.5, %v1831
    %v1833 = vmul.f32 %v1828, %v1832
    %v1834 = vmul.f32 %v1731, %v1833
    %vm1835 = vcmp.eq.f32.partialorder %v1731, inf
    %v1836 = vsel %vm1835, %v1731, %v1834
    %vm1837 = vcmp.eq.f32.partialorder %v1731, 0.0
    %v1838 = vand.u32 %v1731, 2147483648
    %v1839 = vsel %vm1837, %v1838, %v1836
    %v1840 = vrsqrt.pop %v1732
    %v1841 = vmul.f32 %v1840, %v1732
    %v1842 = vmul.f32 %v1841, %v1840
    %v1843 = vmul.f32 0.5, %v1842
    %v1844 = vsub.f32 1.5, %v1843
    %v1845 = vmul.f32 %v1840, %v1844
    %v1846 = vmul.f32 %v1732, %v1845
    %vm1847 = vcmp.eq.f32.partialorder %v1732, inf
    %v1848 = vsel %vm1847, %v1732, %v1846
    %vm1849 = vcmp.eq.f32.partialorder %v1732, 0.0
    %v1850 = vand.u32 %v1732, 2147483648
    %v1851 = vsel %vm1849, %v1850, %v1848
    %v1852 = vrsqrt.pop %v1733
    %v1853 = vmul.f32 %v1852, %v1733
    %v1854 = vmul.f32 %v1853, %v1852
    %v1855 = vmul.f32 0.5, %v1854
    %v1856 = vsub.f32 1.5, %v1855
    %v1857 = vmul.f32 %v1852, %v1856
    %v1858 = vmul.f32 %v1733, %v1857
    %vm1859 = vcmp.eq.f32.partialorder %v1733, inf
    %v1860 = vsel %vm1859, %v1733, %v1858
    %vm1861 = vcmp.eq.f32.partialorder %v1733, 0.0
    %v1862 = vand.u32 %v1733, 2147483648
    %v1863 = vsel %vm1861, %v1862, %v1860
    %v1864 = vrsqrt.pop %v1734
    %v1865 = vmul.f32 %v1864, %v1734
    %v1866 = vmul.f32 %v1865, %v1864
    %v1867 = vmul.f32 0.5, %v1866
    %v1868 = vsub.f32 1.5, %v1867
    %v1869 = vmul.f32 %v1864, %v1868
    %v1870 = vmul.f32 %v1734, %v1869
    %vm1871 = vcmp.eq.f32.partialorder %v1734, inf
    %v1872 = vsel %vm1871, %v1734, %v1870
    %vm1873 = vcmp.eq.f32.partialorder %v1734, 0.0
    %v1874 = vand.u32 %v1734, 2147483648
    %v1875 = vsel %vm1873, %v1874, %v1872
    %v1876 = vrsqrt.pop %v1735
    %v1877 = vmul.f32 %v1876, %v1735
    %v1878 = vmul.f32 %v1877, %v1876
    %v1879 = vmul.f32 0.5, %v1878
    %v1880 = vsub.f32 1.5, %v1879
    %v1881 = vmul.f32 %v1876, %v1880
    %v1882 = vmul.f32 %v1735, %v1881
    %vm1883 = vcmp.eq.f32.partialorder %v1735, inf
    %v1884 = vsel %vm1883, %v1735, %v1882
    %vm1885 = vcmp.eq.f32.partialorder %v1735, 0.0
    %v1886 = vand.u32 %v1735, 2147483648
    %v1887 = vsel %vm1885, %v1886, %v1884
    %v1888 = vrsqrt.pop %v1736
    %v1889 = vmul.f32 %v1888, %v1736
    %v1890 = vmul.f32 %v1889, %v1888
    %v1891 = vmul.f32 0.5, %v1890
    %v1892 = vsub.f32 1.5, %v1891
    %v1893 = vmul.f32 %v1888, %v1892
    %v1894 = vmul.f32 %v1736, %v1893
    %vm1895 = vcmp.eq.f32.partialorder %v1736, inf
    %v1896 = vsel %vm1895, %v1736, %v1894
    %vm1897 = vcmp.eq.f32.partialorder %v1736, 0.0
    %v1898 = vand.u32 %v1736, 2147483648
    %v1899 = vsel %vm1897, %v1898, %v1896
    %v1900 = vrsqrt.pop %v1737
    %v1901 = vmul.f32 %v1900, %v1737
    %v1902 = vmul.f32 %v1901, %v1900
    %v1903 = vmul.f32 0.5, %v1902
    %v1904 = vsub.f32 1.5, %v1903
    %v1905 = vmul.f32 %v1900, %v1904
    %v1906 = vmul.f32 %v1737, %v1905
    %vm1907 = vcmp.eq.f32.partialorder %v1737, inf
    %v1908 = vsel %vm1907, %v1737, %v1906
    %vm1909 = vcmp.eq.f32.partialorder %v1737, 0.0
    %v1910 = vand.u32 %v1737, 2147483648
    %v1911 = vsel %vm1909, %v1910, %v1908
    %v1912 = vrsqrt.pop %v1738
    %v1913 = vmul.f32 %v1912, %v1738
    %v1914 = vmul.f32 %v1913, %v1912
    %v1915 = vmul.f32 0.5, %v1914
    %v1916 = vsub.f32 1.5, %v1915
    %v1917 = vmul.f32 %v1912, %v1916
    %v1918 = vmul.f32 %v1738, %v1917
    %vm1919 = vcmp.eq.f32.partialorder %v1738, inf
    %v1920 = vsel %vm1919, %v1738, %v1918
    %vm1921 = vcmp.eq.f32.partialorder %v1738, 0.0
    %v1922 = vand.u32 %v1738, 2147483648
    %v1923 = vsel %vm1921, %v1922, %v1920
    %v1924 = vrsqrt.pop %v1739
    %v1925 = vmul.f32 %v1924, %v1739
    %v1926 = vmul.f32 %v1925, %v1924
    %v1927 = vmul.f32 0.5, %v1926
    %v1928 = vsub.f32 1.5, %v1927
    %v1929 = vmul.f32 %v1924, %v1928
    %v1930 = vmul.f32 %v1739, %v1929
    %vm1931 = vcmp.eq.f32.partialorder %v1739, inf
    %v1932 = vsel %vm1931, %v1739, %v1930
    %vm1933 = vcmp.eq.f32.partialorder %v1739, 0.0
    %v1934 = vand.u32 %v1739, 2147483648
    %v1935 = vsel %vm1933, %v1934, %v1932
    %v1936 = vrsqrt.pop %v1740
    %v1937 = vmul.f32 %v1936, %v1740
    %v1938 = vmul.f32 %v1937, %v1936
    %v1939 = vmul.f32 0.5, %v1938
    %v1940 = vsub.f32 1.5, %v1939
    %v1941 = vmul.f32 %v1936, %v1940
    %v1942 = vmul.f32 %v1740, %v1941
    %vm1943 = vcmp.eq.f32.partialorder %v1740, inf
    %v1944 = vsel %vm1943, %v1740, %v1942
    %vm1945 = vcmp.eq.f32.partialorder %v1740, 0.0
    %v1946 = vand.u32 %v1740, 2147483648
    %v1947 = vsel %vm1945, %v1946, %v1944
    %v1948 = vrsqrt.pop %v1741
    %v1949 = vmul.f32 %v1948, %v1741
    %v1950 = vmul.f32 %v1949, %v1948
    %v1951 = vmul.f32 0.5, %v1950
    %v1952 = vsub.f32 1.5, %v1951
    %v1953 = vmul.f32 %v1948, %v1952
    %v1954 = vmul.f32 %v1741, %v1953
    %vm1955 = vcmp.eq.f32.partialorder %v1741, inf
    %v1956 = vsel %vm1955, %v1741, %v1954
    %vm1957 = vcmp.eq.f32.partialorder %v1741, 0.0
    %v1958 = vand.u32 %v1741, 2147483648
    %v1959 = vsel %vm1957, %v1958, %v1956
    %v1960 = vrsqrt.pop %v1742
    %v1961 = vmul.f32 %v1960, %v1742
    %v1962 = vmul.f32 %v1961, %v1960
    %v1963 = vmul.f32 0.5, %v1962
    %v1964 = vsub.f32 1.5, %v1963
    %v1965 = vmul.f32 %v1960, %v1964
    %v1966 = vmul.f32 %v1742, %v1965
    %vm1967 = vcmp.eq.f32.partialorder %v1742, inf
    %v1968 = vsel %vm1967, %v1742, %v1966
    %vm1969 = vcmp.eq.f32.partialorder %v1742, 0.0
    %v1970 = vand.u32 %v1742, 2147483648
    %v1971 = vsel %vm1969, %v1970, %v1968
    %v1972 = vrsqrt.pop %v1743
    %v1973 = vmul.f32 %v1972, %v1743
    %v1974 = vmul.f32 %v1973, %v1972
    %v1975 = vmul.f32 0.5, %v1974
    %v1976 = vsub.f32 1.5, %v1975
    %v1977 = vmul.f32 %v1972, %v1976
    %v1978 = vmul.f32 %v1743, %v1977
    %vm1979 = vcmp.eq.f32.partialorder %v1743, inf
    %v1980 = vsel %vm1979, %v1743, %v1978
    %vm1981 = vcmp.eq.f32.partialorder %v1743, 0.0
    %v1982 = vand.u32 %v1743, 2147483648
    %v1983 = vsel %vm1981, %v1982, %v1980
    %v1984 = vrsqrt.pop %v1744
    %v1985 = vmul.f32 %v1984, %v1744
    %v1986 = vmul.f32 %v1985, %v1984
    %v1987 = vmul.f32 0.5, %v1986
    %v1988 = vsub.f32 1.5, %v1987
    %v1989 = vmul.f32 %v1984, %v1988
    %v1990 = vmul.f32 %v1744, %v1989
    %vm1991 = vcmp.eq.f32.partialorder %v1744, inf
    %v1992 = vsel %vm1991, %v1744, %v1990
    %vm1993 = vcmp.eq.f32.partialorder %v1744, 0.0
    %v1994 = vand.u32 %v1744, 2147483648
    %v1995 = vsel %vm1993, %v1994, %v1992
    %v1996 = vrsqrt.pop %v1745
    %v1997 = vmul.f32 %v1996, %v1745
    %v1998 = vmul.f32 %v1997, %v1996
    %v1999 = vmul.f32 0.5, %v1998
    %v2000 = vsub.f32 1.5, %v1999
    %v2001 = vmul.f32 %v1996, %v2000
    %v2002 = vmul.f32 %v1745, %v2001
    %vm2003 = vcmp.eq.f32.partialorder %v1745, inf
    %v2004 = vsel %vm2003, %v1745, %v2002
    %vm2005 = vcmp.eq.f32.partialorder %v1745, 0.0
    %v2006 = vand.u32 %v1745, 2147483648
    %v2007 = vsel %vm2005, %v2006, %v2004
    %v2008 = vrsqrt.pop %v1746
    %v2009 = vmul.f32 %v2008, %v1746
    %v2010 = vmul.f32 %v2009, %v2008
    %v2011 = vmul.f32 0.5, %v2010
    %v2012 = vsub.f32 1.5, %v2011
    %v2013 = vmul.f32 %v2008, %v2012
    %v2014 = vmul.f32 %v1746, %v2013
    %vm2015 = vcmp.eq.f32.partialorder %v1746, inf
    %v2016 = vsel %vm2015, %v1746, %v2014
    %vm2017 = vcmp.eq.f32.partialorder %v1746, 0.0
    %v2018 = vand.u32 %v1746, 2147483648
    %v2019 = vsel %vm2017, %v2018, %v2016
    %v2020 = vrsqrt.pop %v1747
    %v2021 = vmul.f32 %v2020, %v1747
    %v2022 = vmul.f32 %v2021, %v2020
    %v2023 = vmul.f32 0.5, %v2022
    %v2024 = vsub.f32 1.5, %v2023
    %v2025 = vmul.f32 %v2020, %v2024
    %v2026 = vmul.f32 %v1747, %v2025
    %vm2027 = vcmp.eq.f32.partialorder %v1747, inf
    %v2028 = vsel %vm2027, %v1747, %v2026
    %vm2029 = vcmp.eq.f32.partialorder %v1747, 0.0
    %v2030 = vand.u32 %v1747, 2147483648
    %v2031 = vsel %vm2029, %v2030, %v2028
    %v2032 = vrsqrt.pop %v1748
    %v2033 = vmul.f32 %v2032, %v1748
    %v2034 = vmul.f32 %v2033, %v2032
    %v2035 = vmul.f32 0.5, %v2034
    %v2036 = vsub.f32 1.5, %v2035
    %v2037 = vmul.f32 %v2032, %v2036
    %v2038 = vmul.f32 %v1748, %v2037
    %vm2039 = vcmp.eq.f32.partialorder %v1748, inf
    %v2040 = vsel %vm2039, %v1748, %v2038
    %vm2041 = vcmp.eq.f32.partialorder %v1748, 0.0
    %v2042 = vand.u32 %v1748, 2147483648
    %v2043 = vsel %vm2041, %v2042, %v2040
    %v2044 = vrsqrt.pop %v1749
    %v2045 = vmul.f32 %v2044, %v1749
    %v2046 = vmul.f32 %v2045, %v2044
    %v2047 = vmul.f32 0.5, %v2046
    %v2048 = vsub.f32 1.5, %v2047
    %v2049 = vmul.f32 %v2044, %v2048
    %v2050 = vmul.f32 %v1749, %v2049
    %vm2051 = vcmp.eq.f32.partialorder %v1749, inf
    %v2052 = vsel %vm2051, %v1749, %v2050
    %vm2053 = vcmp.eq.f32.partialorder %v1749, 0.0
    %v2054 = vand.u32 %v1749, 2147483648
    %v2055 = vsel %vm2053, %v2054, %v2052
    %v2056 = vrsqrt.pop %v1750
    %v2057 = vmul.f32 %v2056, %v1750
    %v2058 = vmul.f32 %v2057, %v2056
    %v2059 = vmul.f32 0.5, %v2058
    %v2060 = vsub.f32 1.5, %v2059
    %v2061 = vmul.f32 %v2056, %v2060
    %v2062 = vmul.f32 %v1750, %v2061
    %vm2063 = vcmp.eq.f32.partialorder %v1750, inf
    %v2064 = vsel %vm2063, %v1750, %v2062
    %vm2065 = vcmp.eq.f32.partialorder %v1750, 0.0
    %v2066 = vand.u32 %v1750, 2147483648
    %v2067 = vsel %vm2065, %v2066, %v2064
    %v2068 = vrsqrt.pop %v1751
    %v2069 = vmul.f32 %v2068, %v1751
    %v2070 = vmul.f32 %v2069, %v2068
    %v2071 = vmul.f32 0.5, %v2070
    %v2072 = vsub.f32 1.5, %v2071
    %v2073 = vmul.f32 %v2068, %v2072
    %v2074 = vmul.f32 %v1751, %v2073
    %vm2075 = vcmp.eq.f32.partialorder %v1751, inf
    %v2076 = vsel %vm2075, %v1751, %v2074
    %vm2077 = vcmp.eq.f32.partialorder %v1751, 0.0
    %v2078 = vand.u32 %v1751, 2147483648
    %v2079 = vsel %vm2077, %v2078, %v2076
    %v2080 = vrsqrt.pop %v1752
    %v2081 = vmul.f32 %v2080, %v1752
    %v2082 = vmul.f32 %v2081, %v2080
    %v2083 = vmul.f32 0.5, %v2082
    %v2084 = vsub.f32 1.5, %v2083
    %v2085 = vmul.f32 %v2080, %v2084
    %v2086 = vmul.f32 %v1752, %v2085
    %vm2087 = vcmp.eq.f32.partialorder %v1752, inf
    %v2088 = vsel %vm2087, %v1752, %v2086
    %vm2089 = vcmp.eq.f32.partialorder %v1752, 0.0
    %v2090 = vand.u32 %v1752, 2147483648
    %v2091 = vsel %vm2089, %v2090, %v2088
    %v2092 = vrsqrt.pop %v1753
    %v2093 = vmul.f32 %v2092, %v1753
    %v2094 = vmul.f32 %v2093, %v2092
    %v2095 = vmul.f32 0.5, %v2094
    %v2096 = vsub.f32 1.5, %v2095
    %v2097 = vmul.f32 %v2092, %v2096
    %v2098 = vmul.f32 %v1753, %v2097
    %vm2099 = vcmp.eq.f32.partialorder %v1753, inf
    %v2100 = vsel %vm2099, %v1753, %v2098
    %vm2101 = vcmp.eq.f32.partialorder %v1753, 0.0
    %v2102 = vand.u32 %v1753, 2147483648
    %v2103 = vsel %vm2101, %v2102, %v2100
    %v2104 = vrsqrt.pop %v1754
    %v2105 = vmul.f32 %v2104, %v1754
    %v2106 = vmul.f32 %v2105, %v2104
    %v2107 = vmul.f32 0.5, %v2106
    %v2108 = vsub.f32 1.5, %v2107
    %v2109 = vmul.f32 %v2104, %v2108
    %v2110 = vmul.f32 %v1754, %v2109
    %vm2111 = vcmp.eq.f32.partialorder %v1754, inf
    %v2112 = vsel %vm2111, %v1754, %v2110
    %vm2113 = vcmp.eq.f32.partialorder %v1754, 0.0
    %v2114 = vand.u32 %v1754, 2147483648
    %v2115 = vsel %vm2113, %v2114, %v2112
    %v2116 = vrsqrt.pop %v1755
    %v2117 = vmul.f32 %v2116, %v1755
    %v2118 = vmul.f32 %v2117, %v2116
    %v2119 = vmul.f32 0.5, %v2118
    %v2120 = vsub.f32 1.5, %v2119
    %v2121 = vmul.f32 %v2116, %v2120
    %v2122 = vmul.f32 %v1755, %v2121
    %vm2123 = vcmp.eq.f32.partialorder %v1755, inf
    %v2124 = vsel %vm2123, %v1755, %v2122
    %vm2125 = vcmp.eq.f32.partialorder %v1755, 0.0
    %v2126 = vand.u32 %v1755, 2147483648
    %v2127 = vsel %vm2125, %v2126, %v2124
    %v2128 = vrsqrt.pop %v1756
    %v2129 = vmul.f32 %v2128, %v1756
    %v2130 = vmul.f32 %v2129, %v2128
    %v2131 = vmul.f32 0.5, %v2130
    %v2132 = vsub.f32 1.5, %v2131
    %v2133 = vmul.f32 %v2128, %v2132
    %v2134 = vmul.f32 %v1756, %v2133
    %vm2135 = vcmp.eq.f32.partialorder %v1756, inf
    %v2136 = vsel %vm2135, %v1756, %v2134
    %vm2137 = vcmp.eq.f32.partialorder %v1756, 0.0
    %v2138 = vand.u32 %v1756, 2147483648
    %v2139 = vsel %vm2137, %v2138, %v2136
    %v2140 = vrsqrt.pop %v1757
    %v2141 = vmul.f32 %v2140, %v1757
    %v2142 = vmul.f32 %v2141, %v2140
    %v2143 = vmul.f32 0.5, %v2142
    %v2144 = vsub.f32 1.5, %v2143
    %v2145 = vmul.f32 %v2140, %v2144
    %v2146 = vmul.f32 %v1757, %v2145
    %vm2147 = vcmp.eq.f32.partialorder %v1757, inf
    %v2148 = vsel %vm2147, %v1757, %v2146
    %vm2149 = vcmp.eq.f32.partialorder %v1757, 0.0
    %v2150 = vand.u32 %v1757, 2147483648
    %v2151 = vsel %vm2149, %v2150, %v2148
    %v2152 = vrsqrt.pop %v1758
    %v2153 = vmul.f32 %v2152, %v1758
    %v2154 = vmul.f32 %v2153, %v2152
    %v2155 = vmul.f32 0.5, %v2154
    %v2156 = vsub.f32 1.5, %v2155
    %v2157 = vmul.f32 %v2152, %v2156
    %v2158 = vmul.f32 %v1758, %v2157
    %vm2159 = vcmp.eq.f32.partialorder %v1758, inf
    %v2160 = vsel %vm2159, %v1758, %v2158
    %vm2161 = vcmp.eq.f32.partialorder %v1758, 0.0
    %v2162 = vand.u32 %v1758, 2147483648
    %v2163 = vsel %vm2161, %v2162, %v2160
    %v2164 = vrsqrt.pop %v1759
    %v2165 = vmul.f32 %v2164, %v1759
    %v2166 = vmul.f32 %v2165, %v2164
    %v2167 = vmul.f32 0.5, %v2166
    %v2168 = vsub.f32 1.5, %v2167
    %v2169 = vmul.f32 %v2164, %v2168
    %v2170 = vmul.f32 %v1759, %v2169
    %vm2171 = vcmp.eq.f32.partialorder %v1759, inf
    %v2172 = vsel %vm2171, %v1759, %v2170
    %vm2173 = vcmp.eq.f32.partialorder %v1759, 0.0
    %v2174 = vand.u32 %v1759, 2147483648
    %v2175 = vsel %vm2173, %v2174, %v2172
    %v2176 = vrsqrt.pop %v1760
    %v2177 = vmul.f32 %v2176, %v1760
    %v2178 = vmul.f32 %v2177, %v2176
    %v2179 = vmul.f32 0.5, %v2178
    %v2180 = vsub.f32 1.5, %v2179
    %v2181 = vmul.f32 %v2176, %v2180
    %v2182 = vmul.f32 %v1760, %v2181
    %vm2183 = vcmp.eq.f32.partialorder %v1760, inf
    %v2184 = vsel %vm2183, %v1760, %v2182
    %vm2185 = vcmp.eq.f32.partialorder %v1760, 0.0
    %v2186 = vand.u32 %v1760, 2147483648
    %v2187 = vsel %vm2185, %v2186, %v2184
    %v2188 = vrsqrt.pop %v1761
    %v2189 = vmul.f32 %v2188, %v1761
    %v2190 = vmul.f32 %v2189, %v2188
    %v2191 = vmul.f32 0.5, %v2190
    %v2192 = vsub.f32 1.5, %v2191
    %v2193 = vmul.f32 %v2188, %v2192
    %v2194 = vmul.f32 %v1761, %v2193
    %vm2195 = vcmp.eq.f32.partialorder %v1761, inf
    %v2196 = vsel %vm2195, %v1761, %v2194
    %vm2197 = vcmp.eq.f32.partialorder %v1761, 0.0
    %v2198 = vand.u32 %v1761, 2147483648
    %v2199 = vsel %vm2197, %v2198, %v2196
    %v2200 = vrsqrt.pop %v1762
    %v2201 = vmul.f32 %v2200, %v1762
    %v2202 = vmul.f32 %v2201, %v2200
    %v2203 = vmul.f32 0.5, %v2202
    %v2204 = vsub.f32 1.5, %v2203
    %v2205 = vmul.f32 %v2200, %v2204
    %v2206 = vmul.f32 %v1762, %v2205
    %vm2207 = vcmp.eq.f32.partialorder %v1762, inf
    %v2208 = vsel %vm2207, %v1762, %v2206
    %vm2209 = vcmp.eq.f32.partialorder %v1762, 0.0
    %v2210 = vand.u32 %v1762, 2147483648
    %v2211 = vsel %vm2209, %v2210, %v2208
    %v2212 = vrsqrt.pop %v1763
    %v2213 = vmul.f32 %v2212, %v1763
    %v2214 = vmul.f32 %v2213, %v2212
    %v2215 = vmul.f32 0.5, %v2214
    %v2216 = vsub.f32 1.5, %v2215
    %v2217 = vmul.f32 %v2212, %v2216
    %v2218 = vmul.f32 %v1763, %v2217
    %vm2219 = vcmp.eq.f32.partialorder %v1763, inf
    %v2220 = vsel %vm2219, %v1763, %v2218
    %vm2221 = vcmp.eq.f32.partialorder %v1763, 0.0
    %v2222 = vand.u32 %v1763, 2147483648
    %v2223 = vsel %vm2221, %v2222, %v2220
    %v2224 = vrsqrt.pop %v1764
    %v2225 = vmul.f32 %v2224, %v1764
    %v2226 = vmul.f32 %v2225, %v2224
    %v2227 = vmul.f32 0.5, %v2226
    %v2228 = vsub.f32 1.5, %v2227
    %v2229 = vmul.f32 %v2224, %v2228
    %v2230 = vmul.f32 %v1764, %v2229
    %vm2231 = vcmp.eq.f32.partialorder %v1764, inf
    %v2232 = vsel %vm2231, %v1764, %v2230
    %vm2233 = vcmp.eq.f32.partialorder %v1764, 0.0
    %v2234 = vand.u32 %v1764, 2147483648
    %v2235 = vsel %vm2233, %v2234, %v2232
    %v2236 = vrsqrt.pop %v1765
    %v2237 = vmul.f32 %v2236, %v1765
    %v2238 = vmul.f32 %v2237, %v2236
    %v2239 = vmul.f32 0.5, %v2238
    %v2240 = vsub.f32 1.5, %v2239
    %v2241 = vmul.f32 %v2236, %v2240
    %v2242 = vmul.f32 %v1765, %v2241
    %vm2243 = vcmp.eq.f32.partialorder %v1765, inf
    %v2244 = vsel %vm2243, %v1765, %v2242
    %vm2245 = vcmp.eq.f32.partialorder %v1765, 0.0
    %v2246 = vand.u32 %v1765, 2147483648
    %v2247 = vsel %vm2245, %v2246, %v2244
    %v2248 = vrsqrt.pop %v1766
    %v2249 = vmul.f32 %v2248, %v1766
    %v2250 = vmul.f32 %v2249, %v2248
    %v2251 = vmul.f32 0.5, %v2250
    %v2252 = vsub.f32 1.5, %v2251
    %v2253 = vmul.f32 %v2248, %v2252
    %v2254 = vmul.f32 %v1766, %v2253
    %vm2255 = vcmp.eq.f32.partialorder %v1766, inf
    %v2256 = vsel %vm2255, %v1766, %v2254
    %vm2257 = vcmp.eq.f32.partialorder %v1766, 0.0
    %v2258 = vand.u32 %v1766, 2147483648
    %v2259 = vsel %vm2257, %v2258, %v2256
    %v2260 = vrsqrt.pop %v1767
    %v2261 = vmul.f32 %v2260, %v1767
    %v2262 = vmul.f32 %v2261, %v2260
    %v2263 = vmul.f32 0.5, %v2262
    %v2264 = vsub.f32 1.5, %v2263
    %v2265 = vmul.f32 %v2260, %v2264
    %v2266 = vmul.f32 %v1767, %v2265
    %vm2267 = vcmp.eq.f32.partialorder %v1767, inf
    %v2268 = vsel %vm2267, %v1767, %v2266
    %vm2269 = vcmp.eq.f32.partialorder %v1767, 0.0
    %v2270 = vand.u32 %v1767, 2147483648
    %v2271 = vsel %vm2269, %v2270, %v2268
    %v2272 = vrsqrt.pop %v1768
    %v2273 = vmul.f32 %v2272, %v1768
    %v2274 = vmul.f32 %v2273, %v2272
    %v2275 = vmul.f32 0.5, %v2274
    %v2276 = vsub.f32 1.5, %v2275
    %v2277 = vmul.f32 %v2272, %v2276
    %v2278 = vmul.f32 %v1768, %v2277
    %vm2279 = vcmp.eq.f32.partialorder %v1768, inf
    %v2280 = vsel %vm2279, %v1768, %v2278
    %vm2281 = vcmp.eq.f32.partialorder %v1768, 0.0
    %v2282 = vand.u32 %v1768, 2147483648
    %v2283 = vsel %vm2281, %v2282, %v2280
    %v2284 = vrsqrt.pop %v1769
    %v2285 = vmul.f32 %v2284, %v1769
    %v2286 = vmul.f32 %v2285, %v2284
    %v2287 = vmul.f32 0.5, %v2286
    %v2288 = vsub.f32 1.5, %v2287
    %v2289 = vmul.f32 %v2284, %v2288
    %v2290 = vmul.f32 %v1769, %v2289
    %vm2291 = vcmp.eq.f32.partialorder %v1769, inf
    %v2292 = vsel %vm2291, %v1769, %v2290
    %vm2293 = vcmp.eq.f32.partialorder %v1769, 0.0
    %v2294 = vand.u32 %v1769, 2147483648
    %v2295 = vsel %vm2293, %v2294, %v2292
    %v2296 = vrsqrt.pop %v1770
    %v2297 = vmul.f32 %v2296, %v1770
    %v2298 = vmul.f32 %v2297, %v2296
    %v2299 = vmul.f32 0.5, %v2298
    %v2300 = vsub.f32 1.5, %v2299
    %v2301 = vmul.f32 %v2296, %v2300
    %v2302 = vmul.f32 %v1770, %v2301
    %vm2303 = vcmp.eq.f32.partialorder %v1770, inf
    %v2304 = vsel %vm2303, %v1770, %v2302
    %vm2305 = vcmp.eq.f32.partialorder %v1770, 0.0
    %v2306 = vand.u32 %v1770, 2147483648
    %v2307 = vsel %vm2305, %v2306, %v2304
    %v2308 = vrsqrt.pop %v1771
    %v2309 = vmul.f32 %v2308, %v1771
    %v2310 = vmul.f32 %v2309, %v2308
    %v2311 = vmul.f32 0.5, %v2310
    %v2312 = vsub.f32 1.5, %v2311
    %v2313 = vmul.f32 %v2308, %v2312
    %v2314 = vmul.f32 %v1771, %v2313
    %vm2315 = vcmp.eq.f32.partialorder %v1771, inf
    %v2316 = vsel %vm2315, %v1771, %v2314
    %vm2317 = vcmp.eq.f32.partialorder %v1771, 0.0
    %v2318 = vand.u32 %v1771, 2147483648
    %v2319 = vsel %vm2317, %v2318, %v2316
    %v2320 = vrsqrt.pop %v1772
    %v2321 = vmul.f32 %v2320, %v1772
    %v2322 = vmul.f32 %v2321, %v2320
    %v2323 = vmul.f32 0.5, %v2322
    %v2324 = vsub.f32 1.5, %v2323
    %v2325 = vmul.f32 %v2320, %v2324
    %v2326 = vmul.f32 %v1772, %v2325
    %vm2327 = vcmp.eq.f32.partialorder %v1772, inf
    %v2328 = vsel %vm2327, %v1772, %v2326
    %vm2329 = vcmp.eq.f32.partialorder %v1772, 0.0
    %v2330 = vand.u32 %v1772, 2147483648
    %v2331 = vsel %vm2329, %v2330, %v2328
    %v2332 = vrsqrt.pop %v1773
    %v2333 = vmul.f32 %v2332, %v1773
    %v2334 = vmul.f32 %v2333, %v2332
    %v2335 = vmul.f32 0.5, %v2334
    %v2336 = vsub.f32 1.5, %v2335
    %v2337 = vmul.f32 %v2332, %v2336
    %v2338 = vmul.f32 %v1773, %v2337
    %vm2339 = vcmp.eq.f32.partialorder %v1773, inf
    %v2340 = vsel %vm2339, %v1773, %v2338
    %vm2341 = vcmp.eq.f32.partialorder %v1773, 0.0
    %v2342 = vand.u32 %v1773, 2147483648
    %v2343 = vsel %vm2341, %v2342, %v2340
    %v2344 = vrsqrt.pop %v1774
    %v2345 = vmul.f32 %v2344, %v1774
    %v2346 = vmul.f32 %v2345, %v2344
    %v2347 = vmul.f32 0.5, %v2346
    %v2348 = vsub.f32 1.5, %v2347
    %v2349 = vmul.f32 %v2344, %v2348
    %v2350 = vmul.f32 %v1774, %v2349
    %vm2351 = vcmp.eq.f32.partialorder %v1774, inf
    %v2352 = vsel %vm2351, %v1774, %v2350
    %vm2353 = vcmp.eq.f32.partialorder %v1774, 0.0
    %v2354 = vand.u32 %v1774, 2147483648
    %v2355 = vsel %vm2353, %v2354, %v2352
    %v2356 = vrsqrt.pop %v1775
    %v2357 = vmul.f32 %v2356, %v1775
    %v2358 = vmul.f32 %v2357, %v2356
    %v2359 = vmul.f32 0.5, %v2358
    %v2360 = vsub.f32 1.5, %v2359
    %v2361 = vmul.f32 %v2356, %v2360
    %v2362 = vmul.f32 %v1775, %v2361
    %vm2363 = vcmp.eq.f32.partialorder %v1775, inf
    %v2364 = vsel %vm2363, %v1775, %v2362
    %vm2365 = vcmp.eq.f32.partialorder %v1775, 0.0
    %v2366 = vand.u32 %v1775, 2147483648
    %v2367 = vsel %vm2365, %v2366, %v2364
    %v2368 = vrsqrt.pop %v1776
    %v2369 = vmul.f32 %v2368, %v1776
    %v2370 = vmul.f32 %v2369, %v2368
    %v2371 = vmul.f32 0.5, %v2370
    %v2372 = vsub.f32 1.5, %v2371
    %v2373 = vmul.f32 %v2368, %v2372
    %v2374 = vmul.f32 %v1776, %v2373
    %vm2375 = vcmp.eq.f32.partialorder %v1776, inf
    %v2376 = vsel %vm2375, %v1776, %v2374
    %vm2377 = vcmp.eq.f32.partialorder %v1776, 0.0
    %v2378 = vand.u32 %v1776, 2147483648
    %v2379 = vsel %vm2377, %v2378, %v2376
    %v2380 = vrsqrt.pop %v1777
    %v2381 = vmul.f32 %v2380, %v1777
    %v2382 = vmul.f32 %v2381, %v2380
    %v2383 = vmul.f32 0.5, %v2382
    %v2384 = vsub.f32 1.5, %v2383
    %v2385 = vmul.f32 %v2380, %v2384
    %v2386 = vmul.f32 %v1777, %v2385
    %vm2387 = vcmp.eq.f32.partialorder %v1777, inf
    %v2388 = vsel %vm2387, %v1777, %v2386
    %vm2389 = vcmp.eq.f32.partialorder %v1777, 0.0
    %v2390 = vand.u32 %v1777, 2147483648
    %v2391 = vsel %vm2389, %v2390, %v2388
    %v2392 = vrsqrt.pop %v1778
    %v2393 = vmul.f32 %v2392, %v1778
    %v2394 = vmul.f32 %v2393, %v2392
    %v2395 = vmul.f32 0.5, %v2394
    %v2396 = vsub.f32 1.5, %v2395
    %v2397 = vmul.f32 %v2392, %v2396
    %v2398 = vmul.f32 %v1778, %v2397
    %vm2399 = vcmp.eq.f32.partialorder %v1778, inf
    %v2400 = vsel %vm2399, %v1778, %v2398
    %vm2401 = vcmp.eq.f32.partialorder %v1778, 0.0
    %v2402 = vand.u32 %v1778, 2147483648
    %v2403 = vsel %vm2401, %v2402, %v2400
    %v2404 = vrsqrt.pop %v1779
    %v2405 = vmul.f32 %v2404, %v1779
    %v2406 = vmul.f32 %v2405, %v2404
    %v2407 = vmul.f32 0.5, %v2406
    %v2408 = vsub.f32 1.5, %v2407
    %v2409 = vmul.f32 %v2404, %v2408
    %v2410 = vmul.f32 %v1779, %v2409
    %vm2411 = vcmp.eq.f32.partialorder %v1779, inf
    %v2412 = vsel %vm2411, %v1779, %v2410
    %vm2413 = vcmp.eq.f32.partialorder %v1779, 0.0
    %v2414 = vand.u32 %v1779, 2147483648
    %v2415 = vsel %vm2413, %v2414, %v2412
    %v2416 = vrsqrt.pop %v1780
    %v2417 = vmul.f32 %v2416, %v1780
    %v2418 = vmul.f32 %v2417, %v2416
    %v2419 = vmul.f32 0.5, %v2418
    %v2420 = vsub.f32 1.5, %v2419
    %v2421 = vmul.f32 %v2416, %v2420
    %v2422 = vmul.f32 %v1780, %v2421
    %vm2423 = vcmp.eq.f32.partialorder %v1780, inf
    %v2424 = vsel %vm2423, %v1780, %v2422
    %vm2425 = vcmp.eq.f32.partialorder %v1780, 0.0
    %v2426 = vand.u32 %v1780, 2147483648
    %v2427 = vsel %vm2425, %v2426, %v2424
    %v2428 = vrsqrt.pop %v1781
    %v2429 = vmul.f32 %v2428, %v1781
    %v2430 = vmul.f32 %v2429, %v2428
    %v2431 = vmul.f32 0.5, %v2430
    %v2432 = vsub.f32 1.5, %v2431
    %v2433 = vmul.f32 %v2428, %v2432
    %v2434 = vmul.f32 %v1781, %v2433
    %vm2435 = vcmp.eq.f32.partialorder %v1781, inf
    %v2436 = vsel %vm2435, %v1781, %v2434
    %vm2437 = vcmp.eq.f32.partialorder %v1781, 0.0
    %v2438 = vand.u32 %v1781, 2147483648
    %v2439 = vsel %vm2437, %v2438, %v2436
    %v2440 = vrsqrt.pop %v1782
    %v2441 = vmul.f32 %v2440, %v1782
    %v2442 = vmul.f32 %v2441, %v2440
    %v2443 = vmul.f32 0.5, %v2442
    %v2444 = vsub.f32 1.5, %v2443
    %v2445 = vmul.f32 %v2440, %v2444
    %v2446 = vmul.f32 %v1782, %v2445
    %vm2447 = vcmp.eq.f32.partialorder %v1782, inf
    %v2448 = vsel %vm2447, %v1782, %v2446
    %vm2449 = vcmp.eq.f32.partialorder %v1782, 0.0
    %v2450 = vand.u32 %v1782, 2147483648
    %v2451 = vsel %vm2449, %v2450, %v2448
    %v2452 = vrsqrt.pop %v1783
    %v2453 = vmul.f32 %v2452, %v1783
    %v2454 = vmul.f32 %v2453, %v2452
    %v2455 = vmul.f32 0.5, %v2454
    %v2456 = vsub.f32 1.5, %v2455
    %v2457 = vmul.f32 %v2452, %v2456
    %v2458 = vmul.f32 %v1783, %v2457
    %vm2459 = vcmp.eq.f32.partialorder %v1783, inf
    %v2460 = vsel %vm2459, %v1783, %v2458
    %vm2461 = vcmp.eq.f32.partialorder %v1783, 0.0
    %v2462 = vand.u32 %v1783, 2147483648
    %v2463 = vsel %vm2461, %v2462, %v2460
    %v2464 = vrsqrt.pop %v1784
    %v2465 = vmul.f32 %v2464, %v1784
    %v2466 = vmul.f32 %v2465, %v2464
    %v2467 = vmul.f32 0.5, %v2466
    %v2468 = vsub.f32 1.5, %v2467
    %v2469 = vmul.f32 %v2464, %v2468
    %v2470 = vmul.f32 %v1784, %v2469
    %vm2471 = vcmp.eq.f32.partialorder %v1784, inf
    %v2472 = vsel %vm2471, %v1784, %v2470
    %vm2473 = vcmp.eq.f32.partialorder %v1784, 0.0
    %v2474 = vand.u32 %v1784, 2147483648
    %v2475 = vsel %vm2473, %v2474, %v2472
    %v2476 = vrsqrt.pop %v1785
    %v2477 = vmul.f32 %v2476, %v1785
    %v2478 = vmul.f32 %v2477, %v2476
    %v2479 = vmul.f32 0.5, %v2478
    %v2480 = vsub.f32 1.5, %v2479
    %v2481 = vmul.f32 %v2476, %v2480
    %v2482 = vmul.f32 %v1785, %v2481
    %vm2483 = vcmp.eq.f32.partialorder %v1785, inf
    %v2484 = vsel %vm2483, %v1785, %v2482
    %vm2485 = vcmp.eq.f32.partialorder %v1785, 0.0
    %v2486 = vand.u32 %v1785, 2147483648
    %v2487 = vsel %vm2485, %v2486, %v2484
    %v2488 = vrsqrt.pop %v1786
    %v2489 = vmul.f32 %v2488, %v1786
    %v2490 = vmul.f32 %v2489, %v2488
    %v2491 = vmul.f32 0.5, %v2490
    %v2492 = vsub.f32 1.5, %v2491
    %v2493 = vmul.f32 %v2488, %v2492
    %v2494 = vmul.f32 %v1786, %v2493
    %vm2495 = vcmp.eq.f32.partialorder %v1786, inf
    %v2496 = vsel %vm2495, %v1786, %v2494
    %vm2497 = vcmp.eq.f32.partialorder %v1786, 0.0
    %v2498 = vand.u32 %v1786, 2147483648
    %v2499 = vsel %vm2497, %v2498, %v2496
    %v2500 = vrsqrt.pop %v1787
    %v2501 = vmul.f32 %v2500, %v1787
    %v2502 = vmul.f32 %v2501, %v2500
    %v2503 = vmul.f32 0.5, %v2502
    %v2504 = vsub.f32 1.5, %v2503
    %v2505 = vmul.f32 %v2500, %v2504
    %v2506 = vmul.f32 %v1787, %v2505
    %vm2507 = vcmp.eq.f32.partialorder %v1787, inf
    %v2508 = vsel %vm2507, %v1787, %v2506
    %vm2509 = vcmp.eq.f32.partialorder %v1787, 0.0
    %v2510 = vand.u32 %v1787, 2147483648
    %v2511 = vsel %vm2509, %v2510, %v2508
    %v2512 = vrsqrt.pop %v1788
    %v2513 = vmul.f32 %v2512, %v1788
    %v2514 = vmul.f32 %v2513, %v2512
    %v2515 = vmul.f32 0.5, %v2514
    %v2516 = vsub.f32 1.5, %v2515
    %v2517 = vmul.f32 %v2512, %v2516
    %v2518 = vmul.f32 %v1788, %v2517
    %vm2519 = vcmp.eq.f32.partialorder %v1788, inf
    %v2520 = vsel %vm2519, %v1788, %v2518
    %vm2521 = vcmp.eq.f32.partialorder %v1788, 0.0
    %v2522 = vand.u32 %v1788, 2147483648
    %v2523 = vsel %vm2521, %v2522, %v2520
    %v2524 = vrsqrt.pop %v1789
    %v2525 = vmul.f32 %v2524, %v1789
    %v2526 = vmul.f32 %v2525, %v2524
    %v2527 = vmul.f32 0.5, %v2526
    %v2528 = vsub.f32 1.5, %v2527
    %v2529 = vmul.f32 %v2524, %v2528
    %v2530 = vmul.f32 %v1789, %v2529
    %vm2531 = vcmp.eq.f32.partialorder %v1789, inf
    %v2532 = vsel %vm2531, %v1789, %v2530
    %vm2533 = vcmp.eq.f32.partialorder %v1789, 0.0
    %v2534 = vand.u32 %v1789, 2147483648
    %v2535 = vsel %vm2533, %v2534, %v2532
    %v2536 = vrsqrt.pop %v1790
    %v2537 = vmul.f32 %v2536, %v1790
    %v2538 = vmul.f32 %v2537, %v2536
    %v2539 = vmul.f32 0.5, %v2538
    %v2540 = vsub.f32 1.5, %v2539
    %v2541 = vmul.f32 %v2536, %v2540
    %v2542 = vmul.f32 %v1790, %v2541
    %vm2543 = vcmp.eq.f32.partialorder %v1790, inf
    %v2544 = vsel %vm2543, %v1790, %v2542
    %vm2545 = vcmp.eq.f32.partialorder %v1790, 0.0
    %v2546 = vand.u32 %v1790, 2147483648
    %v2547 = vsel %vm2545, %v2546, %v2544
    %v2548 = vrsqrt.pop %v1791
    %v2549 = vmul.f32 %v2548, %v1791
    %v2550 = vmul.f32 %v2549, %v2548
    %v2551 = vmul.f32 0.5, %v2550
    %v2552 = vsub.f32 1.5, %v2551
    %v2553 = vmul.f32 %v2548, %v2552
    %v2554 = vmul.f32 %v1791, %v2553
    %vm2555 = vcmp.eq.f32.partialorder %v1791, inf
    %v2556 = vsel %vm2555, %v1791, %v2554
    %vm2557 = vcmp.eq.f32.partialorder %v1791, 0.0
    %v2558 = vand.u32 %v1791, 2147483648
    %v2559 = vsel %vm2557, %v2558, %v2556
    %v2560 = vmul.f32 %v504, %v993
    %v2561 = vmul.f32 %v506, %v995
    %v2562 = vmul.f32 %v509, %v998
    %v2563 = vmul.f32 %v511, %v1000
    %v2564 = vmul.f32 %v514, %v1003
    %v2565 = vmul.f32 %v516, %v1005
    %v2566 = vmul.f32 %v519, %v1008
    %v2567 = vmul.f32 %v521, %v1010
    %v2568 = vmul.f32 %v524, %v1013
    %v2569 = vmul.f32 %v526, %v1015
    %v2570 = vmul.f32 %v529, %v1018
    %v2571 = vmul.f32 %v531, %v1020
    %v2572 = vmul.f32 %v534, %v1023
    %v2573 = vmul.f32 %v536, %v1025
    %v2574 = vmul.f32 %v539, %v1028
    %v2575 = vmul.f32 %v541, %v1030
    %v2576 = vmul.f32 %v544, %v1033
    %v2577 = vmul.f32 %v546, %v1035
    %v2578 = vmul.f32 %v549, %v1038
    %v2579 = vmul.f32 %v551, %v1040
    %v2580 = vmul.f32 %v554, %v1043
    %v2581 = vmul.f32 %v556, %v1045
    %v2582 = vmul.f32 %v559, %v1048
    %v2583 = vmul.f32 %v561, %v1050
    %v2584 = vmul.f32 %v564, %v1053
    %v2585 = vmul.f32 %v566, %v1055
    %v2586 = vmul.f32 %v569, %v1058
    %v2587 = vmul.f32 %v571, %v1060
    %v2588 = vmul.f32 %v574, %v1063
    %v2589 = vmul.f32 %v576, %v1065
    %v2590 = vmul.f32 %v579, %v1068
    %v2591 = vmul.f32 %v581, %v1070
    %v2592 = vmul.f32 %v584, %v1073
    %v2593 = vmul.f32 %v586, %v1075
    %v2594 = vmul.f32 %v589, %v1078
    %v2595 = vmul.f32 %v591, %v1080
    %v2596 = vmul.f32 %v594, %v1083
    %v2597 = vmul.f32 %v596, %v1085
    %v2598 = vmul.f32 %v599, %v1088
    %v2599 = vmul.f32 %v601, %v1090
    %v2600 = vmul.f32 %v604, %v1093
    %v2601 = vmul.f32 %v606, %v1095
    %v2602 = vmul.f32 %v609, %v1098
    %v2603 = vmul.f32 %v611, %v1100
    %v2604 = vmul.f32 %v614, %v1103
    %v2605 = vmul.f32 %v616, %v1105
    %v2606 = vmul.f32 %v619, %v1108
    %v2607 = vmul.f32 %v621, %v1110
    %v2608 = vmul.f32 %v624, %v1113
    %v2609 = vmul.f32 %v626, %v1115
    %v2610 = vmul.f32 %v629, %v1118
    %v2611 = vmul.f32 %v631, %v1120
    %v2612 = vmul.f32 %v634, %v1123
    %v2613 = vmul.f32 %v636, %v1125
    %v2614 = vmul.f32 %v639, %v1128
    %v2615 = vmul.f32 %v641, %v1130
    %v2616 = vmul.f32 %v644, %v1133
    %v2617 = vmul.f32 %v646, %v1135
    %v2618 = vmul.f32 %v649, %v1138
    %v2619 = vmul.f32 %v651, %v1140
    %v2620 = vmul.f32 %v654, %v1143
    %v2621 = vmul.f32 %v656, %v1145
    %v2622 = vmul.f32 %v659, %v1148
    %v2623 = vmul.f32 %v661, %v1150
    %v2624 = vmul.f32 %v664, %v1153
    %v2625 = vmul.f32 %v666, %v1155
    %v2626 = vmul.f32 %v669, %v1158
    %v2627 = vmul.f32 %v671, %v1160
    %v2628 = vmul.f32 %v674, %v1163
    %v2629 = vmul.f32 %v676, %v1165
    %v2630 = vmul.f32 %v679, %v1168
    %v2631 = vmul.f32 %v681, %v1170
    %v2632 = vmul.f32 %v684, %v1173
    %v2633 = vmul.f32 %v686, %v1175
    %v2634 = vmul.f32 %v689, %v1178
    %v2635 = vmul.f32 %v691, %v1180
    %v2636 = vmul.f32 %v694, %v1183
    %v2637 = vmul.f32 %v696, %v1185
    %v2638 = vmul.f32 %v699, %v1188
    %v2639 = vmul.f32 %v701, %v1190
    %v2640 = vmul.f32 %v704, %v1193
    %v2641 = vmul.f32 %v706, %v1195
    %v2642 = vmul.f32 %v709, %v1198
    %v2643 = vmul.f32 %v711, %v1200
    %v2644 = vmul.f32 %v714, %v1203
    %v2645 = vmul.f32 %v716, %v1205
    %v2646 = vmul.f32 %v719, %v1208
    %v2647 = vmul.f32 %v721, %v1210
    %v2648 = vmul.f32 %v724, %v1213
    %v2649 = vmul.f32 %v726, %v1215
    %v2650 = vmul.f32 %v729, %v1218
    %v2651 = vmul.f32 %v731, %v1220
    %v2652 = vmul.f32 %v734, %v1223
    %v2653 = vmul.f32 %v736, %v1225
    %v2654 = vmul.f32 %v739, %v1228
    %v2655 = vmul.f32 %v741, %v1230
    %v2656 = vmul.f32 %v744, %v1233
    %v2657 = vmul.f32 %v746, %v1235
    %v2658 = vmul.f32 %v749, %v1238
    %v2659 = vmul.f32 %v751, %v1240
    %v2660 = vmul.f32 %v754, %v1243
    %v2661 = vmul.f32 %v756, %v1245
    %v2662 = vmul.f32 %v759, %v1248
    %v2663 = vmul.f32 %v761, %v1250
    %v2664 = vmul.f32 %v764, %v1253
    %v2665 = vmul.f32 %v766, %v1255
    %v2666 = vmul.f32 %v769, %v1258
    %v2667 = vmul.f32 %v771, %v1260
    %v2668 = vmul.f32 %v774, %v1263
    %v2669 = vmul.f32 %v776, %v1265
    %v2670 = vmul.f32 %v779, %v1268
    %v2671 = vmul.f32 %v781, %v1270
    %v2672 = vmul.f32 %v784, %v1273
    %v2673 = vmul.f32 %v786, %v1275
    %v2674 = vmul.f32 %v789, %v1278
    %v2675 = vmul.f32 %v791, %v1280
    %v2676 = vmul.f32 %v794, %v1283
    %v2677 = vmul.f32 %v796, %v1285
    %v2678 = vmul.f32 %v799, %v1288
    %v2679 = vmul.f32 %v801, %v1290
    %v2680 = vmul.f32 %v804, %v1293
    %v2681 = vmul.f32 %v806, %v1295
    %v2682 = vmul.f32 %v809, %v1298
    %v2683 = vmul.f32 %v811, %v1300
    %v2684 = vmul.f32 %v814, %v1303
    %v2685 = vmul.f32 %v816, %v1305
    %v2686 = vmul.f32 %v819, %v1308
    %v2687 = vmul.f32 %v821, %v1310
    %v2688 = vadd.f32 %v2560, %v2624
    %v2689 = vadd.f32 %v2561, %v2625
    %v2690 = vadd.f32 %v2562, %v2626
    %v2691 = vadd.f32 %v2563, %v2627
    %v2692 = vadd.f32 %v2564, %v2628
    %v2693 = vadd.f32 %v2565, %v2629
    %v2694 = vadd.f32 %v2566, %v2630
    %v2695 = vadd.f32 %v2567, %v2631
    %v2696 = vadd.f32 %v2568, %v2632
    %v2697 = vadd.f32 %v2569, %v2633
    %v2698 = vadd.f32 %v2570, %v2634
    %v2699 = vadd.f32 %v2571, %v2635
    %v2700 = vadd.f32 %v2572, %v2636
    %v2701 = vadd.f32 %v2573, %v2637
    %v2702 = vadd.f32 %v2574, %v2638
    %v2703 = vadd.f32 %v2575, %v2639
    %v2704 = vadd.f32 %v2576, %v2640
    %v2705 = vadd.f32 %v2577, %v2641
    %v2706 = vadd.f32 %v2578, %v2642
    %v2707 = vadd.f32 %v2579, %v2643
    %v2708 = vadd.f32 %v2580, %v2644
    %v2709 = vadd.f32 %v2581, %v2645
    %v2710 = vadd.f32 %v2582, %v2646
    %v2711 = vadd.f32 %v2583, %v2647
    %v2712 = vadd.f32 %v2584, %v2648
    %v2713 = vadd.f32 %v2585, %v2649
    %v2714 = vadd.f32 %v2586, %v2650
    %v2715 = vadd.f32 %v2587, %v2651
    %v2716 = vadd.f32 %v2588, %v2652
    %v2717 = vadd.f32 %v2589, %v2653
    %v2718 = vadd.f32 %v2590, %v2654
    %v2719 = vadd.f32 %v2591, %v2655
    %v2720 = vadd.f32 %v2592, %v2656
    %v2721 = vadd.f32 %v2593, %v2657
    %v2722 = vadd.f32 %v2594, %v2658
    %v2723 = vadd.f32 %v2595, %v2659
    %v2724 = vadd.f32 %v2596, %v2660
    %v2725 = vadd.f32 %v2597, %v2661
    %v2726 = vadd.f32 %v2598, %v2662
    %v2727 = vadd.f32 %v2599, %v2663
    %v2728 = vadd.f32 %v2600, %v2664
    %v2729 = vadd.f32 %v2601, %v2665
    %v2730 = vadd.f32 %v2602, %v2666
    %v2731 = vadd.f32 %v2603, %v2667
    %v2732 = vadd.f32 %v2604, %v2668
    %v2733 = vadd.f32 %v2605, %v2669
    %v2734 = vadd.f32 %v2606, %v2670
    %v2735 = vadd.f32 %v2607, %v2671
    %v2736 = vadd.f32 %v2608, %v2672
    %v2737 = vadd.f32 %v2609, %v2673
    %v2738 = vadd.f32 %v2610, %v2674
    %v2739 = vadd.f32 %v2611, %v2675
    %v2740 = vadd.f32 %v2612, %v2676
    %v2741 = vadd.f32 %v2613, %v2677
    %v2742 = vadd.f32 %v2614, %v2678
    %v2743 = vadd.f32 %v2615, %v2679
    %v2744 = vadd.f32 %v2616, %v2680
    %v2745 = vadd.f32 %v2617, %v2681
    %v2746 = vadd.f32 %v2618, %v2682
    %v2747 = vadd.f32 %v2619, %v2683
    %v2748 = vadd.f32 %v2620, %v2684
    %v2749 = vadd.f32 %v2621, %v2685
    %v2750 = vadd.f32 %v2622, %v2686
    %v2751 = vadd.f32 %v2623, %v2687
    %v2752 = vmul.f32 %v824, %v1313
    %v2753 = vmul.f32 %v826, %v1315
    %v2754 = vmul.f32 %v829, %v1318
    %v2755 = vmul.f32 %v831, %v1320
    %v2756 = vmul.f32 %v834, %v1323
    %v2757 = vmul.f32 %v836, %v1325
    %v2758 = vmul.f32 %v839, %v1328
    %v2759 = vmul.f32 %v841, %v1330
    %v2760 = vmul.f32 %v844, %v1333
    %v2761 = vmul.f32 %v846, %v1335
    %v2762 = vmul.f32 %v849, %v1338
    %v2763 = vmul.f32 %v851, %v1340
    %v2764 = vmul.f32 %v854, %v1343
    %v2765 = vmul.f32 %v856, %v1345
    %v2766 = vmul.f32 %v859, %v1348
    %v2767 = vmul.f32 %v861, %v1350
    %v2768 = vmul.f32 %v864, %v1353
    %v2769 = vmul.f32 %v866, %v1355
    %v2770 = vmul.f32 %v869, %v1358
    %v2771 = vmul.f32 %v871, %v1360
    %v2772 = vmul.f32 %v874, %v1363
    %v2773 = vmul.f32 %v876, %v1365
    %v2774 = vmul.f32 %v879, %v1368
    %v2775 = vmul.f32 %v881, %v1370
    %v2776 = vmul.f32 %v884, %v1373
    %v2777 = vmul.f32 %v886, %v1375
    %v2778 = vmul.f32 %v889, %v1378
    %v2779 = vmul.f32 %v891, %v1380
    %v2780 = vmul.f32 %v894, %v1383
    %v2781 = vmul.f32 %v896, %v1385
    %v2782 = vmul.f32 %v899, %v1388
    %v2783 = vmul.f32 %v901, %v1390
    %v2784 = vmul.f32 %v904, %v1393
    %v2785 = vmul.f32 %v906, %v1395
    %v2786 = vmul.f32 %v909, %v1398
    %v2787 = vmul.f32 %v911, %v1400
    %v2788 = vmul.f32 %v914, %v1403
    %v2789 = vmul.f32 %v916, %v1405
    %v2790 = vmul.f32 %v919, %v1408
    %v2791 = vmul.f32 %v921, %v1410
    %v2792 = vmul.f32 %v924, %v1413
    %v2793 = vmul.f32 %v926, %v1415
    %v2794 = vmul.f32 %v929, %v1418
    %v2795 = vmul.f32 %v931, %v1420
    %v2796 = vmul.f32 %v934, %v1423
    %v2797 = vmul.f32 %v936, %v1425
    %v2798 = vmul.f32 %v939, %v1428
    %v2799 = vmul.f32 %v941, %v1430
    %v2800 = vmul.f32 %v944, %v1433
    %v2801 = vmul.f32 %v946, %v1435
    %v2802 = vmul.f32 %v949, %v1438
    %v2803 = vmul.f32 %v951, %v1440
    %v2804 = vmul.f32 %v954, %v1443
    %v2805 = vmul.f32 %v956, %v1445
    %v2806 = vmul.f32 %v959, %v1448
    %v2807 = vmul.f32 %v961, %v1450
    %v2808 = vmul.f32 %v964, %v1453
    %v2809 = vmul.f32 %v966, %v1455
    %v2810 = vmul.f32 %v969, %v1458
    %v2811 = vmul.f32 %v971, %v1460
    %v2812 = vmul.f32 %v974, %v1463
    %v2813 = vmul.f32 %v976, %v1465
    %v2814 = vmul.f32 %v979, %v1468
    %v2815 = vmul.f32 %v981, %v1470
    %v2816 = vadd.f32 %v2688, %v2752
    %v2817 = vadd.f32 %v2689, %v2753
    %v2818 = vadd.f32 %v2690, %v2754
    %v2819 = vadd.f32 %v2691, %v2755
    %v2820 = vadd.f32 %v2692, %v2756
    %v2821 = vadd.f32 %v2693, %v2757
    %v2822 = vadd.f32 %v2694, %v2758
    %v2823 = vadd.f32 %v2695, %v2759
    %v2824 = vadd.f32 %v2696, %v2760
    %v2825 = vadd.f32 %v2697, %v2761
    %v2826 = vadd.f32 %v2698, %v2762
    %v2827 = vadd.f32 %v2699, %v2763
    %v2828 = vadd.f32 %v2700, %v2764
    %v2829 = vadd.f32 %v2701, %v2765
    %v2830 = vadd.f32 %v2702, %v2766
    %v2831 = vadd.f32 %v2703, %v2767
    %v2832 = vadd.f32 %v2704, %v2768
    %v2833 = vadd.f32 %v2705, %v2769
    %v2834 = vadd.f32 %v2706, %v2770
    %v2835 = vadd.f32 %v2707, %v2771
    %v2836 = vadd.f32 %v2708, %v2772
    %v2837 = vadd.f32 %v2709, %v2773
    %v2838 = vadd.f32 %v2710, %v2774
    %v2839 = vadd.f32 %v2711, %v2775
    %v2840 = vadd.f32 %v2712, %v2776
    %v2841 = vadd.f32 %v2713, %v2777
    %v2842 = vadd.f32 %v2714, %v2778
    %v2843 = vadd.f32 %v2715, %v2779
    %v2844 = vadd.f32 %v2716, %v2780
    %v2845 = vadd.f32 %v2717, %v2781
    %v2846 = vadd.f32 %v2718, %v2782
    %v2847 = vadd.f32 %v2719, %v2783
    %v2848 = vadd.f32 %v2720, %v2784
    %v2849 = vadd.f32 %v2721, %v2785
    %v2850 = vadd.f32 %v2722, %v2786
    %v2851 = vadd.f32 %v2723, %v2787
    %v2852 = vadd.f32 %v2724, %v2788
    %v2853 = vadd.f32 %v2725, %v2789
    %v2854 = vadd.f32 %v2726, %v2790
    %v2855 = vadd.f32 %v2727, %v2791
    %v2856 = vadd.f32 %v2728, %v2792
    %v2857 = vadd.f32 %v2729, %v2793
    %v2858 = vadd.f32 %v2730, %v2794
    %v2859 = vadd.f32 %v2731, %v2795
    %v2860 = vadd.f32 %v2732, %v2796
    %v2861 = vadd.f32 %v2733, %v2797
    %v2862 = vadd.f32 %v2734, %v2798
    %v2863 = vadd.f32 %v2735, %v2799
    %v2864 = vadd.f32 %v2736, %v2800
    %v2865 = vadd.f32 %v2737, %v2801
    %v2866 = vadd.f32 %v2738, %v2802
    %v2867 = vadd.f32 %v2739, %v2803
    %v2868 = vadd.f32 %v2740, %v2804
    %v2869 = vadd.f32 %v2741, %v2805
    %v2870 = vadd.f32 %v2742, %v2806
    %v2871 = vadd.f32 %v2743, %v2807
    %v2872 = vadd.f32 %v2744, %v2808
    %v2873 = vadd.f32 %v2745, %v2809
    %v2874 = vadd.f32 %v2746, %v2810
    %v2875 = vadd.f32 %v2747, %v2811
    %v2876 = vadd.f32 %v2748, %v2812
    %v2877 = vadd.f32 %v2749, %v2813
    %v2878 = vadd.f32 %v2750, %v2814
    %v2879 = vadd.f32 %v2751, %v2815
    %v2880 = vpack.c.bf16 %v1815, %v1803
    %v2881 = vpack.c.bf16 %v47, %v46
    %v2882 = vpack.c.bf16 %v1839, %v1827
    %v2883 = vpack.c.bf16 %v49, %v48
    %v2884 = vpack.c.bf16 %v1863, %v1851
    %v2885 = vpack.c.bf16 %v51, %v50
    %v2886 = vpack.c.bf16 %v1887, %v1875
    %v2887 = vpack.c.bf16 %v53, %v52
    %v2888 = vpack.c.bf16 %v1911, %v1899
    %v2889 = vpack.c.bf16 %v55, %v54
    %v2890 = vpack.c.bf16 %v1935, %v1923
    %v2891 = vpack.c.bf16 %v57, %v56
    %v2892 = vpack.c.bf16 %v1959, %v1947
    %v2893 = vpack.c.bf16 %v59, %v58
    %v2894 = vpack.c.bf16 %v1983, %v1971
    %v2895 = vpack.c.bf16 %v61, %v60
    %v2896 = vpack.c.bf16 %v2007, %v1995
    %v2897 = vpack.c.bf16 %v63, %v62
    %v2898 = vpack.c.bf16 %v2031, %v2019
    %v2899 = vpack.c.bf16 %v65, %v64
    %v2900 = vpack.c.bf16 %v2055, %v2043
    %v2901 = vpack.c.bf16 %v67, %v66
    %v2902 = vpack.c.bf16 %v2079, %v2067
    %v2903 = vpack.c.bf16 %v69, %v68
    %v2904 = vpack.c.bf16 %v2103, %v2091
    %v2905 = vpack.c.bf16 %v71, %v70
    %v2906 = vpack.c.bf16 %v2127, %v2115
    %v2907 = vpack.c.bf16 %v73, %v72
    %v2908 = vpack.c.bf16 %v2151, %v2139
    %v2909 = vpack.c.bf16 %v75, %v74
    %v2910 = vpack.c.bf16 %v2175, %v2163
    %v2911 = vpack.c.bf16 %v77, %v76
    %v2912 = vpack.c.bf16 %v2199, %v2187
    %v2913 = vpack.c.bf16 %v79, %v78
    %v2914 = vpack.c.bf16 %v2223, %v2211
    %v2915 = vpack.c.bf16 %v81, %v80
    %v2916 = vpack.c.bf16 %v2247, %v2235
    %v2917 = vpack.c.bf16 %v83, %v82
    %v2918 = vpack.c.bf16 %v2271, %v2259
    %v2919 = vpack.c.bf16 %v85, %v84
    %v2920 = vpack.c.bf16 %v2295, %v2283
    %v2921 = vpack.c.bf16 %v87, %v86
    %v2922 = vpack.c.bf16 %v2319, %v2307
    %v2923 = vpack.c.bf16 %v89, %v88
    %v2924 = vpack.c.bf16 %v2343, %v2331
    %v2925 = vpack.c.bf16 %v91, %v90
    %v2926 = vpack.c.bf16 %v2367, %v2355
    %v2927 = vpack.c.bf16 %v93, %v92
    %v2928 = vpack.c.bf16 %v2391, %v2379
    %v2929 = vpack.c.bf16 %v95, %v94
    %v2930 = vpack.c.bf16 %v2415, %v2403
    %v2931 = vpack.c.bf16 %v97, %v96
    %v2932 = vpack.c.bf16 %v2439, %v2427
    %v2933 = vpack.c.bf16 %v99, %v98
    %v2934 = vpack.c.bf16 %v2463, %v2451
    %v2935 = vpack.c.bf16 %v101, %v100
    %v2936 = vpack.c.bf16 %v2487, %v2475
    %v2937 = vpack.c.bf16 %v103, %v102
    %v2938 = vpack.c.bf16 %v2511, %v2499
    %v2939 = vpack.c.bf16 %v105, %v104
    %v2940 = vpack.c.bf16 %v2535, %v2523
    %v2941 = vpack.c.bf16 %v107, %v106
    %v2942 = vpack.c.bf16 %v2559, %v2547
    %v2943 = vpack.c.bf16 %v109, %v108
    %v2944 = vld [vmem:[%s3] sm:$0xf]
    %v2945 = vld [vmem:[%s3 + $0x4] sm:$0xf]
    %v2946 = vld [vmem:[%s3 + $0x8] sm:$0xf]
    %v2947 = vld [vmem:[%s3 + $0xc] sm:$0xf]
    %v2948 = vld [vmem:[%s3 + $0x10] sm:$0xf]
    %v2949 = vld [vmem:[%s3 + $0x14] sm:$0xf]
    %v2950 = vld [vmem:[%s3 + $0x18] sm:$0xf]
    %v2951 = vld [vmem:[%s3 + $0x1c] sm:$0xf]
    %v2952 = vld [vmem:[%s3 + $0x20] sm:$0xf]
    %v2953 = vld [vmem:[%s3 + $0x24] sm:$0xf]
    %v2954 = vld [vmem:[%s3 + $0x28] sm:$0xf]
    %v2955 = vld [vmem:[%s3 + $0x2c] sm:$0xf]
    %v2956 = vld [vmem:[%s3 + $0x30] sm:$0xf]
    %v2957 = vld [vmem:[%s3 + $0x34] sm:$0xf]
    %v2958 = vld [vmem:[%s3 + $0x38] sm:$0xf]
    %v2959 = vld [vmem:[%s3 + $0x3c] sm:$0xf]
    %v2960 = vld [vmem:[%s3 + $0x40] sm:$0xf]
    %v2961 = vld [vmem:[%s3 + $0x44] sm:$0xf]
    %v2962 = vld [vmem:[%s3 + $0x48] sm:$0xf]
    %v2963 = vld [vmem:[%s3 + $0x4c] sm:$0xf]
    %v2964 = vld [vmem:[%s3 + $0x50] sm:$0xf]
    %v2965 = vld [vmem:[%s3 + $0x54] sm:$0xf]
    %v2966 = vld [vmem:[%s3 + $0x58] sm:$0xf]
    %v2967 = vld [vmem:[%s3 + $0x5c] sm:$0xf]
    %v2968 = vld [vmem:[%s3 + $0x60] sm:$0xf]
    %v2969 = vld [vmem:[%s3 + $0x64] sm:$0xf]
    %v2970 = vld [vmem:[%s3 + $0x68] sm:$0xf]
    %v2971 = vld [vmem:[%s3 + $0x6c] sm:$0xf]
    %v2972 = vld [vmem:[%s3 + $0x70] sm:$0xf]
    %v2973 = vld [vmem:[%s3 + $0x74] sm:$0xf]
    %v2974 = vld [vmem:[%s3 + $0x78] sm:$0xf]
    %v2975 = vld [vmem:[%s3 + $0x7c] sm:$0xf]
    %v2976 = vld [vmem:[%s4] sm:$0x1]
    %v2978 = vperm.slane %v2976, 0
    %v3012 = vunpack.c.l.b16 %v2944
    %v3013 = vunpack.c.l.b16 %v2945
    %v3014 = vunpack.c.l.b16 %v2946
    %v3015 = vunpack.c.l.b16 %v2947
    %v3016 = vunpack.c.l.b16 %v2948
    %v3017 = vunpack.c.l.b16 %v2949
    %v3018 = vunpack.c.l.b16 %v2950
    %v3019 = vunpack.c.l.b16 %v2951
    %v3020 = vunpack.c.l.b16 %v2952
    %v3021 = vunpack.c.l.b16 %v2953
    %v3022 = vunpack.c.l.b16 %v2954
    %v3023 = vunpack.c.l.b16 %v2955
    %v3024 = vunpack.c.l.b16 %v2956
    %v3025 = vunpack.c.l.b16 %v2957
    %v3026 = vunpack.c.l.b16 %v2958
    %v3027 = vunpack.c.l.b16 %v2959
    %v3028 = vunpack.c.l.b16 %v2960
    %v3029 = vunpack.c.l.b16 %v2961
    %v3030 = vunpack.c.l.b16 %v2962
    %v3031 = vunpack.c.l.b16 %v2963
    %v3032 = vunpack.c.l.b16 %v2964
    %v3033 = vunpack.c.l.b16 %v2965
    %v3034 = vunpack.c.l.b16 %v2966
    %v3035 = vunpack.c.l.b16 %v2967
    %v3036 = vunpack.c.l.b16 %v2968
    %v3037 = vunpack.c.l.b16 %v2969
    %v3038 = vunpack.c.l.b16 %v2970
    %v3039 = vunpack.c.l.b16 %v2971
    %v3040 = vunpack.c.l.b16 %v2972
    %v3041 = vunpack.c.l.b16 %v2973
    %v3042 = vunpack.c.l.b16 %v2974
    %v3043 = vunpack.c.l.b16 %v2975
    %v3044 = vpack.c.b16 %v3013, %v3012
    %v3045 = vpack.c.b16 %v3015, %v3014
    %v3046 = vpack.c.b16 %v3017, %v3016
    %v3047 = vpack.c.b16 %v3019, %v3018
    %v3048 = vpack.c.b16 %v3021, %v3020
    %v3049 = vpack.c.b16 %v3023, %v3022
    %v3050 = vpack.c.b16 %v3025, %v3024
    %v3051 = vpack.c.b16 %v3027, %v3026
    %v3052 = vpack.c.b16 %v3029, %v3028
    %v3053 = vpack.c.b16 %v3031, %v3030
    %v3054 = vpack.c.b16 %v3033, %v3032
    %v3055 = vpack.c.b16 %v3035, %v3034
    %v3056 = vpack.c.b16 %v3037, %v3036
    %v3057 = vpack.c.b16 %v3039, %v3038
    %v3058 = vpack.c.b16 %v3041, %v3040
    %v3059 = vpack.c.b16 %v3043, %v3042
    %3076 = vmatpush.bf16.msra.mxu0 %v3051
    %3077 = vmatpush.bf16.msra.mxu0 %v3050
    %3078 = vmatpush.bf16.msra.mxu0 %v3049
    %3079 = vmatpush.bf16.msra.mxu0 %v3048
    %3080 = vmatpush.bf16.msra.mxu0 %v3047
    %3081 = vmatpush.bf16.msra.mxu0 %v3046
    %3082 = vmatpush.bf16.msra.mxu0 %v3045
    %3083 = vmatpush.bf16.msra.mxu0 %v3044
    %3084 = vmatmul.bf16.gmra.mxu0 %v2880
    %v3085 = vpop.f32.mrf.mxu0
    %v3086 = vadd.f32 %v2978, %v3085
    %v3087 = vpop.f32.mrf.mxu0
    %v3088 = vadd.f32 %v2978, %v3087
    %3089 = vmatmul.bf16.gmra.mxu0 %v2882
    %v3090 = vpop.f32.mrf.mxu0
    %v3091 = vadd.f32 %v2978, %v3090
    %v3092 = vpop.f32.mrf.mxu0
    %v3093 = vadd.f32 %v2978, %v3092
    %3094 = vmatmul.bf16.gmra.mxu0 %v2884
    %v3095 = vpop.f32.mrf.mxu0
    %v3096 = vadd.f32 %v2978, %v3095
    %v3097 = vpop.f32.mrf.mxu0
    %v3098 = vadd.f32 %v2978, %v3097
    %3099 = vmatmul.bf16.gmra.mxu0 %v2886
    %v3100 = vpop.f32.mrf.mxu0
    %v3101 = vadd.f32 %v2978, %v3100
    %v3102 = vpop.f32.mrf.mxu0
    %v3103 = vadd.f32 %v2978, %v3102
    %3104 = vmatmul.bf16.gmra.mxu0 %v2888
    %v3105 = vpop.f32.mrf.mxu0
    %v3106 = vadd.f32 %v2978, %v3105
    %v3107 = vpop.f32.mrf.mxu0
    %v3108 = vadd.f32 %v2978, %v3107
    %3109 = vmatmul.bf16.gmra.mxu0 %v2890
    %v3110 = vpop.f32.mrf.mxu0
    %v3111 = vadd.f32 %v2978, %v3110
    %v3112 = vpop.f32.mrf.mxu0
    %v3113 = vadd.f32 %v2978, %v3112
    %3114 = vmatmul.bf16.gmra.mxu0 %v2892
    %v3115 = vpop.f32.mrf.mxu0
    %v3116 = vadd.f32 %v2978, %v3115
    %v3117 = vpop.f32.mrf.mxu0
    %v3118 = vadd.f32 %v2978, %v3117
    %3119 = vmatmul.bf16.gmra.mxu0 %v2894
    %v3120 = vpop.f32.mrf.mxu0
    %v3121 = vadd.f32 %v2978, %v3120
    %v3122 = vpop.f32.mrf.mxu0
    %v3123 = vadd.f32 %v2978, %v3122
    %3124 = vmatmul.bf16.gmra.mxu0 %v2896
    %v3125 = vpop.f32.mrf.mxu0
    %v3126 = vadd.f32 %v2978, %v3125
    %v3127 = vpop.f32.mrf.mxu0
    %v3128 = vadd.f32 %v2978, %v3127
    %3129 = vmatmul.bf16.gmra.mxu0 %v2898
    %v3130 = vpop.f32.mrf.mxu0
    %v3131 = vadd.f32 %v2978, %v3130
    %v3132 = vpop.f32.mrf.mxu0
    %v3133 = vadd.f32 %v2978, %v3132
    %3134 = vmatmul.bf16.gmra.mxu0 %v2900
    %v3135 = vpop.f32.mrf.mxu0
    %v3136 = vadd.f32 %v2978, %v3135
    %v3137 = vpop.f32.mrf.mxu0
    %v3138 = vadd.f32 %v2978, %v3137
    %3139 = vmatmul.bf16.gmra.mxu0 %v2902
    %v3140 = vpop.f32.mrf.mxu0
    %v3141 = vadd.f32 %v2978, %v3140
    %v3142 = vpop.f32.mrf.mxu0
    %v3143 = vadd.f32 %v2978, %v3142
    %3144 = vmatmul.bf16.gmra.mxu0 %v2904
    %v3145 = vpop.f32.mrf.mxu0
    %v3146 = vadd.f32 %v2978, %v3145
    %v3147 = vpop.f32.mrf.mxu0
    %v3148 = vadd.f32 %v2978, %v3147
    %3149 = vmatmul.bf16.gmra.mxu0 %v2906
    %v3150 = vpop.f32.mrf.mxu0
    %v3151 = vadd.f32 %v2978, %v3150
    %v3152 = vpop.f32.mrf.mxu0
    %v3153 = vadd.f32 %v2978, %v3152
    %3154 = vmatmul.bf16.gmra.mxu0 %v2908
    %v3155 = vpop.f32.mrf.mxu0
    %v3156 = vadd.f32 %v2978, %v3155
    %v3157 = vpop.f32.mrf.mxu0
    %v3158 = vadd.f32 %v2978, %v3157
    %3159 = vmatmul.bf16.gmra.mxu0 %v2910
    %v3160 = vpop.f32.mrf.mxu0
    %v3161 = vadd.f32 %v2978, %v3160
    %v3162 = vpop.f32.mrf.mxu0
    %v3163 = vadd.f32 %v2978, %v3162
    %3164 = vmatmul.bf16.gmra.mxu0 %v2912
    %v3165 = vpop.f32.mrf.mxu0
    %v3166 = vadd.f32 %v2978, %v3165
    %v3167 = vpop.f32.mrf.mxu0
    %v3168 = vadd.f32 %v2978, %v3167
    %3169 = vmatmul.bf16.gmra.mxu0 %v2914
    %v3170 = vpop.f32.mrf.mxu0
    %v3171 = vadd.f32 %v2978, %v3170
    %v3172 = vpop.f32.mrf.mxu0
    %v3173 = vadd.f32 %v2978, %v3172
    %3174 = vmatmul.bf16.gmra.mxu0 %v2916
    %v3175 = vpop.f32.mrf.mxu0
    %v3176 = vadd.f32 %v2978, %v3175
    %v3177 = vpop.f32.mrf.mxu0
    %v3178 = vadd.f32 %v2978, %v3177
    %3179 = vmatmul.bf16.gmra.mxu0 %v2918
    %v3180 = vpop.f32.mrf.mxu0
    %v3181 = vadd.f32 %v2978, %v3180
    %v3182 = vpop.f32.mrf.mxu0
    %v3183 = vadd.f32 %v2978, %v3182
    %3184 = vmatmul.bf16.gmra.mxu0 %v2920
    %v3185 = vpop.f32.mrf.mxu0
    %v3186 = vadd.f32 %v2978, %v3185
    %v3187 = vpop.f32.mrf.mxu0
    %v3188 = vadd.f32 %v2978, %v3187
    %3189 = vmatmul.bf16.gmra.mxu0 %v2922
    %v3190 = vpop.f32.mrf.mxu0
    %v3191 = vadd.f32 %v2978, %v3190
    %v3192 = vpop.f32.mrf.mxu0
    %v3193 = vadd.f32 %v2978, %v3192
    %3194 = vmatmul.bf16.gmra.mxu0 %v2924
    %v3195 = vpop.f32.mrf.mxu0
    %v3196 = vadd.f32 %v2978, %v3195
    %v3197 = vpop.f32.mrf.mxu0
    %v3198 = vadd.f32 %v2978, %v3197
    %3199 = vmatmul.bf16.gmra.mxu0 %v2926
    %v3200 = vpop.f32.mrf.mxu0
    %v3201 = vadd.f32 %v2978, %v3200
    %v3202 = vpop.f32.mrf.mxu0
    %v3203 = vadd.f32 %v2978, %v3202
    %3204 = vmatmul.bf16.gmra.mxu0 %v2928
    %v3205 = vpop.f32.mrf.mxu0
    %v3206 = vadd.f32 %v2978, %v3205
    %v3207 = vpop.f32.mrf.mxu0
    %v3208 = vadd.f32 %v2978, %v3207
    %3209 = vmatmul.bf16.gmra.mxu0 %v2930
    %v3210 = vpop.f32.mrf.mxu0
    %v3211 = vadd.f32 %v2978, %v3210
    %v3212 = vpop.f32.mrf.mxu0
    %v3213 = vadd.f32 %v2978, %v3212
    %3214 = vmatmul.bf16.gmra.mxu0 %v2932
    %v3215 = vpop.f32.mrf.mxu0
    %v3216 = vadd.f32 %v2978, %v3215
    %v3217 = vpop.f32.mrf.mxu0
    %v3218 = vadd.f32 %v2978, %v3217
    %3219 = vmatmul.bf16.gmra.mxu0 %v2934
    %v3220 = vpop.f32.mrf.mxu0
    %v3221 = vadd.f32 %v2978, %v3220
    %v3222 = vpop.f32.mrf.mxu0
    %v3223 = vadd.f32 %v2978, %v3222
    %3224 = vmatmul.bf16.gmra.mxu0 %v2936
    %v3225 = vpop.f32.mrf.mxu0
    %v3226 = vadd.f32 %v2978, %v3225
    %v3227 = vpop.f32.mrf.mxu0
    %v3228 = vadd.f32 %v2978, %v3227
    %3229 = vmatmul.bf16.gmra.mxu0 %v2938
    %v3230 = vpop.f32.mrf.mxu0
    %v3231 = vadd.f32 %v2978, %v3230
    %v3232 = vpop.f32.mrf.mxu0
    %v3233 = vadd.f32 %v2978, %v3232
    %3234 = vmatmul.bf16.gmra.mxu0 %v2940
    %v3235 = vpop.f32.mrf.mxu0
    %v3236 = vadd.f32 %v2978, %v3235
    %v3237 = vpop.f32.mrf.mxu0
    %v3238 = vadd.f32 %v2978, %v3237
    %3239 = vmatmul.bf16.gmra.mxu0 %v2942
    %v3240 = vpop.f32.mrf.mxu0
    %v3241 = vadd.f32 %v2978, %v3240
    %v3242 = vpop.f32.mrf.mxu0
    %v3243 = vadd.f32 %v2978, %v3242
    %3244 = vdwg.mxu0
    %3245 = vmatpush.bf16.msra.mxu0 %v3059
    %3246 = vmatpush.bf16.msra.mxu0 %v3058
    %3247 = vmatpush.bf16.msra.mxu0 %v3057
    %3248 = vmatpush.bf16.msra.mxu0 %v3056
    %3249 = vmatpush.bf16.msra.mxu0 %v3055
    %3250 = vmatpush.bf16.msra.mxu0 %v3054
    %3251 = vmatpush.bf16.msra.mxu0 %v3053
    %3252 = vmatpush.bf16.msra.mxu0 %v3052
    %3253 = vmatmul.bf16.gmra.mxu0 %v2881
    %v3254 = vpop.f32.mrf.mxu0
    %v3255 = vadd.f32 %v3086, %v3254
    %v3256 = vpop.f32.mrf.mxu0
    %v3257 = vadd.f32 %v3088, %v3256
    %3258 = vmatmul.bf16.gmra.mxu0 %v2883
    %v3259 = vpop.f32.mrf.mxu0
    %v3260 = vadd.f32 %v3091, %v3259
    %v3261 = vpop.f32.mrf.mxu0
    %v3262 = vadd.f32 %v3093, %v3261
    %3263 = vmatmul.bf16.gmra.mxu0 %v2885
    %v3264 = vpop.f32.mrf.mxu0
    %v3265 = vadd.f32 %v3096, %v3264
    %v3266 = vpop.f32.mrf.mxu0
    %v3267 = vadd.f32 %v3098, %v3266
    %3268 = vmatmul.bf16.gmra.mxu0 %v2887
    %v3269 = vpop.f32.mrf.mxu0
    %v3270 = vadd.f32 %v3101, %v3269
    %v3271 = vpop.f32.mrf.mxu0
    %v3272 = vadd.f32 %v3103, %v3271
    %3273 = vmatmul.bf16.gmra.mxu0 %v2889
    %v3274 = vpop.f32.mrf.mxu0
    %v3275 = vadd.f32 %v3106, %v3274
    %v3276 = vpop.f32.mrf.mxu0
    %v3277 = vadd.f32 %v3108, %v3276
    %3278 = vmatmul.bf16.gmra.mxu0 %v2891
    %v3279 = vpop.f32.mrf.mxu0
    %v3280 = vadd.f32 %v3111, %v3279
    %v3281 = vpop.f32.mrf.mxu0
    %v3282 = vadd.f32 %v3113, %v3281
    %3283 = vmatmul.bf16.gmra.mxu0 %v2893
    %v3284 = vpop.f32.mrf.mxu0
    %v3285 = vadd.f32 %v3116, %v3284
    %v3286 = vpop.f32.mrf.mxu0
    %v3287 = vadd.f32 %v3118, %v3286
    %3288 = vmatmul.bf16.gmra.mxu0 %v2895
    %v3289 = vpop.f32.mrf.mxu0
    %v3290 = vadd.f32 %v3121, %v3289
    %v3291 = vpop.f32.mrf.mxu0
    %v3292 = vadd.f32 %v3123, %v3291
    %3293 = vmatmul.bf16.gmra.mxu0 %v2897
    %v3294 = vpop.f32.mrf.mxu0
    %v3295 = vadd.f32 %v3126, %v3294
    %v3296 = vpop.f32.mrf.mxu0
    %v3297 = vadd.f32 %v3128, %v3296
    %3298 = vmatmul.bf16.gmra.mxu0 %v2899
    %v3299 = vpop.f32.mrf.mxu0
    %v3300 = vadd.f32 %v3131, %v3299
    %v3301 = vpop.f32.mrf.mxu0
    %v3302 = vadd.f32 %v3133, %v3301
    %3303 = vmatmul.bf16.gmra.mxu0 %v2901
    %v3304 = vpop.f32.mrf.mxu0
    %v3305 = vadd.f32 %v3136, %v3304
    %v3306 = vpop.f32.mrf.mxu0
    %v3307 = vadd.f32 %v3138, %v3306
    %3308 = vmatmul.bf16.gmra.mxu0 %v2903
    %v3309 = vpop.f32.mrf.mxu0
    %v3310 = vadd.f32 %v3141, %v3309
    %v3311 = vpop.f32.mrf.mxu0
    %v3312 = vadd.f32 %v3143, %v3311
    %3313 = vmatmul.bf16.gmra.mxu0 %v2905
    %v3314 = vpop.f32.mrf.mxu0
    %v3315 = vadd.f32 %v3146, %v3314
    %v3316 = vpop.f32.mrf.mxu0
    %v3317 = vadd.f32 %v3148, %v3316
    %3318 = vmatmul.bf16.gmra.mxu0 %v2907
    %v3319 = vpop.f32.mrf.mxu0
    %v3320 = vadd.f32 %v3151, %v3319
    %v3321 = vpop.f32.mrf.mxu0
    %v3322 = vadd.f32 %v3153, %v3321
    %3323 = vmatmul.bf16.gmra.mxu0 %v2909
    %v3324 = vpop.f32.mrf.mxu0
    %v3325 = vadd.f32 %v3156, %v3324
    %v3326 = vpop.f32.mrf.mxu0
    %v3327 = vadd.f32 %v3158, %v3326
    %3328 = vmatmul.bf16.gmra.mxu0 %v2911
    %v3329 = vpop.f32.mrf.mxu0
    %v3330 = vadd.f32 %v3161, %v3329
    %v3331 = vpop.f32.mrf.mxu0
    %v3332 = vadd.f32 %v3163, %v3331
    %3333 = vmatmul.bf16.gmra.mxu0 %v2913
    %v3334 = vpop.f32.mrf.mxu0
    %v3335 = vadd.f32 %v3166, %v3334
    %v3336 = vpop.f32.mrf.mxu0
    %v3337 = vadd.f32 %v3168, %v3336
    %3338 = vmatmul.bf16.gmra.mxu0 %v2915
    %v3339 = vpop.f32.mrf.mxu0
    %v3340 = vadd.f32 %v3171, %v3339
    %v3341 = vpop.f32.mrf.mxu0
    %v3342 = vadd.f32 %v3173, %v3341
    %3343 = vmatmul.bf16.gmra.mxu0 %v2917
    %v3344 = vpop.f32.mrf.mxu0
    %v3345 = vadd.f32 %v3176, %v3344
    %v3346 = vpop.f32.mrf.mxu0
    %v3347 = vadd.f32 %v3178, %v3346
    %3348 = vmatmul.bf16.gmra.mxu0 %v2919
    %v3349 = vpop.f32.mrf.mxu0
    %v3350 = vadd.f32 %v3181, %v3349
    %v3351 = vpop.f32.mrf.mxu0
    %v3352 = vadd.f32 %v3183, %v3351
    %3353 = vmatmul.bf16.gmra.mxu0 %v2921
    %v3354 = vpop.f32.mrf.mxu0
    %v3355 = vadd.f32 %v3186, %v3354
    %v3356 = vpop.f32.mrf.mxu0
    %v3357 = vadd.f32 %v3188, %v3356
    %3358 = vmatmul.bf16.gmra.mxu0 %v2923
    %v3359 = vpop.f32.mrf.mxu0
    %v3360 = vadd.f32 %v3191, %v3359
    %v3361 = vpop.f32.mrf.mxu0
    %v3362 = vadd.f32 %v3193, %v3361
    %3363 = vmatmul.bf16.gmra.mxu0 %v2925
    %v3364 = vpop.f32.mrf.mxu0
    %v3365 = vadd.f32 %v3196, %v3364
    %v3366 = vpop.f32.mrf.mxu0
    %v3367 = vadd.f32 %v3198, %v3366
    %3368 = vmatmul.bf16.gmra.mxu0 %v2927
    %v3369 = vpop.f32.mrf.mxu0
    %v3370 = vadd.f32 %v3201, %v3369
    %v3371 = vpop.f32.mrf.mxu0
    %v3372 = vadd.f32 %v3203, %v3371
    %3373 = vmatmul.bf16.gmra.mxu0 %v2929
    %v3374 = vpop.f32.mrf.mxu0
    %v3375 = vadd.f32 %v3206, %v3374
    %v3376 = vpop.f32.mrf.mxu0
    %v3377 = vadd.f32 %v3208, %v3376
    %3378 = vmatmul.bf16.gmra.mxu0 %v2931
    %v3379 = vpop.f32.mrf.mxu0
    %v3380 = vadd.f32 %v3211, %v3379
    %v3381 = vpop.f32.mrf.mxu0
    %v3382 = vadd.f32 %v3213, %v3381
    %3383 = vmatmul.bf16.gmra.mxu0 %v2933
    %v3384 = vpop.f32.mrf.mxu0
    %v3385 = vadd.f32 %v3216, %v3384
    %v3386 = vpop.f32.mrf.mxu0
    %v3387 = vadd.f32 %v3218, %v3386
    %3388 = vmatmul.bf16.gmra.mxu0 %v2935
    %v3389 = vpop.f32.mrf.mxu0
    %v3390 = vadd.f32 %v3221, %v3389
    %v3391 = vpop.f32.mrf.mxu0
    %v3392 = vadd.f32 %v3223, %v3391
    %3393 = vmatmul.bf16.gmra.mxu0 %v2937
    %v3394 = vpop.f32.mrf.mxu0
    %v3395 = vadd.f32 %v3226, %v3394
    %v3396 = vpop.f32.mrf.mxu0
    %v3397 = vadd.f32 %v3228, %v3396
    %3398 = vmatmul.bf16.gmra.mxu0 %v2939
    %v3399 = vpop.f32.mrf.mxu0
    %v3400 = vadd.f32 %v3231, %v3399
    %v3401 = vpop.f32.mrf.mxu0
    %v3402 = vadd.f32 %v3233, %v3401
    %3403 = vmatmul.bf16.gmra.mxu0 %v2941
    %v3404 = vpop.f32.mrf.mxu0
    %v3405 = vadd.f32 %v3236, %v3404
    %v3406 = vpop.f32.mrf.mxu0
    %v3407 = vadd.f32 %v3238, %v3406
    %3408 = vmatmul.bf16.gmra.mxu0 %v2943
    %v3409 = vpop.f32.mrf.mxu0
    %v3410 = vadd.f32 %v3241, %v3409
    %v3411 = vpop.f32.mrf.mxu0
    %v3412 = vadd.f32 %v3243, %v3411
    %3413 = vdwg.mxu0
    %v3414 = vsub.f32 0.0, %v3255
    %v3415 = vsub.f32 0.0, %v3257
    %v3416 = vsub.f32 0.0, %v3260
    %v3417 = vsub.f32 0.0, %v3262
    %v3418 = vsub.f32 0.0, %v3265
    %v3419 = vsub.f32 0.0, %v3267
    %v3420 = vsub.f32 0.0, %v3270
    %v3421 = vsub.f32 0.0, %v3272
    %v3422 = vsub.f32 0.0, %v3275
    %v3423 = vsub.f32 0.0, %v3277
    %v3424 = vsub.f32 0.0, %v3280
    %v3425 = vsub.f32 0.0, %v3282
    %v3426 = vsub.f32 0.0, %v3285
    %v3427 = vsub.f32 0.0, %v3287
    %v3428 = vsub.f32 0.0, %v3290
    %v3429 = vsub.f32 0.0, %v3292
    %v3430 = vsub.f32 0.0, %v3295
    %v3431 = vsub.f32 0.0, %v3297
    %v3432 = vsub.f32 0.0, %v3300
    %v3433 = vsub.f32 0.0, %v3302
    %v3434 = vsub.f32 0.0, %v3305
    %v3435 = vsub.f32 0.0, %v3307
    %v3436 = vsub.f32 0.0, %v3310
    %v3437 = vsub.f32 0.0, %v3312
    %v3438 = vsub.f32 0.0, %v3315
    %v3439 = vsub.f32 0.0, %v3317
    %v3440 = vsub.f32 0.0, %v3320
    %v3441 = vsub.f32 0.0, %v3322
    %v3442 = vsub.f32 0.0, %v3325
    %v3443 = vsub.f32 0.0, %v3327
    %v3444 = vsub.f32 0.0, %v3330
    %v3445 = vsub.f32 0.0, %v3332
    %v3446 = vsub.f32 0.0, %v3335
    %v3447 = vsub.f32 0.0, %v3337
    %v3448 = vsub.f32 0.0, %v3340
    %v3449 = vsub.f32 0.0, %v3342
    %v3450 = vsub.f32 0.0, %v3345
    %v3451 = vsub.f32 0.0, %v3347
    %v3452 = vsub.f32 0.0, %v3350
    %v3453 = vsub.f32 0.0, %v3352
    %v3454 = vsub.f32 0.0, %v3355
    %v3455 = vsub.f32 0.0, %v3357
    %v3456 = vsub.f32 0.0, %v3360
    %v3457 = vsub.f32 0.0, %v3362
    %v3458 = vsub.f32 0.0, %v3365
    %v3459 = vsub.f32 0.0, %v3367
    %v3460 = vsub.f32 0.0, %v3370
    %v3461 = vsub.f32 0.0, %v3372
    %v3462 = vsub.f32 0.0, %v3375
    %v3463 = vsub.f32 0.0, %v3377
    %v3464 = vsub.f32 0.0, %v3380
    %v3465 = vsub.f32 0.0, %v3382
    %v3466 = vsub.f32 0.0, %v3385
    %v3467 = vsub.f32 0.0, %v3387
    %v3468 = vsub.f32 0.0, %v3390
    %v3469 = vsub.f32 0.0, %v3392
    %v3470 = vsub.f32 0.0, %v3395
    %v3471 = vsub.f32 0.0, %v3397
    %v3472 = vsub.f32 0.0, %v3400
    %v3473 = vsub.f32 0.0, %v3402
    %v3474 = vsub.f32 0.0, %v3405
    %v3475 = vsub.f32 0.0, %v3407
    %v3476 = vsub.f32 0.0, %v3410
    %v3477 = vsub.f32 0.0, %v3412
    %v3478 = vmul.f32 %v3414, 1.442695
    %v3479 = vpow.pop %v3478
    %v3480 = vmul.f32 %v3415, 1.442695
    %v3481 = vpow.pop %v3480
    %v3482 = vmul.f32 %v3416, 1.442695
    %v3483 = vpow.pop %v3482
    %v3484 = vmul.f32 %v3417, 1.442695
    %v3485 = vpow.pop %v3484
    %v3486 = vmul.f32 %v3418, 1.442695
    %v3487 = vpow.pop %v3486
    %v3488 = vmul.f32 %v3419, 1.442695
    %v3489 = vpow.pop %v3488
    %v3490 = vmul.f32 %v3420, 1.442695
    %v3491 = vpow.pop %v3490
    %v3492 = vmul.f32 %v3421, 1.442695
    %v3493 = vpow.pop %v3492
    %v3494 = vmul.f32 %v3422, 1.442695
    %v3495 = vpow.pop %v3494
    %v3496 = vmul.f32 %v3423, 1.442695
    %v3497 = vpow.pop %v3496
    %v3498 = vmul.f32 %v3424, 1.442695
    %v3499 = vpow.pop %v3498
    %v3500 = vmul.f32 %v3425, 1.442695
    %v3501 = vpow.pop %v3500
    %v3502 = vmul.f32 %v3426, 1.442695
    %v3503 = vpow.pop %v3502
    %v3504 = vmul.f32 %v3427, 1.442695
    %v3505 = vpow.pop %v3504
    %v3506 = vmul.f32 %v3428, 1.442695
    %v3507 = vpow.pop %v3506
    %v3508 = vmul.f32 %v3429, 1.442695
    %v3509 = vpow.pop %v3508
    %v3510 = vmul.f32 %v3430, 1.442695
    %v3511 = vpow.pop %v3510
    %v3512 = vmul.f32 %v3431, 1.442695
    %v3513 = vpow.pop %v3512
    %v3514 = vmul.f32 %v3432, 1.442695
    %v3515 = vpow.pop %v3514
    %v3516 = vmul.f32 %v3433, 1.442695
    %v3517 = vpow.pop %v3516
    %v3518 = vmul.f32 %v3434, 1.442695
    %v3519 = vpow.pop %v3518
    %v3520 = vmul.f32 %v3435, 1.442695
    %v3521 = vpow.pop %v3520
    %v3522 = vmul.f32 %v3436, 1.442695
    %v3523 = vpow.pop %v3522
    %v3524 = vmul.f32 %v3437, 1.442695
    %v3525 = vpow.pop %v3524
    %v3526 = vmul.f32 %v3438, 1.442695
    %v3527 = vpow.pop %v3526
    %v3528 = vmul.f32 %v3439, 1.442695
    %v3529 = vpow.pop %v3528
    %v3530 = vmul.f32 %v3440, 1.442695
    %v3531 = vpow.pop %v3530
    %v3532 = vmul.f32 %v3441, 1.442695
    %v3533 = vpow.pop %v3532
    %v3534 = vmul.f32 %v3442, 1.442695
    %v3535 = vpow.pop %v3534
    %v3536 = vmul.f32 %v3443, 1.442695
    %v3537 = vpow.pop %v3536
    %v3538 = vmul.f32 %v3444, 1.442695
    %v3539 = vpow.pop %v3538
    %v3540 = vmul.f32 %v3445, 1.442695
    %v3541 = vpow.pop %v3540
    %v3542 = vmul.f32 %v3446, 1.442695
    %v3543 = vpow.pop %v3542
    %v3544 = vmul.f32 %v3447, 1.442695
    %v3545 = vpow.pop %v3544
    %v3546 = vmul.f32 %v3448, 1.442695
    %v3547 = vpow.pop %v3546
    %v3548 = vmul.f32 %v3449, 1.442695
    %v3549 = vpow.pop %v3548
    %v3550 = vmul.f32 %v3450, 1.442695
    %v3551 = vpow.pop %v3550
    %v3552 = vmul.f32 %v3451, 1.442695
    %v3553 = vpow.pop %v3552
    %v3554 = vmul.f32 %v3452, 1.442695
    %v3555 = vpow.pop %v3554
    %v3556 = vmul.f32 %v3453, 1.442695
    %v3557 = vpow.pop %v3556
    %v3558 = vmul.f32 %v3454, 1.442695
    %v3559 = vpow.pop %v3558
    %v3560 = vmul.f32 %v3455, 1.442695
    %v3561 = vpow.pop %v3560
    %v3562 = vmul.f32 %v3456, 1.442695
    %v3563 = vpow.pop %v3562
    %v3564 = vmul.f32 %v3457, 1.442695
    %v3565 = vpow.pop %v3564
    %v3566 = vmul.f32 %v3458, 1.442695
    %v3567 = vpow.pop %v3566
    %v3568 = vmul.f32 %v3459, 1.442695
    %v3569 = vpow.pop %v3568
    %v3570 = vmul.f32 %v3460, 1.442695
    %v3571 = vpow.pop %v3570
    %v3572 = vmul.f32 %v3461, 1.442695
    %v3573 = vpow.pop %v3572
    %v3574 = vmul.f32 %v3462, 1.442695
    %v3575 = vpow.pop %v3574
    %v3576 = vmul.f32 %v3463, 1.442695
    %v3577 = vpow.pop %v3576
    %v3578 = vmul.f32 %v3464, 1.442695
    %v3579 = vpow.pop %v3578
    %v3580 = vmul.f32 %v3465, 1.442695
    %v3581 = vpow.pop %v3580
    %v3582 = vmul.f32 %v3466, 1.442695
    %v3583 = vpow.pop %v3582
    %v3584 = vmul.f32 %v3467, 1.442695
    %v3585 = vpow.pop %v3584
    %v3586 = vmul.f32 %v3468, 1.442695
    %v3587 = vpow.pop %v3586
    %v3588 = vmul.f32 %v3469, 1.442695
    %v3589 = vpow.pop %v3588
    %v3590 = vmul.f32 %v3470, 1.442695
    %v3591 = vpow.pop %v3590
    %v3592 = vmul.f32 %v3471, 1.442695
    %v3593 = vpow.pop %v3592
    %v3594 = vmul.f32 %v3472, 1.442695
    %v3595 = vpow.pop %v3594
    %v3596 = vmul.f32 %v3473, 1.442695
    %v3597 = vpow.pop %v3596
    %v3598 = vmul.f32 %v3474, 1.442695
    %v3599 = vpow.pop %v3598
    %v3600 = vmul.f32 %v3475, 1.442695
    %v3601 = vpow.pop %v3600
    %v3602 = vmul.f32 %v3476, 1.442695
    %v3603 = vpow.pop %v3602
    %v3604 = vmul.f32 %v3477, 1.442695
    %v3605 = vpow.pop %v3604
    %v3606 = vadd.f32 %v3479, 1.0
    %v3607 = vadd.f32 %v3481, 1.0
    %v3608 = vadd.f32 %v3483, 1.0
    %v3609 = vadd.f32 %v3485, 1.0
    %v3610 = vadd.f32 %v3487, 1.0
    %v3611 = vadd.f32 %v3489, 1.0
    %v3612 = vadd.f32 %v3491, 1.0
    %v3613 = vadd.f32 %v3493, 1.0
    %v3614 = vadd.f32 %v3495, 1.0
    %v3615 = vadd.f32 %v3497, 1.0
    %v3616 = vadd.f32 %v3499, 1.0
    %v3617 = vadd.f32 %v3501, 1.0
    %v3618 = vadd.f32 %v3503, 1.0
    %v3619 = vadd.f32 %v3505, 1.0
    %v3620 = vadd.f32 %v3507, 1.0
    %v3621 = vadd.f32 %v3509, 1.0
    %v3622 = vadd.f32 %v3511, 1.0
    %v3623 = vadd.f32 %v3513, 1.0
    %v3624 = vadd.f32 %v3515, 1.0
    %v3625 = vadd.f32 %v3517, 1.0
    %v3626 = vadd.f32 %v3519, 1.0
    %v3627 = vadd.f32 %v3521, 1.0
    %v3628 = vadd.f32 %v3523, 1.0
    %v3629 = vadd.f32 %v3525, 1.0
    %v3630 = vadd.f32 %v3527, 1.0
    %v3631 = vadd.f32 %v3529, 1.0
    %v3632 = vadd.f32 %v3531, 1.0
    %v3633 = vadd.f32 %v3533, 1.0
    %v3634 = vadd.f32 %v3535, 1.0
    %v3635 = vadd.f32 %v3537, 1.0
    %v3636 = vadd.f32 %v3539, 1.0
    %v3637 = vadd.f32 %v3541, 1.0
    %v3638 = vadd.f32 %v3543, 1.0
    %v3639 = vadd.f32 %v3545, 1.0
    %v3640 = vadd.f32 %v3547, 1.0
    %v3641 = vadd.f32 %v3549, 1.0
    %v3642 = vadd.f32 %v3551, 1.0
    %v3643 = vadd.f32 %v3553, 1.0
    %v3644 = vadd.f32 %v3555, 1.0
    %v3645 = vadd.f32 %v3557, 1.0
    %v3646 = vadd.f32 %v3559, 1.0
    %v3647 = vadd.f32 %v3561, 1.0
    %v3648 = vadd.f32 %v3563, 1.0
    %v3649 = vadd.f32 %v3565, 1.0
    %v3650 = vadd.f32 %v3567, 1.0
    %v3651 = vadd.f32 %v3569, 1.0
    %v3652 = vadd.f32 %v3571, 1.0
    %v3653 = vadd.f32 %v3573, 1.0
    %v3654 = vadd.f32 %v3575, 1.0
    %v3655 = vadd.f32 %v3577, 1.0
    %v3656 = vadd.f32 %v3579, 1.0
    %v3657 = vadd.f32 %v3581, 1.0
    %v3658 = vadd.f32 %v3583, 1.0
    %v3659 = vadd.f32 %v3585, 1.0
    %v3660 = vadd.f32 %v3587, 1.0
    %v3661 = vadd.f32 %v3589, 1.0
    %v3662 = vadd.f32 %v3591, 1.0
    %v3663 = vadd.f32 %v3593, 1.0
    %v3664 = vadd.f32 %v3595, 1.0
    %v3665 = vadd.f32 %v3597, 1.0
    %v3666 = vadd.f32 %v3599, 1.0
    %v3667 = vadd.f32 %v3601, 1.0
    %v3668 = vadd.f32 %v3603, 1.0
    %v3669 = vadd.f32 %v3605, 1.0
    %v3670 = vrcp.pop %v3606
    %v3671 = vmul.f32 %v3606, %v3670
    %v3672 = vsub.f32 1.0, %v3671
    %v3673 = vmul.f32 %v3670, %v3672
    %v3674 = vadd.f32 %v3670, %v3673
    %vm3675 = vweird.f32 %v3606
    %vm3676 = vweird.f32 %v3670
    %vm3677 = vmor %vm3675, %vm3676
    %v3678 = vsel %vm3677, %v3670, %v3674
    %v3679 = vand.u32 2147483647, %v3606
    %vm3680 = vcmp.eq.f32.partialorder %v3679, 8.507059e+37
    %v3681 = vand.u32 %v3606, 2147483648
    %v3682 = vor.u32 1.1754944e-38, %v3681
    %v3683 = vsel %vm3680, %v3682, %v3678
    %v3684 = vmul.f32 1.0, %v3683
    %v3685 = vrcp.pop %v3607
    %v3686 = vmul.f32 %v3607, %v3685
    %v3687 = vsub.f32 1.0, %v3686
    %v3688 = vmul.f32 %v3685, %v3687
    %v3689 = vadd.f32 %v3685, %v3688
    %vm3690 = vweird.f32 %v3607
    %vm3691 = vweird.f32 %v3685
    %vm3692 = vmor %vm3690, %vm3691
    %v3693 = vsel %vm3692, %v3685, %v3689
    %v3694 = vand.u32 2147483647, %v3607
    %vm3695 = vcmp.eq.f32.partialorder %v3694, 8.507059e+37
    %v3696 = vand.u32 %v3607, 2147483648
    %v3697 = vor.u32 1.1754944e-38, %v3696
    %v3698 = vsel %vm3695, %v3697, %v3693
    %v3699 = vmul.f32 1.0, %v3698
    %v3700 = vrcp.pop %v3608
    %v3701 = vmul.f32 %v3608, %v3700
    %v3702 = vsub.f32 1.0, %v3701
    %v3703 = vmul.f32 %v3700, %v3702
    %v3704 = vadd.f32 %v3700, %v3703
    %vm3705 = vweird.f32 %v3608
    %vm3706 = vweird.f32 %v3700
    %vm3707 = vmor %vm3705, %vm3706
    %v3708 = vsel %vm3707, %v3700, %v3704
    %v3709 = vand.u32 2147483647, %v3608
    %vm3710 = vcmp.eq.f32.partialorder %v3709, 8.507059e+37
    %v3711 = vand.u32 %v3608, 2147483648
    %v3712 = vor.u32 1.1754944e-38, %v3711
    %v3713 = vsel %vm3710, %v3712, %v3708
    %v3714 = vmul.f32 1.0, %v3713
    %v3715 = vrcp.pop %v3609
    %v3716 = vmul.f32 %v3609, %v3715
    %v3717 = vsub.f32 1.0, %v3716
    %v3718 = vmul.f32 %v3715, %v3717
    %v3719 = vadd.f32 %v3715, %v3718
    %vm3720 = vweird.f32 %v3609
    %vm3721 = vweird.f32 %v3715
    %vm3722 = vmor %vm3720, %vm3721
    %v3723 = vsel %vm3722, %v3715, %v3719
    %v3724 = vand.u32 2147483647, %v3609
    %vm3725 = vcmp.eq.f32.partialorder %v3724, 8.507059e+37
    %v3726 = vand.u32 %v3609, 2147483648
    %v3727 = vor.u32 1.1754944e-38, %v3726
    %v3728 = vsel %vm3725, %v3727, %v3723
    %v3729 = vmul.f32 1.0, %v3728
    %v3730 = vrcp.pop %v3610
    %v3731 = vmul.f32 %v3610, %v3730
    %v3732 = vsub.f32 1.0, %v3731
    %v3733 = vmul.f32 %v3730, %v3732
    %v3734 = vadd.f32 %v3730, %v3733
    %vm3735 = vweird.f32 %v3610
    %vm3736 = vweird.f32 %v3730
    %vm3737 = vmor %vm3735, %vm3736
    %v3738 = vsel %vm3737, %v3730, %v3734
    %v3739 = vand.u32 2147483647, %v3610
    %vm3740 = vcmp.eq.f32.partialorder %v3739, 8.507059e+37
    %v3741 = vand.u32 %v3610, 2147483648
    %v3742 = vor.u32 1.1754944e-38, %v3741
    %v3743 = vsel %vm3740, %v3742, %v3738
    %v3744 = vmul.f32 1.0, %v3743
    %v3745 = vrcp.pop %v3611
    %v3746 = vmul.f32 %v3611, %v3745
    %v3747 = vsub.f32 1.0, %v3746
    %v3748 = vmul.f32 %v3745, %v3747
    %v3749 = vadd.f32 %v3745, %v3748
    %vm3750 = vweird.f32 %v3611
    %vm3751 = vweird.f32 %v3745
    %vm3752 = vmor %vm3750, %vm3751
    %v3753 = vsel %vm3752, %v3745, %v3749
    %v3754 = vand.u32 2147483647, %v3611
    %vm3755 = vcmp.eq.f32.partialorder %v3754, 8.507059e+37
    %v3756 = vand.u32 %v3611, 2147483648
    %v3757 = vor.u32 1.1754944e-38, %v3756
    %v3758 = vsel %vm3755, %v3757, %v3753
    %v3759 = vmul.f32 1.0, %v3758
    %v3760 = vrcp.pop %v3612
    %v3761 = vmul.f32 %v3612, %v3760
    %v3762 = vsub.f32 1.0, %v3761
    %v3763 = vmul.f32 %v3760, %v3762
    %v3764 = vadd.f32 %v3760, %v3763
    %vm3765 = vweird.f32 %v3612
    %vm3766 = vweird.f32 %v3760
    %vm3767 = vmor %vm3765, %vm3766
    %v3768 = vsel %vm3767, %v3760, %v3764
    %v3769 = vand.u32 2147483647, %v3612
    %vm3770 = vcmp.eq.f32.partialorder %v3769, 8.507059e+37
    %v3771 = vand.u32 %v3612, 2147483648
    %v3772 = vor.u32 1.1754944e-38, %v3771
    %v3773 = vsel %vm3770, %v3772, %v3768
    %v3774 = vmul.f32 1.0, %v3773
    %v3775 = vrcp.pop %v3613
    %v3776 = vmul.f32 %v3613, %v3775
    %v3777 = vsub.f32 1.0, %v3776
    %v3778 = vmul.f32 %v3775, %v3777
    %v3779 = vadd.f32 %v3775, %v3778
    %vm3780 = vweird.f32 %v3613
    %vm3781 = vweird.f32 %v3775
    %vm3782 = vmor %vm3780, %vm3781
    %v3783 = vsel %vm3782, %v3775, %v3779
    %v3784 = vand.u32 2147483647, %v3613
    %vm3785 = vcmp.eq.f32.partialorder %v3784, 8.507059e+37
    %v3786 = vand.u32 %v3613, 2147483648
    %v3787 = vor.u32 1.1754944e-38, %v3786
    %v3788 = vsel %vm3785, %v3787, %v3783
    %v3789 = vmul.f32 1.0, %v3788
    %v3790 = vrcp.pop %v3614
    %v3791 = vmul.f32 %v3614, %v3790
    %v3792 = vsub.f32 1.0, %v3791
    %v3793 = vmul.f32 %v3790, %v3792
    %v3794 = vadd.f32 %v3790, %v3793
    %vm3795 = vweird.f32 %v3614
    %vm3796 = vweird.f32 %v3790
    %vm3797 = vmor %vm3795, %vm3796
    %v3798 = vsel %vm3797, %v3790, %v3794
    %v3799 = vand.u32 2147483647, %v3614
    %vm3800 = vcmp.eq.f32.partialorder %v3799, 8.507059e+37
    %v3801 = vand.u32 %v3614, 2147483648
    %v3802 = vor.u32 1.1754944e-38, %v3801
    %v3803 = vsel %vm3800, %v3802, %v3798
    %v3804 = vmul.f32 1.0, %v3803
    %v3805 = vrcp.pop %v3615
    %v3806 = vmul.f32 %v3615, %v3805
    %v3807 = vsub.f32 1.0, %v3806
    %v3808 = vmul.f32 %v3805, %v3807
    %v3809 = vadd.f32 %v3805, %v3808
    %vm3810 = vweird.f32 %v3615
    %vm3811 = vweird.f32 %v3805
    %vm3812 = vmor %vm3810, %vm3811
    %v3813 = vsel %vm3812, %v3805, %v3809
    %v3814 = vand.u32 2147483647, %v3615
    %vm3815 = vcmp.eq.f32.partialorder %v3814, 8.507059e+37
    %v3816 = vand.u32 %v3615, 2147483648
    %v3817 = vor.u32 1.1754944e-38, %v3816
    %v3818 = vsel %vm3815, %v3817, %v3813
    %v3819 = vmul.f32 1.0, %v3818
    %v3820 = vrcp.pop %v3616
    %v3821 = vmul.f32 %v3616, %v3820
    %v3822 = vsub.f32 1.0, %v3821
    %v3823 = vmul.f32 %v3820, %v3822
    %v3824 = vadd.f32 %v3820, %v3823
    %vm3825 = vweird.f32 %v3616
    %vm3826 = vweird.f32 %v3820
    %vm3827 = vmor %vm3825, %vm3826
    %v3828 = vsel %vm3827, %v3820, %v3824
    %v3829 = vand.u32 2147483647, %v3616
    %vm3830 = vcmp.eq.f32.partialorder %v3829, 8.507059e+37
    %v3831 = vand.u32 %v3616, 2147483648
    %v3832 = vor.u32 1.1754944e-38, %v3831
    %v3833 = vsel %vm3830, %v3832, %v3828
    %v3834 = vmul.f32 1.0, %v3833
    %v3835 = vrcp.pop %v3617
    %v3836 = vmul.f32 %v3617, %v3835
    %v3837 = vsub.f32 1.0, %v3836
    %v3838 = vmul.f32 %v3835, %v3837
    %v3839 = vadd.f32 %v3835, %v3838
    %vm3840 = vweird.f32 %v3617
    %vm3841 = vweird.f32 %v3835
    %vm3842 = vmor %vm3840, %vm3841
    %v3843 = vsel %vm3842, %v3835, %v3839
    %v3844 = vand.u32 2147483647, %v3617
    %vm3845 = vcmp.eq.f32.partialorder %v3844, 8.507059e+37
    %v3846 = vand.u32 %v3617, 2147483648
    %v3847 = vor.u32 1.1754944e-38, %v3846
    %v3848 = vsel %vm3845, %v3847, %v3843
    %v3849 = vmul.f32 1.0, %v3848
    %v3850 = vrcp.pop %v3618
    %v3851 = vmul.f32 %v3618, %v3850
    %v3852 = vsub.f32 1.0, %v3851
    %v3853 = vmul.f32 %v3850, %v3852
    %v3854 = vadd.f32 %v3850, %v3853
    %vm3855 = vweird.f32 %v3618
    %vm3856 = vweird.f32 %v3850
    %vm3857 = vmor %vm3855, %vm3856
    %v3858 = vsel %vm3857, %v3850, %v3854
    %v3859 = vand.u32 2147483647, %v3618
    %vm3860 = vcmp.eq.f32.partialorder %v3859, 8.507059e+37
    %v3861 = vand.u32 %v3618, 2147483648
    %v3862 = vor.u32 1.1754944e-38, %v3861
    %v3863 = vsel %vm3860, %v3862, %v3858
    %v3864 = vmul.f32 1.0, %v3863
    %v3865 = vrcp.pop %v3619
    %v3866 = vmul.f32 %v3619, %v3865
    %v3867 = vsub.f32 1.0, %v3866
    %v3868 = vmul.f32 %v3865, %v3867
    %v3869 = vadd.f32 %v3865, %v3868
    %vm3870 = vweird.f32 %v3619
    %vm3871 = vweird.f32 %v3865
    %vm3872 = vmor %vm3870, %vm3871
    %v3873 = vsel %vm3872, %v3865, %v3869
    %v3874 = vand.u32 2147483647, %v3619
    %vm3875 = vcmp.eq.f32.partialorder %v3874, 8.507059e+37
    %v3876 = vand.u32 %v3619, 2147483648
    %v3877 = vor.u32 1.1754944e-38, %v3876
    %v3878 = vsel %vm3875, %v3877, %v3873
    %v3879 = vmul.f32 1.0, %v3878
    %v3880 = vrcp.pop %v3620
    %v3881 = vmul.f32 %v3620, %v3880
    %v3882 = vsub.f32 1.0, %v3881
    %v3883 = vmul.f32 %v3880, %v3882
    %v3884 = vadd.f32 %v3880, %v3883
    %vm3885 = vweird.f32 %v3620
    %vm3886 = vweird.f32 %v3880
    %vm3887 = vmor %vm3885, %vm3886
    %v3888 = vsel %vm3887, %v3880, %v3884
    %v3889 = vand.u32 2147483647, %v3620
    %vm3890 = vcmp.eq.f32.partialorder %v3889, 8.507059e+37
    %v3891 = vand.u32 %v3620, 2147483648
    %v3892 = vor.u32 1.1754944e-38, %v3891
    %v3893 = vsel %vm3890, %v3892, %v3888
    %v3894 = vmul.f32 1.0, %v3893
    %v3895 = vrcp.pop %v3621
    %v3896 = vmul.f32 %v3621, %v3895
    %v3897 = vsub.f32 1.0, %v3896
    %v3898 = vmul.f32 %v3895, %v3897
    %v3899 = vadd.f32 %v3895, %v3898
    %vm3900 = vweird.f32 %v3621
    %vm3901 = vweird.f32 %v3895
    %vm3902 = vmor %vm3900, %vm3901
    %v3903 = vsel %vm3902, %v3895, %v3899
    %v3904 = vand.u32 2147483647, %v3621
    %vm3905 = vcmp.eq.f32.partialorder %v3904, 8.507059e+37
    %v3906 = vand.u32 %v3621, 2147483648
    %v3907 = vor.u32 1.1754944e-38, %v3906
    %v3908 = vsel %vm3905, %v3907, %v3903
    %v3909 = vmul.f32 1.0, %v3908
    %v3910 = vrcp.pop %v3622
    %v3911 = vmul.f32 %v3622, %v3910
    %v3912 = vsub.f32 1.0, %v3911
    %v3913 = vmul.f32 %v3910, %v3912
    %v3914 = vadd.f32 %v3910, %v3913
    %vm3915 = vweird.f32 %v3622
    %vm3916 = vweird.f32 %v3910
    %vm3917 = vmor %vm3915, %vm3916
    %v3918 = vsel %vm3917, %v3910, %v3914
    %v3919 = vand.u32 2147483647, %v3622
    %vm3920 = vcmp.eq.f32.partialorder %v3919, 8.507059e+37
    %v3921 = vand.u32 %v3622, 2147483648
    %v3922 = vor.u32 1.1754944e-38, %v3921
    %v3923 = vsel %vm3920, %v3922, %v3918
    %v3924 = vmul.f32 1.0, %v3923
    %v3925 = vrcp.pop %v3623
    %v3926 = vmul.f32 %v3623, %v3925
    %v3927 = vsub.f32 1.0, %v3926
    %v3928 = vmul.f32 %v3925, %v3927
    %v3929 = vadd.f32 %v3925, %v3928
    %vm3930 = vweird.f32 %v3623
    %vm3931 = vweird.f32 %v3925
    %vm3932 = vmor %vm3930, %vm3931
    %v3933 = vsel %vm3932, %v3925, %v3929
    %v3934 = vand.u32 2147483647, %v3623
    %vm3935 = vcmp.eq.f32.partialorder %v3934, 8.507059e+37
    %v3936 = vand.u32 %v3623, 2147483648
    %v3937 = vor.u32 1.1754944e-38, %v3936
    %v3938 = vsel %vm3935, %v3937, %v3933
    %v3939 = vmul.f32 1.0, %v3938
    %v3940 = vrcp.pop %v3624
    %v3941 = vmul.f32 %v3624, %v3940
    %v3942 = vsub.f32 1.0, %v3941
    %v3943 = vmul.f32 %v3940, %v3942
    %v3944 = vadd.f32 %v3940, %v3943
    %vm3945 = vweird.f32 %v3624
    %vm3946 = vweird.f32 %v3940
    %vm3947 = vmor %vm3945, %vm3946
    %v3948 = vsel %vm3947, %v3940, %v3944
    %v3949 = vand.u32 2147483647, %v3624
    %vm3950 = vcmp.eq.f32.partialorder %v3949, 8.507059e+37
    %v3951 = vand.u32 %v3624, 2147483648
    %v3952 = vor.u32 1.1754944e-38, %v3951
    %v3953 = vsel %vm3950, %v3952, %v3948
    %v3954 = vmul.f32 1.0, %v3953
    %v3955 = vrcp.pop %v3625
    %v3956 = vmul.f32 %v3625, %v3955
    %v3957 = vsub.f32 1.0, %v3956
    %v3958 = vmul.f32 %v3955, %v3957
    %v3959 = vadd.f32 %v3955, %v3958
    %vm3960 = vweird.f32 %v3625
    %vm3961 = vweird.f32 %v3955
    %vm3962 = vmor %vm3960, %vm3961
    %v3963 = vsel %vm3962, %v3955, %v3959
    %v3964 = vand.u32 2147483647, %v3625
    %vm3965 = vcmp.eq.f32.partialorder %v3964, 8.507059e+37
    %v3966 = vand.u32 %v3625, 2147483648
    %v3967 = vor.u32 1.1754944e-38, %v3966
    %v3968 = vsel %vm3965, %v3967, %v3963
    %v3969 = vmul.f32 1.0, %v3968
    %v3970 = vrcp.pop %v3626
    %v3971 = vmul.f32 %v3626, %v3970
    %v3972 = vsub.f32 1.0, %v3971
    %v3973 = vmul.f32 %v3970, %v3972
    %v3974 = vadd.f32 %v3970, %v3973
    %vm3975 = vweird.f32 %v3626
    %vm3976 = vweird.f32 %v3970
    %vm3977 = vmor %vm3975, %vm3976
    %v3978 = vsel %vm3977, %v3970, %v3974
    %v3979 = vand.u32 2147483647, %v3626
    %vm3980 = vcmp.eq.f32.partialorder %v3979, 8.507059e+37
    %v3981 = vand.u32 %v3626, 2147483648
    %v3982 = vor.u32 1.1754944e-38, %v3981
    %v3983 = vsel %vm3980, %v3982, %v3978
    %v3984 = vmul.f32 1.0, %v3983
    %v3985 = vrcp.pop %v3627
    %v3986 = vmul.f32 %v3627, %v3985
    %v3987 = vsub.f32 1.0, %v3986
    %v3988 = vmul.f32 %v3985, %v3987
    %v3989 = vadd.f32 %v3985, %v3988
    %vm3990 = vweird.f32 %v3627
    %vm3991 = vweird.f32 %v3985
    %vm3992 = vmor %vm3990, %vm3991
    %v3993 = vsel %vm3992, %v3985, %v3989
    %v3994 = vand.u32 2147483647, %v3627
    %vm3995 = vcmp.eq.f32.partialorder %v3994, 8.507059e+37
    %v3996 = vand.u32 %v3627, 2147483648
    %v3997 = vor.u32 1.1754944e-38, %v3996
    %v3998 = vsel %vm3995, %v3997, %v3993
    %v3999 = vmul.f32 1.0, %v3998
    %v4000 = vrcp.pop %v3628
    %v4001 = vmul.f32 %v3628, %v4000
    %v4002 = vsub.f32 1.0, %v4001
    %v4003 = vmul.f32 %v4000, %v4002
    %v4004 = vadd.f32 %v4000, %v4003
    %vm4005 = vweird.f32 %v3628
    %vm4006 = vweird.f32 %v4000
    %vm4007 = vmor %vm4005, %vm4006
    %v4008 = vsel %vm4007, %v4000, %v4004
    %v4009 = vand.u32 2147483647, %v3628
    %vm4010 = vcmp.eq.f32.partialorder %v4009, 8.507059e+37
    %v4011 = vand.u32 %v3628, 2147483648
    %v4012 = vor.u32 1.1754944e-38, %v4011
    %v4013 = vsel %vm4010, %v4012, %v4008
    %v4014 = vmul.f32 1.0, %v4013
    %v4015 = vrcp.pop %v3629
    %v4016 = vmul.f32 %v3629, %v4015
    %v4017 = vsub.f32 1.0, %v4016
    %v4018 = vmul.f32 %v4015, %v4017
    %v4019 = vadd.f32 %v4015, %v4018
    %vm4020 = vweird.f32 %v3629
    %vm4021 = vweird.f32 %v4015
    %vm4022 = vmor %vm4020, %vm4021
    %v4023 = vsel %vm4022, %v4015, %v4019
    %v4024 = vand.u32 2147483647, %v3629
    %vm4025 = vcmp.eq.f32.partialorder %v4024, 8.507059e+37
    %v4026 = vand.u32 %v3629, 2147483648
    %v4027 = vor.u32 1.1754944e-38, %v4026
    %v4028 = vsel %vm4025, %v4027, %v4023
    %v4029 = vmul.f32 1.0, %v4028
    %v4030 = vrcp.pop %v3630
    %v4031 = vmul.f32 %v3630, %v4030
    %v4032 = vsub.f32 1.0, %v4031
    %v4033 = vmul.f32 %v4030, %v4032
    %v4034 = vadd.f32 %v4030, %v4033
    %vm4035 = vweird.f32 %v3630
    %vm4036 = vweird.f32 %v4030
    %vm4037 = vmor %vm4035, %vm4036
    %v4038 = vsel %vm4037, %v4030, %v4034
    %v4039 = vand.u32 2147483647, %v3630
    %vm4040 = vcmp.eq.f32.partialorder %v4039, 8.507059e+37
    %v4041 = vand.u32 %v3630, 2147483648
    %v4042 = vor.u32 1.1754944e-38, %v4041
    %v4043 = vsel %vm4040, %v4042, %v4038
    %v4044 = vmul.f32 1.0, %v4043
    %v4045 = vrcp.pop %v3631
    %v4046 = vmul.f32 %v3631, %v4045
    %v4047 = vsub.f32 1.0, %v4046
    %v4048 = vmul.f32 %v4045, %v4047
    %v4049 = vadd.f32 %v4045, %v4048
    %vm4050 = vweird.f32 %v3631
    %vm4051 = vweird.f32 %v4045
    %vm4052 = vmor %vm4050, %vm4051
    %v4053 = vsel %vm4052, %v4045, %v4049
    %v4054 = vand.u32 2147483647, %v3631
    %vm4055 = vcmp.eq.f32.partialorder %v4054, 8.507059e+37
    %v4056 = vand.u32 %v3631, 2147483648
    %v4057 = vor.u32 1.1754944e-38, %v4056
    %v4058 = vsel %vm4055, %v4057, %v4053
    %v4059 = vmul.f32 1.0, %v4058
    %v4060 = vrcp.pop %v3632
    %v4061 = vmul.f32 %v3632, %v4060
    %v4062 = vsub.f32 1.0, %v4061
    %v4063 = vmul.f32 %v4060, %v4062
    %v4064 = vadd.f32 %v4060, %v4063
    %vm4065 = vweird.f32 %v3632
    %vm4066 = vweird.f32 %v4060
    %vm4067 = vmor %vm4065, %vm4066
    %v4068 = vsel %vm4067, %v4060, %v4064
    %v4069 = vand.u32 2147483647, %v3632
    %vm4070 = vcmp.eq.f32.partialorder %v4069, 8.507059e+37
    %v4071 = vand.u32 %v3632, 2147483648
    %v4072 = vor.u32 1.1754944e-38, %v4071
    %v4073 = vsel %vm4070, %v4072, %v4068
    %v4074 = vmul.f32 1.0, %v4073
    %v4075 = vrcp.pop %v3633
    %v4076 = vmul.f32 %v3633, %v4075
    %v4077 = vsub.f32 1.0, %v4076
    %v4078 = vmul.f32 %v4075, %v4077
    %v4079 = vadd.f32 %v4075, %v4078
    %vm4080 = vweird.f32 %v3633
    %vm4081 = vweird.f32 %v4075
    %vm4082 = vmor %vm4080, %vm4081
    %v4083 = vsel %vm4082, %v4075, %v4079
    %v4084 = vand.u32 2147483647, %v3633
    %vm4085 = vcmp.eq.f32.partialorder %v4084, 8.507059e+37
    %v4086 = vand.u32 %v3633, 2147483648
    %v4087 = vor.u32 1.1754944e-38, %v4086
    %v4088 = vsel %vm4085, %v4087, %v4083
    %v4089 = vmul.f32 1.0, %v4088
    %v4090 = vrcp.pop %v3634
    %v4091 = vmul.f32 %v3634, %v4090
    %v4092 = vsub.f32 1.0, %v4091
    %v4093 = vmul.f32 %v4090, %v4092
    %v4094 = vadd.f32 %v4090, %v4093
    %vm4095 = vweird.f32 %v3634
    %vm4096 = vweird.f32 %v4090
    %vm4097 = vmor %vm4095, %vm4096
    %v4098 = vsel %vm4097, %v4090, %v4094
    %v4099 = vand.u32 2147483647, %v3634
    %vm4100 = vcmp.eq.f32.partialorder %v4099, 8.507059e+37
    %v4101 = vand.u32 %v3634, 2147483648
    %v4102 = vor.u32 1.1754944e-38, %v4101
    %v4103 = vsel %vm4100, %v4102, %v4098
    %v4104 = vmul.f32 1.0, %v4103
    %v4105 = vrcp.pop %v3635
    %v4106 = vmul.f32 %v3635, %v4105
    %v4107 = vsub.f32 1.0, %v4106
    %v4108 = vmul.f32 %v4105, %v4107
    %v4109 = vadd.f32 %v4105, %v4108
    %vm4110 = vweird.f32 %v3635
    %vm4111 = vweird.f32 %v4105
    %vm4112 = vmor %vm4110, %vm4111
    %v4113 = vsel %vm4112, %v4105, %v4109
    %v4114 = vand.u32 2147483647, %v3635
    %vm4115 = vcmp.eq.f32.partialorder %v4114, 8.507059e+37
    %v4116 = vand.u32 %v3635, 2147483648
    %v4117 = vor.u32 1.1754944e-38, %v4116
    %v4118 = vsel %vm4115, %v4117, %v4113
    %v4119 = vmul.f32 1.0, %v4118
    %v4120 = vrcp.pop %v3636
    %v4121 = vmul.f32 %v3636, %v4120
    %v4122 = vsub.f32 1.0, %v4121
    %v4123 = vmul.f32 %v4120, %v4122
    %v4124 = vadd.f32 %v4120, %v4123
    %vm4125 = vweird.f32 %v3636
    %vm4126 = vweird.f32 %v4120
    %vm4127 = vmor %vm4125, %vm4126
    %v4128 = vsel %vm4127, %v4120, %v4124
    %v4129 = vand.u32 2147483647, %v3636
    %vm4130 = vcmp.eq.f32.partialorder %v4129, 8.507059e+37
    %v4131 = vand.u32 %v3636, 2147483648
    %v4132 = vor.u32 1.1754944e-38, %v4131
    %v4133 = vsel %vm4130, %v4132, %v4128
    %v4134 = vmul.f32 1.0, %v4133
    %v4135 = vrcp.pop %v3637
    %v4136 = vmul.f32 %v3637, %v4135
    %v4137 = vsub.f32 1.0, %v4136
    %v4138 = vmul.f32 %v4135, %v4137
    %v4139 = vadd.f32 %v4135, %v4138
    %vm4140 = vweird.f32 %v3637
    %vm4141 = vweird.f32 %v4135
    %vm4142 = vmor %vm4140, %vm4141
    %v4143 = vsel %vm4142, %v4135, %v4139
    %v4144 = vand.u32 2147483647, %v3637
    %vm4145 = vcmp.eq.f32.partialorder %v4144, 8.507059e+37
    %v4146 = vand.u32 %v3637, 2147483648
    %v4147 = vor.u32 1.1754944e-38, %v4146
    %v4148 = vsel %vm4145, %v4147, %v4143
    %v4149 = vmul.f32 1.0, %v4148
    %v4150 = vrcp.pop %v3638
    %v4151 = vmul.f32 %v3638, %v4150
    %v4152 = vsub.f32 1.0, %v4151
    %v4153 = vmul.f32 %v4150, %v4152
    %v4154 = vadd.f32 %v4150, %v4153
    %vm4155 = vweird.f32 %v3638
    %vm4156 = vweird.f32 %v4150
    %vm4157 = vmor %vm4155, %vm4156
    %v4158 = vsel %vm4157, %v4150, %v4154
    %v4159 = vand.u32 2147483647, %v3638
    %vm4160 = vcmp.eq.f32.partialorder %v4159, 8.507059e+37
    %v4161 = vand.u32 %v3638, 2147483648
    %v4162 = vor.u32 1.1754944e-38, %v4161
    %v4163 = vsel %vm4160, %v4162, %v4158
    %v4164 = vmul.f32 1.0, %v4163
    %v4165 = vrcp.pop %v3639
    %v4166 = vmul.f32 %v3639, %v4165
    %v4167 = vsub.f32 1.0, %v4166
    %v4168 = vmul.f32 %v4165, %v4167
    %v4169 = vadd.f32 %v4165, %v4168
    %vm4170 = vweird.f32 %v3639
    %vm4171 = vweird.f32 %v4165
    %vm4172 = vmor %vm4170, %vm4171
    %v4173 = vsel %vm4172, %v4165, %v4169
    %v4174 = vand.u32 2147483647, %v3639
    %vm4175 = vcmp.eq.f32.partialorder %v4174, 8.507059e+37
    %v4176 = vand.u32 %v3639, 2147483648
    %v4177 = vor.u32 1.1754944e-38, %v4176
    %v4178 = vsel %vm4175, %v4177, %v4173
    %v4179 = vmul.f32 1.0, %v4178
    %v4180 = vrcp.pop %v3640
    %v4181 = vmul.f32 %v3640, %v4180
    %v4182 = vsub.f32 1.0, %v4181
    %v4183 = vmul.f32 %v4180, %v4182
    %v4184 = vadd.f32 %v4180, %v4183
    %vm4185 = vweird.f32 %v3640
    %vm4186 = vweird.f32 %v4180
    %vm4187 = vmor %vm4185, %vm4186
    %v4188 = vsel %vm4187, %v4180, %v4184
    %v4189 = vand.u32 2147483647, %v3640
    %vm4190 = vcmp.eq.f32.partialorder %v4189, 8.507059e+37
    %v4191 = vand.u32 %v3640, 2147483648
    %v4192 = vor.u32 1.1754944e-38, %v4191
    %v4193 = vsel %vm4190, %v4192, %v4188
    %v4194 = vmul.f32 1.0, %v4193
    %v4195 = vrcp.pop %v3641
    %v4196 = vmul.f32 %v3641, %v4195
    %v4197 = vsub.f32 1.0, %v4196
    %v4198 = vmul.f32 %v4195, %v4197
    %v4199 = vadd.f32 %v4195, %v4198
    %vm4200 = vweird.f32 %v3641
    %vm4201 = vweird.f32 %v4195
    %vm4202 = vmor %vm4200, %vm4201
    %v4203 = vsel %vm4202, %v4195, %v4199
    %v4204 = vand.u32 2147483647, %v3641
    %vm4205 = vcmp.eq.f32.partialorder %v4204, 8.507059e+37
    %v4206 = vand.u32 %v3641, 2147483648
    %v4207 = vor.u32 1.1754944e-38, %v4206
    %v4208 = vsel %vm4205, %v4207, %v4203
    %v4209 = vmul.f32 1.0, %v4208
    %v4210 = vrcp.pop %v3642
    %v4211 = vmul.f32 %v3642, %v4210
    %v4212 = vsub.f32 1.0, %v4211
    %v4213 = vmul.f32 %v4210, %v4212
    %v4214 = vadd.f32 %v4210, %v4213
    %vm4215 = vweird.f32 %v3642
    %vm4216 = vweird.f32 %v4210
    %vm4217 = vmor %vm4215, %vm4216
    %v4218 = vsel %vm4217, %v4210, %v4214
    %v4219 = vand.u32 2147483647, %v3642
    %vm4220 = vcmp.eq.f32.partialorder %v4219, 8.507059e+37
    %v4221 = vand.u32 %v3642, 2147483648
    %v4222 = vor.u32 1.1754944e-38, %v4221
    %v4223 = vsel %vm4220, %v4222, %v4218
    %v4224 = vmul.f32 1.0, %v4223
    %v4225 = vrcp.pop %v3643
    %v4226 = vmul.f32 %v3643, %v4225
    %v4227 = vsub.f32 1.0, %v4226
    %v4228 = vmul.f32 %v4225, %v4227
    %v4229 = vadd.f32 %v4225, %v4228
    %vm4230 = vweird.f32 %v3643
    %vm4231 = vweird.f32 %v4225
    %vm4232 = vmor %vm4230, %vm4231
    %v4233 = vsel %vm4232, %v4225, %v4229
    %v4234 = vand.u32 2147483647, %v3643
    %vm4235 = vcmp.eq.f32.partialorder %v4234, 8.507059e+37
    %v4236 = vand.u32 %v3643, 2147483648
    %v4237 = vor.u32 1.1754944e-38, %v4236
    %v4238 = vsel %vm4235, %v4237, %v4233
    %v4239 = vmul.f32 1.0, %v4238
    %v4240 = vrcp.pop %v3644
    %v4241 = vmul.f32 %v3644, %v4240
    %v4242 = vsub.f32 1.0, %v4241
    %v4243 = vmul.f32 %v4240, %v4242
    %v4244 = vadd.f32 %v4240, %v4243
    %vm4245 = vweird.f32 %v3644
    %vm4246 = vweird.f32 %v4240
    %vm4247 = vmor %vm4245, %vm4246
    %v4248 = vsel %vm4247, %v4240, %v4244
    %v4249 = vand.u32 2147483647, %v3644
    %vm4250 = vcmp.eq.f32.partialorder %v4249, 8.507059e+37
    %v4251 = vand.u32 %v3644, 2147483648
    %v4252 = vor.u32 1.1754944e-38, %v4251
    %v4253 = vsel %vm4250, %v4252, %v4248
    %v4254 = vmul.f32 1.0, %v4253
    %v4255 = vrcp.pop %v3645
    %v4256 = vmul.f32 %v3645, %v4255
    %v4257 = vsub.f32 1.0, %v4256
    %v4258 = vmul.f32 %v4255, %v4257
    %v4259 = vadd.f32 %v4255, %v4258
    %vm4260 = vweird.f32 %v3645
    %vm4261 = vweird.f32 %v4255
    %vm4262 = vmor %vm4260, %vm4261
    %v4263 = vsel %vm4262, %v4255, %v4259
    %v4264 = vand.u32 2147483647, %v3645
    %vm4265 = vcmp.eq.f32.partialorder %v4264, 8.507059e+37
    %v4266 = vand.u32 %v3645, 2147483648
    %v4267 = vor.u32 1.1754944e-38, %v4266
    %v4268 = vsel %vm4265, %v4267, %v4263
    %v4269 = vmul.f32 1.0, %v4268
    %v4270 = vrcp.pop %v3646
    %v4271 = vmul.f32 %v3646, %v4270
    %v4272 = vsub.f32 1.0, %v4271
    %v4273 = vmul.f32 %v4270, %v4272
    %v4274 = vadd.f32 %v4270, %v4273
    %vm4275 = vweird.f32 %v3646
    %vm4276 = vweird.f32 %v4270
    %vm4277 = vmor %vm4275, %vm4276
    %v4278 = vsel %vm4277, %v4270, %v4274
    %v4279 = vand.u32 2147483647, %v3646
    %vm4280 = vcmp.eq.f32.partialorder %v4279, 8.507059e+37
    %v4281 = vand.u32 %v3646, 2147483648
    %v4282 = vor.u32 1.1754944e-38, %v4281
    %v4283 = vsel %vm4280, %v4282, %v4278
    %v4284 = vmul.f32 1.0, %v4283
    %v4285 = vrcp.pop %v3647
    %v4286 = vmul.f32 %v3647, %v4285
    %v4287 = vsub.f32 1.0, %v4286
    %v4288 = vmul.f32 %v4285, %v4287
    %v4289 = vadd.f32 %v4285, %v4288
    %vm4290 = vweird.f32 %v3647
    %vm4291 = vweird.f32 %v4285
    %vm4292 = vmor %vm4290, %vm4291
    %v4293 = vsel %vm4292, %v4285, %v4289
    %v4294 = vand.u32 2147483647, %v3647
    %vm4295 = vcmp.eq.f32.partialorder %v4294, 8.507059e+37
    %v4296 = vand.u32 %v3647, 2147483648
    %v4297 = vor.u32 1.1754944e-38, %v4296
    %v4298 = vsel %vm4295, %v4297, %v4293
    %v4299 = vmul.f32 1.0, %v4298
    %v4300 = vrcp.pop %v3648
    %v4301 = vmul.f32 %v3648, %v4300
    %v4302 = vsub.f32 1.0, %v4301
    %v4303 = vmul.f32 %v4300, %v4302
    %v4304 = vadd.f32 %v4300, %v4303
    %vm4305 = vweird.f32 %v3648
    %vm4306 = vweird.f32 %v4300
    %vm4307 = vmor %vm4305, %vm4306
    %v4308 = vsel %vm4307, %v4300, %v4304
    %v4309 = vand.u32 2147483647, %v3648
    %vm4310 = vcmp.eq.f32.partialorder %v4309, 8.507059e+37
    %v4311 = vand.u32 %v3648, 2147483648
    %v4312 = vor.u32 1.1754944e-38, %v4311
    %v4313 = vsel %vm4310, %v4312, %v4308
    %v4314 = vmul.f32 1.0, %v4313
    %v4315 = vrcp.pop %v3649
    %v4316 = vmul.f32 %v3649, %v4315
    %v4317 = vsub.f32 1.0, %v4316
    %v4318 = vmul.f32 %v4315, %v4317
    %v4319 = vadd.f32 %v4315, %v4318
    %vm4320 = vweird.f32 %v3649
    %vm4321 = vweird.f32 %v4315
    %vm4322 = vmor %vm4320, %vm4321
    %v4323 = vsel %vm4322, %v4315, %v4319
    %v4324 = vand.u32 2147483647, %v3649
    %vm4325 = vcmp.eq.f32.partialorder %v4324, 8.507059e+37
    %v4326 = vand.u32 %v3649, 2147483648
    %v4327 = vor.u32 1.1754944e-38, %v4326
    %v4328 = vsel %vm4325, %v4327, %v4323
    %v4329 = vmul.f32 1.0, %v4328
    %v4330 = vrcp.pop %v3650
    %v4331 = vmul.f32 %v3650, %v4330
    %v4332 = vsub.f32 1.0, %v4331
    %v4333 = vmul.f32 %v4330, %v4332
    %v4334 = vadd.f32 %v4330, %v4333
    %vm4335 = vweird.f32 %v3650
    %vm4336 = vweird.f32 %v4330
    %vm4337 = vmor %vm4335, %vm4336
    %v4338 = vsel %vm4337, %v4330, %v4334
    %v4339 = vand.u32 2147483647, %v3650
    %vm4340 = vcmp.eq.f32.partialorder %v4339, 8.507059e+37
    %v4341 = vand.u32 %v3650, 2147483648
    %v4342 = vor.u32 1.1754944e-38, %v4341
    %v4343 = vsel %vm4340, %v4342, %v4338
    %v4344 = vmul.f32 1.0, %v4343
    %v4345 = vrcp.pop %v3651
    %v4346 = vmul.f32 %v3651, %v4345
    %v4347 = vsub.f32 1.0, %v4346
    %v4348 = vmul.f32 %v4345, %v4347
    %v4349 = vadd.f32 %v4345, %v4348
    %vm4350 = vweird.f32 %v3651
    %vm4351 = vweird.f32 %v4345
    %vm4352 = vmor %vm4350, %vm4351
    %v4353 = vsel %vm4352, %v4345, %v4349
    %v4354 = vand.u32 2147483647, %v3651
    %vm4355 = vcmp.eq.f32.partialorder %v4354, 8.507059e+37
    %v4356 = vand.u32 %v3651, 2147483648
    %v4357 = vor.u32 1.1754944e-38, %v4356
    %v4358 = vsel %vm4355, %v4357, %v4353
    %v4359 = vmul.f32 1.0, %v4358
    %v4360 = vrcp.pop %v3652
    %v4361 = vmul.f32 %v3652, %v4360
    %v4362 = vsub.f32 1.0, %v4361
    %v4363 = vmul.f32 %v4360, %v4362
    %v4364 = vadd.f32 %v4360, %v4363
    %vm4365 = vweird.f32 %v3652
    %vm4366 = vweird.f32 %v4360
    %vm4367 = vmor %vm4365, %vm4366
    %v4368 = vsel %vm4367, %v4360, %v4364
    %v4369 = vand.u32 2147483647, %v3652
    %vm4370 = vcmp.eq.f32.partialorder %v4369, 8.507059e+37
    %v4371 = vand.u32 %v3652, 2147483648
    %v4372 = vor.u32 1.1754944e-38, %v4371
    %v4373 = vsel %vm4370, %v4372, %v4368
    %v4374 = vmul.f32 1.0, %v4373
    %v4375 = vrcp.pop %v3653
    %v4376 = vmul.f32 %v3653, %v4375
    %v4377 = vsub.f32 1.0, %v4376
    %v4378 = vmul.f32 %v4375, %v4377
    %v4379 = vadd.f32 %v4375, %v4378
    %vm4380 = vweird.f32 %v3653
    %vm4381 = vweird.f32 %v4375
    %vm4382 = vmor %vm4380, %vm4381
    %v4383 = vsel %vm4382, %v4375, %v4379
    %v4384 = vand.u32 2147483647, %v3653
    %vm4385 = vcmp.eq.f32.partialorder %v4384, 8.507059e+37
    %v4386 = vand.u32 %v3653, 2147483648
    %v4387 = vor.u32 1.1754944e-38, %v4386
    %v4388 = vsel %vm4385, %v4387, %v4383
    %v4389 = vmul.f32 1.0, %v4388
    %v4390 = vrcp.pop %v3654
    %v4391 = vmul.f32 %v3654, %v4390
    %v4392 = vsub.f32 1.0, %v4391
    %v4393 = vmul.f32 %v4390, %v4392
    %v4394 = vadd.f32 %v4390, %v4393
    %vm4395 = vweird.f32 %v3654
    %vm4396 = vweird.f32 %v4390
    %vm4397 = vmor %vm4395, %vm4396
    %v4398 = vsel %vm4397, %v4390, %v4394
    %v4399 = vand.u32 2147483647, %v3654
    %vm4400 = vcmp.eq.f32.partialorder %v4399, 8.507059e+37
    %v4401 = vand.u32 %v3654, 2147483648
    %v4402 = vor.u32 1.1754944e-38, %v4401
    %v4403 = vsel %vm4400, %v4402, %v4398
    %v4404 = vmul.f32 1.0, %v4403
    %v4405 = vrcp.pop %v3655
    %v4406 = vmul.f32 %v3655, %v4405
    %v4407 = vsub.f32 1.0, %v4406
    %v4408 = vmul.f32 %v4405, %v4407
    %v4409 = vadd.f32 %v4405, %v4408
    %vm4410 = vweird.f32 %v3655
    %vm4411 = vweird.f32 %v4405
    %vm4412 = vmor %vm4410, %vm4411
    %v4413 = vsel %vm4412, %v4405, %v4409
    %v4414 = vand.u32 2147483647, %v3655
    %vm4415 = vcmp.eq.f32.partialorder %v4414, 8.507059e+37
    %v4416 = vand.u32 %v3655, 2147483648
    %v4417 = vor.u32 1.1754944e-38, %v4416
    %v4418 = vsel %vm4415, %v4417, %v4413
    %v4419 = vmul.f32 1.0, %v4418
    %v4420 = vrcp.pop %v3656
    %v4421 = vmul.f32 %v3656, %v4420
    %v4422 = vsub.f32 1.0, %v4421
    %v4423 = vmul.f32 %v4420, %v4422
    %v4424 = vadd.f32 %v4420, %v4423
    %vm4425 = vweird.f32 %v3656
    %vm4426 = vweird.f32 %v4420
    %vm4427 = vmor %vm4425, %vm4426
    %v4428 = vsel %vm4427, %v4420, %v4424
    %v4429 = vand.u32 2147483647, %v3656
    %vm4430 = vcmp.eq.f32.partialorder %v4429, 8.507059e+37
    %v4431 = vand.u32 %v3656, 2147483648
    %v4432 = vor.u32 1.1754944e-38, %v4431
    %v4433 = vsel %vm4430, %v4432, %v4428
    %v4434 = vmul.f32 1.0, %v4433
    %v4435 = vrcp.pop %v3657
    %v4436 = vmul.f32 %v3657, %v4435
    %v4437 = vsub.f32 1.0, %v4436
    %v4438 = vmul.f32 %v4435, %v4437
    %v4439 = vadd.f32 %v4435, %v4438
    %vm4440 = vweird.f32 %v3657
    %vm4441 = vweird.f32 %v4435
    %vm4442 = vmor %vm4440, %vm4441
    %v4443 = vsel %vm4442, %v4435, %v4439
    %v4444 = vand.u32 2147483647, %v3657
    %vm4445 = vcmp.eq.f32.partialorder %v4444, 8.507059e+37
    %v4446 = vand.u32 %v3657, 2147483648
    %v4447 = vor.u32 1.1754944e-38, %v4446
    %v4448 = vsel %vm4445, %v4447, %v4443
    %v4449 = vmul.f32 1.0, %v4448
    %v4450 = vrcp.pop %v3658
    %v4451 = vmul.f32 %v3658, %v4450
    %v4452 = vsub.f32 1.0, %v4451
    %v4453 = vmul.f32 %v4450, %v4452
    %v4454 = vadd.f32 %v4450, %v4453
    %vm4455 = vweird.f32 %v3658
    %vm4456 = vweird.f32 %v4450
    %vm4457 = vmor %vm4455, %vm4456
    %v4458 = vsel %vm4457, %v4450, %v4454
    %v4459 = vand.u32 2147483647, %v3658
    %vm4460 = vcmp.eq.f32.partialorder %v4459, 8.507059e+37
    %v4461 = vand.u32 %v3658, 2147483648
    %v4462 = vor.u32 1.1754944e-38, %v4461
    %v4463 = vsel %vm4460, %v4462, %v4458
    %v4464 = vmul.f32 1.0, %v4463
    %v4465 = vrcp.pop %v3659
    %v4466 = vmul.f32 %v3659, %v4465
    %v4467 = vsub.f32 1.0, %v4466
    %v4468 = vmul.f32 %v4465, %v4467
    %v4469 = vadd.f32 %v4465, %v4468
    %vm4470 = vweird.f32 %v3659
    %vm4471 = vweird.f32 %v4465
    %vm4472 = vmor %vm4470, %vm4471
    %v4473 = vsel %vm4472, %v4465, %v4469
    %v4474 = vand.u32 2147483647, %v3659
    %vm4475 = vcmp.eq.f32.partialorder %v4474, 8.507059e+37
    %v4476 = vand.u32 %v3659, 2147483648
    %v4477 = vor.u32 1.1754944e-38, %v4476
    %v4478 = vsel %vm4475, %v4477, %v4473
    %v4479 = vmul.f32 1.0, %v4478
    %v4480 = vrcp.pop %v3660
    %v4481 = vmul.f32 %v3660, %v4480
    %v4482 = vsub.f32 1.0, %v4481
    %v4483 = vmul.f32 %v4480, %v4482
    %v4484 = vadd.f32 %v4480, %v4483
    %vm4485 = vweird.f32 %v3660
    %vm4486 = vweird.f32 %v4480
    %vm4487 = vmor %vm4485, %vm4486
    %v4488 = vsel %vm4487, %v4480, %v4484
    %v4489 = vand.u32 2147483647, %v3660
    %vm4490 = vcmp.eq.f32.partialorder %v4489, 8.507059e+37
    %v4491 = vand.u32 %v3660, 2147483648
    %v4492 = vor.u32 1.1754944e-38, %v4491
    %v4493 = vsel %vm4490, %v4492, %v4488
    %v4494 = vmul.f32 1.0, %v4493
    %v4495 = vrcp.pop %v3661
    %v4496 = vmul.f32 %v3661, %v4495
    %v4497 = vsub.f32 1.0, %v4496
    %v4498 = vmul.f32 %v4495, %v4497
    %v4499 = vadd.f32 %v4495, %v4498
    %vm4500 = vweird.f32 %v3661
    %vm4501 = vweird.f32 %v4495
    %vm4502 = vmor %vm4500, %vm4501
    %v4503 = vsel %vm4502, %v4495, %v4499
    %v4504 = vand.u32 2147483647, %v3661
    %vm4505 = vcmp.eq.f32.partialorder %v4504, 8.507059e+37
    %v4506 = vand.u32 %v3661, 2147483648
    %v4507 = vor.u32 1.1754944e-38, %v4506
    %v4508 = vsel %vm4505, %v4507, %v4503
    %v4509 = vmul.f32 1.0, %v4508
    %v4510 = vrcp.pop %v3662
    %v4511 = vmul.f32 %v3662, %v4510
    %v4512 = vsub.f32 1.0, %v4511
    %v4513 = vmul.f32 %v4510, %v4512
    %v4514 = vadd.f32 %v4510, %v4513
    %vm4515 = vweird.f32 %v3662
    %vm4516 = vweird.f32 %v4510
    %vm4517 = vmor %vm4515, %vm4516
    %v4518 = vsel %vm4517, %v4510, %v4514
    %v4519 = vand.u32 2147483647, %v3662
    %vm4520 = vcmp.eq.f32.partialorder %v4519, 8.507059e+37
    %v4521 = vand.u32 %v3662, 2147483648
    %v4522 = vor.u32 1.1754944e-38, %v4521
    %v4523 = vsel %vm4520, %v4522, %v4518
    %v4524 = vmul.f32 1.0, %v4523
    %v4525 = vrcp.pop %v3663
    %v4526 = vmul.f32 %v3663, %v4525
    %v4527 = vsub.f32 1.0, %v4526
    %v4528 = vmul.f32 %v4525, %v4527
    %v4529 = vadd.f32 %v4525, %v4528
    %vm4530 = vweird.f32 %v3663
    %vm4531 = vweird.f32 %v4525
    %vm4532 = vmor %vm4530, %vm4531
    %v4533 = vsel %vm4532, %v4525, %v4529
    %v4534 = vand.u32 2147483647, %v3663
    %vm4535 = vcmp.eq.f32.partialorder %v4534, 8.507059e+37
    %v4536 = vand.u32 %v3663, 2147483648
    %v4537 = vor.u32 1.1754944e-38, %v4536
    %v4538 = vsel %vm4535, %v4537, %v4533
    %v4539 = vmul.f32 1.0, %v4538
    %v4540 = vrcp.pop %v3664
    %v4541 = vmul.f32 %v3664, %v4540
    %v4542 = vsub.f32 1.0, %v4541
    %v4543 = vmul.f32 %v4540, %v4542
    %v4544 = vadd.f32 %v4540, %v4543
    %vm4545 = vweird.f32 %v3664
    %vm4546 = vweird.f32 %v4540
    %vm4547 = vmor %vm4545, %vm4546
    %v4548 = vsel %vm4547, %v4540, %v4544
    %v4549 = vand.u32 2147483647, %v3664
    %vm4550 = vcmp.eq.f32.partialorder %v4549, 8.507059e+37
    %v4551 = vand.u32 %v3664, 2147483648
    %v4552 = vor.u32 1.1754944e-38, %v4551
    %v4553 = vsel %vm4550, %v4552, %v4548
    %v4554 = vmul.f32 1.0, %v4553
    %v4555 = vrcp.pop %v3665
    %v4556 = vmul.f32 %v3665, %v4555
    %v4557 = vsub.f32 1.0, %v4556
    %v4558 = vmul.f32 %v4555, %v4557
    %v4559 = vadd.f32 %v4555, %v4558
    %vm4560 = vweird.f32 %v3665
    %vm4561 = vweird.f32 %v4555
    %vm4562 = vmor %vm4560, %vm4561
    %v4563 = vsel %vm4562, %v4555, %v4559
    %v4564 = vand.u32 2147483647, %v3665
    %vm4565 = vcmp.eq.f32.partialorder %v4564, 8.507059e+37
    %v4566 = vand.u32 %v3665, 2147483648
    %v4567 = vor.u32 1.1754944e-38, %v4566
    %v4568 = vsel %vm4565, %v4567, %v4563
    %v4569 = vmul.f32 1.0, %v4568
    %v4570 = vrcp.pop %v3666
    %v4571 = vmul.f32 %v3666, %v4570
    %v4572 = vsub.f32 1.0, %v4571
    %v4573 = vmul.f32 %v4570, %v4572
    %v4574 = vadd.f32 %v4570, %v4573
    %vm4575 = vweird.f32 %v3666
    %vm4576 = vweird.f32 %v4570
    %vm4577 = vmor %vm4575, %vm4576
    %v4578 = vsel %vm4577, %v4570, %v4574
    %v4579 = vand.u32 2147483647, %v3666
    %vm4580 = vcmp.eq.f32.partialorder %v4579, 8.507059e+37
    %v4581 = vand.u32 %v3666, 2147483648
    %v4582 = vor.u32 1.1754944e-38, %v4581
    %v4583 = vsel %vm4580, %v4582, %v4578
    %v4584 = vmul.f32 1.0, %v4583
    %v4585 = vrcp.pop %v3667
    %v4586 = vmul.f32 %v3667, %v4585
    %v4587 = vsub.f32 1.0, %v4586
    %v4588 = vmul.f32 %v4585, %v4587
    %v4589 = vadd.f32 %v4585, %v4588
    %vm4590 = vweird.f32 %v3667
    %vm4591 = vweird.f32 %v4585
    %vm4592 = vmor %vm4590, %vm4591
    %v4593 = vsel %vm4592, %v4585, %v4589
    %v4594 = vand.u32 2147483647, %v3667
    %vm4595 = vcmp.eq.f32.partialorder %v4594, 8.507059e+37
    %v4596 = vand.u32 %v3667, 2147483648
    %v4597 = vor.u32 1.1754944e-38, %v4596
    %v4598 = vsel %vm4595, %v4597, %v4593
    %v4599 = vmul.f32 1.0, %v4598
    %v4600 = vrcp.pop %v3668
    %v4601 = vmul.f32 %v3668, %v4600
    %v4602 = vsub.f32 1.0, %v4601
    %v4603 = vmul.f32 %v4600, %v4602
    %v4604 = vadd.f32 %v4600, %v4603
    %vm4605 = vweird.f32 %v3668
    %vm4606 = vweird.f32 %v4600
    %vm4607 = vmor %vm4605, %vm4606
    %v4608 = vsel %vm4607, %v4600, %v4604
    %v4609 = vand.u32 2147483647, %v3668
    %vm4610 = vcmp.eq.f32.partialorder %v4609, 8.507059e+37
    %v4611 = vand.u32 %v3668, 2147483648
    %v4612 = vor.u32 1.1754944e-38, %v4611
    %v4613 = vsel %vm4610, %v4612, %v4608
    %v4614 = vmul.f32 1.0, %v4613
    %v4615 = vrcp.pop %v3669
    %v4616 = vmul.f32 %v3669, %v4615
    %v4617 = vsub.f32 1.0, %v4616
    %v4618 = vmul.f32 %v4615, %v4617
    %v4619 = vadd.f32 %v4615, %v4618
    %vm4620 = vweird.f32 %v3669
    %vm4621 = vweird.f32 %v4615
    %vm4622 = vmor %vm4620, %vm4621
    %v4623 = vsel %vm4622, %v4615, %v4619
    %v4624 = vand.u32 2147483647, %v3669
    %vm4625 = vcmp.eq.f32.partialorder %v4624, 8.507059e+37
    %v4626 = vand.u32 %v3669, 2147483648
    %v4627 = vor.u32 1.1754944e-38, %v4626
    %v4628 = vsel %vm4625, %v4627, %v4623
    %v4629 = vmul.f32 1.0, %v4628
    %v4630 = vmul.f32 %v3255, %v3684
    %v4631 = vmul.f32 %v3257, %v3699
    %v4632 = vmul.f32 %v3260, %v3714
    %v4633 = vmul.f32 %v3262, %v3729
    %v4634 = vmul.f32 %v3265, %v3744
    %v4635 = vmul.f32 %v3267, %v3759
    %v4636 = vmul.f32 %v3270, %v3774
    %v4637 = vmul.f32 %v3272, %v3789
    %v4638 = vmul.f32 %v3275, %v3804
    %v4639 = vmul.f32 %v3277, %v3819
    %v4640 = vmul.f32 %v3280, %v3834
    %v4641 = vmul.f32 %v3282, %v3849
    %v4642 = vmul.f32 %v3285, %v3864
    %v4643 = vmul.f32 %v3287, %v3879
    %v4644 = vmul.f32 %v3290, %v3894
    %v4645 = vmul.f32 %v3292, %v3909
    %v4646 = vmul.f32 %v3295, %v3924
    %v4647 = vmul.f32 %v3297, %v3939
    %v4648 = vmul.f32 %v3300, %v3954
    %v4649 = vmul.f32 %v3302, %v3969
    %v4650 = vmul.f32 %v3305, %v3984
    %v4651 = vmul.f32 %v3307, %v3999
    %v4652 = vmul.f32 %v3310, %v4014
    %v4653 = vmul.f32 %v3312, %v4029
    %v4654 = vmul.f32 %v3315, %v4044
    %v4655 = vmul.f32 %v3317, %v4059
    %v4656 = vmul.f32 %v3320, %v4074
    %v4657 = vmul.f32 %v3322, %v4089
    %v4658 = vmul.f32 %v3325, %v4104
    %v4659 = vmul.f32 %v3327, %v4119
    %v4660 = vmul.f32 %v3330, %v4134
    %v4661 = vmul.f32 %v3332, %v4149
    %v4662 = vmul.f32 %v3335, %v4164
    %v4663 = vmul.f32 %v3337, %v4179
    %v4664 = vmul.f32 %v3340, %v4194
    %v4665 = vmul.f32 %v3342, %v4209
    %v4666 = vmul.f32 %v3345, %v4224
    %v4667 = vmul.f32 %v3347, %v4239
    %v4668 = vmul.f32 %v3350, %v4254
    %v4669 = vmul.f32 %v3352, %v4269
    %v4670 = vmul.f32 %v3355, %v4284
    %v4671 = vmul.f32 %v3357, %v4299
    %v4672 = vmul.f32 %v3360, %v4314
    %v4673 = vmul.f32 %v3362, %v4329
    %v4674 = vmul.f32 %v3365, %v4344
    %v4675 = vmul.f32 %v3367, %v4359
    %v4676 = vmul.f32 %v3370, %v4374
    %v4677 = vmul.f32 %v3372, %v4389
    %v4678 = vmul.f32 %v3375, %v4404
    %v4679 = vmul.f32 %v3377, %v4419
    %v4680 = vmul.f32 %v3380, %v4434
    %v4681 = vmul.f32 %v3382, %v4449
    %v4682 = vmul.f32 %v3385, %v4464
    %v4683 = vmul.f32 %v3387, %v4479
    %v4684 = vmul.f32 %v3390, %v4494
    %v4685 = vmul.f32 %v3392, %v4509
    %v4686 = vmul.f32 %v3395, %v4524
    %v4687 = vmul.f32 %v3397, %v4539
    %v4688 = vmul.f32 %v3400, %v4554
    %v4689 = vmul.f32 %v3402, %v4569
    %v4690 = vmul.f32 %v3405, %v4584
    %v4691 = vmul.f32 %v3407, %v4599
    %v4692 = vmul.f32 %v3410, %v4614
    %v4693 = vmul.f32 %v3412, %v4629
    %v4694 = vpack.c.bf16 %v4631, %v4630
    %v4695 = vpack.c.bf16 %v4633, %v4632
    %v4696 = vpack.c.bf16 %v4635, %v4634
    %v4697 = vpack.c.bf16 %v4637, %v4636
    %v4698 = vpack.c.bf16 %v4639, %v4638
    %v4699 = vpack.c.bf16 %v4641, %v4640
    %v4700 = vpack.c.bf16 %v4643, %v4642
    %v4701 = vpack.c.bf16 %v4645, %v4644
    %v4702 = vpack.c.bf16 %v4647, %v4646
    %v4703 = vpack.c.bf16 %v4649, %v4648
    %v4704 = vpack.c.bf16 %v4651, %v4650
    %v4705 = vpack.c.bf16 %v4653, %v4652
    %v4706 = vpack.c.bf16 %v4655, %v4654
    %v4707 = vpack.c.bf16 %v4657, %v4656
    %v4708 = vpack.c.bf16 %v4659, %v4658
    %v4709 = vpack.c.bf16 %v4661, %v4660
    %v4710 = vpack.c.bf16 %v4663, %v4662
    %v4711 = vpack.c.bf16 %v4665, %v4664
    %v4712 = vpack.c.bf16 %v4667, %v4666
    %v4713 = vpack.c.bf16 %v4669, %v4668
    %v4714 = vpack.c.bf16 %v4671, %v4670
    %v4715 = vpack.c.bf16 %v4673, %v4672
    %v4716 = vpack.c.bf16 %v4675, %v4674
    %v4717 = vpack.c.bf16 %v4677, %v4676
    %v4718 = vpack.c.bf16 %v4679, %v4678
    %v4719 = vpack.c.bf16 %v4681, %v4680
    %v4720 = vpack.c.bf16 %v4683, %v4682
    %v4721 = vpack.c.bf16 %v4685, %v4684
    %v4722 = vpack.c.bf16 %v4687, %v4686
    %v4723 = vpack.c.bf16 %v4689, %v4688
    %v4724 = vpack.c.bf16 %v4691, %v4690
    %v4725 = vpack.c.bf16 %v4693, %v4692
    %v4726 = vld [vmem:[%s5] sm:$0xff]
    %v4727 = vld [vmem:[%s5 + $0x8] sm:$0xf]
    %v4728 = vld [vmem:[%s5 + $0xc] sm:$0xff]
    %v4729 = vld [vmem:[%s5 + $0x14] sm:$0xf]
    %v4730 = vld [vmem:[%s5 + $0x18] sm:$0xff]
    %v4731 = vld [vmem:[%s5 + $0x20] sm:$0xf]
    %v4732 = vld [vmem:[%s5 + $0x24] sm:$0xff]
    %v4733 = vld [vmem:[%s5 + $0x2c] sm:$0xf]
    %v4734 = vld [vmem:[%s5 + $0x30] sm:$0xff]
    %v4735 = vld [vmem:[%s5 + $0x38] sm:$0xf]
    %v4736 = vld [vmem:[%s5 + $0x3c] sm:$0xff]
    %v4737 = vld [vmem:[%s5 + $0x44] sm:$0xf]
    %v4738 = vld [vmem:[%s5 + $0x48] sm:$0xff]
    %v4739 = vld [vmem:[%s5 + $0x50] sm:$0xf]
    %v4740 = vld [vmem:[%s5 + $0x54] sm:$0xff]
    %v4741 = vld [vmem:[%s5 + $0x5c] sm:$0xf]
    %v4742 = vld [vmem:[%s5 + $0x60] sm:$0xff]
    %v4743 = vld [vmem:[%s5 + $0x68] sm:$0xf]
    %v4744 = vld [vmem:[%s5 + $0x6c] sm:$0xff]
    %v4745 = vld [vmem:[%s5 + $0x74] sm:$0xf]
    %v4746 = vld [vmem:[%s5 + $0x78] sm:$0xff]
    %v4747 = vld [vmem:[%s5 + $0x80] sm:$0xf]
    %v4748 = vld [vmem:[%s5 + $0x84] sm:$0xff]
    %v4749 = vld [vmem:[%s5 + $0x8c] sm:$0xf]
    %v4750 = vld [vmem:[%s5 + $0x90] sm:$0xff]
    %v4751 = vld [vmem:[%s5 + $0x98] sm:$0xf]
    %v4752 = vld [vmem:[%s5 + $0x9c] sm:$0xff]
    %v4753 = vld [vmem:[%s5 + $0xa4] sm:$0xf]
    %v4754 = vld [vmem:[%s5 + $0xa8] sm:$0xff]
    %v4755 = vld [vmem:[%s5 + $0xb0] sm:$0xf]
    %v4756 = vld [vmem:[%s5 + $0xb4] sm:$0xff]
    %v4757 = vld [vmem:[%s5 + $0xbc] sm:$0xf]
    %v4758 = vld [vmem:[%s6] sm:$0x7]
    %v4760 = vperm.slane %v4758, 0
    %v4761 = vperm.slane %v4758, 1
    %v4762 = vperm.slane %v4758, 2
    %v4798 = vunpack.c.l.b16 %v4726
    %v4799 = vunpack.c.h.b16 %v4726
    %v4800 = vunpack.c.l.b16 %v4727
    %v4801 = vunpack.c.l.b16 %v4728
    %v4802 = vunpack.c.h.b16 %v4728
    %v4803 = vunpack.c.l.b16 %v4729
    %v4804 = vunpack.c.l.b16 %v4730
    %v4805 = vunpack.c.h.b16 %v4730
    %v4806 = vunpack.c.l.b16 %v4731
    %v4807 = vunpack.c.l.b16 %v4732
    %v4808 = vunpack.c.h.b16 %v4732
    %v4809 = vunpack.c.l.b16 %v4733
    %v4810 = vunpack.c.l.b16 %v4734
    %v4811 = vunpack.c.h.b16 %v4734
    %v4812 = vunpack.c.l.b16 %v4735
    %v4813 = vunpack.c.l.b16 %v4736
    %v4814 = vunpack.c.h.b16 %v4736
    %v4815 = vunpack.c.l.b16 %v4737
    %v4816 = vunpack.c.l.b16 %v4738
    %v4817 = vunpack.c.h.b16 %v4738
    %v4818 = vunpack.c.l.b16 %v4739
    %v4819 = vunpack.c.l.b16 %v4740
    %v4820 = vunpack.c.h.b16 %v4740
    %v4821 = vunpack.c.l.b16 %v4741
    %v4822 = vunpack.c.l.b16 %v4742
    %v4823 = vunpack.c.h.b16 %v4742
    %v4824 = vunpack.c.l.b16 %v4743
    %v4825 = vunpack.c.l.b16 %v4744
    %v4826 = vunpack.c.h.b16 %v4744
    %v4827 = vunpack.c.l.b16 %v4745
    %v4828 = vunpack.c.l.b16 %v4746
    %v4829 = vunpack.c.h.b16 %v4746
    %v4830 = vunpack.c.l.b16 %v4747
    %v4831 = vunpack.c.l.b16 %v4748
    %v4832 = vunpack.c.h.b16 %v4748
    %v4833 = vunpack.c.l.b16 %v4749
    %v4834 = vunpack.c.l.b16 %v4750
    %v4835 = vunpack.c.h.b16 %v4750
    %v4836 = vunpack.c.l.b16 %v4751
    %v4837 = vunpack.c.l.b16 %v4752
    %v4838 = vunpack.c.h.b16 %v4752
    %v4839 = vunpack.c.l.b16 %v4753
    %v4840 = vunpack.c.l.b16 %v4754
    %v4841 = vunpack.c.h.b16 %v4754
    %v4842 = vunpack.c.l.b16 %v4755
    %v4843 = vunpack.c.l.b16 %v4756
    %v4844 = vunpack.c.h.b16 %v4756
    %v4845 = vunpack.c.l.b16 %v4757
    %v4846 = vpack.c.b16 %v4801, %v4798
    %v4847 = vpack.c.b16 %v4802, %v4799
    %v4848 = vpack.c.b16 %v4803, %v4800
    %v4849 = vpack.c.b16 %v4807, %v4804
    %v4850 = vpack.c.b16 %v4808, %v4805
    %v4851 = vpack.c.b16 %v4809, %v4806
    %v4852 = vpack.c.b16 %v4813, %v4810
    %v4853 = vpack.c.b16 %v4814, %v4811
    %v4854 = vpack.c.b16 %v4815, %v4812
    %v4855 = vpack.c.b16 %v4819, %v4816
    %v4856 = vpack.c.b16 %v4820, %v4817
    %v4857 = vpack.c.b16 %v4821, %v4818
    %v4858 = vpack.c.b16 %v4825, %v4822
    %v4859 = vpack.c.b16 %v4826, %v4823
    %v4860 = vpack.c.b16 %v4827, %v4824
    %v4861 = vpack.c.b16 %v4831, %v4828
    %v4862 = vpack.c.b16 %v4832, %v4829
    %v4863 = vpack.c.b16 %v4833, %v4830
    %v4864 = vpack.c.b16 %v4837, %v4834
    %v4865 = vpack.c.b16 %v4838, %v4835
    %v4866 = vpack.c.b16 %v4839, %v4836
    %v4867 = vpack.c.b16 %v4843, %v4840
    %v4868 = vpack.c.b16 %v4844, %v4841
    %v4869 = vpack.c.b16 %v4845, %v4842
    %4894 = vmatpush.bf16.msra.mxu0 %v4867
    %4895 = vmatpush.bf16.msra.mxu0 %v4864
    %4896 = vmatpush.bf16.msra.mxu0 %v4861
    %4897 = vmatpush.bf16.msra.mxu0 %v4858
    %4898 = vmatpush.bf16.msra.mxu0 %v4855
    %4899 = vmatpush.bf16.msra.mxu0 %v4852
    %4900 = vmatpush.bf16.msra.mxu0 %v4849
    %4901 = vmatpush.bf16.msra.mxu0 %v4846
    %4902 = vmatmul.bf16.gmra.mxu0 %v4694
    %v4903 = vpop.f32.mrf.mxu0
    %v4904 = vadd.f32 %v4760, %v4903
    %v4905 = vpop.f32.mrf.mxu0
    %v4906 = vadd.f32 %v4760, %v4905
    %4907 = vmatmul.bf16.gmra.mxu0 %v4695
    %v4908 = vpop.f32.mrf.mxu0
    %v4909 = vadd.f32 %v4760, %v4908
    %v4910 = vpop.f32.mrf.mxu0
    %v4911 = vadd.f32 %v4760, %v4910
    %4912 = vmatmul.bf16.gmra.mxu0 %v4696
    %v4913 = vpop.f32.mrf.mxu0
    %v4914 = vadd.f32 %v4760, %v4913
    %v4915 = vpop.f32.mrf.mxu0
    %v4916 = vadd.f32 %v4760, %v4915
    %4917 = vmatmul.bf16.gmra.mxu0 %v4697
    %v4918 = vpop.f32.mrf.mxu0
    %v4919 = vadd.f32 %v4760, %v4918
    %v4920 = vpop.f32.mrf.mxu0
    %v4921 = vadd.f32 %v4760, %v4920
    %4922 = vmatmul.bf16.gmra.mxu0 %v4698
    %v4923 = vpop.f32.mrf.mxu0
    %v4924 = vadd.f32 %v4760, %v4923
    %v4925 = vpop.f32.mrf.mxu0
    %v4926 = vadd.f32 %v4760, %v4925
    %4927 = vmatmul.bf16.gmra.mxu0 %v4699
    %v4928 = vpop.f32.mrf.mxu0
    %v4929 = vadd.f32 %v4760, %v4928
    %v4930 = vpop.f32.mrf.mxu0
    %v4931 = vadd.f32 %v4760, %v4930
    %4932 = vmatmul.bf16.gmra.mxu0 %v4700
    %v4933 = vpop.f32.mrf.mxu0
    %v4934 = vadd.f32 %v4760, %v4933
    %v4935 = vpop.f32.mrf.mxu0
    %v4936 = vadd.f32 %v4760, %v4935
    %4937 = vmatmul.bf16.gmra.mxu0 %v4701
    %v4938 = vpop.f32.mrf.mxu0
    %v4939 = vadd.f32 %v4760, %v4938
    %v4940 = vpop.f32.mrf.mxu0
    %v4941 = vadd.f32 %v4760, %v4940
    %4942 = vmatmul.bf16.gmra.mxu0 %v4702
    %v4943 = vpop.f32.mrf.mxu0
    %v4944 = vadd.f32 %v4760, %v4943
    %v4945 = vpop.f32.mrf.mxu0
    %v4946 = vadd.f32 %v4760, %v4945
    %4947 = vmatmul.bf16.gmra.mxu0 %v4703
    %v4948 = vpop.f32.mrf.mxu0
    %v4949 = vadd.f32 %v4760, %v4948
    %v4950 = vpop.f32.mrf.mxu0
    %v4951 = vadd.f32 %v4760, %v4950
    %4952 = vmatmul.bf16.gmra.mxu0 %v4704
    %v4953 = vpop.f32.mrf.mxu0
    %v4954 = vadd.f32 %v4760, %v4953
    %v4955 = vpop.f32.mrf.mxu0
    %v4956 = vadd.f32 %v4760, %v4955
    %4957 = vmatmul.bf16.gmra.mxu0 %v4705
    %v4958 = vpop.f32.mrf.mxu0
    %v4959 = vadd.f32 %v4760, %v4958
    %v4960 = vpop.f32.mrf.mxu0
    %v4961 = vadd.f32 %v4760, %v4960
    %4962 = vmatmul.bf16.gmra.mxu0 %v4706
    %v4963 = vpop.f32.mrf.mxu0
    %v4964 = vadd.f32 %v4760, %v4963
    %v4965 = vpop.f32.mrf.mxu0
    %v4966 = vadd.f32 %v4760, %v4965
    %4967 = vmatmul.bf16.gmra.mxu0 %v4707
    %v4968 = vpop.f32.mrf.mxu0
    %v4969 = vadd.f32 %v4760, %v4968
    %v4970 = vpop.f32.mrf.mxu0
    %v4971 = vadd.f32 %v4760, %v4970
    %4972 = vmatmul.bf16.gmra.mxu0 %v4708
    %v4973 = vpop.f32.mrf.mxu0
    %v4974 = vadd.f32 %v4760, %v4973
    %v4975 = vpop.f32.mrf.mxu0
    %v4976 = vadd.f32 %v4760, %v4975
    %4977 = vmatmul.bf16.gmra.mxu0 %v4709
    %v4978 = vpop.f32.mrf.mxu0
    %v4979 = vadd.f32 %v4760, %v4978
    %v4980 = vpop.f32.mrf.mxu0
    %v4981 = vadd.f32 %v4760, %v4980
    %4982 = vmatmul.bf16.gmra.mxu0 %v4710
    %v4983 = vpop.f32.mrf.mxu0
    %v4984 = vadd.f32 %v4760, %v4983
    %v4985 = vpop.f32.mrf.mxu0
    %v4986 = vadd.f32 %v4760, %v4985
    %4987 = vmatmul.bf16.gmra.mxu0 %v4711
    %v4988 = vpop.f32.mrf.mxu0
    %v4989 = vadd.f32 %v4760, %v4988
    %v4990 = vpop.f32.mrf.mxu0
    %v4991 = vadd.f32 %v4760, %v4990
    %4992 = vmatmul.bf16.gmra.mxu0 %v4712
    %v4993 = vpop.f32.mrf.mxu0
    %v4994 = vadd.f32 %v4760, %v4993
    %v4995 = vpop.f32.mrf.mxu0
    %v4996 = vadd.f32 %v4760, %v4995
    %4997 = vmatmul.bf16.gmra.mxu0 %v4713
    %v4998 = vpop.f32.mrf.mxu0
    %v4999 = vadd.f32 %v4760, %v4998
    %v5000 = vpop.f32.mrf.mxu0
    %v5001 = vadd.f32 %v4760, %v5000
    %5002 = vmatmul.bf16.gmra.mxu0 %v4714
    %v5003 = vpop.f32.mrf.mxu0
    %v5004 = vadd.f32 %v4760, %v5003
    %v5005 = vpop.f32.mrf.mxu0
    %v5006 = vadd.f32 %v4760, %v5005
    %5007 = vmatmul.bf16.gmra.mxu0 %v4715
    %v5008 = vpop.f32.mrf.mxu0
    %v5009 = vadd.f32 %v4760, %v5008
    %v5010 = vpop.f32.mrf.mxu0
    %v5011 = vadd.f32 %v4760, %v5010
    %5012 = vmatmul.bf16.gmra.mxu0 %v4716
    %v5013 = vpop.f32.mrf.mxu0
    %v5014 = vadd.f32 %v4760, %v5013
    %v5015 = vpop.f32.mrf.mxu0
    %v5016 = vadd.f32 %v4760, %v5015
    %5017 = vmatmul.bf16.gmra.mxu0 %v4717
    %v5018 = vpop.f32.mrf.mxu0
    %v5019 = vadd.f32 %v4760, %v5018
    %v5020 = vpop.f32.mrf.mxu0
    %v5021 = vadd.f32 %v4760, %v5020
    %5022 = vmatmul.bf16.gmra.mxu0 %v4718
    %v5023 = vpop.f32.mrf.mxu0
    %v5024 = vadd.f32 %v4760, %v5023
    %v5025 = vpop.f32.mrf.mxu0
    %v5026 = vadd.f32 %v4760, %v5025
    %5027 = vmatmul.bf16.gmra.mxu0 %v4719
    %v5028 = vpop.f32.mrf.mxu0
    %v5029 = vadd.f32 %v4760, %v5028
    %v5030 = vpop.f32.mrf.mxu0
    %v5031 = vadd.f32 %v4760, %v5030
    %5032 = vmatmul.bf16.gmra.mxu0 %v4720
    %v5033 = vpop.f32.mrf.mxu0
    %v5034 = vadd.f32 %v4760, %v5033
    %v5035 = vpop.f32.mrf.mxu0
    %v5036 = vadd.f32 %v4760, %v5035
    %5037 = vmatmul.bf16.gmra.mxu0 %v4721
    %v5038 = vpop.f32.mrf.mxu0
    %v5039 = vadd.f32 %v4760, %v5038
    %v5040 = vpop.f32.mrf.mxu0
    %v5041 = vadd.f32 %v4760, %v5040
    %5042 = vmatmul.bf16.gmra.mxu0 %v4722
    %v5043 = vpop.f32.mrf.mxu0
    %v5044 = vadd.f32 %v4760, %v5043
    %v5045 = vpop.f32.mrf.mxu0
    %v5046 = vadd.f32 %v4760, %v5045
    %5047 = vmatmul.bf16.gmra.mxu0 %v4723
    %v5048 = vpop.f32.mrf.mxu0
    %v5049 = vadd.f32 %v4760, %v5048
    %v5050 = vpop.f32.mrf.mxu0
    %v5051 = vadd.f32 %v4760, %v5050
    %5052 = vmatmul.bf16.gmra.mxu0 %v4724
    %v5053 = vpop.f32.mrf.mxu0
    %v5054 = vadd.f32 %v4760, %v5053
    %v5055 = vpop.f32.mrf.mxu0
    %v5056 = vadd.f32 %v4760, %v5055
    %5057 = vmatmul.bf16.gmra.mxu0 %v4725
    %v5058 = vpop.f32.mrf.mxu0
    %v5059 = vadd.f32 %v4760, %v5058
    %v5060 = vpop.f32.mrf.mxu0
    %v5061 = vadd.f32 %v4760, %v5060
    %5062 = vdwg.mxu0
    %5063 = vmatpush.bf16.msra.mxu0 %v4868
    %5064 = vmatpush.bf16.msra.mxu0 %v4865
    %5065 = vmatpush.bf16.msra.mxu0 %v4862
    %5066 = vmatpush.bf16.msra.mxu0 %v4859
    %5067 = vmatpush.bf16.msra.mxu0 %v4856
    %5068 = vmatpush.bf16.msra.mxu0 %v4853
    %5069 = vmatpush.bf16.msra.mxu0 %v4850
    %5070 = vmatpush.bf16.msra.mxu0 %v4847
    %5071 = vmatmul.bf16.gmra.mxu0 %v4694
    %v5072 = vpop.f32.mrf.mxu0
    %v5073 = vadd.f32 %v4761, %v5072
    %v5074 = vpop.f32.mrf.mxu0
    %v5075 = vadd.f32 %v4761, %v5074
    %5076 = vmatmul.bf16.gmra.mxu0 %v4695
    %v5077 = vpop.f32.mrf.mxu0
    %v5078 = vadd.f32 %v4761, %v5077
    %v5079 = vpop.f32.mrf.mxu0
    %v5080 = vadd.f32 %v4761, %v5079
    %5081 = vmatmul.bf16.gmra.mxu0 %v4696
    %v5082 = vpop.f32.mrf.mxu0
    %v5083 = vadd.f32 %v4761, %v5082
    %v5084 = vpop.f32.mrf.mxu0
    %v5085 = vadd.f32 %v4761, %v5084
    %5086 = vmatmul.bf16.gmra.mxu0 %v4697
    %v5087 = vpop.f32.mrf.mxu0
    %v5088 = vadd.f32 %v4761, %v5087
    %v5089 = vpop.f32.mrf.mxu0
    %v5090 = vadd.f32 %v4761, %v5089
    %5091 = vmatmul.bf16.gmra.mxu0 %v4698
    %v5092 = vpop.f32.mrf.mxu0
    %v5093 = vadd.f32 %v4761, %v5092
    %v5094 = vpop.f32.mrf.mxu0
    %v5095 = vadd.f32 %v4761, %v5094
    %5096 = vmatmul.bf16.gmra.mxu0 %v4699
    %v5097 = vpop.f32.mrf.mxu0
    %v5098 = vadd.f32 %v4761, %v5097
    %v5099 = vpop.f32.mrf.mxu0
    %v5100 = vadd.f32 %v4761, %v5099
    %5101 = vmatmul.bf16.gmra.mxu0 %v4700
    %v5102 = vpop.f32.mrf.mxu0
    %v5103 = vadd.f32 %v4761, %v5102
    %v5104 = vpop.f32.mrf.mxu0
    %v5105 = vadd.f32 %v4761, %v5104
    %5106 = vmatmul.bf16.gmra.mxu0 %v4701
    %v5107 = vpop.f32.mrf.mxu0
    %v5108 = vadd.f32 %v4761, %v5107
    %v5109 = vpop.f32.mrf.mxu0
    %v5110 = vadd.f32 %v4761, %v5109
    %5111 = vmatmul.bf16.gmra.mxu0 %v4702
    %v5112 = vpop.f32.mrf.mxu0
    %v5113 = vadd.f32 %v4761, %v5112
    %v5114 = vpop.f32.mrf.mxu0
    %v5115 = vadd.f32 %v4761, %v5114
    %5116 = vmatmul.bf16.gmra.mxu0 %v4703
    %v5117 = vpop.f32.mrf.mxu0
    %v5118 = vadd.f32 %v4761, %v5117
    %v5119 = vpop.f32.mrf.mxu0
    %v5120 = vadd.f32 %v4761, %v5119
    %5121 = vmatmul.bf16.gmra.mxu0 %v4704
    %v5122 = vpop.f32.mrf.mxu0
    %v5123 = vadd.f32 %v4761, %v5122
    %v5124 = vpop.f32.mrf.mxu0
    %v5125 = vadd.f32 %v4761, %v5124
    %5126 = vmatmul.bf16.gmra.mxu0 %v4705
    %v5127 = vpop.f32.mrf.mxu0
    %v5128 = vadd.f32 %v4761, %v5127
    %v5129 = vpop.f32.mrf.mxu0
    %v5130 = vadd.f32 %v4761, %v5129
    %5131 = vmatmul.bf16.gmra.mxu0 %v4706
    %v5132 = vpop.f32.mrf.mxu0
    %v5133 = vadd.f32 %v4761, %v5132
    %v5134 = vpop.f32.mrf.mxu0
    %v5135 = vadd.f32 %v4761, %v5134
    %5136 = vmatmul.bf16.gmra.mxu0 %v4707
    %v5137 = vpop.f32.mrf.mxu0
    %v5138 = vadd.f32 %v4761, %v5137
    %v5139 = vpop.f32.mrf.mxu0
    %v5140 = vadd.f32 %v4761, %v5139
    %5141 = vmatmul.bf16.gmra.mxu0 %v4708
    %v5142 = vpop.f32.mrf.mxu0
    %v5143 = vadd.f32 %v4761, %v5142
    %v5144 = vpop.f32.mrf.mxu0
    %v5145 = vadd.f32 %v4761, %v5144
    %5146 = vmatmul.bf16.gmra.mxu0 %v4709
    %v5147 = vpop.f32.mrf.mxu0
    %v5148 = vadd.f32 %v4761, %v5147
    %v5149 = vpop.f32.mrf.mxu0
    %v5150 = vadd.f32 %v4761, %v5149
    %5151 = vmatmul.bf16.gmra.mxu0 %v4710
    %v5152 = vpop.f32.mrf.mxu0
    %v5153 = vadd.f32 %v4761, %v5152
    %v5154 = vpop.f32.mrf.mxu0
    %v5155 = vadd.f32 %v4761, %v5154
    %5156 = vmatmul.bf16.gmra.mxu0 %v4711
    %v5157 = vpop.f32.mrf.mxu0
    %v5158 = vadd.f32 %v4761, %v5157
    %v5159 = vpop.f32.mrf.mxu0
    %v5160 = vadd.f32 %v4761, %v5159
    %5161 = vmatmul.bf16.gmra.mxu0 %v4712
    %v5162 = vpop.f32.mrf.mxu0
    %v5163 = vadd.f32 %v4761, %v5162
    %v5164 = vpop.f32.mrf.mxu0
    %v5165 = vadd.f32 %v4761, %v5164
    %5166 = vmatmul.bf16.gmra.mxu0 %v4713
    %v5167 = vpop.f32.mrf.mxu0
    %v5168 = vadd.f32 %v4761, %v5167
    %v5169 = vpop.f32.mrf.mxu0
    %v5170 = vadd.f32 %v4761, %v5169
    %5171 = vmatmul.bf16.gmra.mxu0 %v4714
    %v5172 = vpop.f32.mrf.mxu0
    %v5173 = vadd.f32 %v4761, %v5172
    %v5174 = vpop.f32.mrf.mxu0
    %v5175 = vadd.f32 %v4761, %v5174
    %5176 = vmatmul.bf16.gmra.mxu0 %v4715
    %v5177 = vpop.f32.mrf.mxu0
    %v5178 = vadd.f32 %v4761, %v5177
    %v5179 = vpop.f32.mrf.mxu0
    %v5180 = vadd.f32 %v4761, %v5179
    %5181 = vmatmul.bf16.gmra.mxu0 %v4716
    %v5182 = vpop.f32.mrf.mxu0
    %v5183 = vadd.f32 %v4761, %v5182
    %v5184 = vpop.f32.mrf.mxu0
    %v5185 = vadd.f32 %v4761, %v5184
    %5186 = vmatmul.bf16.gmra.mxu0 %v4717
    %v5187 = vpop.f32.mrf.mxu0
    %v5188 = vadd.f32 %v4761, %v5187
    %v5189 = vpop.f32.mrf.mxu0
    %v5190 = vadd.f32 %v4761, %v5189
    %5191 = vmatmul.bf16.gmra.mxu0 %v4718
    %v5192 = vpop.f32.mrf.mxu0
    %v5193 = vadd.f32 %v4761, %v5192
    %v5194 = vpop.f32.mrf.mxu0
    %v5195 = vadd.f32 %v4761, %v5194
    %5196 = vmatmul.bf16.gmra.mxu0 %v4719
    %v5197 = vpop.f32.mrf.mxu0
    %v5198 = vadd.f32 %v4761, %v5197
    %v5199 = vpop.f32.mrf.mxu0
    %v5200 = vadd.f32 %v4761, %v5199
    %5201 = vmatmul.bf16.gmra.mxu0 %v4720
    %v5202 = vpop.f32.mrf.mxu0
    %v5203 = vadd.f32 %v4761, %v5202
    %v5204 = vpop.f32.mrf.mxu0
    %v5205 = vadd.f32 %v4761, %v5204
    %5206 = vmatmul.bf16.gmra.mxu0 %v4721
    %v5207 = vpop.f32.mrf.mxu0
    %v5208 = vadd.f32 %v4761, %v5207
    %v5209 = vpop.f32.mrf.mxu0
    %v5210 = vadd.f32 %v4761, %v5209
    %5211 = vmatmul.bf16.gmra.mxu0 %v4722
    %v5212 = vpop.f32.mrf.mxu0
    %v5213 = vadd.f32 %v4761, %v5212
    %v5214 = vpop.f32.mrf.mxu0
    %v5215 = vadd.f32 %v4761, %v5214
    %5216 = vmatmul.bf16.gmra.mxu0 %v4723
    %v5217 = vpop.f32.mrf.mxu0
    %v5218 = vadd.f32 %v4761, %v5217
    %v5219 = vpop.f32.mrf.mxu0
    %v5220 = vadd.f32 %v4761, %v5219
    %5221 = vmatmul.bf16.gmra.mxu0 %v4724
    %v5222 = vpop.f32.mrf.mxu0
    %v5223 = vadd.f32 %v4761, %v5222
    %v5224 = vpop.f32.mrf.mxu0
    %v5225 = vadd.f32 %v4761, %v5224
    %5226 = vmatmul.bf16.gmra.mxu0 %v4725
    %v5227 = vpop.f32.mrf.mxu0
    %v5228 = vadd.f32 %v4761, %v5227
    %v5229 = vpop.f32.mrf.mxu0
    %v5230 = vadd.f32 %v4761, %v5229
    %5231 = vdwg.mxu0
    %5232 = vmatpush.bf16.msra.mxu0 %v4869
    %5233 = vmatpush.bf16.msra.mxu0 %v4866
    %5234 = vmatpush.bf16.msra.mxu0 %v4863
    %5235 = vmatpush.bf16.msra.mxu0 %v4860
    %5236 = vmatpush.bf16.msra.mxu0 %v4857
    %5237 = vmatpush.bf16.msra.mxu0 %v4854
    %5238 = vmatpush.bf16.msra.mxu0 %v4851
    %5239 = vmatpush.bf16.msra.mxu0 %v4848
    %5240 = vmatmul.bf16.gmra.mxu0 %v4694
    %v5241 = vpop.f32.mrf.mxu0
    %v5242 = vadd.f32 %v4762, %v5241
    %v5243 = vpop.f32.mrf.mxu0
    %v5244 = vadd.f32 %v4762, %v5243
    %5245 = vmatmul.bf16.gmra.mxu0 %v4695
    %v5246 = vpop.f32.mrf.mxu0
    %v5247 = vadd.f32 %v4762, %v5246
    %v5248 = vpop.f32.mrf.mxu0
    %v5249 = vadd.f32 %v4762, %v5248
    %5250 = vmatmul.bf16.gmra.mxu0 %v4696
    %v5251 = vpop.f32.mrf.mxu0
    %v5252 = vadd.f32 %v4762, %v5251
    %v5253 = vpop.f32.mrf.mxu0
    %v5254 = vadd.f32 %v4762, %v5253
    %5255 = vmatmul.bf16.gmra.mxu0 %v4697
    %v5256 = vpop.f32.mrf.mxu0
    %v5257 = vadd.f32 %v4762, %v5256
    %v5258 = vpop.f32.mrf.mxu0
    %v5259 = vadd.f32 %v4762, %v5258
    %5260 = vmatmul.bf16.gmra.mxu0 %v4698
    %v5261 = vpop.f32.mrf.mxu0
    %v5262 = vadd.f32 %v4762, %v5261
    %v5263 = vpop.f32.mrf.mxu0
    %v5264 = vadd.f32 %v4762, %v5263
    %5265 = vmatmul.bf16.gmra.mxu0 %v4699
    %v5266 = vpop.f32.mrf.mxu0
    %v5267 = vadd.f32 %v4762, %v5266
    %v5268 = vpop.f32.mrf.mxu0
    %v5269 = vadd.f32 %v4762, %v5268
    %5270 = vmatmul.bf16.gmra.mxu0 %v4700
    %v5271 = vpop.f32.mrf.mxu0
    %v5272 = vadd.f32 %v4762, %v5271
    %v5273 = vpop.f32.mrf.mxu0
    %v5274 = vadd.f32 %v4762, %v5273
    %5275 = vmatmul.bf16.gmra.mxu0 %v4701
    %v5276 = vpop.f32.mrf.mxu0
    %v5277 = vadd.f32 %v4762, %v5276
    %v5278 = vpop.f32.mrf.mxu0
    %v5279 = vadd.f32 %v4762, %v5278
    %5280 = vmatmul.bf16.gmra.mxu0 %v4702
    %v5281 = vpop.f32.mrf.mxu0
    %v5282 = vadd.f32 %v4762, %v5281
    %v5283 = vpop.f32.mrf.mxu0
    %v5284 = vadd.f32 %v4762, %v5283
    %5285 = vmatmul.bf16.gmra.mxu0 %v4703
    %v5286 = vpop.f32.mrf.mxu0
    %v5287 = vadd.f32 %v4762, %v5286
    %v5288 = vpop.f32.mrf.mxu0
    %v5289 = vadd.f32 %v4762, %v5288
    %5290 = vmatmul.bf16.gmra.mxu0 %v4704
    %v5291 = vpop.f32.mrf.mxu0
    %v5292 = vadd.f32 %v4762, %v5291
    %v5293 = vpop.f32.mrf.mxu0
    %v5294 = vadd.f32 %v4762, %v5293
    %5295 = vmatmul.bf16.gmra.mxu0 %v4705
    %v5296 = vpop.f32.mrf.mxu0
    %v5297 = vadd.f32 %v4762, %v5296
    %v5298 = vpop.f32.mrf.mxu0
    %v5299 = vadd.f32 %v4762, %v5298
    %5300 = vmatmul.bf16.gmra.mxu0 %v4706
    %v5301 = vpop.f32.mrf.mxu0
    %v5302 = vadd.f32 %v4762, %v5301
    %v5303 = vpop.f32.mrf.mxu0
    %v5304 = vadd.f32 %v4762, %v5303
    %5305 = vmatmul.bf16.gmra.mxu0 %v4707
    %v5306 = vpop.f32.mrf.mxu0
    %v5307 = vadd.f32 %v4762, %v5306
    %v5308 = vpop.f32.mrf.mxu0
    %v5309 = vadd.f32 %v4762, %v5308
    %5310 = vmatmul.bf16.gmra.mxu0 %v4708
    %v5311 = vpop.f32.mrf.mxu0
    %v5312 = vadd.f32 %v4762, %v5311
    %v5313 = vpop.f32.mrf.mxu0
    %v5314 = vadd.f32 %v4762, %v5313
    %5315 = vmatmul.bf16.gmra.mxu0 %v4709
    %v5316 = vpop.f32.mrf.mxu0
    %v5317 = vadd.f32 %v4762, %v5316
    %v5318 = vpop.f32.mrf.mxu0
    %v5319 = vadd.f32 %v4762, %v5318
    %5320 = vmatmul.bf16.gmra.mxu0 %v4710
    %v5321 = vpop.f32.mrf.mxu0
    %v5322 = vadd.f32 %v4762, %v5321
    %v5323 = vpop.f32.mrf.mxu0
    %v5324 = vadd.f32 %v4762, %v5323
    %5325 = vmatmul.bf16.gmra.mxu0 %v4711
    %v5326 = vpop.f32.mrf.mxu0
    %v5327 = vadd.f32 %v4762, %v5326
    %v5328 = vpop.f32.mrf.mxu0
    %v5329 = vadd.f32 %v4762, %v5328
    %5330 = vmatmul.bf16.gmra.mxu0 %v4712
    %v5331 = vpop.f32.mrf.mxu0
    %v5332 = vadd.f32 %v4762, %v5331
    %v5333 = vpop.f32.mrf.mxu0
    %v5334 = vadd.f32 %v4762, %v5333
    %5335 = vmatmul.bf16.gmra.mxu0 %v4713
    %v5336 = vpop.f32.mrf.mxu0
    %v5337 = vadd.f32 %v4762, %v5336
    %v5338 = vpop.f32.mrf.mxu0
    %v5339 = vadd.f32 %v4762, %v5338
    %5340 = vmatmul.bf16.gmra.mxu0 %v4714
    %v5341 = vpop.f32.mrf.mxu0
    %v5342 = vadd.f32 %v4762, %v5341
    %v5343 = vpop.f32.mrf.mxu0
    %v5344 = vadd.f32 %v4762, %v5343
    %5345 = vmatmul.bf16.gmra.mxu0 %v4715
    %v5346 = vpop.f32.mrf.mxu0
    %v5347 = vadd.f32 %v4762, %v5346
    %v5348 = vpop.f32.mrf.mxu0
    %v5349 = vadd.f32 %v4762, %v5348
    %5350 = vmatmul.bf16.gmra.mxu0 %v4716
    %v5351 = vpop.f32.mrf.mxu0
    %v5352 = vadd.f32 %v4762, %v5351
    %v5353 = vpop.f32.mrf.mxu0
    %v5354 = vadd.f32 %v4762, %v5353
    %5355 = vmatmul.bf16.gmra.mxu0 %v4717
    %v5356 = vpop.f32.mrf.mxu0
    %v5357 = vadd.f32 %v4762, %v5356
    %v5358 = vpop.f32.mrf.mxu0
    %v5359 = vadd.f32 %v4762, %v5358
    %5360 = vmatmul.bf16.gmra.mxu0 %v4718
    %v5361 = vpop.f32.mrf.mxu0
    %v5362 = vadd.f32 %v4762, %v5361
    %v5363 = vpop.f32.mrf.mxu0
    %v5364 = vadd.f32 %v4762, %v5363
    %5365 = vmatmul.bf16.gmra.mxu0 %v4719
    %v5366 = vpop.f32.mrf.mxu0
    %v5367 = vadd.f32 %v4762, %v5366
    %v5368 = vpop.f32.mrf.mxu0
    %v5369 = vadd.f32 %v4762, %v5368
    %5370 = vmatmul.bf16.gmra.mxu0 %v4720
    %v5371 = vpop.f32.mrf.mxu0
    %v5372 = vadd.f32 %v4762, %v5371
    %v5373 = vpop.f32.mrf.mxu0
    %v5374 = vadd.f32 %v4762, %v5373
    %5375 = vmatmul.bf16.gmra.mxu0 %v4721
    %v5376 = vpop.f32.mrf.mxu0
    %v5377 = vadd.f32 %v4762, %v5376
    %v5378 = vpop.f32.mrf.mxu0
    %v5379 = vadd.f32 %v4762, %v5378
    %5380 = vmatmul.bf16.gmra.mxu0 %v4722
    %v5381 = vpop.f32.mrf.mxu0
    %v5382 = vadd.f32 %v4762, %v5381
    %v5383 = vpop.f32.mrf.mxu0
    %v5384 = vadd.f32 %v4762, %v5383
    %5385 = vmatmul.bf16.gmra.mxu0 %v4723
    %v5386 = vpop.f32.mrf.mxu0
    %v5387 = vadd.f32 %v4762, %v5386
    %v5388 = vpop.f32.mrf.mxu0
    %v5389 = vadd.f32 %v4762, %v5388
    %5390 = vmatmul.bf16.gmra.mxu0 %v4724
    %v5391 = vpop.f32.mrf.mxu0
    %v5392 = vadd.f32 %v4762, %v5391
    %v5393 = vpop.f32.mrf.mxu0
    %v5394 = vadd.f32 %v4762, %v5393
    %5395 = vmatmul.bf16.gmra.mxu0 %v4725
    %v5396 = vpop.f32.mrf.mxu0
    %v5397 = vadd.f32 %v4762, %v5396
    %v5398 = vpop.f32.mrf.mxu0
    %v5399 = vadd.f32 %v4762, %v5398
    %5400 = vdwg.mxu0
    %v5401 = vadd.f32 %v46, %v5242
    %v5402 = vadd.f32 %v47, %v5244
    %v5403 = vadd.f32 %v48, %v5247
    %v5404 = vadd.f32 %v49, %v5249
    %v5405 = vadd.f32 %v50, %v5252
    %v5406 = vadd.f32 %v51, %v5254
    %v5407 = vadd.f32 %v52, %v5257
    %v5408 = vadd.f32 %v53, %v5259
    %v5409 = vadd.f32 %v54, %v5262
    %v5410 = vadd.f32 %v55, %v5264
    %v5411 = vadd.f32 %v56, %v5267
    %v5412 = vadd.f32 %v57, %v5269
    %v5413 = vadd.f32 %v58, %v5272
    %v5414 = vadd.f32 %v59, %v5274
    %v5415 = vadd.f32 %v60, %v5277
    %v5416 = vadd.f32 %v61, %v5279
    %v5417 = vadd.f32 %v62, %v5282
    %v5418 = vadd.f32 %v63, %v5284
    %v5419 = vadd.f32 %v64, %v5287
    %v5420 = vadd.f32 %v65, %v5289
    %v5421 = vadd.f32 %v66, %v5292
    %v5422 = vadd.f32 %v67, %v5294
    %v5423 = vadd.f32 %v68, %v5297
    %v5424 = vadd.f32 %v69, %v5299
    %v5425 = vadd.f32 %v70, %v5302
    %v5426 = vadd.f32 %v71, %v5304
    %v5427 = vadd.f32 %v72, %v5307
    %v5428 = vadd.f32 %v73, %v5309
    %v5429 = vadd.f32 %v74, %v5312
    %v5430 = vadd.f32 %v75, %v5314
    %v5431 = vadd.f32 %v76, %v5317
    %v5432 = vadd.f32 %v77, %v5319
    %v5433 = vadd.f32 %v78, %v5322
    %v5434 = vadd.f32 %v79, %v5324
    %v5435 = vadd.f32 %v80, %v5327
    %v5436 = vadd.f32 %v81, %v5329
    %v5437 = vadd.f32 %v82, %v5332
    %v5438 = vadd.f32 %v83, %v5334
    %v5439 = vadd.f32 %v84, %v5337
    %v5440 = vadd.f32 %v85, %v5339
    %v5441 = vadd.f32 %v86, %v5342
    %v5442 = vadd.f32 %v87, %v5344
    %v5443 = vadd.f32 %v88, %v5347
    %v5444 = vadd.f32 %v89, %v5349
    %v5445 = vadd.f32 %v90, %v5352
    %v5446 = vadd.f32 %v91, %v5354
    %v5447 = vadd.f32 %v92, %v5357
    %v5448 = vadd.f32 %v93, %v5359
    %v5449 = vadd.f32 %v94, %v5362
    %v5450 = vadd.f32 %v95, %v5364
    %v5451 = vadd.f32 %v96, %v5367
    %v5452 = vadd.f32 %v97, %v5369
    %v5453 = vadd.f32 %v98, %v5372
    %v5454 = vadd.f32 %v99, %v5374
    %v5455 = vadd.f32 %v100, %v5377
    %v5456 = vadd.f32 %v101, %v5379
    %v5457 = vadd.f32 %v102, %v5382
    %v5458 = vadd.f32 %v103, %v5384
    %v5459 = vadd.f32 %v104, %v5387
    %v5460 = vadd.f32 %v105, %v5389
    %v5461 = vadd.f32 %v106, %v5392
    %v5462 = vadd.f32 %v107, %v5394
    %v5463 = vadd.f32 %v108, %v5397
    %v5464 = vadd.f32 %v109, %v5399
    %v5465 = vmul.f32 %v5073, %v2816
    %v5466 = vmul.f32 %v5075, %v2817
    %v5467 = vmul.f32 %v5078, %v2818
    %v5468 = vmul.f32 %v5080, %v2819
    %v5469 = vmul.f32 %v5083, %v2820
    %v5470 = vmul.f32 %v5085, %v2821
    %v5471 = vmul.f32 %v5088, %v2822
    %v5472 = vmul.f32 %v5090, %v2823
    %v5473 = vmul.f32 %v5093, %v2824
    %v5474 = vmul.f32 %v5095, %v2825
    %v5475 = vmul.f32 %v5098, %v2826
    %v5476 = vmul.f32 %v5100, %v2827
    %v5477 = vmul.f32 %v5103, %v2828
    %v5478 = vmul.f32 %v5105, %v2829
    %v5479 = vmul.f32 %v5108, %v2830
    %v5480 = vmul.f32 %v5110, %v2831
    %v5481 = vmul.f32 %v5113, %v2832
    %v5482 = vmul.f32 %v5115, %v2833
    %v5483 = vmul.f32 %v5118, %v2834
    %v5484 = vmul.f32 %v5120, %v2835
    %v5485 = vmul.f32 %v5123, %v2836
    %v5486 = vmul.f32 %v5125, %v2837
    %v5487 = vmul.f32 %v5128, %v2838
    %v5488 = vmul.f32 %v5130, %v2839
    %v5489 = vmul.f32 %v5133, %v2840
    %v5490 = vmul.f32 %v5135, %v2841
    %v5491 = vmul.f32 %v5138, %v2842
    %v5492 = vmul.f32 %v5140, %v2843
    %v5493 = vmul.f32 %v5143, %v2844
    %v5494 = vmul.f32 %v5145, %v2845
    %v5495 = vmul.f32 %v5148, %v2846
    %v5496 = vmul.f32 %v5150, %v2847
    %v5497 = vmul.f32 %v5153, %v2848
    %v5498 = vmul.f32 %v5155, %v2849
    %v5499 = vmul.f32 %v5158, %v2850
    %v5500 = vmul.f32 %v5160, %v2851
    %v5501 = vmul.f32 %v5163, %v2852
    %v5502 = vmul.f32 %v5165, %v2853
    %v5503 = vmul.f32 %v5168, %v2854
    %v5504 = vmul.f32 %v5170, %v2855
    %v5505 = vmul.f32 %v5173, %v2856
    %v5506 = vmul.f32 %v5175, %v2857
    %v5507 = vmul.f32 %v5178, %v2858
    %v5508 = vmul.f32 %v5180, %v2859
    %v5509 = vmul.f32 %v5183, %v2860
    %v5510 = vmul.f32 %v5185, %v2861
    %v5511 = vmul.f32 %v5188, %v2862
    %v5512 = vmul.f32 %v5190, %v2863
    %v5513 = vmul.f32 %v5193, %v2864
    %v5514 = vmul.f32 %v5195, %v2865
    %v5515 = vmul.f32 %v5198, %v2866
    %v5516 = vmul.f32 %v5200, %v2867
    %v5517 = vmul.f32 %v5203, %v2868
    %v5518 = vmul.f32 %v5205, %v2869
    %v5519 = vmul.f32 %v5208, %v2870
    %v5520 = vmul.f32 %v5210, %v2871
    %v5521 = vmul.f32 %v5213, %v2872
    %v5522 = vmul.f32 %v5215, %v2873
    %v5523 = vmul.f32 %v5218, %v2874
    %v5524 = vmul.f32 %v5220, %v2875
    %v5525 = vmul.f32 %v5223, %v2876
    %v5526 = vmul.f32 %v5225, %v2877
    %v5527 = vmul.f32 %v5228, %v2878
    %v5528 = vmul.f32 %v5230, %v2879
    %v5529 = vadd.f32 %v5401, %v5465
    %v5530 = vadd.f32 %v5402, %v5466
    %v5531 = vadd.f32 %v5403, %v5467
    %v5532 = vadd.f32 %v5404, %v5468
    %v5533 = vadd.f32 %v5405, %v5469
    %v5534 = vadd.f32 %v5406, %v5470
    %v5535 = vadd.f32 %v5407, %v5471
    %v5536 = vadd.f32 %v5408, %v5472
    %v5537 = vadd.f32 %v5409, %v5473
    %v5538 = vadd.f32 %v5410, %v5474
    %v5539 = vadd.f32 %v5411, %v5475
    %v5540 = vadd.f32 %v5412, %v5476
    %v5541 = vadd.f32 %v5413, %v5477
    %v5542 = vadd.f32 %v5414, %v5478
    %v5543 = vadd.f32 %v5415, %v5479
    %v5544 = vadd.f32 %v5416, %v5480
    %v5545 = vadd.f32 %v5417, %v5481
    %v5546 = vadd.f32 %v5418, %v5482
    %v5547 = vadd.f32 %v5419, %v5483
    %v5548 = vadd.f32 %v5420, %v5484
    %v5549 = vadd.f32 %v5421, %v5485
    %v5550 = vadd.f32 %v5422, %v5486
    %v5551 = vadd.f32 %v5423, %v5487
    %v5552 = vadd.f32 %v5424, %v5488
    %v5553 = vadd.f32 %v5425, %v5489
    %v5554 = vadd.f32 %v5426, %v5490
    %v5555 = vadd.f32 %v5427, %v5491
    %v5556 = vadd.f32 %v5428, %v5492
    %v5557 = vadd.f32 %v5429, %v5493
    %v5558 = vadd.f32 %v5430, %v5494
    %v5559 = vadd.f32 %v5431, %v5495
    %v5560 = vadd.f32 %v5432, %v5496
    %v5561 = vadd.f32 %v5433, %v5497
    %v5562 = vadd.f32 %v5434, %v5498
    %v5563 = vadd.f32 %v5435, %v5499
    %v5564 = vadd.f32 %v5436, %v5500
    %v5565 = vadd.f32 %v5437, %v5501
    %v5566 = vadd.f32 %v5438, %v5502
    %v5567 = vadd.f32 %v5439, %v5503
    %v5568 = vadd.f32 %v5440, %v5504
    %v5569 = vadd.f32 %v5441, %v5505
    %v5570 = vadd.f32 %v5442, %v5506
    %v5571 = vadd.f32 %v5443, %v5507
    %v5572 = vadd.f32 %v5444, %v5508
    %v5573 = vadd.f32 %v5445, %v5509
    %v5574 = vadd.f32 %v5446, %v5510
    %v5575 = vadd.f32 %v5447, %v5511
    %v5576 = vadd.f32 %v5448, %v5512
    %v5577 = vadd.f32 %v5449, %v5513
    %v5578 = vadd.f32 %v5450, %v5514
    %v5579 = vadd.f32 %v5451, %v5515
    %v5580 = vadd.f32 %v5452, %v5516
    %v5581 = vadd.f32 %v5453, %v5517
    %v5582 = vadd.f32 %v5454, %v5518
    %v5583 = vadd.f32 %v5455, %v5519
    %v5584 = vadd.f32 %v5456, %v5520
    %v5585 = vadd.f32 %v5457, %v5521
    %v5586 = vadd.f32 %v5458, %v5522
    %v5587 = vadd.f32 %v5459, %v5523
    %v5588 = vadd.f32 %v5460, %v5524
    %v5589 = vadd.f32 %v5461, %v5525
    %v5590 = vadd.f32 %v5462, %v5526
    %v5591 = vadd.f32 %v5463, %v5527
    %v5592 = vadd.f32 %v5464, %v5528
    %5593 = vst [vmem:[#allocation5] sm:$0xff] %v5529
    %5594 = vst [vmem:[#allocation5 + $0x8] sm:$0xff] %v5530
    %5595 = vst [vmem:[#allocation5 + $0x10] sm:$0xff] %v5531
    %5596 = vst [vmem:[#allocation5 + $0x18] sm:$0xff] %v5532
    %5597 = vst [vmem:[#allocation5 + $0x20] sm:$0xff] %v5533
    %5598 = vst [vmem:[#allocation5 + $0x28] sm:$0xff] %v5534
    %5599 = vst [vmem:[#allocation5 + $0x30] sm:$0xff] %v5535
    %5600 = vst [vmem:[#allocation5 + $0x38] sm:$0xff] %v5536
    %5601 = vst [vmem:[#allocation5 + $0x40] sm:$0xff] %v5537
    %5602 = vst [vmem:[#allocation5 + $0x48] sm:$0xff] %v5538
    %5603 = vst [vmem:[#allocation5 + $0x50] sm:$0xff] %v5539
    %5604 = vst [vmem:[#allocation5 + $0x58] sm:$0xff] %v5540
    %5605 = vst [vmem:[#allocation5 + $0x60] sm:$0xff] %v5541
    %5606 = vst [vmem:[#allocation5 + $0x68] sm:$0xff] %v5542
    %5607 = vst [vmem:[#allocation5 + $0x70] sm:$0xff] %v5543
    %5608 = vst [vmem:[#allocation5 + $0x78] sm:$0xff] %v5544
    %5609 = vst [vmem:[#allocation5 + $0x80] sm:$0xff] %v5545
    %5610 = vst [vmem:[#allocation5 + $0x88] sm:$0xff] %v5546
    %5611 = vst [vmem:[#allocation5 + $0x90] sm:$0xff] %v5547
    %5612 = vst [vmem:[#allocation5 + $0x98] sm:$0xff] %v5548
    %5613 = vst [vmem:[#allocation5 + $0xa0] sm:$0xff] %v5549
    %5614 = vst [vmem:[#allocation5 + $0xa8] sm:$0xff] %v5550
    %5615 = vst [vmem:[#allocation5 + $0xb0] sm:$0xff] %v5551
    %5616 = vst [vmem:[#allocation5 + $0xb8] sm:$0xff] %v5552
    %5617 = vst [vmem:[#allocation5 + $0xc0] sm:$0xff] %v5553
    %5618 = vst [vmem:[#allocation5 + $0xc8] sm:$0xff] %v5554
    %5619 = vst [vmem:[#allocation5 + $0xd0] sm:$0xff] %v5555
    %5620 = vst [vmem:[#allocation5 + $0xd8] sm:$0xff] %v5556
    %5621 = vst [vmem:[#allocation5 + $0xe0] sm:$0xff] %v5557
    %5622 = vst [vmem:[#allocation5 + $0xe8] sm:$0xff] %v5558
    %5623 = vst [vmem:[#allocation5 + $0xf0] sm:$0xff] %v5559
    %5624 = vst [vmem:[#allocation5 + $0xf8] sm:$0xff] %v5560
    %5625 = vst [vmem:[#allocation5 + $0x100] sm:$0xff] %v5561
    %5626 = vst [vmem:[#allocation5 + $0x108] sm:$0xff] %v5562
    %5627 = vst [vmem:[#allocation5 + $0x110] sm:$0xff] %v5563
    %5628 = vst [vmem:[#allocation5 + $0x118] sm:$0xff] %v5564
    %5629 = vst [vmem:[#allocation5 + $0x120] sm:$0xff] %v5565
    %5630 = vst [vmem:[#allocation5 + $0x128] sm:$0xff] %v5566
    %5631 = vst [vmem:[#allocation5 + $0x130] sm:$0xff] %v5567
    %5632 = vst [vmem:[#allocation5 + $0x138] sm:$0xff] %v5568
    %5633 = vst [vmem:[#allocation5 + $0x140] sm:$0xff] %v5569
    %5634 = vst [vmem:[#allocation5 + $0x148] sm:$0xff] %v5570
    %5635 = vst [vmem:[#allocation5 + $0x150] sm:$0xff] %v5571
    %5636 = vst [vmem:[#allocation5 + $0x158] sm:$0xff] %v5572
    %5637 = vst [vmem:[#allocation5 + $0x160] sm:$0xff] %v5573
    %5638 = vst [vmem:[#allocation5 + $0x168] sm:$0xff] %v5574
    %5639 = vst [vmem:[#allocation5 + $0x170] sm:$0xff] %v5575
    %5640 = vst [vmem:[#allocation5 + $0x178] sm:$0xff] %v5576
    %5641 = vst [vmem:[#allocation5 + $0x180] sm:$0xff] %v5577
    %5642 = vst [vmem:[#allocation5 + $0x188] sm:$0xff] %v5578
    %5643 = vst [vmem:[#allocation5 + $0x190] sm:$0xff] %v5579
    %5644 = vst [vmem:[#allocation5 + $0x198] sm:$0xff] %v5580
    %5645 = vst [vmem:[#allocation5 + $0x1a0] sm:$0xff] %v5581
    %5646 = vst [vmem:[#allocation5 + $0x1a8] sm:$0xff] %v5582
    %5647 = vst [vmem:[#allocation5 + $0x1b0] sm:$0xff] %v5583
    %5648 = vst [vmem:[#allocation5 + $0x1b8] sm:$0xff] %v5584
    %5649 = vst [vmem:[#allocation5 + $0x1c0] sm:$0xff] %v5585
    %5650 = vst [vmem:[#allocation5 + $0x1c8] sm:$0xff] %v5586
    %5651 = vst [vmem:[#allocation5 + $0x1d0] sm:$0xff] %v5587
    %5652 = vst [vmem:[#allocation5 + $0x1d8] sm:$0xff] %v5588
    %5653 = vst [vmem:[#allocation5 + $0x1e0] sm:$0xff] %v5589
    %5654 = vst [vmem:[#allocation5 + $0x1e8] sm:$0xff] %v5590
    %5655 = vst [vmem:[#allocation5 + $0x1f0] sm:$0xff] %v5591
    %5656 = vst [vmem:[#allocation5 + $0x1f8] sm:$0xff] %v5592
    %v5657 = vmul.f32 %v504, %v4904
    %v5658 = vmul.f32 %v506, %v4906
    %v5659 = vmul.f32 %v509, %v4909
    %v5660 = vmul.f32 %v511, %v4911
    %v5661 = vmul.f32 %v514, %v4914
    %v5662 = vmul.f32 %v516, %v4916
    %v5663 = vmul.f32 %v519, %v4919
    %v5664 = vmul.f32 %v521, %v4921
    %v5665 = vmul.f32 %v524, %v4924
    %v5666 = vmul.f32 %v526, %v4926
    %v5667 = vmul.f32 %v529, %v4929
    %v5668 = vmul.f32 %v531, %v4931
    %v5669 = vmul.f32 %v534, %v4934
    %v5670 = vmul.f32 %v536, %v4936
    %v5671 = vmul.f32 %v539, %v4939
    %v5672 = vmul.f32 %v541, %v4941
    %v5673 = vmul.f32 %v544, %v4944
    %v5674 = vmul.f32 %v546, %v4946
    %v5675 = vmul.f32 %v549, %v4949
    %v5676 = vmul.f32 %v551, %v4951
    %v5677 = vmul.f32 %v554, %v4954
    %v5678 = vmul.f32 %v556, %v4956
    %v5679 = vmul.f32 %v559, %v4959
    %v5680 = vmul.f32 %v561, %v4961
    %v5681 = vmul.f32 %v564, %v4964
    %v5682 = vmul.f32 %v566, %v4966
    %v5683 = vmul.f32 %v569, %v4969
    %v5684 = vmul.f32 %v571, %v4971
    %v5685 = vmul.f32 %v574, %v4974
    %v5686 = vmul.f32 %v576, %v4976
    %v5687 = vmul.f32 %v579, %v4979
    %v5688 = vmul.f32 %v581, %v4981
    %v5689 = vmul.f32 %v584, %v4984
    %v5690 = vmul.f32 %v586, %v4986
    %v5691 = vmul.f32 %v589, %v4989
    %v5692 = vmul.f32 %v591, %v4991
    %v5693 = vmul.f32 %v594, %v4994
    %v5694 = vmul.f32 %v596, %v4996
    %v5695 = vmul.f32 %v599, %v4999
    %v5696 = vmul.f32 %v601, %v5001
    %v5697 = vmul.f32 %v604, %v5004
    %v5698 = vmul.f32 %v606, %v5006
    %v5699 = vmul.f32 %v609, %v5009
    %v5700 = vmul.f32 %v611, %v5011
    %v5701 = vmul.f32 %v614, %v5014
    %v5702 = vmul.f32 %v616, %v5016
    %v5703 = vmul.f32 %v619, %v5019
    %v5704 = vmul.f32 %v621, %v5021
    %v5705 = vmul.f32 %v624, %v5024
    %v5706 = vmul.f32 %v626, %v5026
    %v5707 = vmul.f32 %v629, %v5029
    %v5708 = vmul.f32 %v631, %v5031
    %v5709 = vmul.f32 %v634, %v5034
    %v5710 = vmul.f32 %v636, %v5036
    %v5711 = vmul.f32 %v639, %v5039
    %v5712 = vmul.f32 %v641, %v5041
    %v5713 = vmul.f32 %v644, %v5044
    %v5714 = vmul.f32 %v646, %v5046
    %v5715 = vmul.f32 %v649, %v5049
    %v5716 = vmul.f32 %v651, %v5051
    %v5717 = vmul.f32 %v654, %v5054
    %v5718 = vmul.f32 %v656, %v5056
    %v5719 = vmul.f32 %v659, %v5059
    %v5720 = vmul.f32 %v661, %v5061
    %v5721 = vadd.f32 %v110, %v5657
    %v5722 = vadd.f32 %v111, %v5658
    %v5723 = vadd.f32 %v112, %v5659
    %v5724 = vadd.f32 %v113, %v5660
    %v5725 = vadd.f32 %v114, %v5661
    %v5726 = vadd.f32 %v115, %v5662
    %v5727 = vadd.f32 %v116, %v5663
    %v5728 = vadd.f32 %v117, %v5664
    %v5729 = vadd.f32 %v118, %v5665
    %v5730 = vadd.f32 %v119, %v5666
    %v5731 = vadd.f32 %v120, %v5667
    %v5732 = vadd.f32 %v121, %v5668
    %v5733 = vadd.f32 %v122, %v5669
    %v5734 = vadd.f32 %v123, %v5670
    %v5735 = vadd.f32 %v124, %v5671
    %v5736 = vadd.f32 %v125, %v5672
    %v5737 = vadd.f32 %v126, %v5673
    %v5738 = vadd.f32 %v127, %v5674
    %v5739 = vadd.f32 %v128, %v5675
    %v5740 = vadd.f32 %v129, %v5676
    %v5741 = vadd.f32 %v130, %v5677
    %v5742 = vadd.f32 %v131, %v5678
    %v5743 = vadd.f32 %v132, %v5679
    %v5744 = vadd.f32 %v133, %v5680
    %v5745 = vadd.f32 %v134, %v5681
    %v5746 = vadd.f32 %v135, %v5682
    %v5747 = vadd.f32 %v136, %v5683
    %v5748 = vadd.f32 %v137, %v5684
    %v5749 = vadd.f32 %v138, %v5685
    %v5750 = vadd.f32 %v139, %v5686
    %v5751 = vadd.f32 %v140, %v5687
    %v5752 = vadd.f32 %v141, %v5688
    %v5753 = vadd.f32 %v142, %v5689
    %v5754 = vadd.f32 %v143, %v5690
    %v5755 = vadd.f32 %v144, %v5691
    %v5756 = vadd.f32 %v145, %v5692
    %v5757 = vadd.f32 %v146, %v5693
    %v5758 = vadd.f32 %v147, %v5694
    %v5759 = vadd.f32 %v148, %v5695
    %v5760 = vadd.f32 %v149, %v5696
    %v5761 = vadd.f32 %v150, %v5697
    %v5762 = vadd.f32 %v151, %v5698
    %v5763 = vadd.f32 %v152, %v5699
    %v5764 = vadd.f32 %v153, %v5700
    %v5765 = vadd.f32 %v154, %v5701
    %v5766 = vadd.f32 %v155, %v5702
    %v5767 = vadd.f32 %v156, %v5703
    %v5768 = vadd.f32 %v157, %v5704
    %v5769 = vadd.f32 %v158, %v5705
    %v5770 = vadd.f32 %v159, %v5706
    %v5771 = vadd.f32 %v160, %v5707
    %v5772 = vadd.f32 %v161, %v5708
    %v5773 = vadd.f32 %v162, %v5709
    %v5774 = vadd.f32 %v163, %v5710
    %v5775 = vadd.f32 %v164, %v5711
    %v5776 = vadd.f32 %v165, %v5712
    %v5777 = vadd.f32 %v166, %v5713
    %v5778 = vadd.f32 %v167, %v5714
    %v5779 = vadd.f32 %v168, %v5715
    %v5780 = vadd.f32 %v169, %v5716
    %v5781 = vadd.f32 %v170, %v5717
    %v5782 = vadd.f32 %v171, %v5718
    %v5783 = vadd.f32 %v172, %v5719
    %v5784 = vadd.f32 %v173, %v5720
    %5785 = vst [vmem:[#allocation6] sm:$0xff] %v5721
    %5786 = vst [vmem:[#allocation6 + $0x8] sm:$0xff] %v5722
    %5787 = vst [vmem:[#allocation6 + $0x10] sm:$0xff] %v5723
    %5788 = vst [vmem:[#allocation6 + $0x18] sm:$0xff] %v5724
    %5789 = vst [vmem:[#allocation6 + $0x20] sm:$0xff] %v5725
    %5790 = vst [vmem:[#allocation6 + $0x28] sm:$0xff] %v5726
    %5791 = vst [vmem:[#allocation6 + $0x30] sm:$0xff] %v5727
    %5792 = vst [vmem:[#allocation6 + $0x38] sm:$0xff] %v5728
    %5793 = vst [vmem:[#allocation6 + $0x40] sm:$0xff] %v5729
    %5794 = vst [vmem:[#allocation6 + $0x48] sm:$0xff] %v5730
    %5795 = vst [vmem:[#allocation6 + $0x50] sm:$0xff] %v5731
    %5796 = vst [vmem:[#allocation6 + $0x58] sm:$0xff] %v5732
    %5797 = vst [vmem:[#allocation6 + $0x60] sm:$0xff] %v5733
    %5798 = vst [vmem:[#allocation6 + $0x68] sm:$0xff] %v5734
    %5799 = vst [vmem:[#allocation6 + $0x70] sm:$0xff] %v5735
    %5800 = vst [vmem:[#allocation6 + $0x78] sm:$0xff] %v5736
    %5801 = vst [vmem:[#allocation6 + $0x80] sm:$0xff] %v5737
    %5802 = vst [vmem:[#allocation6 + $0x88] sm:$0xff] %v5738
    %5803 = vst [vmem:[#allocation6 + $0x90] sm:$0xff] %v5739
    %5804 = vst [vmem:[#allocation6 + $0x98] sm:$0xff] %v5740
    %5805 = vst [vmem:[#allocation6 + $0xa0] sm:$0xff] %v5741
    %5806 = vst [vmem:[#allocation6 + $0xa8] sm:$0xff] %v5742
    %5807 = vst [vmem:[#allocation6 + $0xb0] sm:$0xff] %v5743
    %5808 = vst [vmem:[#allocation6 + $0xb8] sm:$0xff] %v5744
    %5809 = vst [vmem:[#allocation6 + $0xc0] sm:$0xff] %v5745
    %5810 = vst [vmem:[#allocation6 + $0xc8] sm:$0xff] %v5746
    %5811 = vst [vmem:[#allocation6 + $0xd0] sm:$0xff] %v5747
    %5812 = vst [vmem:[#allocation6 + $0xd8] sm:$0xff] %v5748
    %5813 = vst [vmem:[#allocation6 + $0xe0] sm:$0xff] %v5749
    %5814 = vst [vmem:[#allocation6 + $0xe8] sm:$0xff] %v5750
    %5815 = vst [vmem:[#allocation6 + $0xf0] sm:$0xff] %v5751
    %5816 = vst [vmem:[#allocation6 + $0xf8] sm:$0xff] %v5752
    %5817 = vst [vmem:[#allocation6 + $0x100] sm:$0xff] %v5753
    %5818 = vst [vmem:[#allocation6 + $0x108] sm:$0xff] %v5754
    %5819 = vst [vmem:[#allocation6 + $0x110] sm:$0xff] %v5755
    %5820 = vst [vmem:[#allocation6 + $0x118] sm:$0xff] %v5756
    %5821 = vst [vmem:[#allocation6 + $0x120] sm:$0xff] %v5757
    %5822 = vst [vmem:[#allocation6 + $0x128] sm:$0xff] %v5758
    %5823 = vst [vmem:[#allocation6 + $0x130] sm:$0xff] %v5759
    %5824 = vst [vmem:[#allocation6 + $0x138] sm:$0xff] %v5760
    %5825 = vst [vmem:[#allocation6 + $0x140] sm:$0xff] %v5761
    %5826 = vst [vmem:[#allocation6 + $0x148] sm:$0xff] %v5762
    %5827 = vst [vmem:[#allocation6 + $0x150] sm:$0xff] %v5763
    %5828 = vst [vmem:[#allocation6 + $0x158] sm:$0xff] %v5764
    %5829 = vst [vmem:[#allocation6 + $0x160] sm:$0xff] %v5765
    %5830 = vst [vmem:[#allocation6 + $0x168] sm:$0xff] %v5766
    %5831 = vst [vmem:[#allocation6 + $0x170] sm:$0xff] %v5767
    %5832 = vst [vmem:[#allocation6 + $0x178] sm:$0xff] %v5768
    %5833 = vst [vmem:[#allocation6 + $0x180] sm:$0xff] %v5769
    %5834 = vst [vmem:[#allocation6 + $0x188] sm:$0xff] %v5770
    %5835 = vst [vmem:[#allocation6 + $0x190] sm:$0xff] %v5771
    %5836 = vst [vmem:[#allocation6 + $0x198] sm:$0xff] %v5772
    %5837 = vst [vmem:[#allocation6 + $0x1a0] sm:$0xff] %v5773
    %5838 = vst [vmem:[#allocation6 + $0x1a8] sm:$0xff] %v5774
    %5839 = vst [vmem:[#allocation6 + $0x1b0] sm:$0xff] %v5775
    %5840 = vst [vmem:[#allocation6 + $0x1b8] sm:$0xff] %v5776
    %5841 = vst [vmem:[#allocation6 + $0x1c0] sm:$0xff] %v5777
    %5842 = vst [vmem:[#allocation6 + $0x1c8] sm:$0xff] %v5778
    %5843 = vst [vmem:[#allocation6 + $0x1d0] sm:$0xff] %v5779
    %5844 = vst [vmem:[#allocation6 + $0x1d8] sm:$0xff] %v5780
    %5845 = vst [vmem:[#allocation6 + $0x1e0] sm:$0xff] %v5781
    %5846 = vst [vmem:[#allocation6 + $0x1e8] sm:$0xff] %v5782
    %5847 = vst [vmem:[#allocation6 + $0x1f0] sm:$0xff] %v5783
    %5848 = vst [vmem:[#allocation6 + $0x1f8] sm:$0xff] %v5784
    %v5849 = vmul.f32 %v664, %v4904
    %v5850 = vmul.f32 %v666, %v4906
    %v5851 = vmul.f32 %v669, %v4909
    %v5852 = vmul.f32 %v671, %v4911
    %v5853 = vmul.f32 %v674, %v4914
    %v5854 = vmul.f32 %v676, %v4916
    %v5855 = vmul.f32 %v679, %v4919
    %v5856 = vmul.f32 %v681, %v4921
    %v5857 = vmul.f32 %v684, %v4924
    %v5858 = vmul.f32 %v686, %v4926
    %v5859 = vmul.f32 %v689, %v4929
    %v5860 = vmul.f32 %v691, %v4931
    %v5861 = vmul.f32 %v694, %v4934
    %v5862 = vmul.f32 %v696, %v4936
    %v5863 = vmul.f32 %v699, %v4939
    %v5864 = vmul.f32 %v701, %v4941
    %v5865 = vmul.f32 %v704, %v4944
    %v5866 = vmul.f32 %v706, %v4946
    %v5867 = vmul.f32 %v709, %v4949
    %v5868 = vmul.f32 %v711, %v4951
    %v5869 = vmul.f32 %v714, %v4954
    %v5870 = vmul.f32 %v716, %v4956
    %v5871 = vmul.f32 %v719, %v4959
    %v5872 = vmul.f32 %v721, %v4961
    %v5873 = vmul.f32 %v724, %v4964
    %v5874 = vmul.f32 %v726, %v4966
    %v5875 = vmul.f32 %v729, %v4969
    %v5876 = vmul.f32 %v731, %v4971
    %v5877 = vmul.f32 %v734, %v4974
    %v5878 = vmul.f32 %v736, %v4976
    %v5879 = vmul.f32 %v739, %v4979
    %v5880 = vmul.f32 %v741, %v4981
    %v5881 = vmul.f32 %v744, %v4984
    %v5882 = vmul.f32 %v746, %v4986
    %v5883 = vmul.f32 %v749, %v4989
    %v5884 = vmul.f32 %v751, %v4991
    %v5885 = vmul.f32 %v754, %v4994
    %v5886 = vmul.f32 %v756, %v4996
    %v5887 = vmul.f32 %v759, %v4999
    %v5888 = vmul.f32 %v761, %v5001
    %v5889 = vmul.f32 %v764, %v5004
    %v5890 = vmul.f32 %v766, %v5006
    %v5891 = vmul.f32 %v769, %v5009
    %v5892 = vmul.f32 %v771, %v5011
    %v5893 = vmul.f32 %v774, %v5014
    %v5894 = vmul.f32 %v776, %v5016
    %v5895 = vmul.f32 %v779, %v5019
    %v5896 = vmul.f32 %v781, %v5021
    %v5897 = vmul.f32 %v784, %v5024
    %v5898 = vmul.f32 %v786, %v5026
    %v5899 = vmul.f32 %v789, %v5029
    %v5900 = vmul.f32 %v791, %v5031
    %v5901 = vmul.f32 %v794, %v5034
    %v5902 = vmul.f32 %v796, %v5036
    %v5903 = vmul.f32 %v799, %v5039
    %v5904 = vmul.f32 %v801, %v5041
    %v5905 = vmul.f32 %v804, %v5044
    %v5906 = vmul.f32 %v806, %v5046
    %v5907 = vmul.f32 %v809, %v5049
    %v5908 = vmul.f32 %v811, %v5051
    %v5909 = vmul.f32 %v814, %v5054
    %v5910 = vmul.f32 %v816, %v5056
    %v5911 = vmul.f32 %v819, %v5059
    %v5912 = vmul.f32 %v821, %v5061
    %v5913 = vadd.f32 %v174, %v5849
    %v5914 = vadd.f32 %v175, %v5850
    %v5915 = vadd.f32 %v176, %v5851
    %v5916 = vadd.f32 %v177, %v5852
    %v5917 = vadd.f32 %v178, %v5853
    %v5918 = vadd.f32 %v179, %v5854
    %v5919 = vadd.f32 %v180, %v5855
    %v5920 = vadd.f32 %v181, %v5856
    %v5921 = vadd.f32 %v182, %v5857
    %v5922 = vadd.f32 %v183, %v5858
    %v5923 = vadd.f32 %v184, %v5859
    %v5924 = vadd.f32 %v185, %v5860
    %v5925 = vadd.f32 %v186, %v5861
    %v5926 = vadd.f32 %v187, %v5862
    %v5927 = vadd.f32 %v188, %v5863
    %v5928 = vadd.f32 %v189, %v5864
    %v5929 = vadd.f32 %v190, %v5865
    %v5930 = vadd.f32 %v191, %v5866
    %v5931 = vadd.f32 %v192, %v5867
    %v5932 = vadd.f32 %v193, %v5868
    %v5933 = vadd.f32 %v194, %v5869
    %v5934 = vadd.f32 %v195, %v5870
    %v5935 = vadd.f32 %v196, %v5871
    %v5936 = vadd.f32 %v197, %v5872
    %v5937 = vadd.f32 %v198, %v5873
    %v5938 = vadd.f32 %v199, %v5874
    %v5939 = vadd.f32 %v200, %v5875
    %v5940 = vadd.f32 %v201, %v5876
    %v5941 = vadd.f32 %v202, %v5877
    %v5942 = vadd.f32 %v203, %v5878
    %v5943 = vadd.f32 %v204, %v5879
    %v5944 = vadd.f32 %v205, %v5880
    %v5945 = vadd.f32 %v206, %v5881
    %v5946 = vadd.f32 %v207, %v5882
    %v5947 = vadd.f32 %v208, %v5883
    %v5948 = vadd.f32 %v209, %v5884
    %v5949 = vadd.f32 %v210, %v5885
    %v5950 = vadd.f32 %v211, %v5886
    %v5951 = vadd.f32 %v212, %v5887
    %v5952 = vadd.f32 %v213, %v5888
    %v5953 = vadd.f32 %v214, %v5889
    %v5954 = vadd.f32 %v215, %v5890
    %v5955 = vadd.f32 %v216, %v5891
    %v5956 = vadd.f32 %v217, %v5892
    %v5957 = vadd.f32 %v218, %v5893
    %v5958 = vadd.f32 %v219, %v5894
    %v5959 = vadd.f32 %v220, %v5895
    %v5960 = vadd.f32 %v221, %v5896
    %v5961 = vadd.f32 %v222, %v5897
    %v5962 = vadd.f32 %v223, %v5898
    %v5963 = vadd.f32 %v224, %v5899
    %v5964 = vadd.f32 %v225, %v5900
    %v5965 = vadd.f32 %v226, %v5901
    %v5966 = vadd.f32 %v227, %v5902
    %v5967 = vadd.f32 %v228, %v5903
    %v5968 = vadd.f32 %v229, %v5904
    %v5969 = vadd.f32 %v230, %v5905
    %v5970 = vadd.f32 %v231, %v5906
    %v5971 = vadd.f32 %v232, %v5907
    %v5972 = vadd.f32 %v233, %v5908
    %v5973 = vadd.f32 %v234, %v5909
    %v5974 = vadd.f32 %v235, %v5910
    %v5975 = vadd.f32 %v236, %v5911
    %v5976 = vadd.f32 %v237, %v5912
    %s5977 = scalar_lea.vmem [#allocation6], 512
    %5978 = vst [vmem:[%s5977] sm:$0xff] %v5913
    %5979 = vst [vmem:[%s5977 + $0x8] sm:$0xff] %v5914
    %5980 = vst [vmem:[%s5977 + $0x10] sm:$0xff] %v5915
    %5981 = vst [vmem:[%s5977 + $0x18] sm:$0xff] %v5916
    %5982 = vst [vmem:[%s5977 + $0x20] sm:$0xff] %v5917
    %5983 = vst [vmem:[%s5977 + $0x28] sm:$0xff] %v5918
    %5984 = vst [vmem:[%s5977 + $0x30] sm:$0xff] %v5919
    %5985 = vst [vmem:[%s5977 + $0x38] sm:$0xff] %v5920
    %5986 = vst [vmem:[%s5977 + $0x40] sm:$0xff] %v5921
    %5987 = vst [vmem:[%s5977 + $0x48] sm:$0xff] %v5922
    %5988 = vst [vmem:[%s5977 + $0x50] sm:$0xff] %v5923
    %5989 = vst [vmem:[%s5977 + $0x58] sm:$0xff] %v5924
    %5990 = vst [vmem:[%s5977 + $0x60] sm:$0xff] %v5925
    %5991 = vst [vmem:[%s5977 + $0x68] sm:$0xff] %v5926
    %5992 = vst [vmem:[%s5977 + $0x70] sm:$0xff] %v5927
    %5993 = vst [vmem:[%s5977 + $0x78] sm:$0xff] %v5928
    %5994 = vst [vmem:[%s5977 + $0x80] sm:$0xff] %v5929
    %5995 = vst [vmem:[%s5977 + $0x88] sm:$0xff] %v5930
    %5996 = vst [vmem:[%s5977 + $0x90] sm:$0xff] %v5931
    %5997 = vst [vmem:[%s5977 + $0x98] sm:$0xff] %v5932
    %5998 = vst [vmem:[%s5977 + $0xa0] sm:$0xff] %v5933
    %5999 = vst [vmem:[%s5977 + $0xa8] sm:$0xff] %v5934
    %6000 = vst [vmem:[%s5977 + $0xb0] sm:$0xff] %v5935
    %6001 = vst [vmem:[%s5977 + $0xb8] sm:$0xff] %v5936
    %6002 = vst [vmem:[%s5977 + $0xc0] sm:$0xff] %v5937
    %6003 = vst [vmem:[%s5977 + $0xc8] sm:$0xff] %v5938
    %6004 = vst [vmem:[%s5977 + $0xd0] sm:$0xff] %v5939
    %6005 = vst [vmem:[%s5977 + $0xd8] sm:$0xff] %v5940
    %6006 = vst [vmem:[%s5977 + $0xe0] sm:$0xff] %v5941
    %6007 = vst [vmem:[%s5977 + $0xe8] sm:$0xff] %v5942
    %6008 = vst [vmem:[%s5977 + $0xf0] sm:$0xff] %v5943
    %6009 = vst [vmem:[%s5977 + $0xf8] sm:$0xff] %v5944
    %6010 = vst [vmem:[%s5977 + $0x100] sm:$0xff] %v5945
    %6011 = vst [vmem:[%s5977 + $0x108] sm:$0xff] %v5946
    %6012 = vst [vmem:[%s5977 + $0x110] sm:$0xff] %v5947
    %6013 = vst [vmem:[%s5977 + $0x118] sm:$0xff] %v5948
    %6014 = vst [vmem:[%s5977 + $0x120] sm:$0xff] %v5949
    %6015 = vst [vmem:[%s5977 + $0x128] sm:$0xff] %v5950
    %6016 = vst [vmem:[%s5977 + $0x130] sm:$0xff] %v5951
    %6017 = vst [vmem:[%s5977 + $0x138] sm:$0xff] %v5952
    %6018 = vst [vmem:[%s5977 + $0x140] sm:$0xff] %v5953
    %6019 = vst [vmem:[%s5977 + $0x148] sm:$0xff] %v5954
    %6020 = vst [vmem:[%s5977 + $0x150] sm:$0xff] %v5955
    %6021 = vst [vmem:[%s5977 + $0x158] sm:$0xff] %v5956
    %6022 = vst [vmem:[%s5977 + $0x160] sm:$0xff] %v5957
    %6023 = vst [vmem:[%s5977 + $0x168] sm:$0xff] %v5958
    %6024 = vst [vmem:[%s5977 + $0x170] sm:$0xff] %v5959
    %6025 = vst [vmem:[%s5977 + $0x178] sm:$0xff] %v5960
    %6026 = vst [vmem:[%s5977 + $0x180] sm:$0xff] %v5961
    %6027 = vst [vmem:[%s5977 + $0x188] sm:$0xff] %v5962
    %6028 = vst [vmem:[%s5977 + $0x190] sm:$0xff] %v5963
    %6029 = vst [vmem:[%s5977 + $0x198] sm:$0xff] %v5964
    %6030 = vst [vmem:[%s5977 + $0x1a0] sm:$0xff] %v5965
    %6031 = vst [vmem:[%s5977 + $0x1a8] sm:$0xff] %v5966
    %6032 = vst [vmem:[%s5977 + $0x1b0] sm:$0xff] %v5967
    %6033 = vst [vmem:[%s5977 + $0x1b8] sm:$0xff] %v5968
    %6034 = vst [vmem:[%s5977 + $0x1c0] sm:$0xff] %v5969
    %6035 = vst [vmem:[%s5977 + $0x1c8] sm:$0xff] %v5970
    %6036 = vst [vmem:[%s5977 + $0x1d0] sm:$0xff] %v5971
    %6037 = vst [vmem:[%s5977 + $0x1d8] sm:$0xff] %v5972
    %6038 = vst [vmem:[%s5977 + $0x1e0] sm:$0xff] %v5973
    %6039 = vst [vmem:[%s5977 + $0x1e8] sm:$0xff] %v5974
    %6040 = vst [vmem:[%s5977 + $0x1f0] sm:$0xff] %v5975
    %6041 = vst [vmem:[%s5977 + $0x1f8] sm:$0xff] %v5976
    %v6042 = vmul.f32 %v824, %v4904
    %v6043 = vmul.f32 %v826, %v4906
    %v6044 = vmul.f32 %v829, %v4909
    %v6045 = vmul.f32 %v831, %v4911
    %v6046 = vmul.f32 %v834, %v4914
    %v6047 = vmul.f32 %v836, %v4916
    %v6048 = vmul.f32 %v839, %v4919
    %v6049 = vmul.f32 %v841, %v4921
    %v6050 = vmul.f32 %v844, %v4924
    %v6051 = vmul.f32 %v846, %v4926
    %v6052 = vmul.f32 %v849, %v4929
    %v6053 = vmul.f32 %v851, %v4931
    %v6054 = vmul.f32 %v854, %v4934
    %v6055 = vmul.f32 %v856, %v4936
    %v6056 = vmul.f32 %v859, %v4939
    %v6057 = vmul.f32 %v861, %v4941
    %v6058 = vmul.f32 %v864, %v4944
    %v6059 = vmul.f32 %v866, %v4946
    %v6060 = vmul.f32 %v869, %v4949
    %v6061 = vmul.f32 %v871, %v4951
    %v6062 = vmul.f32 %v874, %v4954
    %v6063 = vmul.f32 %v876, %v4956
    %v6064 = vmul.f32 %v879, %v4959
    %v6065 = vmul.f32 %v881, %v4961
    %v6066 = vmul.f32 %v884, %v4964
    %v6067 = vmul.f32 %v886, %v4966
    %v6068 = vmul.f32 %v889, %v4969
    %v6069 = vmul.f32 %v891, %v4971
    %v6070 = vmul.f32 %v894, %v4974
    %v6071 = vmul.f32 %v896, %v4976
    %v6072 = vmul.f32 %v899, %v4979
    %v6073 = vmul.f32 %v901, %v4981
    %v6074 = vmul.f32 %v904, %v4984
    %v6075 = vmul.f32 %v906, %v4986
    %v6076 = vmul.f32 %v909, %v4989
    %v6077 = vmul.f32 %v911, %v4991
    %v6078 = vmul.f32 %v914, %v4994
    %v6079 = vmul.f32 %v916, %v4996
    %v6080 = vmul.f32 %v919, %v4999
    %v6081 = vmul.f32 %v921, %v5001
    %v6082 = vmul.f32 %v924, %v5004
    %v6083 = vmul.f32 %v926, %v5006
    %v6084 = vmul.f32 %v929, %v5009
    %v6085 = vmul.f32 %v931, %v5011
    %v6086 = vmul.f32 %v934, %v5014
    %v6087 = vmul.f32 %v936, %v5016
    %v6088 = vmul.f32 %v939, %v5019
    %v6089 = vmul.f32 %v941, %v5021
    %v6090 = vmul.f32 %v944, %v5024
    %v6091 = vmul.f32 %v946, %v5026
    %v6092 = vmul.f32 %v949, %v5029
    %v6093 = vmul.f32 %v951, %v5031
    %v6094 = vmul.f32 %v954, %v5034
    %v6095 = vmul.f32 %v956, %v5036
    %v6096 = vmul.f32 %v959, %v5039
    %v6097 = vmul.f32 %v961, %v5041
    %v6098 = vmul.f32 %v964, %v5044
    %v6099 = vmul.f32 %v966, %v5046
    %v6100 = vmul.f32 %v969, %v5049
    %v6101 = vmul.f32 %v971, %v5051
    %v6102 = vmul.f32 %v974, %v5054
    %v6103 = vmul.f32 %v976, %v5056
    %v6104 = vmul.f32 %v979, %v5059
    %v6105 = vmul.f32 %v981, %v5061
    %v6106 = vadd.f32 %v238, %v6042
    %v6107 = vadd.f32 %v239, %v6043
    %v6108 = vadd.f32 %v240, %v6044
    %v6109 = vadd.f32 %v241, %v6045
    %v6110 = vadd.f32 %v242, %v6046
    %v6111 = vadd.f32 %v243, %v6047
    %v6112 = vadd.f32 %v244, %v6048
    %v6113 = vadd.f32 %v245, %v6049
    %v6114 = vadd.f32 %v246, %v6050
    %v6115 = vadd.f32 %v247, %v6051
    %v6116 = vadd.f32 %v248, %v6052
    %v6117 = vadd.f32 %v249, %v6053
    %v6118 = vadd.f32 %v250, %v6054
    %v6119 = vadd.f32 %v251, %v6055
    %v6120 = vadd.f32 %v252, %v6056
    %v6121 = vadd.f32 %v253, %v6057
    %v6122 = vadd.f32 %v254, %v6058
    %v6123 = vadd.f32 %v255, %v6059
    %v6124 = vadd.f32 %v256, %v6060
    %v6125 = vadd.f32 %v257, %v6061
    %v6126 = vadd.f32 %v258, %v6062
    %v6127 = vadd.f32 %v259, %v6063
    %v6128 = vadd.f32 %v260, %v6064
    %v6129 = vadd.f32 %v261, %v6065
    %v6130 = vadd.f32 %v262, %v6066
    %v6131 = vadd.f32 %v263, %v6067
    %v6132 = vadd.f32 %v264, %v6068
    %v6133 = vadd.f32 %v265, %v6069
    %v6134 = vadd.f32 %v266, %v6070
    %v6135 = vadd.f32 %v267, %v6071
    %v6136 = vadd.f32 %v268, %v6072
    %v6137 = vadd.f32 %v269, %v6073
    %v6138 = vadd.f32 %v270, %v6074
    %v6139 = vadd.f32 %v271, %v6075
    %v6140 = vadd.f32 %v272, %v6076
    %v6141 = vadd.f32 %v273, %v6077
    %v6142 = vadd.f32 %v274, %v6078
    %v6143 = vadd.f32 %v275, %v6079
    %v6144 = vadd.f32 %v276, %v6080
    %v6145 = vadd.f32 %v277, %v6081
    %v6146 = vadd.f32 %v278, %v6082
    %v6147 = vadd.f32 %v279, %v6083
    %v6148 = vadd.f32 %v280, %v6084
    %v6149 = vadd.f32 %v281, %v6085
    %v6150 = vadd.f32 %v282, %v6086
    %v6151 = vadd.f32 %v283, %v6087
    %v6152 = vadd.f32 %v284, %v6088
    %v6153 = vadd.f32 %v285, %v6089
    %v6154 = vadd.f32 %v286, %v6090
    %v6155 = vadd.f32 %v287, %v6091
    %v6156 = vadd.f32 %v288, %v6092
    %v6157 = vadd.f32 %v289, %v6093
    %v6158 = vadd.f32 %v290, %v6094
    %v6159 = vadd.f32 %v291, %v6095
    %v6160 = vadd.f32 %v292, %v6096
    %v6161 = vadd.f32 %v293, %v6097
    %v6162 = vadd.f32 %v294, %v6098
    %v6163 = vadd.f32 %v295, %v6099
    %v6164 = vadd.f32 %v296, %v6100
    %v6165 = vadd.f32 %v297, %v6101
    %v6166 = vadd.f32 %v298, %v6102
    %v6167 = vadd.f32 %v299, %v6103
    %v6168 = vadd.f32 %v300, %v6104
    %v6169 = vadd.f32 %v301, %v6105
    %s6170 = scalar_lea.vmem [#allocation6], 1024
    %6171 = vst [vmem:[%s6170] sm:$0xff] %v6106
    %6172 = vst [vmem:[%s6170 + $0x8] sm:$0xff] %v6107
    %6173 = vst [vmem:[%s6170 + $0x10] sm:$0xff] %v6108
    %6174 = vst [vmem:[%s6170 + $0x18] sm:$0xff] %v6109
    %6175 = vst [vmem:[%s6170 + $0x20] sm:$0xff] %v6110
    %6176 = vst [vmem:[%s6170 + $0x28] sm:$0xff] %v6111
    %6177 = vst [vmem:[%s6170 + $0x30] sm:$0xff] %v6112
    %6178 = vst [vmem:[%s6170 + $0x38] sm:$0xff] %v6113
    %6179 = vst [vmem:[%s6170 + $0x40] sm:$0xff] %v6114
    %6180 = vst [vmem:[%s6170 + $0x48] sm:$0xff] %v6115
    %6181 = vst [vmem:[%s6170 + $0x50] sm:$0xff] %v6116
    %6182 = vst [vmem:[%s6170 + $0x58] sm:$0xff] %v6117
    %6183 = vst [vmem:[%s6170 + $0x60] sm:$0xff] %v6118
    %6184 = vst [vmem:[%s6170 + $0x68] sm:$0xff] %v6119
    %6185 = vst [vmem:[%s6170 + $0x70] sm:$0xff] %v6120
    %6186 = vst [vmem:[%s6170 + $0x78] sm:$0xff] %v6121
    %6187 = vst [vmem:[%s6170 + $0x80] sm:$0xff] %v6122
    %6188 = vst [vmem:[%s6170 + $0x88] sm:$0xff] %v6123
    %6189 = vst [vmem:[%s6170 + $0x90] sm:$0xff] %v6124
    %6190 = vst [vmem:[%s6170 + $0x98] sm:$0xff] %v6125
    %6191 = vst [vmem:[%s6170 + $0xa0] sm:$0xff] %v6126
    %6192 = vst [vmem:[%s6170 + $0xa8] sm:$0xff] %v6127
    %6193 = vst [vmem:[%s6170 + $0xb0] sm:$0xff] %v6128
    %6194 = vst [vmem:[%s6170 + $0xb8] sm:$0xff] %v6129
    %6195 = vst [vmem:[%s6170 + $0xc0] sm:$0xff] %v6130
    %6196 = vst [vmem:[%s6170 + $0xc8] sm:$0xff] %v6131
    %6197 = vst [vmem:[%s6170 + $0xd0] sm:$0xff] %v6132
    %6198 = vst [vmem:[%s6170 + $0xd8] sm:$0xff] %v6133
    %6199 = vst [vmem:[%s6170 + $0xe0] sm:$0xff] %v6134
    %6200 = vst [vmem:[%s6170 + $0xe8] sm:$0xff] %v6135
    %6201 = vst [vmem:[%s6170 + $0xf0] sm:$0xff] %v6136
    %6202 = vst [vmem:[%s6170 + $0xf8] sm:$0xff] %v6137
    %6203 = vst [vmem:[%s6170 + $0x100] sm:$0xff] %v6138
    %6204 = vst [vmem:[%s6170 + $0x108] sm:$0xff] %v6139
    %6205 = vst [vmem:[%s6170 + $0x110] sm:$0xff] %v6140
    %6206 = vst [vmem:[%s6170 + $0x118] sm:$0xff] %v6141
    %6207 = vst [vmem:[%s6170 + $0x120] sm:$0xff] %v6142
    %6208 = vst [vmem:[%s6170 + $0x128] sm:$0xff] %v6143
    %6209 = vst [vmem:[%s6170 + $0x130] sm:$0xff] %v6144
    %6210 = vst [vmem:[%s6170 + $0x138] sm:$0xff] %v6145
    %6211 = vst [vmem:[%s6170 + $0x140] sm:$0xff] %v6146
    %6212 = vst [vmem:[%s6170 + $0x148] sm:$0xff] %v6147
    %6213 = vst [vmem:[%s6170 + $0x150] sm:$0xff] %v6148
    %6214 = vst [vmem:[%s6170 + $0x158] sm:$0xff] %v6149
    %6215 = vst [vmem:[%s6170 + $0x160] sm:$0xff] %v6150
    %6216 = vst [vmem:[%s6170 + $0x168] sm:$0xff] %v6151
    %6217 = vst [vmem:[%s6170 + $0x170] sm:$0xff] %v6152
    %6218 = vst [vmem:[%s6170 + $0x178] sm:$0xff] %v6153
    %6219 = vst [vmem:[%s6170 + $0x180] sm:$0xff] %v6154
    %6220 = vst [vmem:[%s6170 + $0x188] sm:$0xff] %v6155
    %6221 = vst [vmem:[%s6170 + $0x190] sm:$0xff] %v6156
    %6222 = vst [vmem:[%s6170 + $0x198] sm:$0xff] %v6157
    %6223 = vst [vmem:[%s6170 + $0x1a0] sm:$0xff] %v6158
    %6224 = vst [vmem:[%s6170 + $0x1a8] sm:$0xff] %v6159
    %6225 = vst [vmem:[%s6170 + $0x1b0] sm:$0xff] %v6160
    %6226 = vst [vmem:[%s6170 + $0x1b8] sm:$0xff] %v6161
    %6227 = vst [vmem:[%s6170 + $0x1c0] sm:$0xff] %v6162
    %6228 = vst [vmem:[%s6170 + $0x1c8] sm:$0xff] %v6163
    %6229 = vst [vmem:[%s6170 + $0x1d0] sm:$0xff] %v6164
    %6230 = vst [vmem:[%s6170 + $0x1d8] sm:$0xff] %v6165
    %6231 = vst [vmem:[%s6170 + $0x1e0] sm:$0xff] %v6166
    %6232 = vst [vmem:[%s6170 + $0x1e8] sm:$0xff] %v6167
    %6233 = vst [vmem:[%s6170 + $0x1f0] sm:$0xff] %v6168
    %6234 = vst [vmem:[%s6170 + $0x1f8] sm:$0xff] %v6169
    // Predicated region
    $region34: #{painn_update_block_v3nf.1} parent=1 // pred_check
      _
    $region35: #{painn_update_block_v3nf.1} parent=1 // pred_check_branch
      %6236 = sbr.rel (0) target = $region37
    $region36: #{painn_update_block_v3nf.1} parent=1 // pred_region
      %6238 = vsyncadd [#allocation4], 0
      %s6239 = sshll.u32 [#allocation5], 4
      %s6240 = int_to_ptr.vmem [resolvable:$true] %s6239
      %s6241 = sshll.u32 %s7, 4
      %s6242 = int_to_ptr.hbm [resolvable:$true] %s6241
      %6247 = dma.vmem_to_hbm [thread:$0]  %s6240, 8192, %s6242, [#allocation4], 128, 128, 8
    $region37: #{painn_update_block_v3nf.1} parent=1 // pred_fallthru
      _
    // Predicated region
    $region38: #{painn_update_block_v3nf.1} parent=1 // pred_check
      _
    $region39: #{painn_update_block_v3nf.1} parent=1 // pred_check_branch
      %6249 = sbr.rel (0) target = $region41
    $region40: #{painn_update_block_v3nf.1} parent=1 // pred_region
      %6251 = vsyncadd [#allocation7], 0
      %s6252 = sshll.u32 [#allocation6], 4
      %s6253 = int_to_ptr.vmem [resolvable:$true] %s6252
      %s6254 = sshll.u32 %s8, 4
      %s6255 = int_to_ptr.hbm [resolvable:$true] %s6254
      %6260 = dma.vmem_to_hbm [thread:$0]  %s6253, 24576, %s6255, [#allocation7], 128, 128, 8
    $region41: #{painn_update_block_v3nf.1} parent=1 // pred_fallthru
      _
    // Predicated region
    $region42: #{painn_update_block_v3nf.1} parent=1 // pred_check
      _
    $region43: #{painn_update_block_v3nf.1} parent=1 // pred_check_branch
      %6262 = sbr.rel (0) target = $region45
    $region44: #{painn_update_block_v3nf.1} parent=1 // pred_region
      %6264 = dma.done [#allocation4], 8192
    $region45: #{painn_update_block_v3nf.1} parent=1 // pred_fallthru
      _
    // Predicated region
    $region46: #{painn_update_block_v3nf.1} parent=1 // pred_check
      _
    $region47: #{painn_update_block_v3nf.1} parent=1 // pred_check_branch
      %6266 = sbr.rel (0) target = $region49
    $region48: #{painn_update_block_v3nf.1} parent=1 // pred_region
      %6268 = dma.done [#allocation7], 24576
    $region49: #{painn_update_block_v3nf.1} parent=1 // pred_fallthru
      _
    %6269 = vsyncpa [#allocation3], 1
    %6270 = vsyncpa [#allocation4], 1
    %6271 = vsyncpa [#allocation7], 1

</llo_original>
